<compile_context>
chip_gen: v7x
topology: tpu7x:2x2x1
jax: 0.10.0
libtpu: 0.0.40
codegen_flags: <defaults>
</compile_context>

<pallas_src>
from functools import partial

import jax
import jax.numpy as jnp
from jax.experimental import pallas as pl
from jax.experimental.pallas import tpu as pltpu


def _res_block_kernel(x_ref, w1_ref, b1_ref, w2_ref, b2_ref, o_ref,
                      xpad_ref, patch_ref, *, B, H, W, C, KH, KW, pad):
    """Fused res_block for a block of B batch elements.

    x_ref    : (B, H, W, C)  f32   input block (also the residual)
    w1_ref   : (KH*KW*C, C)  bf16  conv1 weights with BN1 scale folded in
    b1_ref   : (1, C)        f32   folded conv1-bias + BN1 bias
    w2_ref   : (KH*KW*C, C)  bf16  conv2 weights with BN2 scale folded in
    b2_ref   : (1, C)        f32   folded conv2-bias + BN2 bias
    o_ref    : (B, H, W, C)  f32   output block
    xpad_ref : VMEM (B, H+2p, W+2p, C) bf16  zero-padded activation scratch (both stages)
    patch_ref: VMEM (B*H*W, KH*KW*C)  bf16  im2col patch scratch
    """
    M = B * H * W
    Hp = H + 2 * pad
    Wp = W + 2 * pad
    cdt = xpad_ref.dtype  # bf16 compute dtype for MXU operands

    # Zero ONLY the halo ring each step; the interior is fully overwritten below.
    # (Cannot gate on program_id == 0: under "parallel" semantics each core has its
    #  own scratch and its own first iteration.)
    xpad_ref[:, :pad, :, :] = jnp.zeros((B, pad, Wp, C), cdt)
    xpad_ref[:, pad + H:, :, :] = jnp.zeros((B, pad, Wp, C), cdt)
    xpad_ref[:, :, :pad, :] = jnp.zeros((B, Hp, pad, C), cdt)
    xpad_ref[:, :, pad + W:, :] = jnp.zeros((B, Hp, pad, C), cdt)

    # Stage-1 input: the x block, cast to bf16 for the MXU.
    xpad_ref[:, pad:pad + H, pad:pad + W, :] = x_ref[...].astype(cdt)

    def conv3x3(w_ref, b_ref):
        # im2col: fold the KH*KW taps into the contraction dim so the MXU sees ONE
        # (M, KH*KW*C) x (KH*KW*C, C) bf16 matmul (K = 9*C) instead of 9 tiny K=C ones.
        xp = xpad_ref[...]                                  # (B, Hp, Wp, C) bf16
        for dy in range(KH):
            for dx in range(KW):
                t = dy * KW + dx
                patch_ref[:, t * C:(t + 1) * C] = (
                    xp[:, dy:dy + H, dx:dx + W, :].reshape(M, C))
        # bf16 x bf16 operands, f32 accumulation; f32 bias epilogue on the VPU.
        return jnp.dot(patch_ref[...], w_ref[...],
                       preferred_element_type=jnp.float32) + b_ref[...]

    # Stage 1: conv1 + folded BN1 + ReLU (stays in VMEM, no HBM round-trip).
    h1 = jnp.maximum(conv3x3(w1_ref, b1_ref), 0.0)          # (M, C) f32

    # Stage 2: reuse the padded scratch (halo is still zero), conv2 + folded BN2,
    # residual add (re-read from the VMEM-resident x block), final ReLU — all f32.
    xpad_ref[:, pad:pad + H, pad:pad + W, :] = h1.reshape(B, H, W, C).astype(cdt)
    y = conv3x3(w2_ref, b2_ref)
    y = y + x_ref[...].reshape(M, C).astype(jnp.float32)
    o_ref[...] = jnp.maximum(y, 0.0).reshape(B, H, W, C).astype(o_ref.dtype)


def _fold_bn_into_conv(w, b, gamma, beta, mean, var, eps=1e-5):
    """Fold conv bias + eval-mode BatchNorm into the conv weights / a per-channel bias.

    w: (KH, KW, Cin, Cout) HWIO. Returns (KH*KW*Cin, Cout) bf16 weights, (1, Cout) f32 bias.
    """
    scale = gamma / jnp.sqrt(var + eps)                      # (Cout,)
    KH, KW, Cin, Cout = w.shape
    w_f = (w * scale[None, None, None, :]).reshape(KH * KW * Cin, Cout)
    b_f = ((b - mean) * scale + beta)[None, :]
    return w_f.astype(jnp.bfloat16), b_f.astype(jnp.float32)


def _pick_batch_tile(n, h, w, target_rows=256):
    """Largest divisor of n with packed matmul rows b*h*w <= target_rows (MXU fill),
    while keeping the grid length >= 2 whenever n >= 2 (so both v7x TCs get work)."""
    best = 1
    for b in range(1, n + 1):
        if n % b:
            continue
        if b > 1 and b * h * w > target_rows:
            continue
        if n >= 2 and n // b < 2:
            continue
        best = b
    return best


def res_block_forward(x, params, pad=1):
    """x: (N, H, W, C) float32 NHWC. Returns (N, H, W, C)."""
    N, H, W, C = x.shape
    KH, KW = params["w1"].shape[:2]

    w1f, b1f = _fold_bn_into_conv(params["w1"], params["b1"], params["gamma1"],
                                  params["beta1"], params["mean1"], params["var1"])
    w2f, b2f = _fold_bn_into_conv(params["w2"], params["b2"], params["gamma2"],
                                  params["beta2"], params["mean2"], params["var2"])

    B = _pick_batch_tile(N, H, W)
    grid = (N // B,)

    kernel = partial(_res_block_kernel, B=B, H=H, W=W, C=C, KH=KH, KW=KW, pad=pad)

    def build(single_buffer_weights):
        if single_buffer_weights:
            def const_spec(shape):
                # Constant index_map -> the block never changes across the grid;
                # single-buffer it to halve resident weight VMEM.
                return pl.BlockSpec(shape, lambda n: (0,) * len(shape),
                                    pipeline_mode=pl.Buffered(1))
        else:
            def const_spec(shape):
                return pl.BlockSpec(shape, lambda n: (0,) * len(shape))

        return pl.pallas_call(
            kernel,
            out_shape=jax.ShapeDtypeStruct((N, H, W, C), x.dtype),
            grid=grid,
            in_specs=[
                pl.BlockSpec((B, H, W, C), lambda n: (n, 0, 0, 0)),   # x (and residual)
                const_spec((KH * KW * C, C)),                         # w1 (resident)
                const_spec((1, C)),                                   # b1
                const_spec((KH * KW * C, C)),                         # w2 (resident)
                const_spec((1, C)),                                   # b2
            ],
            out_specs=pl.BlockSpec((B, H, W, C), lambda n: (n, 0, 0, 0)),
            scratch_shapes=[
                pltpu.VMEM((B, H + 2 * pad, W + 2 * pad, C), jnp.bfloat16),  # padded acts
                pltpu.VMEM((B * H * W, KH * KW * C), jnp.bfloat16),          # im2col patch
            ],
            compiler_params=pltpu.CompilerParams(
                dimension_semantics=("parallel",),      # split batch-blocks across TCs
                vmem_limit_bytes=32 * 1024 * 1024,
            ),
        )

    try:
        return build(True)(x, w1f, b1f, w2f, b2f)
    except Exception:
        # pipeline_mode / pl.Buffered not supported by this JAX build: fall back to the
        # default double-buffered (but still index_map-constant, resident) weight specs.
        return build(False)(x, w1f, b1f, w2f, b2f)


def _reference(x, params, pad=1, eps=1e-5):
    """Pure-JAX reference (eval-mode BN), NHWC / HWIO."""
    def conv(v, w, b):
        y = jax.lax.conv_general_dilated(
            v, w, window_strides=(1, 1), padding=((pad, pad), (pad, pad)),
            dimension_numbers=("NHWC", "HWIO", "NHWC"))
        return y + b

    def bn(v, g, be, m, var):
        return (v - m) / jnp.sqrt(var + eps) * g + be

    y = conv(x, params["w1"], params["b1"])
    y = bn(y, params["gamma1"], params["beta1"], params["mean1"], params["var1"])
    y = jnp.maximum(y, 0.0)
    y = conv(y, params["w2"], params["b2"])
    y = bn(y, params["gamma2"], params["beta2"], params["mean2"], params["var2"])
    return jnp.maximum(y + x, 0.0)


def _init_params(key, C, ksize=3):
    ks = jax.random.split(key, 12)
    fan_in = C * ksize * ksize
    w_scale = 1.0 / jnp.sqrt(jnp.float32(fan_in))
    return {
        "w1": jax.random.normal(ks[0], (ksize, ksize, C, C), jnp.float32) * w_scale,
        "b1": jax.random.normal(ks[1], (C,), jnp.float32) * 0.05,
        "gamma1": jax.random.uniform(ks[2], (C,), jnp.float32, 0.5, 1.5),
        "beta1": jax.random.normal(ks[3], (C,), jnp.float32) * 0.1,
        "mean1": jax.random.normal(ks[4], (C,), jnp.float32) * 0.1,
        "var1": jax.random.uniform(ks[5], (C,), jnp.float32, 0.5, 1.5),
        "w2": jax.random.normal(ks[6], (ksize, ksize, C, C), jnp.float32) * w_scale,
        "b2": jax.random.normal(ks[7], (C,), jnp.float32) * 0.05,
        "gamma2": jax.random.uniform(ks[8], (C,), jnp.float32, 0.5, 1.5),
        "beta2": jax.random.normal(ks[9], (C,), jnp.float32) * 0.1,
        "mean2": jax.random.normal(ks[10], (C,), jnp.float32) * 0.1,
        "var2": jax.random.uniform(ks[11], (C,), jnp.float32, 0.5, 1.5),
    }


if __name__ == "__main__":
    key = jax.random.PRNGKey(0)
    k_x, k_p = jax.random.split(key)

    # Module default hidden_channels=128 (lane-dense), small spatial / batch.
    N, H, W, C = 2, 8, 8, 128
    x = jax.random.normal(k_x, (N, H, W, C), jnp.float32)   # NHWC
    params = _init_params(k_p, C)

    out = jax.block_until_ready(res_block_forward(x, params))
    ref = jax.block_until_ready(_reference(x, params))

    assert out.shape == (N, H, W, C)
    # bf16 MXU operands (f32 accumulation) through two 3x3x128 convs -> loose tolerance.
    max_err = float(jnp.max(jnp.abs(out - ref)))
    assert jnp.allclose(out, ref, atol=5e-2, rtol=5e-2), f"max abs err {max_err}"

    print("KERNEL_OK")
</pallas_src>

<mosaic_0001>
module attributes {stable_mosaic.version = 11 : i64} {
  func.func @_res_block_kernel(%arg0: i32, %arg1: memref<1x8x8x128xf32, #tpu.memory_space<vmem>>, %arg2: memref<1152x128xbf16, #tpu.memory_space<vmem>>, %arg3: memref<1x128xf32, #tpu.memory_space<vmem>>, %arg4: memref<1152x128xbf16, #tpu.memory_space<vmem>>, %arg5: memref<1x128xf32, #tpu.memory_space<vmem>>, %arg6: memref<1x8x8x128xf32, #tpu.memory_space<vmem>>, %arg7: memref<1x10x10x128xbf16, #tpu.memory_space<vmem>>, %arg8: memref<64x1152xbf16, #tpu.memory_space<vmem>>) attributes {dimension_semantics = [#tpu.dimension_semantics<parallel>], iteration_bounds = array<i64: 2>, scalar_prefetch = 0 : i64, scratch_operands = 2 : i64, tpu.core_type = #tpu.core_type<tc>, window_params = [{transform_indices = @transform_0, window_bounds = array<i64: 1, 8, 8, 128>}, {pipeline_mode = #tpu.pipeline_mode<synchronous>, transform_indices = @transform_1, window_bounds = array<i64: 1152, 128>}, {pipeline_mode = #tpu.pipeline_mode<synchronous>, transform_indices = @transform_2, window_bounds = array<i64: 1, 128>}, {pipeline_mode = #tpu.pipeline_mode<synchronous>, transform_indices = @transform_3, window_bounds = array<i64: 1152, 128>}, {pipeline_mode = #tpu.pipeline_mode<synchronous>, transform_indices = @transform_4, window_bounds = array<i64: 1, 128>}, {transform_indices = @transform_5, window_bounds = array<i64: 1, 8, 8, 128>}]} {
    %cst = arith.constant 0.000000e+00 : bf16
    %0 = vector.broadcast %cst : bf16 to vector<1x1x10x128xbf16>
    %c0 = arith.constant 0 : index
    %c0_0 = arith.constant 0 : index
    %c0_1 = arith.constant 0 : index
    %c0_2 = arith.constant 0 : index
    %1 = vector.load %arg7[%c0, %c0_0, %c0_1, %c0_2] : memref<1x10x10x128xbf16, #tpu.memory_space<vmem>>, vector<1x1x10x128xbf16>
    tpu.vector_store %arg7[%c0, %c0_0, %c0_1, %c0_2], %0 {strides = array<i32>} : memref<1x10x10x128xbf16, #tpu.memory_space<vmem>>, vector<1x1x10x128xbf16>,
    %cst_3 = arith.constant 0.000000e+00 : bf16
    %2 = vector.broadcast %cst_3 : bf16 to vector<1x1x10x128xbf16>
    %c0_4 = arith.constant 0 : index
    %c9 = arith.constant 9 : index
    %c0_5 = arith.constant 0 : index
    %c0_6 = arith.constant 0 : index
    %3 = vector.load %arg7[%c0_4, %c9, %c0_5, %c0_6] : memref<1x10x10x128xbf16, #tpu.memory_space<vmem>>, vector<1x1x10x128xbf16>
    tpu.vector_store %arg7[%c0_4, %c9, %c0_5, %c0_6], %2 {strides = array<i32>} : memref<1x10x10x128xbf16, #tpu.memory_space<vmem>>, vector<1x1x10x128xbf16>,
    %cst_7 = arith.constant 0.000000e+00 : bf16
    %4 = vector.broadcast %cst_7 : bf16 to vector<1x10x1x128xbf16>
    %c0_8 = arith.constant 0 : index
    %c0_9 = arith.constant 0 : index
    %c0_10 = arith.constant 0 : index
    %c0_11 = arith.constant 0 : index
    %5 = vector.load %arg7[%c0_8, %c0_9, %c0_10, %c0_11] : memref<1x10x10x128xbf16, #tpu.memory_space<vmem>>, vector<1x10x1x128xbf16>
    tpu.vector_store %arg7[%c0_8, %c0_9, %c0_10, %c0_11], %4 {strides = array<i32>} : memref<1x10x10x128xbf16, #tpu.memory_space<vmem>>, vector<1x10x1x128xbf16>,
    %cst_12 = arith.constant 0.000000e+00 : bf16
    %6 = vector.broadcast %cst_12 : bf16 to vector<1x10x1x128xbf16>
    %c0_13 = arith.constant 0 : index
    %c0_14 = arith.constant 0 : index
    %c9_15 = arith.constant 9 : index
    %c0_16 = arith.constant 0 : index
    %7 = vector.load %arg7[%c0_13, %c0_14, %c9_15, %c0_16] : memref<1x10x10x128xbf16, #tpu.memory_space<vmem>>, vector<1x10x1x128xbf16>
    tpu.vector_store %arg7[%c0_13, %c0_14, %c9_15, %c0_16], %6 {strides = array<i32>} : memref<1x10x10x128xbf16, #tpu.memory_space<vmem>>, vector<1x10x1x128xbf16>,
    %c0_17 = arith.constant 0 : index
    %c0_18 = arith.constant 0 : index
    %c0_19 = arith.constant 0 : index
    %c0_20 = arith.constant 0 : index
    %8 = vector.load %arg1[%c0_17, %c0_18, %c0_19, %c0_20] : memref<1x8x8x128xf32, #tpu.memory_space<vmem>>, vector<1x8x8x128xf32>
    %9 = arith.truncf %8 : vector<1x8x8x128xf32> to vector<1x8x8x128xbf16>
    %c0_21 = arith.constant 0 : index
    %c1 = arith.constant 1 : index
    %c1_22 = arith.constant 1 : index
    %c0_23 = arith.constant 0 : index
    %10 = vector.load %arg7[%c0_21, %c1, %c1_22, %c0_23] : memref<1x10x10x128xbf16, #tpu.memory_space<vmem>>, vector<1x8x8x128xbf16>
    tpu.vector_store %arg7[%c0_21, %c1, %c1_22, %c0_23], %9 {strides = array<i32>} : memref<1x10x10x128xbf16, #tpu.memory_space<vmem>>, vector<1x8x8x128xbf16>,
    %c0_24 = arith.constant 0 : index
    %c0_25 = arith.constant 0 : index
    %c0_26 = arith.constant 0 : index
    %c0_27 = arith.constant 0 : index
    %11 = vector.load %arg7[%c0_24, %c0_25, %c0_26, %c0_27] : memref<1x10x10x128xbf16, #tpu.memory_space<vmem>>, vector<1x10x10x128xbf16>
    %12 = vector.extract_strided_slice %11 {offsets = [0, 0, 0, 0], sizes = [1, 8, 8, 128], strides = [1, 1, 1, 1]} : vector<1x10x10x128xbf16> to vector<1x8x8x128xbf16>
    %13 = vector.shape_cast %12 : vector<1x8x8x128xbf16> to vector<64x128xbf16>
    %c0_28 = arith.constant 0 : index
    %c0_29 = arith.constant 0 : index
    %14 = vector.load %arg8[%c0_28, %c0_29] : memref<64x1152xbf16, #tpu.memory_space<vmem>>, vector<64x128xbf16>
    tpu.vector_store %arg8[%c0_28, %c0_29], %13 {strides = array<i32>} : memref<64x1152xbf16, #tpu.memory_space<vmem>>, vector<64x128xbf16>,
    %15 = vector.extract_strided_slice %11 {offsets = [0, 0, 1, 0], sizes = [1, 8, 8, 128], strides = [1, 1, 1, 1]} : vector<1x10x10x128xbf16> to vector<1x8x8x128xbf16>
    %16 = vector.shape_cast %15 : vector<1x8x8x128xbf16> to vector<64x128xbf16>
    %c0_30 = arith.constant 0 : index
    %c128 = arith.constant 128 : index
    %17 = vector.load %arg8[%c0_30, %c128] : memref<64x1152xbf16, #tpu.memory_space<vmem>>, vector<64x128xbf16>
    tpu.vector_store %arg8[%c0_30, %c128], %16 {strides = array<i32>} : memref<64x1152xbf16, #tpu.memory_space<vmem>>, vector<64x128xbf16>,
    %18 = vector.extract_strided_slice %11 {offsets = [0, 0, 2, 0], sizes = [1, 8, 8, 128], strides = [1, 1, 1, 1]} : vector<1x10x10x128xbf16> to vector<1x8x8x128xbf16>
    %19 = vector.shape_cast %18 : vector<1x8x8x128xbf16> to vector<64x128xbf16>
    %c0_31 = arith.constant 0 : index
    %c256 = arith.constant 256 : index
    %20 = vector.load %arg8[%c0_31, %c256] : memref<64x1152xbf16, #tpu.memory_space<vmem>>, vector<64x128xbf16>
    tpu.vector_store %arg8[%c0_31, %c256], %19 {strides = array<i32>} : memref<64x1152xbf16, #tpu.memory_space<vmem>>, vector<64x128xbf16>,
    %21 = vector.extract_strided_slice %11 {offsets = [0, 1, 0, 0], sizes = [1, 8, 8, 128], strides = [1, 1, 1, 1]} : vector<1x10x10x128xbf16> to vector<1x8x8x128xbf16>
    %22 = vector.shape_cast %21 : vector<1x8x8x128xbf16> to vector<64x128xbf16>
    %c0_32 = arith.constant 0 : index
    %c384 = arith.constant 384 : index
    %23 = vector.load %arg8[%c0_32, %c384] : memref<64x1152xbf16, #tpu.memory_space<vmem>>, vector<64x128xbf16>
    tpu.vector_store %arg8[%c0_32, %c384], %22 {strides = array<i32>} : memref<64x1152xbf16, #tpu.memory_space<vmem>>, vector<64x128xbf16>,
    %24 = vector.extract_strided_slice %11 {offsets = [0, 1, 1, 0], sizes = [1, 8, 8, 128], strides = [1, 1, 1, 1]} : vector<1x10x10x128xbf16> to vector<1x8x8x128xbf16>
    %25 = vector.shape_cast %24 : vector<1x8x8x128xbf16> to vector<64x128xbf16>
    %c0_33 = arith.constant 0 : index
    %c512 = arith.constant 512 : index
    %26 = vector.load %arg8[%c0_33, %c512] : memref<64x1152xbf16, #tpu.memory_space<vmem>>, vector<64x128xbf16>
    tpu.vector_store %arg8[%c0_33, %c512], %25 {strides = array<i32>} : memref<64x1152xbf16, #tpu.memory_space<vmem>>, vector<64x128xbf16>,
    %27 = vector.extract_strided_slice %11 {offsets = [0, 1, 2, 0], sizes = [1, 8, 8, 128], strides = [1, 1, 1, 1]} : vector<1x10x10x128xbf16> to vector<1x8x8x128xbf16>
    %28 = vector.shape_cast %27 : vector<1x8x8x128xbf16> to vector<64x128xbf16>
    %c0_34 = arith.constant 0 : index
    %c640 = arith.constant 640 : index
    %29 = vector.load %arg8[%c0_34, %c640] : memref<64x1152xbf16, #tpu.memory_space<vmem>>, vector<64x128xbf16>
    tpu.vector_store %arg8[%c0_34, %c640], %28 {strides = array<i32>} : memref<64x1152xbf16, #tpu.memory_space<vmem>>, vector<64x128xbf16>,
    %30 = vector.extract_strided_slice %11 {offsets = [0, 2, 0, 0], sizes = [1, 8, 8, 128], strides = [1, 1, 1, 1]} : vector<1x10x10x128xbf16> to vector<1x8x8x128xbf16>
    %31 = vector.shape_cast %30 : vector<1x8x8x128xbf16> to vector<64x128xbf16>
    %c0_35 = arith.constant 0 : index
    %c768 = arith.constant 768 : index
    %32 = vector.load %arg8[%c0_35, %c768] : memref<64x1152xbf16, #tpu.memory_space<vmem>>, vector<64x128xbf16>
    tpu.vector_store %arg8[%c0_35, %c768], %31 {strides = array<i32>} : memref<64x1152xbf16, #tpu.memory_space<vmem>>, vector<64x128xbf16>,
    %33 = vector.extract_strided_slice %11 {offsets = [0, 2, 1, 0], sizes = [1, 8, 8, 128], strides = [1, 1, 1, 1]} : vector<1x10x10x128xbf16> to vector<1x8x8x128xbf16>
    %34 = vector.shape_cast %33 : vector<1x8x8x128xbf16> to vector<64x128xbf16>
    %c0_36 = arith.constant 0 : index
    %c896 = arith.constant 896 : index
    %35 = vector.load %arg8[%c0_36, %c896] : memref<64x1152xbf16, #tpu.memory_space<vmem>>, vector<64x128xbf16>
    tpu.vector_store %arg8[%c0_36, %c896], %34 {strides = array<i32>} : memref<64x1152xbf16, #tpu.memory_space<vmem>>, vector<64x128xbf16>,
    %36 = vector.extract_strided_slice %11 {offsets = [0, 2, 2, 0], sizes = [1, 8, 8, 128], strides = [1, 1, 1, 1]} : vector<1x10x10x128xbf16> to vector<1x8x8x128xbf16>
    %37 = vector.shape_cast %36 : vector<1x8x8x128xbf16> to vector<64x128xbf16>
    %c0_37 = arith.constant 0 : index
    %c1024 = arith.constant 1024 : index
    %38 = vector.load %arg8[%c0_37, %c1024] : memref<64x1152xbf16, #tpu.memory_space<vmem>>, vector<64x128xbf16>
    tpu.vector_store %arg8[%c0_37, %c1024], %37 {strides = array<i32>} : memref<64x1152xbf16, #tpu.memory_space<vmem>>, vector<64x128xbf16>,
    %c0_38 = arith.constant 0 : index
    %c0_39 = arith.constant 0 : index
    %39 = vector.load %arg8[%c0_38, %c0_39] : memref<64x1152xbf16, #tpu.memory_space<vmem>>, vector<64x1152xbf16>
    %c0_40 = arith.constant 0 : index
    %c0_41 = arith.constant 0 : index
    %40 = vector.load %arg2[%c0_40, %c0_41] : memref<1152x128xbf16, #tpu.memory_space<vmem>>, vector<1152x128xbf16>
    %cst_42 = arith.constant dense<0.000000e+00> : vector<64x128xf32>
    %41 = tpu.matmul %39, %40, %cst_42 {dimension_numbers = #tpu.dot_dimension_numbers<[1], [0], [0], [1], [0, 0, 1, 1], [], []>} : vector<64x1152xbf16>, vector<1152x128xbf16>, vector<64x128xf32> -> vector<64x128xf32>
    %c0_43 = arith.constant 0 : index
    %c0_44 = arith.constant 0 : index
    %42 = vector.load %arg3[%c0_43, %c0_44] : memref<1x128xf32, #tpu.memory_space<vmem>>, vector<1x128xf32>
    %43 = vector.broadcast %42 : vector<1x128xf32> to vector<64x128xf32>
    %44 = arith.addf %41, %43 : vector<64x128xf32>
    %cst_45 = arith.constant 0.000000e+00 : f32
    %45 = vector.broadcast %cst_45 : f32 to vector<64x128xf32>
    %46 = arith.maximumf %44, %45 : vector<64x128xf32>
    %47 = vector.shape_cast %46 : vector<64x128xf32> to vector<1x8x8x128xf32>
    %48 = arith.truncf %47 : vector<1x8x8x128xf32> to vector<1x8x8x128xbf16>
    %c0_46 = arith.constant 0 : index
    %c1_47 = arith.constant 1 : index
    %c1_48 = arith.constant 1 : index
    %c0_49 = arith.constant 0 : index
    %49 = vector.load %arg7[%c0_46, %c1_47, %c1_48, %c0_49] : memref<1x10x10x128xbf16, #tpu.memory_space<vmem>>, vector<1x8x8x128xbf16>
    tpu.vector_store %arg7[%c0_46, %c1_47, %c1_48, %c0_49], %48 {strides = array<i32>} : memref<1x10x10x128xbf16, #tpu.memory_space<vmem>>, vector<1x8x8x128xbf16>,
    %c0_50 = arith.constant 0 : index
    %c0_51 = arith.constant 0 : index
    %c0_52 = arith.constant 0 : index
    %c0_53 = arith.constant 0 : index
    %50 = vector.load %arg7[%c0_50, %c0_51, %c0_52, %c0_53] : memref<1x10x10x128xbf16, #tpu.memory_space<vmem>>, vector<1x10x10x128xbf16>
    %51 = vector.extract_strided_slice %50 {offsets = [0, 0, 0, 0], sizes = [1, 8, 8, 128], strides = [1, 1, 1, 1]} : vector<1x10x10x128xbf16> to vector<1x8x8x128xbf16>
    %52 = vector.shape_cast %51 : vector<1x8x8x128xbf16> to vector<64x128xbf16>
    %c0_54 = arith.constant 0 : index
    %c0_55 = arith.constant 0 : index
    %53 = vector.load %arg8[%c0_54, %c0_55] : memref<64x1152xbf16, #tpu.memory_space<vmem>>, vector<64x128xbf16>
    tpu.vector_store %arg8[%c0_54, %c0_55], %52 {strides = array<i32>} : memref<64x1152xbf16, #tpu.memory_space<vmem>>, vector<64x128xbf16>,
    %54 = vector.extract_strided_slice %50 {offsets = [0, 0, 1, 0], sizes = [1, 8, 8, 128], strides = [1, 1, 1, 1]} : vector<1x10x10x128xbf16> to vector<1x8x8x128xbf16>
    %55 = vector.shape_cast %54 : vector<1x8x8x128xbf16> to vector<64x128xbf16>
    %c0_56 = arith.constant 0 : index
    %c128_57 = arith.constant 128 : index
    %56 = vector.load %arg8[%c0_56, %c128_57] : memref<64x1152xbf16, #tpu.memory_space<vmem>>, vector<64x128xbf16>
    tpu.vector_store %arg8[%c0_56, %c128_57], %55 {strides = array<i32>} : memref<64x1152xbf16, #tpu.memory_space<vmem>>, vector<64x128xbf16>,
    %57 = vector.extract_strided_slice %50 {offsets = [0, 0, 2, 0], sizes = [1, 8, 8, 128], strides = [1, 1, 1, 1]} : vector<1x10x10x128xbf16> to vector<1x8x8x128xbf16>
    %58 = vector.shape_cast %57 : vector<1x8x8x128xbf16> to vector<64x128xbf16>
    %c0_58 = arith.constant 0 : index
    %c256_59 = arith.constant 256 : index
    %59 = vector.load %arg8[%c0_58, %c256_59] : memref<64x1152xbf16, #tpu.memory_space<vmem>>, vector<64x128xbf16>
    tpu.vector_store %arg8[%c0_58, %c256_59], %58 {strides = array<i32>} : memref<64x1152xbf16, #tpu.memory_space<vmem>>, vector<64x128xbf16>,
    %60 = vector.extract_strided_slice %50 {offsets = [0, 1, 0, 0], sizes = [1, 8, 8, 128], strides = [1, 1, 1, 1]} : vector<1x10x10x128xbf16> to vector<1x8x8x128xbf16>
    %61 = vector.shape_cast %60 : vector<1x8x8x128xbf16> to vector<64x128xbf16>
    %c0_60 = arith.constant 0 : index
    %c384_61 = arith.constant 384 : index
    %62 = vector.load %arg8[%c0_60, %c384_61] : memref<64x1152xbf16, #tpu.memory_space<vmem>>, vector<64x128xbf16>
    tpu.vector_store %arg8[%c0_60, %c384_61], %61 {strides = array<i32>} : memref<64x1152xbf16, #tpu.memory_space<vmem>>, vector<64x128xbf16>,
    %63 = vector.extract_strided_slice %50 {offsets = [0, 1, 1, 0], sizes = [1, 8, 8, 128], strides = [1, 1, 1, 1]} : vector<1x10x10x128xbf16> to vector<1x8x8x128xbf16>
    %64 = vector.shape_cast %63 : vector<1x8x8x128xbf16> to vector<64x128xbf16>
    %c0_62 = arith.constant 0 : index
    %c512_63 = arith.constant 512 : index
    %65 = vector.load %arg8[%c0_62, %c512_63] : memref<64x1152xbf16, #tpu.memory_space<vmem>>, vector<64x128xbf16>
    tpu.vector_store %arg8[%c0_62, %c512_63], %64 {strides = array<i32>} : memref<64x1152xbf16, #tpu.memory_space<vmem>>, vector<64x128xbf16>,
    %66 = vector.extract_strided_slice %50 {offsets = [0, 1, 2, 0], sizes = [1, 8, 8, 128], strides = [1, 1, 1, 1]} : vector<1x10x10x128xbf16> to vector<1x8x8x128xbf16>
    %67 = vector.shape_cast %66 : vector<1x8x8x128xbf16> to vector<64x128xbf16>
    %c0_64 = arith.constant 0 : index
    %c640_65 = arith.constant 640 : index
    %68 = vector.load %arg8[%c0_64, %c640_65] : memref<64x1152xbf16, #tpu.memory_space<vmem>>, vector<64x128xbf16>
    tpu.vector_store %arg8[%c0_64, %c640_65], %67 {strides = array<i32>} : memref<64x1152xbf16, #tpu.memory_space<vmem>>, vector<64x128xbf16>,
    %69 = vector.extract_strided_slice %50 {offsets = [0, 2, 0, 0], sizes = [1, 8, 8, 128], strides = [1, 1, 1, 1]} : vector<1x10x10x128xbf16> to vector<1x8x8x128xbf16>
    %70 = vector.shape_cast %69 : vector<1x8x8x128xbf16> to vector<64x128xbf16>
    %c0_66 = arith.constant 0 : index
    %c768_67 = arith.constant 768 : index
    %71 = vector.load %arg8[%c0_66, %c768_67] : memref<64x1152xbf16, #tpu.memory_space<vmem>>, vector<64x128xbf16>
    tpu.vector_store %arg8[%c0_66, %c768_67], %70 {strides = array<i32>} : memref<64x1152xbf16, #tpu.memory_space<vmem>>, vector<64x128xbf16>,
    %72 = vector.extract_strided_slice %50 {offsets = [0, 2, 1, 0], sizes = [1, 8, 8, 128], strides = [1, 1, 1, 1]} : vector<1x10x10x128xbf16> to vector<1x8x8x128xbf16>
    %73 = vector.shape_cast %72 : vector<1x8x8x128xbf16> to vector<64x128xbf16>
    %c0_68 = arith.constant 0 : index
    %c896_69 = arith.constant 896 : index
    %74 = vector.load %arg8[%c0_68, %c896_69] : memref<64x1152xbf16, #tpu.memory_space<vmem>>, vector<64x128xbf16>
    tpu.vector_store %arg8[%c0_68, %c896_69], %73 {strides = array<i32>} : memref<64x1152xbf16, #tpu.memory_space<vmem>>, vector<64x128xbf16>,
    %75 = vector.extract_strided_slice %50 {offsets = [0, 2, 2, 0], sizes = [1, 8, 8, 128], strides = [1, 1, 1, 1]} : vector<1x10x10x128xbf16> to vector<1x8x8x128xbf16>
    %76 = vector.shape_cast %75 : vector<1x8x8x128xbf16> to vector<64x128xbf16>
    %c0_70 = arith.constant 0 : index
    %c1024_71 = arith.constant 1024 : index
    %77 = vector.load %arg8[%c0_70, %c1024_71] : memref<64x1152xbf16, #tpu.memory_space<vmem>>, vector<64x128xbf16>
    tpu.vector_store %arg8[%c0_70, %c1024_71], %76 {strides = array<i32>} : memref<64x1152xbf16, #tpu.memory_space<vmem>>, vector<64x128xbf16>,
    %c0_72 = arith.constant 0 : index
    %c0_73 = arith.constant 0 : index
    %78 = vector.load %arg8[%c0_72, %c0_73] : memref<64x1152xbf16, #tpu.memory_space<vmem>>, vector<64x1152xbf16>
    %c0_74 = arith.constant 0 : index
    %c0_75 = arith.constant 0 : index
    %79 = vector.load %arg4[%c0_74, %c0_75] : memref<1152x128xbf16, #tpu.memory_space<vmem>>, vector<1152x128xbf16>
    %cst_76 = arith.constant dense<0.000000e+00> : vector<64x128xf32>
    %80 = tpu.matmul %78, %79, %cst_76 {dimension_numbers = #tpu.dot_dimension_numbers<[1], [0], [0], [1], [0, 0, 1, 1], [], []>} : vector<64x1152xbf16>, vector<1152x128xbf16>, vector<64x128xf32> -> vector<64x128xf32>
    %c0_77 = arith.constant 0 : index
    %c0_78 = arith.constant 0 : index
    %81 = vector.load %arg5[%c0_77, %c0_78] : memref<1x128xf32, #tpu.memory_space<vmem>>, vector<1x128xf32>
    %82 = vector.broadcast %81 : vector<1x128xf32> to vector<64x128xf32>
    %83 = arith.addf %80, %82 : vector<64x128xf32>
    %c0_79 = arith.constant 0 : index
    %c0_80 = arith.constant 0 : index
    %c0_81 = arith.constant 0 : index
    %c0_82 = arith.constant 0 : index
    %84 = vector.load %arg1[%c0_79, %c0_80, %c0_81, %c0_82] : memref<1x8x8x128xf32, #tpu.memory_space<vmem>>, vector<1x8x8x128xf32>
    %85 = vector.shape_cast %84 : vector<1x8x8x128xf32> to vector<64x128xf32>
    %86 = arith.addf %83, %85 : vector<64x128xf32>
    %cst_83 = arith.constant 0.000000e+00 : f32
    %87 = vector.broadcast %cst_83 : f32 to vector<64x128xf32>
    %88 = arith.maximumf %86, %87 : vector<64x128xf32>
    %89 = vector.shape_cast %88 : vector<64x128xf32> to vector<1x8x8x128xf32>
    %c0_84 = arith.constant 0 : index
    %c0_85 = arith.constant 0 : index
    %c0_86 = arith.constant 0 : index
    %c0_87 = arith.constant 0 : index
    %90 = vector.load %arg6[%c0_84, %c0_85, %c0_86, %c0_87] : memref<1x8x8x128xf32, #tpu.memory_space<vmem>>, vector<1x8x8x128xf32>
    tpu.vector_store %arg6[%c0_84, %c0_85, %c0_86, %c0_87], %89 {strides = array<i32>} : memref<1x8x8x128xf32, #tpu.memory_space<vmem>>, vector<1x8x8x128xf32>,
    return
  }
  func.func @transform_0(%arg0: i32) -> (i32, i32, i32, i32) {
    %c0_i32 = arith.constant 0 : i32
    %c0_i32_0 = arith.constant 0 : i32
    %c0_i32_1 = arith.constant 0 : i32
    %c0_i32_2 = arith.constant 0 : i32
    return %arg0, %c0_i32, %c0_i32_0, %c0_i32_1 : i32, i32, i32, i32
  }
  func.func @transform_1(%arg0: i32) -> (i32, i32) {
    %c0_i32 = arith.constant 0 : i32
    %c0_i32_0 = arith.constant 0 : i32
    %c0_i32_1 = arith.constant 0 : i32
    return %c0_i32, %c0_i32_0 : i32, i32
  }
  func.func @transform_2(%arg0: i32) -> (i32, i32) {
    %c0_i32 = arith.constant 0 : i32
    %c0_i32_0 = arith.constant 0 : i32
    %c0_i32_1 = arith.constant 0 : i32
    return %c0_i32, %c0_i32_0 : i32, i32
  }
  func.func @transform_3(%arg0: i32) -> (i32, i32) {
    %c0_i32 = arith.constant 0 : i32
    %c0_i32_0 = arith.constant 0 : i32
    %c0_i32_1 = arith.constant 0 : i32
    return %c0_i32, %c0_i32_0 : i32, i32
  }
  func.func @transform_4(%arg0: i32) -> (i32, i32) {
    %c0_i32 = arith.constant 0 : i32
    %c0_i32_0 = arith.constant 0 : i32
    %c0_i32_1 = arith.constant 0 : i32
    return %c0_i32, %c0_i32_0 : i32, i32
  }
  func.func @transform_5(%arg0: i32) -> (i32, i32, i32, i32) {
    %c0_i32 = arith.constant 0 : i32
    %c0_i32_0 = arith.constant 0 : i32
    %c0_i32_1 = arith.constant 0 : i32
    %c0_i32_2 = arith.constant 0 : i32
    return %arg0, %c0_i32, %c0_i32_0, %c0_i32_1 : i32, i32, i32, i32
  }
}

module attributes {stable_mosaic.version = 11 : i64} {
  func.func @_res_block_kernel(%arg0: i32, %arg1: memref<1x8x8x128xf32, #tpu.memory_space<vmem>>, %arg2: memref<1152x128xbf16, #tpu.memory_space<vmem>>, %arg3: memref<1x128xf32, #tpu.memory_space<vmem>>, %arg4: memref<1152x128xbf16, #tpu.memory_space<vmem>>, %arg5: memref<1x128xf32, #tpu.memory_space<vmem>>, %arg6: memref<1x8x8x128xf32, #tpu.memory_space<vmem>>, %arg7: memref<1x10x10x128xbf16, #tpu.memory_space<vmem>>, %arg8: memref<64x1152xbf16, #tpu.memory_space<vmem>>) attributes {dimension_semantics = [#tpu.dimension_semantics<parallel>], iteration_bounds = array<i64: 2>, scalar_prefetch = 0 : i64, scratch_operands = 2 : i64, tpu.core_type = #tpu.core_type<tc>, window_params = [{transform_indices = @transform_0, window_bounds = array<i64: 1, 8, 8, 128>}, {pipeline_mode = #tpu.pipeline_mode<synchronous>, transform_indices = @transform_1, window_bounds = array<i64: 1152, 128>}, {pipeline_mode = #tpu.pipeline_mode<synchronous>, transform_indices = @transform_2, window_bounds = array<i64: 1, 128>}, {pipeline_mode = #tpu.pipeline_mode<synchronous>, transform_indices = @transform_3, window_bounds = array<i64: 1152, 128>}, {pipeline_mode = #tpu.pipeline_mode<synchronous>, transform_indices = @transform_4, window_bounds = array<i64: 1, 128>}, {transform_indices = @transform_5, window_bounds = array<i64: 1, 8, 8, 128>}]} {
    %cst = arith.constant 0.000000e+00 : bf16
    %0 = vector.broadcast %cst : bf16 to vector<1x1x10x128xbf16>
    %c0 = arith.constant 0 : index
    %c0_0 = arith.constant 0 : index
    %c0_1 = arith.constant 0 : index
    %c0_2 = arith.constant 0 : index
    %1 = vector.load %arg7[%c0, %c0_0, %c0_1, %c0_2] : memref<1x10x10x128xbf16, #tpu.memory_space<vmem>>, vector<1x1x10x128xbf16>
    tpu.vector_store %arg7[%c0, %c0_0, %c0_1, %c0_2], %0 {strides = array<i32>} : memref<1x10x10x128xbf16, #tpu.memory_space<vmem>>, vector<1x1x10x128xbf16>,
    %cst_3 = arith.constant 0.000000e+00 : bf16
    %2 = vector.broadcast %cst_3 : bf16 to vector<1x1x10x128xbf16>
    %c0_4 = arith.constant 0 : index
    %c9 = arith.constant 9 : index
    %c0_5 = arith.constant 0 : index
    %c0_6 = arith.constant 0 : index
    %3 = vector.load %arg7[%c0_4, %c9, %c0_5, %c0_6] : memref<1x10x10x128xbf16, #tpu.memory_space<vmem>>, vector<1x1x10x128xbf16>
    tpu.vector_store %arg7[%c0_4, %c9, %c0_5, %c0_6], %2 {strides = array<i32>} : memref<1x10x10x128xbf16, #tpu.memory_space<vmem>>, vector<1x1x10x128xbf16>,
    %cst_7 = arith.constant 0.000000e+00 : bf16
    %4 = vector.broadcast %cst_7 : bf16 to vector<1x10x1x128xbf16>
    %c0_8 = arith.constant 0 : index
    %c0_9 = arith.constant 0 : index
    %c0_10 = arith.constant 0 : index
    %c0_11 = arith.constant 0 : index
    %5 = vector.load %arg7[%c0_8, %c0_9, %c0_10, %c0_11] : memref<1x10x10x128xbf16, #tpu.memory_space<vmem>>, vector<1x10x1x128xbf16>
    tpu.vector_store %arg7[%c0_8, %c0_9, %c0_10, %c0_11], %4 {strides = array<i32>} : memref<1x10x10x128xbf16, #tpu.memory_space<vmem>>, vector<1x10x1x128xbf16>,
    %cst_12 = arith.constant 0.000000e+00 : bf16
    %6 = vector.broadcast %cst_12 : bf16 to vector<1x10x1x128xbf16>
    %c0_13 = arith.constant 0 : index
    %c0_14 = arith.constant 0 : index
    %c9_15 = arith.constant 9 : index
    %c0_16 = arith.constant 0 : index
    %7 = vector.load %arg7[%c0_13, %c0_14, %c9_15, %c0_16] : memref<1x10x10x128xbf16, #tpu.memory_space<vmem>>, vector<1x10x1x128xbf16>
    tpu.vector_store %arg7[%c0_13, %c0_14, %c9_15, %c0_16], %6 {strides = array<i32>} : memref<1x10x10x128xbf16, #tpu.memory_space<vmem>>, vector<1x10x1x128xbf16>,
    %c0_17 = arith.constant 0 : index
    %c0_18 = arith.constant 0 : index
    %c0_19 = arith.constant 0 : index
    %c0_20 = arith.constant 0 : index
    %8 = vector.load %arg1[%c0_17, %c0_18, %c0_19, %c0_20] : memref<1x8x8x128xf32, #tpu.memory_space<vmem>>, vector<1x8x8x128xf32>
    %9 = arith.truncf %8 : vector<1x8x8x128xf32> to vector<1x8x8x128xbf16>
    %c0_21 = arith.constant 0 : index
    %c1 = arith.constant 1 : index
    %c1_22 = arith.constant 1 : index
    %c0_23 = arith.constant 0 : index
    %10 = vector.load %arg7[%c0_21, %c1, %c1_22, %c0_23] : memref<1x10x10x128xbf16, #tpu.memory_space<vmem>>, vector<1x8x8x128xbf16>
    tpu.vector_store %arg7[%c0_21, %c1, %c1_22, %c0_23], %9 {strides = array<i32>} : memref<1x10x10x128xbf16, #tpu.memory_space<vmem>>, vector<1x8x8x128xbf16>,
    %c0_24 = arith.constant 0 : index
    %c0_25 = arith.constant 0 : index
    %c0_26 = arith.constant 0 : index
    %c0_27 = arith.constant 0 : index
    %11 = vector.load %arg7[%c0_24, %c0_25, %c0_26, %c0_27] : memref<1x10x10x128xbf16, #tpu.memory_space<vmem>>, vector<1x10x10x128xbf16>
    %12 = vector.extract_strided_slice %11 {offsets = [0, 0, 0, 0], sizes = [1, 8, 8, 128], strides = [1, 1, 1, 1]} : vector<1x10x10x128xbf16> to vector<1x8x8x128xbf16>
    %13 = vector.shape_cast %12 : vector<1x8x8x128xbf16> to vector<64x128xbf16>
    %c0_28 = arith.constant 0 : index
    %c0_29 = arith.constant 0 : index
    %14 = vector.load %arg8[%c0_28, %c0_29] : memref<64x1152xbf16, #tpu.memory_space<vmem>>, vector<64x128xbf16>
    tpu.vector_store %arg8[%c0_28, %c0_29], %13 {strides = array<i32>} : memref<64x1152xbf16, #tpu.memory_space<vmem>>, vector<64x128xbf16>,
    %15 = vector.extract_strided_slice %11 {offsets = [0, 0, 1, 0], sizes = [1, 8, 8, 128], strides = [1, 1, 1, 1]} : vector<1x10x10x128xbf16> to vector<1x8x8x128xbf16>
    %16 = vector.shape_cast %15 : vector<1x8x8x128xbf16> to vector<64x128xbf16>
    %c0_30 = arith.constant 0 : index
    %c128 = arith.constant 128 : index
    %17 = vector.load %arg8[%c0_30, %c128] : memref<64x1152xbf16, #tpu.memory_space<vmem>>, vector<64x128xbf16>
    tpu.vector_store %arg8[%c0_30, %c128], %16 {strides = array<i32>} : memref<64x1152xbf16, #tpu.memory_space<vmem>>, vector<64x128xbf16>,
    %18 = vector.extract_strided_slice %11 {offsets = [0, 0, 2, 0], sizes = [1, 8, 8, 128], strides = [1, 1, 1, 1]} : vector<1x10x10x128xbf16> to vector<1x8x8x128xbf16>
    %19 = vector.shape_cast %18 : vector<1x8x8x128xbf16> to vector<64x128xbf16>
    %c0_31 = arith.constant 0 : index
    %c256 = arith.constant 256 : index
    %20 = vector.load %arg8[%c0_31, %c256] : memref<64x1152xbf16, #tpu.memory_space<vmem>>, vector<64x128xbf16>
    tpu.vector_store %arg8[%c0_31, %c256], %19 {strides = array<i32>} : memref<64x1152xbf16, #tpu.memory_space<vmem>>, vector<64x128xbf16>,
    %21 = vector.extract_strided_slice %11 {offsets = [0, 1, 0, 0], sizes = [1, 8, 8, 128], strides = [1, 1, 1, 1]} : vector<1x10x10x128xbf16> to vector<1x8x8x128xbf16>
    %22 = vector.shape_cast %21 : vector<1x8x8x128xbf16> to vector<64x128xbf16>
    %c0_32 = arith.constant 0 : index
    %c384 = arith.constant 384 : index
    %23 = vector.load %arg8[%c0_32, %c384] : memref<64x1152xbf16, #tpu.memory_space<vmem>>, vector<64x128xbf16>
    tpu.vector_store %arg8[%c0_32, %c384], %22 {strides = array<i32>} : memref<64x1152xbf16, #tpu.memory_space<vmem>>, vector<64x128xbf16>,
    %24 = vector.extract_strided_slice %11 {offsets = [0, 1, 1, 0], sizes = [1, 8, 8, 128], strides = [1, 1, 1, 1]} : vector<1x10x10x128xbf16> to vector<1x8x8x128xbf16>
    %25 = vector.shape_cast %24 : vector<1x8x8x128xbf16> to vector<64x128xbf16>
    %c0_33 = arith.constant 0 : index
    %c512 = arith.constant 512 : index
    %26 = vector.load %arg8[%c0_33, %c512] : memref<64x1152xbf16, #tpu.memory_space<vmem>>, vector<64x128xbf16>
    tpu.vector_store %arg8[%c0_33, %c512], %25 {strides = array<i32>} : memref<64x1152xbf16, #tpu.memory_space<vmem>>, vector<64x128xbf16>,
    %27 = vector.extract_strided_slice %11 {offsets = [0, 1, 2, 0], sizes = [1, 8, 8, 128], strides = [1, 1, 1, 1]} : vector<1x10x10x128xbf16> to vector<1x8x8x128xbf16>
    %28 = vector.shape_cast %27 : vector<1x8x8x128xbf16> to vector<64x128xbf16>
    %c0_34 = arith.constant 0 : index
    %c640 = arith.constant 640 : index
    %29 = vector.load %arg8[%c0_34, %c640] : memref<64x1152xbf16, #tpu.memory_space<vmem>>, vector<64x128xbf16>
    tpu.vector_store %arg8[%c0_34, %c640], %28 {strides = array<i32>} : memref<64x1152xbf16, #tpu.memory_space<vmem>>, vector<64x128xbf16>,
    %30 = vector.extract_strided_slice %11 {offsets = [0, 2, 0, 0], sizes = [1, 8, 8, 128], strides = [1, 1, 1, 1]} : vector<1x10x10x128xbf16> to vector<1x8x8x128xbf16>
    %31 = vector.shape_cast %30 : vector<1x8x8x128xbf16> to vector<64x128xbf16>
    %c0_35 = arith.constant 0 : index
    %c768 = arith.constant 768 : index
    %32 = vector.load %arg8[%c0_35, %c768] : memref<64x1152xbf16, #tpu.memory_space<vmem>>, vector<64x128xbf16>
    tpu.vector_store %arg8[%c0_35, %c768], %31 {strides = array<i32>} : memref<64x1152xbf16, #tpu.memory_space<vmem>>, vector<64x128xbf16>,
    %33 = vector.extract_strided_slice %11 {offsets = [0, 2, 1, 0], sizes = [1, 8, 8, 128], strides = [1, 1, 1, 1]} : vector<1x10x10x128xbf16> to vector<1x8x8x128xbf16>
    %34 = vector.shape_cast %33 : vector<1x8x8x128xbf16> to vector<64x128xbf16>
    %c0_36 = arith.constant 0 : index
    %c896 = arith.constant 896 : index
    %35 = vector.load %arg8[%c0_36, %c896] : memref<64x1152xbf16, #tpu.memory_space<vmem>>, vector<64x128xbf16>
    tpu.vector_store %arg8[%c0_36, %c896], %34 {strides = array<i32>} : memref<64x1152xbf16, #tpu.memory_space<vmem>>, vector<64x128xbf16>,
    %36 = vector.extract_strided_slice %11 {offsets = [0, 2, 2, 0], sizes = [1, 8, 8, 128], strides = [1, 1, 1, 1]} : vector<1x10x10x128xbf16> to vector<1x8x8x128xbf16>
    %37 = vector.shape_cast %36 : vector<1x8x8x128xbf16> to vector<64x128xbf16>
    %c0_37 = arith.constant 0 : index
    %c1024 = arith.constant 1024 : index
    %38 = vector.load %arg8[%c0_37, %c1024] : memref<64x1152xbf16, #tpu.memory_space<vmem>>, vector<64x128xbf16>
    tpu.vector_store %arg8[%c0_37, %c1024], %37 {strides = array<i32>} : memref<64x1152xbf16, #tpu.memory_space<vmem>>, vector<64x128xbf16>,
    %c0_38 = arith.constant 0 : index
    %c0_39 = arith.constant 0 : index
    %39 = vector.load %arg8[%c0_38, %c0_39] : memref<64x1152xbf16, #tpu.memory_space<vmem>>, vector<64x1152xbf16>
    %c0_40 = arith.constant 0 : index
    %c0_41 = arith.constant 0 : index
    %40 = vector.load %arg2[%c0_40, %c0_41] : memref<1152x128xbf16, #tpu.memory_space<vmem>>, vector<1152x128xbf16>
    %cst_42 = arith.constant dense<0.000000e+00> : vector<64x128xf32>
    %41 = tpu.matmul %39, %40, %cst_42 {dimension_numbers = #tpu.dot_dimension_numbers<[1], [0], [0], [1], [0, 0, 1, 1], [], []>} : vector<64x1152xbf16>, vector<1152x128xbf16>, vector<64x128xf32> -> vector<64x128xf32>
    %c0_43 = arith.constant 0 : index
    %c0_44 = arith.constant 0 : index
    %42 = vector.load %arg3[%c0_43, %c0_44] : memref<1x128xf32, #tpu.memory_space<vmem>>, vector<1x128xf32>
    %43 = vector.broadcast %42 : vector<1x128xf32> to vector<64x128xf32>
    %44 = arith.addf %41, %43 : vector<64x128xf32>
    %cst_45 = arith.constant 0.000000e+00 : f32
    %45 = vector.broadcast %cst_45 : f32 to vector<64x128xf32>
    %46 = arith.maximumf %44, %45 : vector<64x128xf32>
    %47 = vector.shape_cast %46 : vector<64x128xf32> to vector<1x8x8x128xf32>
    %48 = arith.truncf %47 : vector<1x8x8x128xf32> to vector<1x8x8x128xbf16>
    %c0_46 = arith.constant 0 : index
    %c1_47 = arith.constant 1 : index
    %c1_48 = arith.constant 1 : index
    %c0_49 = arith.constant 0 : index
    %49 = vector.load %arg7[%c0_46, %c1_47, %c1_48, %c0_49] : memref<1x10x10x128xbf16, #tpu.memory_space<vmem>>, vector<1x8x8x128xbf16>
    tpu.vector_store %arg7[%c0_46, %c1_47, %c1_48, %c0_49], %48 {strides = array<i32>} : memref<1x10x10x128xbf16, #tpu.memory_space<vmem>>, vector<1x8x8x128xbf16>,
    %c0_50 = arith.constant 0 : index
    %c0_51 = arith.constant 0 : index
    %c0_52 = arith.constant 0 : index
    %c0_53 = arith.constant 0 : index
    %50 = vector.load %arg7[%c0_50, %c0_51, %c0_52, %c0_53] : memref<1x10x10x128xbf16, #tpu.memory_space<vmem>>, vector<1x10x10x128xbf16>
    %51 = vector.extract_strided_slice %50 {offsets = [0, 0, 0, 0], sizes = [1, 8, 8, 128], strides = [1, 1, 1, 1]} : vector<1x10x10x128xbf16> to vector<1x8x8x128xbf16>
    %52 = vector.shape_cast %51 : vector<1x8x8x128xbf16> to vector<64x128xbf16>
    %c0_54 = arith.constant 0 : index
    %c0_55 = arith.constant 0 : index
    %53 = vector.load %arg8[%c0_54, %c0_55] : memref<64x1152xbf16, #tpu.memory_space<vmem>>, vector<64x128xbf16>
    tpu.vector_store %arg8[%c0_54, %c0_55], %52 {strides = array<i32>} : memref<64x1152xbf16, #tpu.memory_space<vmem>>, vector<64x128xbf16>,
    %54 = vector.extract_strided_slice %50 {offsets = [0, 0, 1, 0], sizes = [1, 8, 8, 128], strides = [1, 1, 1, 1]} : vector<1x10x10x128xbf16> to vector<1x8x8x128xbf16>
    %55 = vector.shape_cast %54 : vector<1x8x8x128xbf16> to vector<64x128xbf16>
    %c0_56 = arith.constant 0 : index
    %c128_57 = arith.constant 128 : index
    %56 = vector.load %arg8[%c0_56, %c128_57] : memref<64x1152xbf16, #tpu.memory_space<vmem>>, vector<64x128xbf16>
    tpu.vector_store %arg8[%c0_56, %c128_57], %55 {strides = array<i32>} : memref<64x1152xbf16, #tpu.memory_space<vmem>>, vector<64x128xbf16>,
    %57 = vector.extract_strided_slice %50 {offsets = [0, 0, 2, 0], sizes = [1, 8, 8, 128], strides = [1, 1, 1, 1]} : vector<1x10x10x128xbf16> to vector<1x8x8x128xbf16>
    %58 = vector.shape_cast %57 : vector<1x8x8x128xbf16> to vector<64x128xbf16>
    %c0_58 = arith.constant 0 : index
    %c256_59 = arith.constant 256 : index
    %59 = vector.load %arg8[%c0_58, %c256_59] : memref<64x1152xbf16, #tpu.memory_space<vmem>>, vector<64x128xbf16>
    tpu.vector_store %arg8[%c0_58, %c256_59], %58 {strides = array<i32>} : memref<64x1152xbf16, #tpu.memory_space<vmem>>, vector<64x128xbf16>,
    %60 = vector.extract_strided_slice %50 {offsets = [0, 1, 0, 0], sizes = [1, 8, 8, 128], strides = [1, 1, 1, 1]} : vector<1x10x10x128xbf16> to vector<1x8x8x128xbf16>
    %61 = vector.shape_cast %60 : vector<1x8x8x128xbf16> to vector<64x128xbf16>
    %c0_60 = arith.constant 0 : index
    %c384_61 = arith.constant 384 : index
    %62 = vector.load %arg8[%c0_60, %c384_61] : memref<64x1152xbf16, #tpu.memory_space<vmem>>, vector<64x128xbf16>
    tpu.vector_store %arg8[%c0_60, %c384_61], %61 {strides = array<i32>} : memref<64x1152xbf16, #tpu.memory_space<vmem>>, vector<64x128xbf16>,
    %63 = vector.extract_strided_slice %50 {offsets = [0, 1, 1, 0], sizes = [1, 8, 8, 128], strides = [1, 1, 1, 1]} : vector<1x10x10x128xbf16> to vector<1x8x8x128xbf16>
    %64 = vector.shape_cast %63 : vector<1x8x8x128xbf16> to vector<64x128xbf16>
    %c0_62 = arith.constant 0 : index
    %c512_63 = arith.constant 512 : index
    %65 = vector.load %arg8[%c0_62, %c512_63] : memref<64x1152xbf16, #tpu.memory_space<vmem>>, vector<64x128xbf16>
    tpu.vector_store %arg8[%c0_62, %c512_63], %64 {strides = array<i32>} : memref<64x1152xbf16, #tpu.memory_space<vmem>>, vector<64x128xbf16>,
    %66 = vector.extract_strided_slice %50 {offsets = [0, 1, 2, 0], sizes = [1, 8, 8, 128], strides = [1, 1, 1, 1]} : vector<1x10x10x128xbf16> to vector<1x8x8x128xbf16>
    %67 = vector.shape_cast %66 : vector<1x8x8x128xbf16> to vector<64x128xbf16>
    %c0_64 = arith.constant 0 : index
    %c640_65 = arith.constant 640 : index
    %68 = vector.load %arg8[%c0_64, %c640_65] : memref<64x1152xbf16, #tpu.memory_space<vmem>>, vector<64x128xbf16>
    tpu.vector_store %arg8[%c0_64, %c640_65], %67 {strides = array<i32>} : memref<64x1152xbf16, #tpu.memory_space<vmem>>, vector<64x128xbf16>,
    %69 = vector.extract_strided_slice %50 {offsets = [0, 2, 0, 0], sizes = [1, 8, 8, 128], strides = [1, 1, 1, 1]} : vector<1x10x10x128xbf16> to vector<1x8x8x128xbf16>
    %70 = vector.shape_cast %69 : vector<1x8x8x128xbf16> to vector<64x128xbf16>
    %c0_66 = arith.constant 0 : index
    %c768_67 = arith.constant 768 : index
    %71 = vector.load %arg8[%c0_66, %c768_67] : memref<64x1152xbf16, #tpu.memory_space<vmem>>, vector<64x128xbf16>
    tpu.vector_store %arg8[%c0_66, %c768_67], %70 {strides = array<i32>} : memref<64x1152xbf16, #tpu.memory_space<vmem>>, vector<64x128xbf16>,
    %72 = vector.extract_strided_slice %50 {offsets = [0, 2, 1, 0], sizes = [1, 8, 8, 128], strides = [1, 1, 1, 1]} : vector<1x10x10x128xbf16> to vector<1x8x8x128xbf16>
    %73 = vector.shape_cast %72 : vector<1x8x8x128xbf16> to vector<64x128xbf16>
    %c0_68 = arith.constant 0 : index
    %c896_69 = arith.constant 896 : index
    %74 = vector.load %arg8[%c0_68, %c896_69] : memref<64x1152xbf16, #tpu.memory_space<vmem>>, vector<64x128xbf16>
    tpu.vector_store %arg8[%c0_68, %c896_69], %73 {strides = array<i32>} : memref<64x1152xbf16, #tpu.memory_space<vmem>>, vector<64x128xbf16>,
    %75 = vector.extract_strided_slice %50 {offsets = [0, 2, 2, 0], sizes = [1, 8, 8, 128], strides = [1, 1, 1, 1]} : vector<1x10x10x128xbf16> to vector<1x8x8x128xbf16>
    %76 = vector.shape_cast %75 : vector<1x8x8x128xbf16> to vector<64x128xbf16>
    %c0_70 = arith.constant 0 : index
    %c1024_71 = arith.constant 1024 : index
    %77 = vector.load %arg8[%c0_70, %c1024_71] : memref<64x1152xbf16, #tpu.memory_space<vmem>>, vector<64x128xbf16>
    tpu.vector_store %arg8[%c0_70, %c1024_71], %76 {strides = array<i32>} : memref<64x1152xbf16, #tpu.memory_space<vmem>>, vector<64x128xbf16>,
    %c0_72 = arith.constant 0 : index
    %c0_73 = arith.constant 0 : index
    %78 = vector.load %arg8[%c0_72, %c0_73] : memref<64x1152xbf16, #tpu.memory_space<vmem>>, vector<64x1152xbf16>
    %c0_74 = arith.constant 0 : index
    %c0_75 = arith.constant 0 : index
    %79 = vector.load %arg4[%c0_74, %c0_75] : memref<1152x128xbf16, #tpu.memory_space<vmem>>, vector<1152x128xbf16>
    %cst_76 = arith.constant dense<0.000000e+00> : vector<64x128xf32>
    %80 = tpu.matmul %78, %79, %cst_76 {dimension_numbers = #tpu.dot_dimension_numbers<[1], [0], [0], [1], [0, 0, 1, 1], [], []>} : vector<64x1152xbf16>, vector<1152x128xbf16>, vector<64x128xf32> -> vector<64x128xf32>
    %c0_77 = arith.constant 0 : index
    %c0_78 = arith.constant 0 : index
    %81 = vector.load %arg5[%c0_77, %c0_78] : memref<1x128xf32, #tpu.memory_space<vmem>>, vector<1x128xf32>
    %82 = vector.broadcast %81 : vector<1x128xf32> to vector<64x128xf32>
    %83 = arith.addf %80, %82 : vector<64x128xf32>
    %c0_79 = arith.constant 0 : index
    %c0_80 = arith.constant 0 : index
    %c0_81 = arith.constant 0 : index
    %c0_82 = arith.constant 0 : index
    %84 = vector.load %arg1[%c0_79, %c0_80, %c0_81, %c0_82] : memref<1x8x8x128xf32, #tpu.memory_space<vmem>>, vector<1x8x8x128xf32>
    %85 = vector.shape_cast %84 : vector<1x8x8x128xf32> to vector<64x128xf32>
    %86 = arith.addf %83, %85 : vector<64x128xf32>
    %cst_83 = arith.constant 0.000000e+00 : f32
    %87 = vector.broadcast %cst_83 : f32 to vector<64x128xf32>
    %88 = arith.maximumf %86, %87 : vector<64x128xf32>
    %89 = vector.shape_cast %88 : vector<64x128xf32> to vector<1x8x8x128xf32>
    %c0_84 = arith.constant 0 : index
    %c0_85 = arith.constant 0 : index
    %c0_86 = arith.constant 0 : index
    %c0_87 = arith.constant 0 : index
    %90 = vector.load %arg6[%c0_84, %c0_85, %c0_86, %c0_87] : memref<1x8x8x128xf32, #tpu.memory_space<vmem>>, vector<1x8x8x128xf32>
    tpu.vector_store %arg6[%c0_84, %c0_85, %c0_86, %c0_87], %89 {strides = array<i32>} : memref<1x8x8x128xf32, #tpu.memory_space<vmem>>, vector<1x8x8x128xf32>,
    return
  }
  func.func @transform_0(%arg0: i32) -> (i32, i32, i32, i32) {
    %c0_i32 = arith.constant 0 : i32
    %c0_i32_0 = arith.constant 0 : i32
    %c0_i32_1 = arith.constant 0 : i32
    %c0_i32_2 = arith.constant 0 : i32
    return %arg0, %c0_i32, %c0_i32_0, %c0_i32_1 : i32, i32, i32, i32
  }
  func.func @transform_1(%arg0: i32) -> (i32, i32) {
    %c0_i32 = arith.constant 0 : i32
    %c0_i32_0 = arith.constant 0 : i32
    %c0_i32_1 = arith.constant 0 : i32
    return %c0_i32, %c0_i32_0 : i32, i32
  }
  func.func @transform_2(%arg0: i32) -> (i32, i32) {
    %c0_i32 = arith.constant 0 : i32
    %c0_i32_0 = arith.constant 0 : i32
    %c0_i32_1 = arith.constant 0 : i32
    return %c0_i32, %c0_i32_0 : i32, i32
  }
  func.func @transform_3(%arg0: i32) -> (i32, i32) {
    %c0_i32 = arith.constant 0 : i32
    %c0_i32_0 = arith.constant 0 : i32
    %c0_i32_1 = arith.constant 0 : i32
    return %c0_i32, %c0_i32_0 : i32, i32
  }
  func.func @transform_4(%arg0: i32) -> (i32, i32) {
    %c0_i32 = arith.constant 0 : i32
    %c0_i32_0 = arith.constant 0 : i32
    %c0_i32_1 = arith.constant 0 : i32
    return %c0_i32, %c0_i32_0 : i32, i32
  }
  func.func @transform_5(%arg0: i32) -> (i32, i32, i32, i32) {
    %c0_i32 = arith.constant 0 : i32
    %c0_i32_0 = arith.constant 0 : i32
    %c0_i32_1 = arith.constant 0 : i32
    %c0_i32_2 = arith.constant 0 : i32
    return %arg0, %c0_i32, %c0_i32_0, %c0_i32_1 : i32, i32, i32, i32
  }
}

</mosaic_0001>

<llo_original>
// kernel: tpu_custom_call.1
$region0: #{tpu_custom_call.1}
  #allocation0 [shape = 'u32[]', space=smem, size = 0x4, offset = 0x4, fixed_abs, tag = 'smem constant byte address 0x4 - core index']
  #allocation1 [shape = 'u32[144,128]{1,0:T(1,128)}', space=vmem, size = 0x12000, scoped, tag = 'internal scratch']
  #allocation2 [shape = 'bf16[1,10,10,128]{3,2,1,0:T(8,128)(2,1)}', space=vmem, size = 0xa000, scoped, tag = 'scratch operand']
  #allocation3 [shape = 'bf16[64,1152]{1,0:T(16,128)(2,1)}', space=vmem, size = 0x24000, scoped, tag = 'scratch operand']
  %s0 = inlined_call_operand.hbm [shape: f32[2,8,8,128], index: 0, kind: input, shape index: {}]
  %s1 = inlined_call_operand.hbm [shape: bf16[1152,128], index: 1, kind: input, shape index: {}]
  %s2 = inlined_call_operand.vmem [shape: f32[1,128], index: 2, kind: input, shape index: {}]
  %s3 = inlined_call_operand.hbm [shape: bf16[1152,128], index: 3, kind: input, shape index: {}]
  %s4 = inlined_call_operand.vmem [shape: f32[1,128], index: 4, kind: input, shape index: {}]
  %s5 = inlined_call_operand.hbm [shape: f32[2,8,8,128], index: 5, kind: output, shape index: {}]
  %s6 = sld [smem:[#allocation0]]
  $region65: #{tpu_custom_call.1} parent=0
    _
  %s8 = ssub.s32 1, %s6
  %s9 = scalar_select 0, %s8, %s6
  $region1: #{tpu_custom_call.1} parent=0
    #allocation4 [shape = 'u8[65536]{0}', space=vmem, size = 0x10000, scoped, tag = 'input window, operand 0']
    #allocation5 [shape = 's32[2]{0}', space=sflag, size = 0x8, scoped, tag = 'scoped memory for tpu_custom_call.1']
    #allocation6 [shape = 's32[2]{0}', space=sflag, size = 0x8, scoped, tag = 'scoped memory for tpu_custom_call.1']
    #allocation7 [shape = 'u8[294912]{0}', space=vmem, size = 0x48000, scoped, tag = 'input window, operand 1, single buffered']
    #allocation8 [shape = 's32[1]{0}', space=sflag, size = 0x4, scoped, tag = 'scoped memory for tpu_custom_call.1']
    #allocation9 [shape = 'u8[294912]{0}', space=vmem, size = 0x48000, scoped, tag = 'input window, operand 3, single buffered']
    #allocation10 [shape = 'u8[65536]{0}', space=vmem, size = 0x10000, scoped, tag = 'output window, operand 0']
    %10 = vsyncpa [#allocation5], 0
    %s11 = scalar_lea.sflag [#allocation5], 1
    %12 = vsyncpa %s11, 0
    %13 = vsyncpa [#allocation8], 0
    %14 = vsyncpa [#allocation6], 0
    %s15 = scalar_lea.sflag [#allocation6], 1
    %16 = vsyncpa %s15, 0
    loop: start=0, step=1, limit=4
    $region2: #{tpu_custom_call.1} parent=1 // loop_pre_header
      _
    $region3: #{tpu_custom_call.1} parent=1 // loop_header
      %s18 = sphi 0, %s22
      %p19 = scmp.ge.s32.totalorder %s18, 4
      %s28 = sphi 0, %s30
      %s31 = sphi 0, %s28
      %s32 = sphi 0, %s31
      %s48 = sphi 0, %s32
      %s52 = sphi 0, %s52
      %s54 = sphi 0, %s52
      %s55 = sphi 0, %s54
      %s69 = sphi 0, %s55
      %s73 = sphi 0, %s73
      %s75 = sphi 0, %s73
      %s76 = sphi 0, %s75
      %s90 = sphi 0, %s76
      %s94 = sphi 0, %s94
      %s96 = sphi 0, %s94
      %s97 = sphi 0, %s96
      %s111 = sphi 0, %s97
      %s115 = sphi 0, %s115
      %s117 = sphi 0, %s115
      %s118 = sphi 0, %s117
      %s132 = sphi 0, %s118
      %s138 = sphi 0, %s140
      %s141 = sphi 0, %s138
      %s142 = sphi 0, %s141
      %s158 = sphi 0, %s142
    $region4: #{tpu_custom_call.1} parent=1 // loop_header_branch
      %21 = sbr.rel (%p19) target = $region8
    $region5: #{tpu_custom_call.1} parent=1 // loop_body
      %s23 = ssub.s32 %s18, 1
      %s24 = ssub.s32 %s18, 2
      %s25 = sadd.s32 %s18, 1
      %s26 = ssub.s32 %s18, %s25
      %p27 = scmp.eq.s32.totalorder %s26, 0
      %s29 = sadd.s32 %s28, 1
      %s30 = scalar_select %p27, %s28, %s29
      %p33 = pneg %p27
      %p34 = scmp.eq.s32.totalorder %s18, 1
      %p35 = por %p33, %p34
      %p36 = scmp.ne.s32.totalorder %s28, %s31
      %p37 = scmp.eq.s32.totalorder %s18, 0
      %p38 = por %p36, %p37
      %p39 = scmp.ne.s32.totalorder %s28, %s31
      %p40 = scmp.eq.s32.totalorder %s23, 1
      %p41 = por %p39, %p40
      %p42 = scmp.ne.s32.totalorder %s31, %s32
      %p43 = scmp.eq.s32.totalorder %s23, 0
      %p44 = por %p42, %p43
      %p45 = scmp.ne.s32.totalorder %s31, %s32
      %p46 = scmp.eq.s32.totalorder %s24, 1
      %p47 = por %p45, %p46
      %p49 = scmp.ne.s32.totalorder %s32, %s48
      %p50 = scmp.eq.s32.totalorder %s24, 0
      %p51 = por %p49, %p50
      %s53 = sadd.s32 %s52, 1
      %p56 = scmp.eq.s32.totalorder %s18, 1
      %p57 = scmp.ne.s32.totalorder %s52, %s54
      %p58 = scmp.eq.s32.totalorder %s18, 0
      %p59 = por %p57, %p58
      %p60 = scmp.ne.s32.totalorder %s52, %s54
      %p61 = scmp.eq.s32.totalorder %s23, 1
      %p62 = por %p60, %p61
      %p63 = scmp.ne.s32.totalorder %s54, %s55
      %p64 = scmp.eq.s32.totalorder %s23, 0
      %p65 = por %p63, %p64
      %p66 = scmp.ne.s32.totalorder %s54, %s55
      %p67 = scmp.eq.s32.totalorder %s24, 1
      %p68 = por %p66, %p67
      %p70 = scmp.ne.s32.totalorder %s55, %s69
      %p71 = scmp.eq.s32.totalorder %s24, 0
      %p72 = por %p70, %p71
      %s74 = sadd.s32 %s73, 1
      %p77 = scmp.eq.s32.totalorder %s18, 1
      %p78 = scmp.ne.s32.totalorder %s73, %s75
      %p79 = scmp.eq.s32.totalorder %s18, 0
      %p80 = por %p78, %p79
      %p81 = scmp.ne.s32.totalorder %s73, %s75
      %p82 = scmp.eq.s32.totalorder %s23, 1
      %p83 = por %p81, %p82
      %p84 = scmp.ne.s32.totalorder %s75, %s76
      %p85 = scmp.eq.s32.totalorder %s23, 0
      %p86 = por %p84, %p85
      %p87 = scmp.ne.s32.totalorder %s75, %s76
      %p88 = scmp.eq.s32.totalorder %s24, 1
      %p89 = por %p87, %p88
      %p91 = scmp.ne.s32.totalorder %s76, %s90
      %p92 = scmp.eq.s32.totalorder %s24, 0
      %p93 = por %p91, %p92
      %s95 = sadd.s32 %s94, 1
      %p98 = scmp.eq.s32.totalorder %s18, 1
      %p99 = scmp.ne.s32.totalorder %s94, %s96
      %p100 = scmp.eq.s32.totalorder %s18, 0
      %p101 = por %p99, %p100
      %p102 = scmp.ne.s32.totalorder %s94, %s96
      %p103 = scmp.eq.s32.totalorder %s23, 1
      %p104 = por %p102, %p103
      %p105 = scmp.ne.s32.totalorder %s96, %s97
      %p106 = scmp.eq.s32.totalorder %s23, 0
      %p107 = por %p105, %p106
      %p108 = scmp.ne.s32.totalorder %s96, %s97
      %p109 = scmp.eq.s32.totalorder %s24, 1
      %p110 = por %p108, %p109
      %p112 = scmp.ne.s32.totalorder %s97, %s111
      %p113 = scmp.eq.s32.totalorder %s24, 0
      %p114 = por %p112, %p113
      %s116 = sadd.s32 %s115, 1
      %p119 = scmp.eq.s32.totalorder %s18, 1
      %p120 = scmp.ne.s32.totalorder %s115, %s117
      %p121 = scmp.eq.s32.totalorder %s18, 0
      %p122 = por %p120, %p121
      %p123 = scmp.ne.s32.totalorder %s115, %s117
      %p124 = scmp.eq.s32.totalorder %s23, 1
      %p125 = por %p123, %p124
      %p126 = scmp.ne.s32.totalorder %s117, %s118
      %p127 = scmp.eq.s32.totalorder %s23, 0
      %p128 = por %p126, %p127
      %p129 = scmp.ne.s32.totalorder %s117, %s118
      %p130 = scmp.eq.s32.totalorder %s24, 1
      %p131 = por %p129, %p130
      %p133 = scmp.ne.s32.totalorder %s118, %s132
      %p134 = scmp.eq.s32.totalorder %s24, 0
      %p135 = por %p133, %p134
      %s136 = ssub.s32 %s18, %s25
      %p137 = scmp.eq.s32.totalorder %s136, 0
      %s139 = sadd.s32 %s138, 1
      %s140 = scalar_select %p137, %s138, %s139
      %p143 = pneg %p137
      %p144 = scmp.eq.s32.totalorder %s18, 1
      %p145 = por %p143, %p144
      %p146 = scmp.ne.s32.totalorder %s138, %s141
      %p147 = scmp.eq.s32.totalorder %s18, 0
      %p148 = por %p146, %p147
      %p149 = scmp.ne.s32.totalorder %s138, %s141
      %p150 = scmp.eq.s32.totalorder %s23, 1
      %p151 = por %p149, %p150
      %p152 = scmp.ne.s32.totalorder %s141, %s142
      %p153 = scmp.eq.s32.totalorder %s23, 0
      %p154 = por %p152, %p153
      %p155 = scmp.ne.s32.totalorder %s141, %s142
      %p156 = scmp.eq.s32.totalorder %s24, 1
      %p157 = por %p155, %p156
      %p159 = scmp.ne.s32.totalorder %s142, %s158
      %p160 = scmp.eq.s32.totalorder %s24, 0
      %p161 = por %p159, %p160
      %p162 = scmp.le.s32.totalorder 1, %s18
      %p163 = scmp.lt.s32.totalorder %s18, 3
      %p164 = pnand %p162, %p163
      %p165 = pneg %p164
      // Predicated region
      $region9: #{tpu_custom_call.1} parent=5 // pred_check
        _
      $region10: #{tpu_custom_call.1} parent=5 // pred_check_branch
        %167 = sbr.rel (%p164) target = $region12
      $region11: #{tpu_custom_call.1} parent=5 // pred_region
        %s168 = ssub.s32 %s18, 1
        // Predicated region
        $region13: #{tpu_custom_call.1} parent=11 // pred_check
          %p169 = pneg %p65
        $region14: #{tpu_custom_call.1} parent=11 // pred_check_branch
          %171 = sbr.rel (%p169) target = $region16
        $region15: #{tpu_custom_call.1} parent=11 // pred_region
          %s173 = ssub.s32 9216, 9216
          %174 = vsyncadd [#allocation8], %s173
          %s175 = sshll.u32 [#allocation7], 4
          %s176 = int_to_ptr.vmem [resolvable:$true] %s175
          %181 = dma.hbm_to_vmem [thread:$0]  %s1, 9216, %s176, [#allocation8], 64, 64, 4
        $region16: #{tpu_custom_call.1} parent=11 // pred_fallthru
          _
        // Predicated region
        $region17: #{tpu_custom_call.1} parent=11 // pred_check
          %p182 = pneg %p86
        $region18: #{tpu_custom_call.1} parent=11 // pred_check_branch
          %184 = sbr.rel (%p182) target = $region20
        $region19: #{tpu_custom_call.1} parent=11 // pred_region
          _
        $region20: #{tpu_custom_call.1} parent=11 // pred_fallthru
          _
        // Predicated region
        $region21: #{tpu_custom_call.1} parent=11 // pred_check
          %p185 = pneg %p107
        $region22: #{tpu_custom_call.1} parent=11 // pred_check_branch
          %187 = sbr.rel (%p185) target = $region24
        $region23: #{tpu_custom_call.1} parent=11 // pred_region
          %s189 = ssub.s32 9216, 9216
          %190 = vsyncadd [#allocation8], %s189
          %s191 = sshll.u32 [#allocation9], 4
          %s192 = int_to_ptr.vmem [resolvable:$true] %s191
          %197 = dma.hbm_to_vmem [thread:$0]  %s3, 9216, %s192, [#allocation8], 64, 64, 4
        $region24: #{tpu_custom_call.1} parent=11 // pred_fallthru
          _
        // Predicated region
        $region25: #{tpu_custom_call.1} parent=11 // pred_check
          %p198 = pneg %p128
        $region26: #{tpu_custom_call.1} parent=11 // pred_check_branch
          %200 = sbr.rel (%p198) target = $region28
        $region27: #{tpu_custom_call.1} parent=11 // pred_region
          _
        $region28: #{tpu_custom_call.1} parent=11 // pred_fallthru
          _
      $region12: #{tpu_custom_call.1} parent=5 // pred_fallthru
        _
      %p201 = scmp.lt.s32.totalorder %s18, 2
      // Predicated region
      $region29: #{tpu_custom_call.1} parent=5 // pred_check
        %p202 = pneg %p201
      $region30: #{tpu_custom_call.1} parent=5 // pred_check_branch
        %204 = sbr.rel (%p202) target = $region32
      $region31: #{tpu_custom_call.1} parent=5 // pred_region
        // Predicated region
        $region33: #{tpu_custom_call.1} parent=31 // pred_check
          %p205 = pneg %p38
        $region34: #{tpu_custom_call.1} parent=31 // pred_check_branch
          %207 = sbr.rel (%p205) target = $region36
        $region35: #{tpu_custom_call.1} parent=31 // pred_region
          %s208 = sand.u32 %s28, 1
          %s209 = scalar_lea.sflag [#allocation5], %s208
          %s210 = sand.u32 %s28, 1
          %s211 = smul.addr %s210, 64
          %s212 = scalar_lea.vmem [#allocation4], %s211
          %s214 = ssub.s32 1024, 1024
          %215 = vsyncadd %s209, %s214
          %s216 = smul.addr %s18, 8
          %s217 = smul.addr %s216, 128
          %s218 = scalar_lea.hbm %s0, %s217
          %s219 = sshll.u32 %s212, 4
          %s220 = int_to_ptr.vmem [resolvable:$true] %s219
          %225 = dma.hbm_to_vmem [thread:$0]  %s218, 1024, %s220, %s209, 128, 128, 8
        $region36: #{tpu_custom_call.1} parent=31 // pred_fallthru
          _
      $region32: #{tpu_custom_call.1} parent=5 // pred_fallthru
        _
      %p226 = scmp.le.s32.totalorder 1, %s18
      %p227 = scmp.lt.s32.totalorder %s18, 3
      %p228 = pnand %p226, %p227
      %p229 = pneg %p228
      // Predicated region
      $region37: #{tpu_custom_call.1} parent=5 // pred_check
        _
      $region38: #{tpu_custom_call.1} parent=5 // pred_check_branch
        %231 = sbr.rel (%p228) target = $region40
      $region39: #{tpu_custom_call.1} parent=5 // pred_region
        %s232 = ssub.s32 %s18, 1
        %s233 = sand.u32 %s31, 1
        %s234 = scalar_lea.sflag [#allocation5], %s233
        %s235 = sand.u32 %s31, 1
        %s236 = smul.addr %s235, 64
        %s237 = scalar_lea.vmem [#allocation4], %s236
        // Predicated region
        $region41: #{tpu_custom_call.1} parent=39 // pred_check
          %p238 = pneg %p44
        $region42: #{tpu_custom_call.1} parent=39 // pred_check_branch
          %240 = sbr.rel (%p238) target = $region44
        $region43: #{tpu_custom_call.1} parent=39 // pred_region
          %241 = dma.done %s234, 1024
        $region44: #{tpu_custom_call.1} parent=39 // pred_fallthru
          _
        // Predicated region
        $region45: #{tpu_custom_call.1} parent=39 // pred_check
          %p242 = pneg %p65
        $region46: #{tpu_custom_call.1} parent=39 // pred_check_branch
          %244 = sbr.rel (%p242) target = $region48
        $region47: #{tpu_custom_call.1} parent=39 // pred_region
          %245 = dma.done [#allocation8], 9216
        $region48: #{tpu_custom_call.1} parent=39 // pred_fallthru
          _
        // Predicated region
        $region49: #{tpu_custom_call.1} parent=39 // pred_check
          %p246 = pneg %p107
        $region50: #{tpu_custom_call.1} parent=39 // pred_check_branch
          %248 = sbr.rel (%p246) target = $region52
        $region51: #{tpu_custom_call.1} parent=39 // pred_region
          %249 = dma.done [#allocation8], 9216
        $region52: #{tpu_custom_call.1} parent=39 // pred_fallthru
          _
        %s250 = sand.u32 %s31, 1
        %s251 = scalar_lea.sflag [#allocation5], %s250
        %s252 = sand.u32 %s31, 1
        %s253 = smul.addr %s252, 64
        %s254 = scalar_lea.vmem [#allocation4], %s253
        %p255 = pneg %p44
        %p256 = pneg %p41
        %p257 = pneg %p65
        %p258 = pneg %p62
        %p259 = pneg %p86
        %p260 = pneg %p83
        %p261 = pneg %p107
        %p262 = pneg %p104
        %p263 = pneg %p128
        %p264 = pneg %p125
        %p265 = pneg %p154
        %p266 = pneg %p151
        %s267 = sand.u32 %s141, 1
        %s268 = scalar_lea.sflag [#allocation6], %s267
        %s269 = sand.u32 %s141, 1
        %s270 = smul.addr %s269, 64
        %s271 = scalar_lea.vmem [#allocation10], %s270
        %273 = vst [vmem:[#allocation2] sm:$0xf] 0
        %274 = vst [vmem:[#allocation2 + $0x4] sm:$0x1] 0
        %s275 = scalar_lea.vmem [#allocation2], 72
        %276 = vst [vmem:[%s275] sm:$0xf] 0
        %277 = vst [vmem:[%s275 + $0x4] sm:$0x1] 0
        %vm278 = vcmask 1040384
        %vm279 = vsmask.f32 256
        %vm280 = vmand %vm278, %vm279
        %v281 = vld [vmem:[#allocation2] sm:$0x1]
        %v282 = vsel %vm280, 0, %v281
        %283 = vst [vmem:[#allocation2] sm:$0x1] %v282
        %v284 = vld [vmem:[#allocation2 + $0x8] sm:$0x1]
        %v285 = vsel %vm280, 0, %v284
        %286 = vst [vmem:[#allocation2 + $0x8] sm:$0x1] %v285
        %v287 = vld [vmem:[#allocation2 + $0x10] sm:$0x1]
        %v288 = vsel %vm280, 0, %v287
        %289 = vst [vmem:[#allocation2 + $0x10] sm:$0x1] %v288
        %v290 = vld [vmem:[#allocation2 + $0x18] sm:$0x1]
        %v291 = vsel %vm280, 0, %v290
        %292 = vst [vmem:[#allocation2 + $0x18] sm:$0x1] %v291
        %v293 = vld [vmem:[#allocation2 + $0x20] sm:$0x1]
        %v294 = vsel %vm280, 0, %v293
        %295 = vst [vmem:[#allocation2 + $0x20] sm:$0x1] %v294
        %v296 = vld [vmem:[#allocation2 + $0x28] sm:$0x1]
        %v297 = vsel %vm280, 0, %v296
        %298 = vst [vmem:[#allocation2 + $0x28] sm:$0x1] %v297
        %v299 = vld [vmem:[#allocation2 + $0x30] sm:$0x1]
        %v300 = vsel %vm280, 0, %v299
        %301 = vst [vmem:[#allocation2 + $0x30] sm:$0x1] %v300
        %v302 = vld [vmem:[#allocation2 + $0x38] sm:$0x1]
        %v303 = vsel %vm280, 0, %v302
        %304 = vst [vmem:[#allocation2 + $0x38] sm:$0x1] %v303
        %v305 = vld [vmem:[#allocation2 + $0x40] sm:$0x1]
        %v306 = vsel %vm280, 0, %v305
        %307 = vst [vmem:[#allocation2 + $0x40] sm:$0x1] %v306
        %v308 = vld [vmem:[#allocation2 + $0x48] sm:$0x1]
        %v309 = vsel %vm280, 0, %v308
        %310 = vst [vmem:[#allocation2 + $0x48] sm:$0x1] %v309
        %vm311 = vsmask.f32 7938
        %vm312 = vmand %vm278, %vm311
        %v313 = vld [vmem:[#allocation2 + $0x4] sm:$0x1]
        %v314 = vsel %vm312, 0, %v313
        %315 = vst [vmem:[#allocation2 + $0x4] sm:$0x1] %v314
        %v316 = vld [vmem:[#allocation2 + $0xc] sm:$0x1]
        %v317 = vsel %vm312, 0, %v316
        %318 = vst [vmem:[#allocation2 + $0xc] sm:$0x1] %v317
        %v319 = vld [vmem:[#allocation2 + $0x14] sm:$0x1]
        %v320 = vsel %vm312, 0, %v319
        %321 = vst [vmem:[#allocation2 + $0x14] sm:$0x1] %v320
        %v322 = vld [vmem:[#allocation2 + $0x1c] sm:$0x1]
        %v323 = vsel %vm312, 0, %v322
        %324 = vst [vmem:[#allocation2 + $0x1c] sm:$0x1] %v323
        %v325 = vld [vmem:[#allocation2 + $0x24] sm:$0x1]
        %v326 = vsel %vm312, 0, %v325
        %327 = vst [vmem:[#allocation2 + $0x24] sm:$0x1] %v326
        %v328 = vld [vmem:[#allocation2 + $0x2c] sm:$0x1]
        %v329 = vsel %vm312, 0, %v328
        %330 = vst [vmem:[#allocation2 + $0x2c] sm:$0x1] %v329
        %v331 = vld [vmem:[#allocation2 + $0x34] sm:$0x1]
        %v332 = vsel %vm312, 0, %v331
        %333 = vst [vmem:[#allocation2 + $0x34] sm:$0x1] %v332
        %v334 = vld [vmem:[#allocation2 + $0x3c] sm:$0x1]
        %v335 = vsel %vm312, 0, %v334
        %336 = vst [vmem:[#allocation2 + $0x3c] sm:$0x1] %v335
        %v337 = vld [vmem:[#allocation2 + $0x44] sm:$0x1]
        %v338 = vsel %vm312, 0, %v337
        %339 = vst [vmem:[#allocation2 + $0x44] sm:$0x1] %v338
        %v340 = vld [vmem:[#allocation2 + $0x4c] sm:$0x1]
        %v341 = vsel %vm312, 0, %v340
        %342 = vst [vmem:[#allocation2 + $0x4c] sm:$0x1] %v341
        %v343 = vld [vmem:[%s237] sm:$0xff]
        %v344 = vld [vmem:[%s237 + $0x8] sm:$0xff]
        %v345 = vld [vmem:[%s237 + $0x10] sm:$0xff]
        %v346 = vld [vmem:[%s237 + $0x18] sm:$0xff]
        %v347 = vld [vmem:[%s237 + $0x20] sm:$0xff]
        %v348 = vld [vmem:[%s237 + $0x28] sm:$0xff]
        %v349 = vld [vmem:[%s237 + $0x30] sm:$0xff]
        %v350 = vld [vmem:[%s237 + $0x38] sm:$0xff]
        %v351 = vpack.c.bf16 %v343, %v343
        %v352 = vpack.c.bf16 %v344, %v344
        %v353 = vpack.c.bf16 %v345, %v345
        %v354 = vpack.c.bf16 %v346, %v346
        %v355 = vpack.c.bf16 %v347, %v347
        %v356 = vpack.c.bf16 %v348, %v348
        %v357 = vpack.c.bf16 %v349, %v349
        %v358 = vpack.c.bf16 %v350, %v350
        %v367 = vunpack.c.l.b16 %v351
        %v368 = vunpack.c.l.b16 %v352
        %v369 = vunpack.c.l.b16 %v353
        %v370 = vunpack.c.l.b16 %v354
        %v371 = vunpack.c.l.b16 %v355
        %v372 = vunpack.c.l.b16 %v356
        %v373 = vunpack.c.l.b16 %v357
        %v374 = vunpack.c.l.b16 %v358
        %v375 = vpack.c.b16 %v367, %v367
        %v376 = vpack.c.b16 %v368, %v368
        %v377 = vpack.c.b16 %v369, %v369
        %v378 = vpack.c.b16 %v370, %v370
        %v379 = vpack.c.b16 %v371, %v371
        %v380 = vpack.c.b16 %v372, %v372
        %v381 = vpack.c.b16 %v373, %v373
        %v382 = vpack.c.b16 %v374, %v374
        %v384 = vshrl.u32 %v375, 16
        %v386 = vrot.slane %v384, 7
        %v387 = vshll.u32 %v375, 16
        %v389 = vor.u32 %v386, %v387
        %v390 = vrot.slane %v386, 4
        %v392 = vshrl.u32 %v376, 16
        %v394 = vrot.slane %v392, 7
        %v395 = vshll.u32 %v376, 16
        %v397 = vor.u32 %v394, %v395
        %v398 = vrot.slane %v394, 4
        %v400 = vshrl.u32 %v377, 16
        %v402 = vrot.slane %v400, 7
        %v403 = vshll.u32 %v377, 16
        %v405 = vor.u32 %v402, %v403
        %v406 = vrot.slane %v402, 4
        %v408 = vshrl.u32 %v378, 16
        %v410 = vrot.slane %v408, 7
        %v411 = vshll.u32 %v378, 16
        %v413 = vor.u32 %v410, %v411
        %v414 = vrot.slane %v410, 4
        %v416 = vshrl.u32 %v379, 16
        %v418 = vrot.slane %v416, 7
        %v419 = vshll.u32 %v379, 16
        %v421 = vor.u32 %v418, %v419
        %v422 = vrot.slane %v418, 4
        %v424 = vshrl.u32 %v380, 16
        %v426 = vrot.slane %v424, 7
        %v427 = vshll.u32 %v380, 16
        %v429 = vor.u32 %v426, %v427
        %v430 = vrot.slane %v426, 4
        %v432 = vshrl.u32 %v381, 16
        %v434 = vrot.slane %v432, 7
        %v435 = vshll.u32 %v381, 16
        %v437 = vor.u32 %v434, %v435
        %v438 = vrot.slane %v434, 4
        %v440 = vshrl.u32 %v382, 16
        %v442 = vrot.slane %v440, 7
        %v443 = vshll.u32 %v382, 16
        %v445 = vor.u32 %v442, %v443
        %v446 = vrot.slane %v442, 4
        %s463 = scalar_lea.vmem [#allocation2], 8
        %vm464 = vcmask 1043456
        %vm465 = vmand %vm464, %vm311
        %v466 = vld [vmem:[%s463] sm:$0xf]
        %v467 = vsel %vm465, %v389, %v466
        %468 = vst [vmem:[%s463] sm:$0xf] %v467
        %v469 = vld [vmem:[%s463 + $0x4] sm:$0x1]
        %v470 = vsel %vm280, %v390, %v469
        %471 = vst [vmem:[%s463 + $0x4] sm:$0x1] %v470
        %v472 = vld [vmem:[%s463 + $0x8] sm:$0xf]
        %v473 = vsel %vm465, %v397, %v472
        %474 = vst [vmem:[%s463 + $0x8] sm:$0xf] %v473
        %v475 = vld [vmem:[%s463 + $0xc] sm:$0x1]
        %v476 = vsel %vm280, %v398, %v475
        %477 = vst [vmem:[%s463 + $0xc] sm:$0x1] %v476
        %v478 = vld [vmem:[%s463 + $0x10] sm:$0xf]
        %v479 = vsel %vm465, %v405, %v478
        %480 = vst [vmem:[%s463 + $0x10] sm:$0xf] %v479
        %v481 = vld [vmem:[%s463 + $0x14] sm:$0x1]
        %v482 = vsel %vm280, %v406, %v481
        %483 = vst [vmem:[%s463 + $0x14] sm:$0x1] %v482
        %v484 = vld [vmem:[%s463 + $0x18] sm:$0xf]
        %v485 = vsel %vm465, %v413, %v484
        %486 = vst [vmem:[%s463 + $0x18] sm:$0xf] %v485
        %v487 = vld [vmem:[%s463 + $0x1c] sm:$0x1]
        %v488 = vsel %vm280, %v414, %v487
        %489 = vst [vmem:[%s463 + $0x1c] sm:$0x1] %v488
        %v490 = vld [vmem:[%s463 + $0x20] sm:$0xf]
        %v491 = vsel %vm465, %v421, %v490
        %492 = vst [vmem:[%s463 + $0x20] sm:$0xf] %v491
        %v493 = vld [vmem:[%s463 + $0x24] sm:$0x1]
        %v494 = vsel %vm280, %v422, %v493
        %495 = vst [vmem:[%s463 + $0x24] sm:$0x1] %v494
        %v496 = vld [vmem:[%s463 + $0x28] sm:$0xf]
        %v497 = vsel %vm465, %v429, %v496
        %498 = vst [vmem:[%s463 + $0x28] sm:$0xf] %v497
        %v499 = vld [vmem:[%s463 + $0x2c] sm:$0x1]
        %v500 = vsel %vm280, %v430, %v499
        %501 = vst [vmem:[%s463 + $0x2c] sm:$0x1] %v500
        %v502 = vld [vmem:[%s463 + $0x30] sm:$0xf]
        %v503 = vsel %vm465, %v437, %v502
        %504 = vst [vmem:[%s463 + $0x30] sm:$0xf] %v503
        %v505 = vld [vmem:[%s463 + $0x34] sm:$0x1]
        %v506 = vsel %vm280, %v438, %v505
        %507 = vst [vmem:[%s463 + $0x34] sm:$0x1] %v506
        %v508 = vld [vmem:[%s463 + $0x38] sm:$0xf]
        %v509 = vsel %vm465, %v445, %v508
        %510 = vst [vmem:[%s463 + $0x38] sm:$0xf] %v509
        %v511 = vld [vmem:[%s463 + $0x3c] sm:$0x1]
        %v512 = vsel %vm280, %v446, %v511
        %513 = vst [vmem:[%s463 + $0x3c] sm:$0x1] %v512
        %v514 = vld [vmem:[#allocation2] sm:$0xf]
        %v515 = vld [vmem:[#allocation2 + $0x4] sm:$0x1]
        %v516 = vld [vmem:[#allocation2 + $0x8] sm:$0xf]
        %v517 = vld [vmem:[#allocation2 + $0xc] sm:$0x1]
        %v518 = vld [vmem:[#allocation2 + $0x10] sm:$0xf]
        %v519 = vld [vmem:[#allocation2 + $0x14] sm:$0x1]
        %v520 = vld [vmem:[#allocation2 + $0x18] sm:$0xf]
        %v521 = vld [vmem:[#allocation2 + $0x1c] sm:$0x1]
        %v522 = vld [vmem:[#allocation2 + $0x20] sm:$0xf]
        %v523 = vld [vmem:[#allocation2 + $0x24] sm:$0x1]
        %v524 = vld [vmem:[#allocation2 + $0x28] sm:$0xf]
        %v525 = vld [vmem:[#allocation2 + $0x2c] sm:$0x1]
        %v526 = vld [vmem:[#allocation2 + $0x30] sm:$0xf]
        %v527 = vld [vmem:[#allocation2 + $0x34] sm:$0x1]
        %v528 = vld [vmem:[#allocation2 + $0x38] sm:$0xf]
        %v529 = vld [vmem:[#allocation2 + $0x3c] sm:$0x1]
        %v530 = vld [vmem:[#allocation2 + $0x40] sm:$0xf]
        %v531 = vld [vmem:[#allocation2 + $0x44] sm:$0x1]
        %v532 = vld [vmem:[#allocation2 + $0x48] sm:$0xf]
        %v533 = vld [vmem:[#allocation2 + $0x4c] sm:$0x1]
        %v542 = vunpack.c.l.b16 %v514
        %v543 = vunpack.c.l.b16 %v516
        %v544 = vunpack.c.l.b16 %v518
        %v545 = vunpack.c.l.b16 %v520
        %v546 = vunpack.c.l.b16 %v522
        %v547 = vunpack.c.l.b16 %v524
        %v548 = vunpack.c.l.b16 %v526
        %v549 = vunpack.c.l.b16 %v528
        %v550 = vpack.c.b16 %v543, %v542
        %v551 = vpack.c.b16 %v545, %v544
        %v552 = vpack.c.b16 %v547, %v546
        %v553 = vpack.c.b16 %v549, %v548
        %558 = vst [vmem:[#allocation3] sm:$0xff] %v550
        %559 = vst [vmem:[#allocation3 + $0x48] sm:$0xff] %v551
        %560 = vst [vmem:[#allocation3 + $0x90] sm:$0xff] %v552
        %561 = vst [vmem:[#allocation3 + $0xd8] sm:$0xff] %v553
        %vm562 = vsmask.f32 3328
        %vm563 = vsmask.f32 7440
        %vm564 = vmor %vm562, %vm563
        %v566 = vshrl.u32 %v514, 16
        %v568 = vrot.slane %v566, 4
        %v569 = vshll.u32 %v514, 16
        %v571 = vrot.slane %v569, 5
        %v572 = vor.u32 %v568, %v571
        %v573 = vrot.slane %v572, 4
        %v575 = vshll.u32 %v515, 16
        %v577 = vrot.slane %v575, 5
        %v578 = vsel %vm564, %v573, %v577
        %v580 = vshrl.u32 %v516, 16
        %v582 = vrot.slane %v580, 4
        %v583 = vshll.u32 %v516, 16
        %v585 = vrot.slane %v583, 5
        %v586 = vor.u32 %v582, %v585
        %v587 = vrot.slane %v586, 4
        %v589 = vshll.u32 %v517, 16
        %v591 = vrot.slane %v589, 5
        %v592 = vsel %vm564, %v587, %v591
        %v594 = vshrl.u32 %v518, 16
        %v596 = vrot.slane %v594, 4
        %v597 = vshll.u32 %v518, 16
        %v599 = vrot.slane %v597, 5
        %v600 = vor.u32 %v596, %v599
        %v601 = vrot.slane %v600, 4
        %v603 = vshll.u32 %v519, 16
        %v605 = vrot.slane %v603, 5
        %v606 = vsel %vm564, %v601, %v605
        %v608 = vshrl.u32 %v520, 16
        %v610 = vrot.slane %v608, 4
        %v611 = vshll.u32 %v520, 16
        %v613 = vrot.slane %v611, 5
        %v614 = vor.u32 %v610, %v613
        %v615 = vrot.slane %v614, 4
        %v617 = vshll.u32 %v521, 16
        %v619 = vrot.slane %v617, 5
        %v620 = vsel %vm564, %v615, %v619
        %v622 = vshrl.u32 %v522, 16
        %v624 = vrot.slane %v622, 4
        %v625 = vshll.u32 %v522, 16
        %v627 = vrot.slane %v625, 5
        %v628 = vor.u32 %v624, %v627
        %v629 = vrot.slane %v628, 4
        %v631 = vshll.u32 %v523, 16
        %v633 = vrot.slane %v631, 5
        %v634 = vsel %vm564, %v629, %v633
        %v636 = vshrl.u32 %v524, 16
        %v638 = vrot.slane %v636, 4
        %v639 = vshll.u32 %v524, 16
        %v641 = vrot.slane %v639, 5
        %v642 = vor.u32 %v638, %v641
        %v643 = vrot.slane %v642, 4
        %v645 = vshll.u32 %v525, 16
        %v647 = vrot.slane %v645, 5
        %v648 = vsel %vm564, %v643, %v647
        %v650 = vshrl.u32 %v526, 16
        %v652 = vrot.slane %v650, 4
        %v653 = vshll.u32 %v526, 16
        %v655 = vrot.slane %v653, 5
        %v656 = vor.u32 %v652, %v655
        %v657 = vrot.slane %v656, 4
        %v659 = vshll.u32 %v527, 16
        %v661 = vrot.slane %v659, 5
        %v662 = vsel %vm564, %v657, %v661
        %v664 = vshrl.u32 %v528, 16
        %v666 = vrot.slane %v664, 4
        %v667 = vshll.u32 %v528, 16
        %v669 = vrot.slane %v667, 5
        %v670 = vor.u32 %v666, %v669
        %v671 = vrot.slane %v670, 4
        %v673 = vshll.u32 %v529, 16
        %v675 = vrot.slane %v673, 5
        %v676 = vsel %vm564, %v671, %v675
        %v677 = vunpack.c.l.b16 %v578
        %v678 = vunpack.c.l.b16 %v592
        %v679 = vunpack.c.l.b16 %v606
        %v680 = vunpack.c.l.b16 %v620
        %v681 = vunpack.c.l.b16 %v634
        %v682 = vunpack.c.l.b16 %v648
        %v683 = vunpack.c.l.b16 %v662
        %v684 = vunpack.c.l.b16 %v676
        %v685 = vpack.c.b16 %v678, %v677
        %v686 = vpack.c.b16 %v680, %v679
        %v687 = vpack.c.b16 %v682, %v681
        %v688 = vpack.c.b16 %v684, %v683
        %693 = vst [vmem:[#allocation3 + $0x8] sm:$0xff] %v685
        %694 = vst [vmem:[#allocation3 + $0x50] sm:$0xff] %v686
        %695 = vst [vmem:[#allocation3 + $0x98] sm:$0xff] %v687
        %696 = vst [vmem:[#allocation3 + $0xe0] sm:$0xff] %v688
        %vm705 = vcmask 1042432
        %vm706 = vcmask 1046532
        %vm707 = vmor %vm705, %vm706
        %v708 = vrot.slane %v514, 5
        %v709 = vrot.slane %v708, 4
        %v710 = vrot.slane %v515, 5
        %v711 = vsel %vm707, %v709, %v710
        %v712 = vrot.slane %v516, 5
        %v713 = vrot.slane %v712, 4
        %v714 = vrot.slane %v517, 5
        %v715 = vsel %vm707, %v713, %v714
        %v716 = vrot.slane %v518, 5
        %v717 = vrot.slane %v716, 4
        %v718 = vrot.slane %v519, 5
        %v719 = vsel %vm707, %v717, %v718
        %v720 = vrot.slane %v520, 5
        %v721 = vrot.slane %v720, 4
        %v722 = vrot.slane %v521, 5
        %v723 = vsel %vm707, %v721, %v722
        %v724 = vrot.slane %v522, 5
        %v725 = vrot.slane %v724, 4
        %v726 = vrot.slane %v523, 5
        %v727 = vsel %vm707, %v725, %v726
        %v728 = vrot.slane %v524, 5
        %v729 = vrot.slane %v728, 4
        %v730 = vrot.slane %v525, 5
        %v731 = vsel %vm707, %v729, %v730
        %v732 = vrot.slane %v526, 5
        %v733 = vrot.slane %v732, 4
        %v734 = vrot.slane %v527, 5
        %v735 = vsel %vm707, %v733, %v734
        %v736 = vrot.slane %v528, 5
        %v737 = vrot.slane %v736, 4
        %v738 = vrot.slane %v529, 5
        %v739 = vsel %vm707, %v737, %v738
        %v740 = vunpack.c.l.b16 %v711
        %v741 = vunpack.c.l.b16 %v715
        %v742 = vunpack.c.l.b16 %v719
        %v743 = vunpack.c.l.b16 %v723
        %v744 = vunpack.c.l.b16 %v727
        %v745 = vunpack.c.l.b16 %v731
        %v746 = vunpack.c.l.b16 %v735
        %v747 = vunpack.c.l.b16 %v739
        %v748 = vpack.c.b16 %v741, %v740
        %v749 = vpack.c.b16 %v743, %v742
        %v750 = vpack.c.b16 %v745, %v744
        %v751 = vpack.c.b16 %v747, %v746
        %756 = vst [vmem:[#allocation3 + $0x10] sm:$0xff] %v748
        %757 = vst [vmem:[#allocation3 + $0x58] sm:$0xff] %v749
        %758 = vst [vmem:[#allocation3 + $0xa0] sm:$0xff] %v750
        %759 = vst [vmem:[#allocation3 + $0xe8] sm:$0xff] %v751
        %v761 = vunpack.c.l.b16 %v530
        %v762 = vpack.c.b16 %v544, %v543
        %v763 = vpack.c.b16 %v546, %v545
        %v764 = vpack.c.b16 %v548, %v547
        %v765 = vpack.c.b16 %v761, %v549
        %770 = vst [vmem:[#allocation3 + $0x18] sm:$0xff] %v762
        %771 = vst [vmem:[#allocation3 + $0x60] sm:$0xff] %v763
        %772 = vst [vmem:[#allocation3 + $0xa8] sm:$0xff] %v764
        %773 = vst [vmem:[#allocation3 + $0xf0] sm:$0xff] %v765
        %v775 = vshrl.u32 %v530, 16
        %v777 = vrot.slane %v775, 4
        %v778 = vshll.u32 %v530, 16
        %v780 = vrot.slane %v778, 5
        %v781 = vor.u32 %v777, %v780
        %v782 = vrot.slane %v781, 4
        %v784 = vshll.u32 %v531, 16
        %v786 = vrot.slane %v784, 5
        %v787 = vsel %vm564, %v782, %v786
        %v788 = vunpack.c.l.b16 %v787
        %v789 = vpack.c.b16 %v679, %v678
        %v790 = vpack.c.b16 %v681, %v680
        %v791 = vpack.c.b16 %v683, %v682
        %v792 = vpack.c.b16 %v788, %v684
        %797 = vst [vmem:[#allocation3 + $0x20] sm:$0xff] %v789
        %798 = vst [vmem:[#allocation3 + $0x68] sm:$0xff] %v790
        %799 = vst [vmem:[#allocation3 + $0xb0] sm:$0xff] %v791
        %800 = vst [vmem:[#allocation3 + $0xf8] sm:$0xff] %v792
        %v802 = vrot.slane %v530, 5
        %v803 = vrot.slane %v802, 4
        %v804 = vrot.slane %v531, 5
        %v805 = vsel %vm707, %v803, %v804
        %v806 = vunpack.c.l.b16 %v805
        %v807 = vpack.c.b16 %v742, %v741
        %v808 = vpack.c.b16 %v744, %v743
        %v809 = vpack.c.b16 %v746, %v745
        %v810 = vpack.c.b16 %v806, %v747
        %815 = vst [vmem:[#allocation3 + $0x28] sm:$0xff] %v807
        %816 = vst [vmem:[#allocation3 + $0x70] sm:$0xff] %v808
        %817 = vst [vmem:[#allocation3 + $0xb8] sm:$0xff] %v809
        %818 = vst [vmem:[#allocation3 + $0x100] sm:$0xff] %v810
        %v820 = vunpack.c.l.b16 %v532
        %v821 = vpack.c.b16 %v820, %v761
        %823 = vst [vmem:[#allocation3 + $0x30] sm:$0xff] %v551
        %824 = vst [vmem:[#allocation3 + $0x78] sm:$0xff] %v552
        %825 = vst [vmem:[#allocation3 + $0xc0] sm:$0xff] %v553
        %826 = vst [vmem:[#allocation3 + $0x108] sm:$0xff] %v821
        %v828 = vshrl.u32 %v532, 16
        %v830 = vrot.slane %v828, 4
        %v831 = vshll.u32 %v532, 16
        %v833 = vrot.slane %v831, 5
        %v834 = vor.u32 %v830, %v833
        %v835 = vrot.slane %v834, 4
        %v837 = vshll.u32 %v533, 16
        %v839 = vrot.slane %v837, 5
        %v840 = vsel %vm564, %v835, %v839
        %v841 = vunpack.c.l.b16 %v840
        %v842 = vpack.c.b16 %v841, %v788
        %844 = vst [vmem:[#allocation3 + $0x38] sm:$0xff] %v686
        %845 = vst [vmem:[#allocation3 + $0x80] sm:$0xff] %v687
        %846 = vst [vmem:[#allocation3 + $0xc8] sm:$0xff] %v688
        %847 = vst [vmem:[#allocation3 + $0x110] sm:$0xff] %v842
        %v849 = vrot.slane %v532, 5
        %v850 = vrot.slane %v849, 4
        %v851 = vrot.slane %v533, 5
        %v852 = vsel %vm707, %v850, %v851
        %v853 = vunpack.c.l.b16 %v852
        %v854 = vpack.c.b16 %v853, %v806
        %856 = vst [vmem:[#allocation3 + $0x40] sm:$0xff] %v749
        %857 = vst [vmem:[#allocation3 + $0x88] sm:$0xff] %v750
        %858 = vst [vmem:[#allocation3 + $0xd0] sm:$0xff] %v751
        %859 = vst [vmem:[#allocation3 + $0x118] sm:$0xff] %v854
        %v860 = vld [vmem:[#allocation3] sm:$0xff]
        %v861 = vld [vmem:[#allocation3 + $0x8] sm:$0xff]
        %v862 = vld [vmem:[#allocation3 + $0x10] sm:$0xff]
        %v863 = vld [vmem:[#allocation3 + $0x18] sm:$0xff]
        %v864 = vld [vmem:[#allocation3 + $0x20] sm:$0xff]
        %v865 = vld [vmem:[#allocation3 + $0x28] sm:$0xff]
        %v866 = vld [vmem:[#allocation3 + $0x30] sm:$0xff]
        %v867 = vld [vmem:[#allocation3 + $0x38] sm:$0xff]
        %v868 = vld [vmem:[#allocation3 + $0x40] sm:$0xff]
        %v869 = vld [vmem:[#allocation3 + $0x48] sm:$0xff]
        %v870 = vld [vmem:[#allocation3 + $0x50] sm:$0xff]
        %v871 = vld [vmem:[#allocation3 + $0x58] sm:$0xff]
        %v872 = vld [vmem:[#allocation3 + $0x60] sm:$0xff]
        %v873 = vld [vmem:[#allocation3 + $0x68] sm:$0xff]
        %v874 = vld [vmem:[#allocation3 + $0x70] sm:$0xff]
        %v875 = vld [vmem:[#allocation3 + $0x78] sm:$0xff]
        %v876 = vld [vmem:[#allocation3 + $0x80] sm:$0xff]
        %v877 = vld [vmem:[#allocation3 + $0x88] sm:$0xff]
        %v878 = vld [vmem:[#allocation3 + $0x90] sm:$0xff]
        %v879 = vld [vmem:[#allocation3 + $0x98] sm:$0xff]
        %v880 = vld [vmem:[#allocation3 + $0xa0] sm:$0xff]
        %v881 = vld [vmem:[#allocation3 + $0xa8] sm:$0xff]
        %v882 = vld [vmem:[#allocation3 + $0xb0] sm:$0xff]
        %v883 = vld [vmem:[#allocation3 + $0xb8] sm:$0xff]
        %v884 = vld [vmem:[#allocation3 + $0xc0] sm:$0xff]
        %v885 = vld [vmem:[#allocation3 + $0xc8] sm:$0xff]
        %v886 = vld [vmem:[#allocation3 + $0xd0] sm:$0xff]
        %v887 = vld [vmem:[#allocation3 + $0xd8] sm:$0xff]
        %v888 = vld [vmem:[#allocation3 + $0xe0] sm:$0xff]
        %v889 = vld [vmem:[#allocation3 + $0xe8] sm:$0xff]
        %v890 = vld [vmem:[#allocation3 + $0xf0] sm:$0xff]
        %v891 = vld [vmem:[#allocation3 + $0xf8] sm:$0xff]
        %v892 = vld [vmem:[#allocation3 + $0x100] sm:$0xff]
        %v893 = vld [vmem:[#allocation3 + $0x108] sm:$0xff]
        %v894 = vld [vmem:[#allocation3 + $0x110] sm:$0xff]
        %v895 = vld [vmem:[#allocation3 + $0x118] sm:$0xff]
        %v896 = vld [vmem:[#allocation7] sm:$0xf]
        %v897 = vld [vmem:[#allocation7 + $0x4] sm:$0xf]
        %v898 = vld [vmem:[#allocation7 + $0x8] sm:$0xf]
        %v899 = vld [vmem:[#allocation7 + $0xc] sm:$0xf]
        %v900 = vld [vmem:[#allocation7 + $0x10] sm:$0xf]
        %v901 = vld [vmem:[#allocation7 + $0x14] sm:$0xf]
        %v902 = vld [vmem:[#allocation7 + $0x18] sm:$0xf]
        %v903 = vld [vmem:[#allocation7 + $0x1c] sm:$0xf]
        %v904 = vld [vmem:[#allocation7 + $0x20] sm:$0xf]
        %v905 = vld [vmem:[#allocation7 + $0x24] sm:$0xf]
        %v906 = vld [vmem:[#allocation7 + $0x28] sm:$0xf]
        %v907 = vld [vmem:[#allocation7 + $0x2c] sm:$0xf]
        %v908 = vld [vmem:[#allocation7 + $0x30] sm:$0xf]
        %v909 = vld [vmem:[#allocation7 + $0x34] sm:$0xf]
        %v910 = vld [vmem:[#allocation7 + $0x38] sm:$0xf]
        %v911 = vld [vmem:[#allocation7 + $0x3c] sm:$0xf]
        %v912 = vld [vmem:[#allocation7 + $0x40] sm:$0xf]
        %v913 = vld [vmem:[#allocation7 + $0x44] sm:$0xf]
        %v914 = vld [vmem:[#allocation7 + $0x48] sm:$0xf]
        %v915 = vld [vmem:[#allocation7 + $0x4c] sm:$0xf]
        %v916 = vld [vmem:[#allocation7 + $0x50] sm:$0xf]
        %v917 = vld [vmem:[#allocation7 + $0x54] sm:$0xf]
        %v918 = vld [vmem:[#allocation7 + $0x58] sm:$0xf]
        %v919 = vld [vmem:[#allocation7 + $0x5c] sm:$0xf]
        %v920 = vld [vmem:[#allocation7 + $0x60] sm:$0xf]
        %v921 = vld [vmem:[#allocation7 + $0x64] sm:$0xf]
        %v922 = vld [vmem:[#allocation7 + $0x68] sm:$0xf]
        %v923 = vld [vmem:[#allocation7 + $0x6c] sm:$0xf]
        %v924 = vld [vmem:[#allocation7 + $0x70] sm:$0xf]
        %v925 = vld [vmem:[#allocation7 + $0x74] sm:$0xf]
        %v926 = vld [vmem:[#allocation7 + $0x78] sm:$0xf]
        %v927 = vld [vmem:[#allocation7 + $0x7c] sm:$0xf]
        %v928 = vld [vmem:[#allocation7 + $0x80] sm:$0xf]
        %v929 = vld [vmem:[#allocation7 + $0x84] sm:$0xf]
        %v930 = vld [vmem:[#allocation7 + $0x88] sm:$0xf]
        %v931 = vld [vmem:[#allocation7 + $0x8c] sm:$0xf]
        %v932 = vld [vmem:[#allocation7 + $0x90] sm:$0xf]
        %v933 = vld [vmem:[#allocation7 + $0x94] sm:$0xf]
        %v934 = vld [vmem:[#allocation7 + $0x98] sm:$0xf]
        %v935 = vld [vmem:[#allocation7 + $0x9c] sm:$0xf]
        %v936 = vld [vmem:[#allocation7 + $0xa0] sm:$0xf]
        %v937 = vld [vmem:[#allocation7 + $0xa4] sm:$0xf]
        %v938 = vld [vmem:[#allocation7 + $0xa8] sm:$0xf]
        %v939 = vld [vmem:[#allocation7 + $0xac] sm:$0xf]
        %v940 = vld [vmem:[#allocation7 + $0xb0] sm:$0xf]
        %v941 = vld [vmem:[#allocation7 + $0xb4] sm:$0xf]
        %v942 = vld [vmem:[#allocation7 + $0xb8] sm:$0xf]
        %v943 = vld [vmem:[#allocation7 + $0xbc] sm:$0xf]
        %v944 = vld [vmem:[#allocation7 + $0xc0] sm:$0xf]
        %v945 = vld [vmem:[#allocation7 + $0xc4] sm:$0xf]
        %v946 = vld [vmem:[#allocation7 + $0xc8] sm:$0xf]
        %v947 = vld [vmem:[#allocation7 + $0xcc] sm:$0xf]
        %v948 = vld [vmem:[#allocation7 + $0xd0] sm:$0xf]
        %v949 = vld [vmem:[#allocation7 + $0xd4] sm:$0xf]
        %v950 = vld [vmem:[#allocation7 + $0xd8] sm:$0xf]
        %v951 = vld [vmem:[#allocation7 + $0xdc] sm:$0xf]
        %v952 = vld [vmem:[#allocation7 + $0xe0] sm:$0xf]
        %v953 = vld [vmem:[#allocation7 + $0xe4] sm:$0xf]
        %v954 = vld [vmem:[#allocation7 + $0xe8] sm:$0xf]
        %v955 = vld [vmem:[#allocation7 + $0xec] sm:$0xf]
        %v956 = vld [vmem:[#allocation7 + $0xf0] sm:$0xf]
        %v957 = vld [vmem:[#allocation7 + $0xf4] sm:$0xf]
        %v958 = vld [vmem:[#allocation7 + $0xf8] sm:$0xf]
        %v959 = vld [vmem:[#allocation7 + $0xfc] sm:$0xf]
        %v960 = vld [vmem:[#allocation7 + $0x100] sm:$0xf]
        %v961 = vld [vmem:[#allocation7 + $0x104] sm:$0xf]
        %v962 = vld [vmem:[#allocation7 + $0x108] sm:$0xf]
        %v963 = vld [vmem:[#allocation7 + $0x10c] sm:$0xf]
        %v964 = vld [vmem:[#allocation7 + $0x110] sm:$0xf]
        %v965 = vld [vmem:[#allocation7 + $0x114] sm:$0xf]
        %v966 = vld [vmem:[#allocation7 + $0x118] sm:$0xf]
        %v967 = vld [vmem:[#allocation7 + $0x11c] sm:$0xf]
        %v968 = vld [vmem:[#allocation7 + $0x120] sm:$0xf]
        %v969 = vld [vmem:[#allocation7 + $0x124] sm:$0xf]
        %v970 = vld [vmem:[#allocation7 + $0x128] sm:$0xf]
        %v971 = vld [vmem:[#allocation7 + $0x12c] sm:$0xf]
        %v972 = vld [vmem:[#allocation7 + $0x130] sm:$0xf]
        %v973 = vld [vmem:[#allocation7 + $0x134] sm:$0xf]
        %v974 = vld [vmem:[#allocation7 + $0x138] sm:$0xf]
        %v975 = vld [vmem:[#allocation7 + $0x13c] sm:$0xf]
        %v976 = vld [vmem:[#allocation7 + $0x140] sm:$0xf]
        %v977 = vld [vmem:[#allocation7 + $0x144] sm:$0xf]
        %v978 = vld [vmem:[#allocation7 + $0x148] sm:$0xf]
        %v979 = vld [vmem:[#allocation7 + $0x14c] sm:$0xf]
        %v980 = vld [vmem:[#allocation7 + $0x150] sm:$0xf]
        %v981 = vld [vmem:[#allocation7 + $0x154] sm:$0xf]
        %v982 = vld [vmem:[#allocation7 + $0x158] sm:$0xf]
        %v983 = vld [vmem:[#allocation7 + $0x15c] sm:$0xf]
        %v984 = vld [vmem:[#allocation7 + $0x160] sm:$0xf]
        %v985 = vld [vmem:[#allocation7 + $0x164] sm:$0xf]
        %v986 = vld [vmem:[#allocation7 + $0x168] sm:$0xf]
        %v987 = vld [vmem:[#allocation7 + $0x16c] sm:$0xf]
        %v988 = vld [vmem:[#allocation7 + $0x170] sm:$0xf]
        %v989 = vld [vmem:[#allocation7 + $0x174] sm:$0xf]
        %v990 = vld [vmem:[#allocation7 + $0x178] sm:$0xf]
        %v991 = vld [vmem:[#allocation7 + $0x17c] sm:$0xf]
        %v992 = vld [vmem:[#allocation7 + $0x180] sm:$0xf]
        %v993 = vld [vmem:[#allocation7 + $0x184] sm:$0xf]
        %v994 = vld [vmem:[#allocation7 + $0x188] sm:$0xf]
        %v995 = vld [vmem:[#allocation7 + $0x18c] sm:$0xf]
        %v996 = vld [vmem:[#allocation7 + $0x190] sm:$0xf]
        %v997 = vld [vmem:[#allocation7 + $0x194] sm:$0xf]
        %v998 = vld [vmem:[#allocation7 + $0x198] sm:$0xf]
        %v999 = vld [vmem:[#allocation7 + $0x19c] sm:$0xf]
        %v1000 = vld [vmem:[#allocation7 + $0x1a0] sm:$0xf]
        %v1001 = vld [vmem:[#allocation7 + $0x1a4] sm:$0xf]
        %v1002 = vld [vmem:[#allocation7 + $0x1a8] sm:$0xf]
        %v1003 = vld [vmem:[#allocation7 + $0x1ac] sm:$0xf]
        %v1004 = vld [vmem:[#allocation7 + $0x1b0] sm:$0xf]
        %v1005 = vld [vmem:[#allocation7 + $0x1b4] sm:$0xf]
        %v1006 = vld [vmem:[#allocation7 + $0x1b8] sm:$0xf]
        %v1007 = vld [vmem:[#allocation7 + $0x1bc] sm:$0xf]
        %v1008 = vld [vmem:[#allocation7 + $0x1c0] sm:$0xf]
        %v1009 = vld [vmem:[#allocation7 + $0x1c4] sm:$0xf]
        %v1010 = vld [vmem:[#allocation7 + $0x1c8] sm:$0xf]
        %v1011 = vld [vmem:[#allocation7 + $0x1cc] sm:$0xf]
        %v1012 = vld [vmem:[#allocation7 + $0x1d0] sm:$0xf]
        %v1013 = vld [vmem:[#allocation7 + $0x1d4] sm:$0xf]
        %v1014 = vld [vmem:[#allocation7 + $0x1d8] sm:$0xf]
        %v1015 = vld [vmem:[#allocation7 + $0x1dc] sm:$0xf]
        %v1016 = vld [vmem:[#allocation7 + $0x1e0] sm:$0xf]
        %v1017 = vld [vmem:[#allocation7 + $0x1e4] sm:$0xf]
        %v1018 = vld [vmem:[#allocation7 + $0x1e8] sm:$0xf]
        %v1019 = vld [vmem:[#allocation7 + $0x1ec] sm:$0xf]
        %v1020 = vld [vmem:[#allocation7 + $0x1f0] sm:$0xf]
        %v1021 = vld [vmem:[#allocation7 + $0x1f4] sm:$0xf]
        %v1022 = vld [vmem:[#allocation7 + $0x1f8] sm:$0xf]
        %v1023 = vld [vmem:[#allocation7 + $0x1fc] sm:$0xf]
        %v1024 = vld [vmem:[#allocation7 + $0x200] sm:$0xf]
        %v1025 = vld [vmem:[#allocation7 + $0x204] sm:$0xf]
        %v1026 = vld [vmem:[#allocation7 + $0x208] sm:$0xf]
        %v1027 = vld [vmem:[#allocation7 + $0x20c] sm:$0xf]
        %v1028 = vld [vmem:[#allocation7 + $0x210] sm:$0xf]
        %v1029 = vld [vmem:[#allocation7 + $0x214] sm:$0xf]
        %v1030 = vld [vmem:[#allocation7 + $0x218] sm:$0xf]
        %v1031 = vld [vmem:[#allocation7 + $0x21c] sm:$0xf]
        %v1032 = vld [vmem:[#allocation7 + $0x220] sm:$0xf]
        %v1033 = vld [vmem:[#allocation7 + $0x224] sm:$0xf]
        %v1034 = vld [vmem:[#allocation7 + $0x228] sm:$0xf]
        %v1035 = vld [vmem:[#allocation7 + $0x22c] sm:$0xf]
        %v1036 = vld [vmem:[#allocation7 + $0x230] sm:$0xf]
        %v1037 = vld [vmem:[#allocation7 + $0x234] sm:$0xf]
        %v1038 = vld [vmem:[#allocation7 + $0x238] sm:$0xf]
        %v1039 = vld [vmem:[#allocation7 + $0x23c] sm:$0xf]
        %v1040 = vld [vmem:[%s2] sm:$0x1]
        %v1042 = vlaneseq
        %v1043 = vshrl.u32 %v1042, 7
        %v1044 = vsub.s32 0, %v1043
        %v1045 = vrot.slane %v1040, %v1044
        %v1191 = vunpack.c.l.b16 %v896
        %v1192 = vunpack.c.l.b16 %v897
        %v1193 = vunpack.c.l.b16 %v898
        %v1194 = vunpack.c.l.b16 %v899
        %v1195 = vunpack.c.l.b16 %v900
        %v1196 = vunpack.c.l.b16 %v901
        %v1197 = vunpack.c.l.b16 %v902
        %v1198 = vunpack.c.l.b16 %v903
        %v1199 = vunpack.c.l.b16 %v904
        %v1200 = vunpack.c.l.b16 %v905
        %v1201 = vunpack.c.l.b16 %v906
        %v1202 = vunpack.c.l.b16 %v907
        %v1203 = vunpack.c.l.b16 %v908
        %v1204 = vunpack.c.l.b16 %v909
        %v1205 = vunpack.c.l.b16 %v910
        %v1206 = vunpack.c.l.b16 %v911
        %v1207 = vunpack.c.l.b16 %v912
        %v1208 = vunpack.c.l.b16 %v913
        %v1209 = vunpack.c.l.b16 %v914
        %v1210 = vunpack.c.l.b16 %v915
        %v1211 = vunpack.c.l.b16 %v916
        %v1212 = vunpack.c.l.b16 %v917
        %v1213 = vunpack.c.l.b16 %v918
        %v1214 = vunpack.c.l.b16 %v919
        %v1215 = vunpack.c.l.b16 %v920
        %v1216 = vunpack.c.l.b16 %v921
        %v1217 = vunpack.c.l.b16 %v922
        %v1218 = vunpack.c.l.b16 %v923
        %v1219 = vunpack.c.l.b16 %v924
        %v1220 = vunpack.c.l.b16 %v925
        %v1221 = vunpack.c.l.b16 %v926
        %v1222 = vunpack.c.l.b16 %v927
        %v1223 = vunpack.c.l.b16 %v928
        %v1224 = vunpack.c.l.b16 %v929
        %v1225 = vunpack.c.l.b16 %v930
        %v1226 = vunpack.c.l.b16 %v931
        %v1227 = vunpack.c.l.b16 %v932
        %v1228 = vunpack.c.l.b16 %v933
        %v1229 = vunpack.c.l.b16 %v934
        %v1230 = vunpack.c.l.b16 %v935
        %v1231 = vunpack.c.l.b16 %v936
        %v1232 = vunpack.c.l.b16 %v937
        %v1233 = vunpack.c.l.b16 %v938
        %v1234 = vunpack.c.l.b16 %v939
        %v1235 = vunpack.c.l.b16 %v940
        %v1236 = vunpack.c.l.b16 %v941
        %v1237 = vunpack.c.l.b16 %v942
        %v1238 = vunpack.c.l.b16 %v943
        %v1239 = vunpack.c.l.b16 %v944
        %v1240 = vunpack.c.l.b16 %v945
        %v1241 = vunpack.c.l.b16 %v946
        %v1242 = vunpack.c.l.b16 %v947
        %v1243 = vunpack.c.l.b16 %v948
        %v1244 = vunpack.c.l.b16 %v949
        %v1245 = vunpack.c.l.b16 %v950
        %v1246 = vunpack.c.l.b16 %v951
        %v1247 = vunpack.c.l.b16 %v952
        %v1248 = vunpack.c.l.b16 %v953
        %v1249 = vunpack.c.l.b16 %v954
        %v1250 = vunpack.c.l.b16 %v955
        %v1251 = vunpack.c.l.b16 %v956
        %v1252 = vunpack.c.l.b16 %v957
        %v1253 = vunpack.c.l.b16 %v958
        %v1254 = vunpack.c.l.b16 %v959
        %v1255 = vunpack.c.l.b16 %v960
        %v1256 = vunpack.c.l.b16 %v961
        %v1257 = vunpack.c.l.b16 %v962
        %v1258 = vunpack.c.l.b16 %v963
        %v1259 = vunpack.c.l.b16 %v964
        %v1260 = vunpack.c.l.b16 %v965
        %v1261 = vunpack.c.l.b16 %v966
        %v1262 = vunpack.c.l.b16 %v967
        %v1263 = vunpack.c.l.b16 %v968
        %v1264 = vunpack.c.l.b16 %v969
        %v1265 = vunpack.c.l.b16 %v970
        %v1266 = vunpack.c.l.b16 %v971
        %v1267 = vunpack.c.l.b16 %v972
        %v1268 = vunpack.c.l.b16 %v973
        %v1269 = vunpack.c.l.b16 %v974
        %v1270 = vunpack.c.l.b16 %v975
        %v1271 = vunpack.c.l.b16 %v976
        %v1272 = vunpack.c.l.b16 %v977
        %v1273 = vunpack.c.l.b16 %v978
        %v1274 = vunpack.c.l.b16 %v979
        %v1275 = vunpack.c.l.b16 %v980
        %v1276 = vunpack.c.l.b16 %v981
        %v1277 = vunpack.c.l.b16 %v982
        %v1278 = vunpack.c.l.b16 %v983
        %v1279 = vunpack.c.l.b16 %v984
        %v1280 = vunpack.c.l.b16 %v985
        %v1281 = vunpack.c.l.b16 %v986
        %v1282 = vunpack.c.l.b16 %v987
        %v1283 = vunpack.c.l.b16 %v988
        %v1284 = vunpack.c.l.b16 %v989
        %v1285 = vunpack.c.l.b16 %v990
        %v1286 = vunpack.c.l.b16 %v991
        %v1287 = vunpack.c.l.b16 %v992
        %v1288 = vunpack.c.l.b16 %v993
        %v1289 = vunpack.c.l.b16 %v994
        %v1290 = vunpack.c.l.b16 %v995
        %v1291 = vunpack.c.l.b16 %v996
        %v1292 = vunpack.c.l.b16 %v997
        %v1293 = vunpack.c.l.b16 %v998
        %v1294 = vunpack.c.l.b16 %v999
        %v1295 = vunpack.c.l.b16 %v1000
        %v1296 = vunpack.c.l.b16 %v1001
        %v1297 = vunpack.c.l.b16 %v1002
        %v1298 = vunpack.c.l.b16 %v1003
        %v1299 = vunpack.c.l.b16 %v1004
        %v1300 = vunpack.c.l.b16 %v1005
        %v1301 = vunpack.c.l.b16 %v1006
        %v1302 = vunpack.c.l.b16 %v1007
        %v1303 = vunpack.c.l.b16 %v1008
        %v1304 = vunpack.c.l.b16 %v1009
        %v1305 = vunpack.c.l.b16 %v1010
        %v1306 = vunpack.c.l.b16 %v1011
        %v1307 = vunpack.c.l.b16 %v1012
        %v1308 = vunpack.c.l.b16 %v1013
        %v1309 = vunpack.c.l.b16 %v1014
        %v1310 = vunpack.c.l.b16 %v1015
        %v1311 = vunpack.c.l.b16 %v1016
        %v1312 = vunpack.c.l.b16 %v1017
        %v1313 = vunpack.c.l.b16 %v1018
        %v1314 = vunpack.c.l.b16 %v1019
        %v1315 = vunpack.c.l.b16 %v1020
        %v1316 = vunpack.c.l.b16 %v1021
        %v1317 = vunpack.c.l.b16 %v1022
        %v1318 = vunpack.c.l.b16 %v1023
        %v1319 = vunpack.c.l.b16 %v1024
        %v1320 = vunpack.c.l.b16 %v1025
        %v1321 = vunpack.c.l.b16 %v1026
        %v1322 = vunpack.c.l.b16 %v1027
        %v1323 = vunpack.c.l.b16 %v1028
        %v1324 = vunpack.c.l.b16 %v1029
        %v1325 = vunpack.c.l.b16 %v1030
        %v1326 = vunpack.c.l.b16 %v1031
        %v1327 = vunpack.c.l.b16 %v1032
        %v1328 = vunpack.c.l.b16 %v1033
        %v1329 = vunpack.c.l.b16 %v1034
        %v1330 = vunpack.c.l.b16 %v1035
        %v1331 = vunpack.c.l.b16 %v1036
        %v1332 = vunpack.c.l.b16 %v1037
        %v1333 = vunpack.c.l.b16 %v1038
        %v1334 = vunpack.c.l.b16 %v1039
        %v1335 = vpack.c.b16 %v1192, %v1191
        %v1336 = vpack.c.b16 %v1194, %v1193
        %v1337 = vpack.c.b16 %v1196, %v1195
        %v1338 = vpack.c.b16 %v1198, %v1197
        %v1339 = vpack.c.b16 %v1200, %v1199
        %v1340 = vpack.c.b16 %v1202, %v1201
        %v1341 = vpack.c.b16 %v1204, %v1203
        %v1342 = vpack.c.b16 %v1206, %v1205
        %v1343 = vpack.c.b16 %v1208, %v1207
        %v1344 = vpack.c.b16 %v1210, %v1209
        %v1345 = vpack.c.b16 %v1212, %v1211
        %v1346 = vpack.c.b16 %v1214, %v1213
        %v1347 = vpack.c.b16 %v1216, %v1215
        %v1348 = vpack.c.b16 %v1218, %v1217
        %v1349 = vpack.c.b16 %v1220, %v1219
        %v1350 = vpack.c.b16 %v1222, %v1221
        %v1351 = vpack.c.b16 %v1224, %v1223
        %v1352 = vpack.c.b16 %v1226, %v1225
        %v1353 = vpack.c.b16 %v1228, %v1227
        %v1354 = vpack.c.b16 %v1230, %v1229
        %v1355 = vpack.c.b16 %v1232, %v1231
        %v1356 = vpack.c.b16 %v1234, %v1233
        %v1357 = vpack.c.b16 %v1236, %v1235
        %v1358 = vpack.c.b16 %v1238, %v1237
        %v1359 = vpack.c.b16 %v1240, %v1239
        %v1360 = vpack.c.b16 %v1242, %v1241
        %v1361 = vpack.c.b16 %v1244, %v1243
        %v1362 = vpack.c.b16 %v1246, %v1245
        %v1363 = vpack.c.b16 %v1248, %v1247
        %v1364 = vpack.c.b16 %v1250, %v1249
        %v1365 = vpack.c.b16 %v1252, %v1251
        %v1366 = vpack.c.b16 %v1254, %v1253
        %v1367 = vpack.c.b16 %v1256, %v1255
        %v1368 = vpack.c.b16 %v1258, %v1257
        %v1369 = vpack.c.b16 %v1260, %v1259
        %v1370 = vpack.c.b16 %v1262, %v1261
        %v1371 = vpack.c.b16 %v1264, %v1263
        %v1372 = vpack.c.b16 %v1266, %v1265
        %v1373 = vpack.c.b16 %v1268, %v1267
        %v1374 = vpack.c.b16 %v1270, %v1269
        %v1375 = vpack.c.b16 %v1272, %v1271
        %v1376 = vpack.c.b16 %v1274, %v1273
        %v1377 = vpack.c.b16 %v1276, %v1275
        %v1378 = vpack.c.b16 %v1278, %v1277
        %v1379 = vpack.c.b16 %v1280, %v1279
        %v1380 = vpack.c.b16 %v1282, %v1281
        %v1381 = vpack.c.b16 %v1284, %v1283
        %v1382 = vpack.c.b16 %v1286, %v1285
        %v1383 = vpack.c.b16 %v1288, %v1287
        %v1384 = vpack.c.b16 %v1290, %v1289
        %v1385 = vpack.c.b16 %v1292, %v1291
        %v1386 = vpack.c.b16 %v1294, %v1293
        %v1387 = vpack.c.b16 %v1296, %v1295
        %v1388 = vpack.c.b16 %v1298, %v1297
        %v1389 = vpack.c.b16 %v1300, %v1299
        %v1390 = vpack.c.b16 %v1302, %v1301
        %v1391 = vpack.c.b16 %v1304, %v1303
        %v1392 = vpack.c.b16 %v1306, %v1305
        %v1393 = vpack.c.b16 %v1308, %v1307
        %v1394 = vpack.c.b16 %v1310, %v1309
        %v1395 = vpack.c.b16 %v1312, %v1311
        %v1396 = vpack.c.b16 %v1314, %v1313
        %v1397 = vpack.c.b16 %v1316, %v1315
        %v1398 = vpack.c.b16 %v1318, %v1317
        %v1399 = vpack.c.b16 %v1320, %v1319
        %v1400 = vpack.c.b16 %v1322, %v1321
        %v1401 = vpack.c.b16 %v1324, %v1323
        %v1402 = vpack.c.b16 %v1326, %v1325
        %v1403 = vpack.c.b16 %v1328, %v1327
        %v1404 = vpack.c.b16 %v1330, %v1329
        %v1405 = vpack.c.b16 %v1332, %v1331
        %v1406 = vpack.c.b16 %v1334, %v1333
        %1479 = vmatprep.subr.bf16.mxu0 0
        %1480 = vmatpush1.bf16.msra.mxu0 %v1335
        %1481 = vmatprep.subr.bf16.mxu0 0
        %1482 = vmatpush1.bf16.msra.mxu0 %v1336
        %1483 = vmatprep.subr.bf16.mxu0 0
        %1484 = vmatpush1.bf16.msra.mxu0 %v1337
        %1485 = vmatprep.subr.bf16.mxu0 0
        %1486 = vmatpush1.bf16.msra.mxu0 %v1338
        %1487 = vmatprep.subr.bf16.mxu0 0
        %1488 = vmatpush1.bf16.msra.mxu0 %v1339
        %1489 = vmatprep.subr.bf16.mxu0 0
        %1490 = vmatpush1.bf16.msra.mxu0 %v1340
        %1491 = vmatprep.subr.bf16.mxu0 0
        %1492 = vmatpush1.bf16.msra.mxu0 %v1341
        %1493 = vmatprep.subr.bf16.mxu0 0
        %1494 = vmatpush1.bf16.msra.mxu0 %v1342
        %1495 = vmatprep.subr.bf16.mxu0 0
        %1496 = vmatpush1.bf16.msra.mxu0 %v1343
        %1497 = vmatprep.subr.bf16.mxu0 0
        %1498 = vmatpush1.bf16.msra.mxu0 %v1344
        %1499 = vmatprep.subr.bf16.mxu0 0
        %1500 = vmatpush1.bf16.msra.mxu0 %v1345
        %1501 = vmatprep.subr.bf16.mxu0 0
        %1502 = vmatpush1.bf16.msra.mxu0 %v1346
        %1503 = vmatprep.subr.bf16.mxu0 0
        %1504 = vmatpush1.bf16.msra.mxu0 %v1347
        %1505 = vmatprep.subr.bf16.mxu0 0
        %1506 = vmatpush1.bf16.msra.mxu0 %v1348
        %1507 = vmatprep.subr.bf16.mxu0 0
        %1508 = vmatpush1.bf16.msra.mxu0 %v1349
        %1509 = vmatprep.subr.bf16.mxu0 0
        %1510 = vmatpush1.bf16.msra.mxu0 %v1350
        %1511 = vmatprep.mubr.bf16.mxu0 %v861
        %1512 = vmatmul.mubr.bf16.gmra.mrb[0].mxu0 %v860
        %v1513 = vpop.f32.mrb[0].mxu0
        %v1514 = vadd.f32 %v1045, %v1513
        %v1515 = vpop.f32.mrb[0].mxu0
        %v1516 = vpop.f32.mrb[0].mxu0
        %v1517 = vadd.f32 %v1045, %v1516
        %v1518 = vpop.f32.mrb[0].mxu0
        %1519 = vmatprep.mubr.bf16.mxu0 %v870
        %1520 = vmatmul.mubr.bf16.gmra.mrb[0].mxu0 %v869
        %v1521 = vpop.f32.mrb[0].mxu0
        %v1522 = vadd.f32 %v1045, %v1521
        %v1523 = vpop.f32.mrb[0].mxu0
        %v1524 = vpop.f32.mrb[0].mxu0
        %v1525 = vadd.f32 %v1045, %v1524
        %v1526 = vpop.f32.mrb[0].mxu0
        %1527 = vmatprep.mubr.bf16.mxu0 %v879
        %1528 = vmatmul.mubr.bf16.gmra.mrb[0].mxu0 %v878
        %v1529 = vpop.f32.mrb[0].mxu0
        %v1530 = vadd.f32 %v1045, %v1529
        %v1531 = vpop.f32.mrb[0].mxu0
        %v1532 = vpop.f32.mrb[0].mxu0
        %v1533 = vadd.f32 %v1045, %v1532
        %v1534 = vpop.f32.mrb[0].mxu0
        %1535 = vmatprep.mubr.bf16.mxu0 %v888
        %1536 = vmatmul.mubr.bf16.gmra.mrb[0].mxu0 %v887
        %v1537 = vpop.f32.mrb[0].mxu0
        %v1538 = vadd.f32 %v1045, %v1537
        %v1539 = vpop.f32.mrb[0].mxu0
        %v1540 = vpop.f32.mrb[0].mxu0
        %v1541 = vadd.f32 %v1045, %v1540
        %v1542 = vpop.f32.mrb[0].mxu0
        %1543 = vdwg.mxu0
        %1544 = vmatprep.subr.bf16.mxu0 0
        %1545 = vmatpush1.bf16.msra.mxu0 %v1351
        %1546 = vmatprep.subr.bf16.mxu0 0
        %1547 = vmatpush1.bf16.msra.mxu0 %v1352
        %1548 = vmatprep.subr.bf16.mxu0 0
        %1549 = vmatpush1.bf16.msra.mxu0 %v1353
        %1550 = vmatprep.subr.bf16.mxu0 0
        %1551 = vmatpush1.bf16.msra.mxu0 %v1354
        %1552 = vmatprep.subr.bf16.mxu0 0
        %1553 = vmatpush1.bf16.msra.mxu0 %v1355
        %1554 = vmatprep.subr.bf16.mxu0 0
        %1555 = vmatpush1.bf16.msra.mxu0 %v1356
        %1556 = vmatprep.subr.bf16.mxu0 0
        %1557 = vmatpush1.bf16.msra.mxu0 %v1357
        %1558 = vmatprep.subr.bf16.mxu0 0
        %1559 = vmatpush1.bf16.msra.mxu0 %v1358
        %1560 = vmatprep.subr.bf16.mxu0 0
        %1561 = vmatpush1.bf16.msra.mxu0 %v1359
        %1562 = vmatprep.subr.bf16.mxu0 0
        %1563 = vmatpush1.bf16.msra.mxu0 %v1360
        %1564 = vmatprep.subr.bf16.mxu0 0
        %1565 = vmatpush1.bf16.msra.mxu0 %v1361
        %1566 = vmatprep.subr.bf16.mxu0 0
        %1567 = vmatpush1.bf16.msra.mxu0 %v1362
        %1568 = vmatprep.subr.bf16.mxu0 0
        %1569 = vmatpush1.bf16.msra.mxu0 %v1363
        %1570 = vmatprep.subr.bf16.mxu0 0
        %1571 = vmatpush1.bf16.msra.mxu0 %v1364
        %1572 = vmatprep.subr.bf16.mxu0 0
        %1573 = vmatpush1.bf16.msra.mxu0 %v1365
        %1574 = vmatprep.subr.bf16.mxu0 0
        %1575 = vmatpush1.bf16.msra.mxu0 %v1366
        %1576 = vmatprep.mubr.bf16.mxu0 %v863
        %1577 = vmatmul.mubr.bf16.gmra.mrb[0].mxu0 %v862
        %v1578 = vpop.f32.mrb[0].mxu0
        %v1579 = vadd.f32 %v1514, %v1578
        %v1580 = vpop.f32.mrb[0].mxu0
        %v1581 = vpop.f32.mrb[0].mxu0
        %v1582 = vadd.f32 %v1517, %v1581
        %v1583 = vpop.f32.mrb[0].mxu0
        %1584 = vmatprep.mubr.bf16.mxu0 %v872
        %1585 = vmatmul.mubr.bf16.gmra.mrb[0].mxu0 %v871
        %v1586 = vpop.f32.mrb[0].mxu0
        %v1587 = vadd.f32 %v1522, %v1586
        %v1588 = vpop.f32.mrb[0].mxu0
        %v1589 = vpop.f32.mrb[0].mxu0
        %v1590 = vadd.f32 %v1525, %v1589
        %v1591 = vpop.f32.mrb[0].mxu0
        %1592 = vmatprep.mubr.bf16.mxu0 %v881
        %1593 = vmatmul.mubr.bf16.gmra.mrb[0].mxu0 %v880
        %v1594 = vpop.f32.mrb[0].mxu0
        %v1595 = vadd.f32 %v1530, %v1594
        %v1596 = vpop.f32.mrb[0].mxu0
        %v1597 = vpop.f32.mrb[0].mxu0
        %v1598 = vadd.f32 %v1533, %v1597
        %v1599 = vpop.f32.mrb[0].mxu0
        %1600 = vmatprep.mubr.bf16.mxu0 %v890
        %1601 = vmatmul.mubr.bf16.gmra.mrb[0].mxu0 %v889
        %v1602 = vpop.f32.mrb[0].mxu0
        %v1603 = vadd.f32 %v1538, %v1602
        %v1604 = vpop.f32.mrb[0].mxu0
        %v1605 = vpop.f32.mrb[0].mxu0
        %v1606 = vadd.f32 %v1541, %v1605
        %v1607 = vpop.f32.mrb[0].mxu0
        %1608 = vdwg.mxu0
        %1609 = vmatprep.subr.bf16.mxu0 0
        %1610 = vmatpush1.bf16.msra.mxu0 %v1367
        %1611 = vmatprep.subr.bf16.mxu0 0
        %1612 = vmatpush1.bf16.msra.mxu0 %v1368
        %1613 = vmatprep.subr.bf16.mxu0 0
        %1614 = vmatpush1.bf16.msra.mxu0 %v1369
        %1615 = vmatprep.subr.bf16.mxu0 0
        %1616 = vmatpush1.bf16.msra.mxu0 %v1370
        %1617 = vmatprep.subr.bf16.mxu0 0
        %1618 = vmatpush1.bf16.msra.mxu0 %v1371
        %1619 = vmatprep.subr.bf16.mxu0 0
        %1620 = vmatpush1.bf16.msra.mxu0 %v1372
        %1621 = vmatprep.subr.bf16.mxu0 0
        %1622 = vmatpush1.bf16.msra.mxu0 %v1373
        %1623 = vmatprep.subr.bf16.mxu0 0
        %1624 = vmatpush1.bf16.msra.mxu0 %v1374
        %1625 = vmatprep.subr.bf16.mxu0 0
        %1626 = vmatpush1.bf16.msra.mxu0 %v1375
        %1627 = vmatprep.subr.bf16.mxu0 0
        %1628 = vmatpush1.bf16.msra.mxu0 %v1376
        %1629 = vmatprep.subr.bf16.mxu0 0
        %1630 = vmatpush1.bf16.msra.mxu0 %v1377
        %1631 = vmatprep.subr.bf16.mxu0 0
        %1632 = vmatpush1.bf16.msra.mxu0 %v1378
        %1633 = vmatprep.subr.bf16.mxu0 0
        %1634 = vmatpush1.bf16.msra.mxu0 %v1379
        %1635 = vmatprep.subr.bf16.mxu0 0
        %1636 = vmatpush1.bf16.msra.mxu0 %v1380
        %1637 = vmatprep.subr.bf16.mxu0 0
        %1638 = vmatpush1.bf16.msra.mxu0 %v1381
        %1639 = vmatprep.subr.bf16.mxu0 0
        %1640 = vmatpush1.bf16.msra.mxu0 %v1382
        %1641 = vmatprep.mubr.bf16.mxu0 %v865
        %1642 = vmatmul.mubr.bf16.gmra.mrb[0].mxu0 %v864
        %v1643 = vpop.f32.mrb[0].mxu0
        %v1644 = vadd.f32 %v1579, %v1643
        %v1645 = vpop.f32.mrb[0].mxu0
        %v1646 = vpop.f32.mrb[0].mxu0
        %v1647 = vadd.f32 %v1582, %v1646
        %v1648 = vpop.f32.mrb[0].mxu0
        %1649 = vmatprep.mubr.bf16.mxu0 %v874
        %1650 = vmatmul.mubr.bf16.gmra.mrb[0].mxu0 %v873
        %v1651 = vpop.f32.mrb[0].mxu0
        %v1652 = vadd.f32 %v1587, %v1651
        %v1653 = vpop.f32.mrb[0].mxu0
        %v1654 = vpop.f32.mrb[0].mxu0
        %v1655 = vadd.f32 %v1590, %v1654
        %v1656 = vpop.f32.mrb[0].mxu0
        %1657 = vmatprep.mubr.bf16.mxu0 %v883
        %1658 = vmatmul.mubr.bf16.gmra.mrb[0].mxu0 %v882
        %v1659 = vpop.f32.mrb[0].mxu0
        %v1660 = vadd.f32 %v1595, %v1659
        %v1661 = vpop.f32.mrb[0].mxu0
        %v1662 = vpop.f32.mrb[0].mxu0
        %v1663 = vadd.f32 %v1598, %v1662
        %v1664 = vpop.f32.mrb[0].mxu0
        %1665 = vmatprep.mubr.bf16.mxu0 %v892
        %1666 = vmatmul.mubr.bf16.gmra.mrb[0].mxu0 %v891
        %v1667 = vpop.f32.mrb[0].mxu0
        %v1668 = vadd.f32 %v1603, %v1667
        %v1669 = vpop.f32.mrb[0].mxu0
        %v1670 = vpop.f32.mrb[0].mxu0
        %v1671 = vadd.f32 %v1606, %v1670
        %v1672 = vpop.f32.mrb[0].mxu0
        %1673 = vdwg.mxu0
        %1674 = vmatprep.subr.bf16.mxu0 0
        %1675 = vmatpush1.bf16.msra.mxu0 %v1383
        %1676 = vmatprep.subr.bf16.mxu0 0
        %1677 = vmatpush1.bf16.msra.mxu0 %v1384
        %1678 = vmatprep.subr.bf16.mxu0 0
        %1679 = vmatpush1.bf16.msra.mxu0 %v1385
        %1680 = vmatprep.subr.bf16.mxu0 0
        %1681 = vmatpush1.bf16.msra.mxu0 %v1386
        %1682 = vmatprep.subr.bf16.mxu0 0
        %1683 = vmatpush1.bf16.msra.mxu0 %v1387
        %1684 = vmatprep.subr.bf16.mxu0 0
        %1685 = vmatpush1.bf16.msra.mxu0 %v1388
        %1686 = vmatprep.subr.bf16.mxu0 0
        %1687 = vmatpush1.bf16.msra.mxu0 %v1389
        %1688 = vmatprep.subr.bf16.mxu0 0
        %1689 = vmatpush1.bf16.msra.mxu0 %v1390
        %1690 = vmatprep.subr.bf16.mxu0 0
        %1691 = vmatpush1.bf16.msra.mxu0 %v1391
        %1692 = vmatprep.subr.bf16.mxu0 0
        %1693 = vmatpush1.bf16.msra.mxu0 %v1392
        %1694 = vmatprep.subr.bf16.mxu0 0
        %1695 = vmatpush1.bf16.msra.mxu0 %v1393
        %1696 = vmatprep.subr.bf16.mxu0 0
        %1697 = vmatpush1.bf16.msra.mxu0 %v1394
        %1698 = vmatprep.subr.bf16.mxu0 0
        %1699 = vmatpush1.bf16.msra.mxu0 %v1395
        %1700 = vmatprep.subr.bf16.mxu0 0
        %1701 = vmatpush1.bf16.msra.mxu0 %v1396
        %1702 = vmatprep.subr.bf16.mxu0 0
        %1703 = vmatpush1.bf16.msra.mxu0 %v1397
        %1704 = vmatprep.subr.bf16.mxu0 0
        %1705 = vmatpush1.bf16.msra.mxu0 %v1398
        %1706 = vmatprep.mubr.bf16.mxu0 %v867
        %1707 = vmatmul.mubr.bf16.gmra.mrb[0].mxu0 %v866
        %v1708 = vpop.f32.mrb[0].mxu0
        %v1709 = vadd.f32 %v1644, %v1708
        %v1710 = vpop.f32.mrb[0].mxu0
        %v1711 = vpop.f32.mrb[0].mxu0
        %v1712 = vadd.f32 %v1647, %v1711
        %v1713 = vpop.f32.mrb[0].mxu0
        %1714 = vmatprep.mubr.bf16.mxu0 %v876
        %1715 = vmatmul.mubr.bf16.gmra.mrb[0].mxu0 %v875
        %v1716 = vpop.f32.mrb[0].mxu0
        %v1717 = vadd.f32 %v1652, %v1716
        %v1718 = vpop.f32.mrb[0].mxu0
        %v1719 = vpop.f32.mrb[0].mxu0
        %v1720 = vadd.f32 %v1655, %v1719
        %v1721 = vpop.f32.mrb[0].mxu0
        %1722 = vmatprep.mubr.bf16.mxu0 %v885
        %1723 = vmatmul.mubr.bf16.gmra.mrb[0].mxu0 %v884
        %v1724 = vpop.f32.mrb[0].mxu0
        %v1725 = vadd.f32 %v1660, %v1724
        %v1726 = vpop.f32.mrb[0].mxu0
        %v1727 = vpop.f32.mrb[0].mxu0
        %v1728 = vadd.f32 %v1663, %v1727
        %v1729 = vpop.f32.mrb[0].mxu0
        %1730 = vmatprep.mubr.bf16.mxu0 %v894
        %1731 = vmatmul.mubr.bf16.gmra.mrb[0].mxu0 %v893
        %v1732 = vpop.f32.mrb[0].mxu0
        %v1733 = vadd.f32 %v1668, %v1732
        %v1734 = vpop.f32.mrb[0].mxu0
        %v1735 = vpop.f32.mrb[0].mxu0
        %v1736 = vadd.f32 %v1671, %v1735
        %v1737 = vpop.f32.mrb[0].mxu0
        %1738 = vdwg.mxu0
        %1739 = vmatprep.subr.bf16.mxu0 0
        %1740 = vmatpush1.bf16.msra.mxu0 %v1399
        %1741 = vmatprep.subr.bf16.mxu0 0
        %1742 = vmatpush1.bf16.msra.mxu0 %v1400
        %1743 = vmatprep.subr.bf16.mxu0 0
        %1744 = vmatpush1.bf16.msra.mxu0 %v1401
        %1745 = vmatprep.subr.bf16.mxu0 0
        %1746 = vmatpush1.bf16.msra.mxu0 %v1402
        %1747 = vmatprep.subr.bf16.mxu0 0
        %1748 = vmatpush1.bf16.msra.mxu0 %v1403
        %1749 = vmatprep.subr.bf16.mxu0 0
        %1750 = vmatpush1.bf16.msra.mxu0 %v1404
        %1751 = vmatprep.subr.bf16.mxu0 0
        %1752 = vmatpush1.bf16.msra.mxu0 %v1405
        %1753 = vmatprep.subr.bf16.mxu0 0
        %1754 = vmatpush1.bf16.msra.mxu0 %v1406
        %1755 = vmatprep.subr.bf16.mxu0 0
        %1756 = vmatpush1.bf16.msra.mxu0 0
        %1757 = vmatprep.subr.bf16.mxu0 0
        %1758 = vmatpush1.bf16.msra.mxu0 0
        %1759 = vmatprep.subr.bf16.mxu0 0
        %1760 = vmatpush1.bf16.msra.mxu0 0
        %1761 = vmatprep.subr.bf16.mxu0 0
        %1762 = vmatpush1.bf16.msra.mxu0 0
        %1763 = vmatprep.subr.bf16.mxu0 0
        %1764 = vmatpush1.bf16.msra.mxu0 0
        %1765 = vmatprep.subr.bf16.mxu0 0
        %1766 = vmatpush1.bf16.msra.mxu0 0
        %1767 = vmatprep.subr.bf16.mxu0 0
        %1768 = vmatpush1.bf16.msra.mxu0 0
        %1769 = vmatprep.subr.bf16.mxu0 0
        %1770 = vmatpush1.bf16.msra.mxu0 0
        %1771 = vmatprep.mubr.bf16.mxu0 0
        %1772 = vmatmul.mubr.bf16.gmra.mrb[0].mxu0 %v868
        %v1773 = vpop.f32.mrb[0].mxu0
        %v1774 = vadd.f32 %v1709, %v1773
        %v1775 = vpop.f32.mrb[0].mxu0
        %v1776 = vpop.f32.mrb[0].mxu0
        %v1777 = vadd.f32 %v1712, %v1776
        %v1778 = vpop.f32.mrb[0].mxu0
        %1779 = vmatprep.mubr.bf16.mxu0 0
        %1780 = vmatmul.mubr.bf16.gmra.mrb[0].mxu0 %v877
        %v1781 = vpop.f32.mrb[0].mxu0
        %v1782 = vadd.f32 %v1717, %v1781
        %v1783 = vpop.f32.mrb[0].mxu0
        %v1784 = vpop.f32.mrb[0].mxu0
        %v1785 = vadd.f32 %v1720, %v1784
        %v1786 = vpop.f32.mrb[0].mxu0
        %1787 = vmatprep.mubr.bf16.mxu0 0
        %1788 = vmatmul.mubr.bf16.gmra.mrb[0].mxu0 %v886
        %v1789 = vpop.f32.mrb[0].mxu0
        %v1790 = vadd.f32 %v1725, %v1789
        %v1791 = vpop.f32.mrb[0].mxu0
        %v1792 = vpop.f32.mrb[0].mxu0
        %v1793 = vadd.f32 %v1728, %v1792
        %v1794 = vpop.f32.mrb[0].mxu0
        %1795 = vmatprep.mubr.bf16.mxu0 0
        %1796 = vmatmul.mubr.bf16.gmra.mrb[0].mxu0 %v895
        %v1797 = vpop.f32.mrb[0].mxu0
        %v1798 = vadd.f32 %v1733, %v1797
        %v1799 = vpop.f32.mrb[0].mxu0
        %v1800 = vpop.f32.mrb[0].mxu0
        %v1801 = vadd.f32 %v1736, %v1800
        %v1802 = vpop.f32.mrb[0].mxu0
        %1803 = vdwg.mxu0
        %v1804 = vmax.f32 %v1774, 0.0
        %v1805 = vmax.f32 %v1777, 0.0
        %v1806 = vmax.f32 %v1782, 0.0
        %v1807 = vmax.f32 %v1785, 0.0
        %v1808 = vmax.f32 %v1790, 0.0
        %v1809 = vmax.f32 %v1793, 0.0
        %v1810 = vmax.f32 %v1798, 0.0
        %v1811 = vmax.f32 %v1801, 0.0
        %v1812 = vpack.c.bf16 %v1804, %v1804
        %v1813 = vpack.c.bf16 %v1805, %v1805
        %v1814 = vpack.c.bf16 %v1806, %v1806
        %v1815 = vpack.c.bf16 %v1807, %v1807
        %v1816 = vpack.c.bf16 %v1808, %v1808
        %v1817 = vpack.c.bf16 %v1809, %v1809
        %v1818 = vpack.c.bf16 %v1810, %v1810
        %v1819 = vpack.c.bf16 %v1811, %v1811
        %v1828 = vunpack.c.l.b16 %v1812
        %v1829 = vunpack.c.l.b16 %v1813
        %v1830 = vunpack.c.l.b16 %v1814
        %v1831 = vunpack.c.l.b16 %v1815
        %v1832 = vunpack.c.l.b16 %v1816
        %v1833 = vunpack.c.l.b16 %v1817
        %v1834 = vunpack.c.l.b16 %v1818
        %v1835 = vunpack.c.l.b16 %v1819
        %v1836 = vpack.c.b16 %v1828, %v1828
        %v1837 = vpack.c.b16 %v1829, %v1829
        %v1838 = vpack.c.b16 %v1830, %v1830
        %v1839 = vpack.c.b16 %v1831, %v1831
        %v1840 = vpack.c.b16 %v1832, %v1832
        %v1841 = vpack.c.b16 %v1833, %v1833
        %v1842 = vpack.c.b16 %v1834, %v1834
        %v1843 = vpack.c.b16 %v1835, %v1835
        %v1845 = vshrl.u32 %v1836, 16
        %v1847 = vrot.slane %v1845, 7
        %v1848 = vshll.u32 %v1836, 16
        %v1850 = vor.u32 %v1847, %v1848
        %v1851 = vrot.slane %v1847, 4
        %v1853 = vshrl.u32 %v1837, 16
        %v1855 = vrot.slane %v1853, 7
        %v1856 = vshll.u32 %v1837, 16
        %v1858 = vor.u32 %v1855, %v1856
        %v1859 = vrot.slane %v1855, 4
        %v1861 = vshrl.u32 %v1838, 16
        %v1863 = vrot.slane %v1861, 7
        %v1864 = vshll.u32 %v1838, 16
        %v1866 = vor.u32 %v1863, %v1864
        %v1867 = vrot.slane %v1863, 4
        %v1869 = vshrl.u32 %v1839, 16
        %v1871 = vrot.slane %v1869, 7
        %v1872 = vshll.u32 %v1839, 16
        %v1874 = vor.u32 %v1871, %v1872
        %v1875 = vrot.slane %v1871, 4
        %v1877 = vshrl.u32 %v1840, 16
        %v1879 = vrot.slane %v1877, 7
        %v1880 = vshll.u32 %v1840, 16
        %v1882 = vor.u32 %v1879, %v1880
        %v1883 = vrot.slane %v1879, 4
        %v1885 = vshrl.u32 %v1841, 16
        %v1887 = vrot.slane %v1885, 7
        %v1888 = vshll.u32 %v1841, 16
        %v1890 = vor.u32 %v1887, %v1888
        %v1891 = vrot.slane %v1887, 4
        %v1893 = vshrl.u32 %v1842, 16
        %v1895 = vrot.slane %v1893, 7
        %v1896 = vshll.u32 %v1842, 16
        %v1898 = vor.u32 %v1895, %v1896
        %v1899 = vrot.slane %v1895, 4
        %v1901 = vshrl.u32 %v1843, 16
        %v1903 = vrot.slane %v1901, 7
        %v1904 = vshll.u32 %v1843, 16
        %v1906 = vor.u32 %v1903, %v1904
        %v1907 = vrot.slane %v1903, 4
        %v1924 = vld [vmem:[%s463] sm:$0xf]
        %v1925 = vsel %vm465, %v1850, %v1924
        %1926 = vst [vmem:[%s463] sm:$0xf] %v1925
        %v1927 = vld [vmem:[%s463 + $0x4] sm:$0x1]
        %v1928 = vsel %vm280, %v1851, %v1927
        %1929 = vst [vmem:[%s463 + $0x4] sm:$0x1] %v1928
        %v1930 = vld [vmem:[%s463 + $0x8] sm:$0xf]
        %v1931 = vsel %vm465, %v1858, %v1930
        %1932 = vst [vmem:[%s463 + $0x8] sm:$0xf] %v1931
        %v1933 = vld [vmem:[%s463 + $0xc] sm:$0x1]
        %v1934 = vsel %vm280, %v1859, %v1933
        %1935 = vst [vmem:[%s463 + $0xc] sm:$0x1] %v1934
        %v1936 = vld [vmem:[%s463 + $0x10] sm:$0xf]
        %v1937 = vsel %vm465, %v1866, %v1936
        %1938 = vst [vmem:[%s463 + $0x10] sm:$0xf] %v1937
        %v1939 = vld [vmem:[%s463 + $0x14] sm:$0x1]
        %v1940 = vsel %vm280, %v1867, %v1939
        %1941 = vst [vmem:[%s463 + $0x14] sm:$0x1] %v1940
        %v1942 = vld [vmem:[%s463 + $0x18] sm:$0xf]
        %v1943 = vsel %vm465, %v1874, %v1942
        %1944 = vst [vmem:[%s463 + $0x18] sm:$0xf] %v1943
        %v1945 = vld [vmem:[%s463 + $0x1c] sm:$0x1]
        %v1946 = vsel %vm280, %v1875, %v1945
        %1947 = vst [vmem:[%s463 + $0x1c] sm:$0x1] %v1946
        %v1948 = vld [vmem:[%s463 + $0x20] sm:$0xf]
        %v1949 = vsel %vm465, %v1882, %v1948
        %1950 = vst [vmem:[%s463 + $0x20] sm:$0xf] %v1949
        %v1951 = vld [vmem:[%s463 + $0x24] sm:$0x1]
        %v1952 = vsel %vm280, %v1883, %v1951
        %1953 = vst [vmem:[%s463 + $0x24] sm:$0x1] %v1952
        %v1954 = vld [vmem:[%s463 + $0x28] sm:$0xf]
        %v1955 = vsel %vm465, %v1890, %v1954
        %1956 = vst [vmem:[%s463 + $0x28] sm:$0xf] %v1955
        %v1957 = vld [vmem:[%s463 + $0x2c] sm:$0x1]
        %v1958 = vsel %vm280, %v1891, %v1957
        %1959 = vst [vmem:[%s463 + $0x2c] sm:$0x1] %v1958
        %v1960 = vld [vmem:[%s463 + $0x30] sm:$0xf]
        %v1961 = vsel %vm465, %v1898, %v1960
        %1962 = vst [vmem:[%s463 + $0x30] sm:$0xf] %v1961
        %v1963 = vld [vmem:[%s463 + $0x34] sm:$0x1]
        %v1964 = vsel %vm280, %v1899, %v1963
        %1965 = vst [vmem:[%s463 + $0x34] sm:$0x1] %v1964
        %v1966 = vld [vmem:[%s463 + $0x38] sm:$0xf]
        %v1967 = vsel %vm465, %v1906, %v1966
        %1968 = vst [vmem:[%s463 + $0x38] sm:$0xf] %v1967
        %v1969 = vld [vmem:[%s463 + $0x3c] sm:$0x1]
        %v1970 = vsel %vm280, %v1907, %v1969
        %1971 = vst [vmem:[%s463 + $0x3c] sm:$0x1] %v1970
        %v1972 = vld [vmem:[#allocation2] sm:$0xf]
        %v1973 = vld [vmem:[#allocation2 + $0x4] sm:$0x1]
        %v1974 = vld [vmem:[#allocation2 + $0x8] sm:$0xf]
        %v1975 = vld [vmem:[#allocation2 + $0xc] sm:$0x1]
        %v1976 = vld [vmem:[#allocation2 + $0x10] sm:$0xf]
        %v1977 = vld [vmem:[#allocation2 + $0x14] sm:$0x1]
        %v1978 = vld [vmem:[#allocation2 + $0x18] sm:$0xf]
        %v1979 = vld [vmem:[#allocation2 + $0x1c] sm:$0x1]
        %v1980 = vld [vmem:[#allocation2 + $0x20] sm:$0xf]
        %v1981 = vld [vmem:[#allocation2 + $0x24] sm:$0x1]
        %v1982 = vld [vmem:[#allocation2 + $0x28] sm:$0xf]
        %v1983 = vld [vmem:[#allocation2 + $0x2c] sm:$0x1]
        %v1984 = vld [vmem:[#allocation2 + $0x30] sm:$0xf]
        %v1985 = vld [vmem:[#allocation2 + $0x34] sm:$0x1]
        %v1986 = vld [vmem:[#allocation2 + $0x38] sm:$0xf]
        %v1987 = vld [vmem:[#allocation2 + $0x3c] sm:$0x1]
        %v1988 = vld [vmem:[#allocation2 + $0x40] sm:$0xf]
        %v1989 = vld [vmem:[#allocation2 + $0x44] sm:$0x1]
        %v1990 = vld [vmem:[#allocation2 + $0x48] sm:$0xf]
        %v1991 = vld [vmem:[#allocation2 + $0x4c] sm:$0x1]
        %v2000 = vunpack.c.l.b16 %v1972
        %v2001 = vunpack.c.l.b16 %v1974
        %v2002 = vunpack.c.l.b16 %v1976
        %v2003 = vunpack.c.l.b16 %v1978
        %v2004 = vunpack.c.l.b16 %v1980
        %v2005 = vunpack.c.l.b16 %v1982
        %v2006 = vunpack.c.l.b16 %v1984
        %v2007 = vunpack.c.l.b16 %v1986
        %v2008 = vpack.c.b16 %v2001, %v2000
        %v2009 = vpack.c.b16 %v2003, %v2002
        %v2010 = vpack.c.b16 %v2005, %v2004
        %v2011 = vpack.c.b16 %v2007, %v2006
        %2016 = vst [vmem:[#allocation3] sm:$0xff] %v2008
        %2017 = vst [vmem:[#allocation3 + $0x48] sm:$0xff] %v2009
        %2018 = vst [vmem:[#allocation3 + $0x90] sm:$0xff] %v2010
        %2019 = vst [vmem:[#allocation3 + $0xd8] sm:$0xff] %v2011
        %v2021 = vshrl.u32 %v1972, 16
        %v2023 = vrot.slane %v2021, 4
        %v2024 = vshll.u32 %v1972, 16
        %v2026 = vrot.slane %v2024, 5
        %v2027 = vor.u32 %v2023, %v2026
        %v2028 = vrot.slane %v2027, 4
        %v2030 = vshll.u32 %v1973, 16
        %v2032 = vrot.slane %v2030, 5
        %v2033 = vsel %vm564, %v2028, %v2032
        %v2035 = vshrl.u32 %v1974, 16
        %v2037 = vrot.slane %v2035, 4
        %v2038 = vshll.u32 %v1974, 16
        %v2040 = vrot.slane %v2038, 5
        %v2041 = vor.u32 %v2037, %v2040
        %v2042 = vrot.slane %v2041, 4
        %v2044 = vshll.u32 %v1975, 16
        %v2046 = vrot.slane %v2044, 5
        %v2047 = vsel %vm564, %v2042, %v2046
        %v2049 = vshrl.u32 %v1976, 16
        %v2051 = vrot.slane %v2049, 4
        %v2052 = vshll.u32 %v1976, 16
        %v2054 = vrot.slane %v2052, 5
        %v2055 = vor.u32 %v2051, %v2054
        %v2056 = vrot.slane %v2055, 4
        %v2058 = vshll.u32 %v1977, 16
        %v2060 = vrot.slane %v2058, 5
        %v2061 = vsel %vm564, %v2056, %v2060
        %v2063 = vshrl.u32 %v1978, 16
        %v2065 = vrot.slane %v2063, 4
        %v2066 = vshll.u32 %v1978, 16
        %v2068 = vrot.slane %v2066, 5
        %v2069 = vor.u32 %v2065, %v2068
        %v2070 = vrot.slane %v2069, 4
        %v2072 = vshll.u32 %v1979, 16
        %v2074 = vrot.slane %v2072, 5
        %v2075 = vsel %vm564, %v2070, %v2074
        %v2077 = vshrl.u32 %v1980, 16
        %v2079 = vrot.slane %v2077, 4
        %v2080 = vshll.u32 %v1980, 16
        %v2082 = vrot.slane %v2080, 5
        %v2083 = vor.u32 %v2079, %v2082
        %v2084 = vrot.slane %v2083, 4
        %v2086 = vshll.u32 %v1981, 16
        %v2088 = vrot.slane %v2086, 5
        %v2089 = vsel %vm564, %v2084, %v2088
        %v2091 = vshrl.u32 %v1982, 16
        %v2093 = vrot.slane %v2091, 4
        %v2094 = vshll.u32 %v1982, 16
        %v2096 = vrot.slane %v2094, 5
        %v2097 = vor.u32 %v2093, %v2096
        %v2098 = vrot.slane %v2097, 4
        %v2100 = vshll.u32 %v1983, 16
        %v2102 = vrot.slane %v2100, 5
        %v2103 = vsel %vm564, %v2098, %v2102
        %v2105 = vshrl.u32 %v1984, 16
        %v2107 = vrot.slane %v2105, 4
        %v2108 = vshll.u32 %v1984, 16
        %v2110 = vrot.slane %v2108, 5
        %v2111 = vor.u32 %v2107, %v2110
        %v2112 = vrot.slane %v2111, 4
        %v2114 = vshll.u32 %v1985, 16
        %v2116 = vrot.slane %v2114, 5
        %v2117 = vsel %vm564, %v2112, %v2116
        %v2119 = vshrl.u32 %v1986, 16
        %v2121 = vrot.slane %v2119, 4
        %v2122 = vshll.u32 %v1986, 16
        %v2124 = vrot.slane %v2122, 5
        %v2125 = vor.u32 %v2121, %v2124
        %v2126 = vrot.slane %v2125, 4
        %v2128 = vshll.u32 %v1987, 16
        %v2130 = vrot.slane %v2128, 5
        %v2131 = vsel %vm564, %v2126, %v2130
        %v2132 = vunpack.c.l.b16 %v2033
        %v2133 = vunpack.c.l.b16 %v2047
        %v2134 = vunpack.c.l.b16 %v2061
        %v2135 = vunpack.c.l.b16 %v2075
        %v2136 = vunpack.c.l.b16 %v2089
        %v2137 = vunpack.c.l.b16 %v2103
        %v2138 = vunpack.c.l.b16 %v2117
        %v2139 = vunpack.c.l.b16 %v2131
        %v2140 = vpack.c.b16 %v2133, %v2132
        %v2141 = vpack.c.b16 %v2135, %v2134
        %v2142 = vpack.c.b16 %v2137, %v2136
        %v2143 = vpack.c.b16 %v2139, %v2138
        %2148 = vst [vmem:[#allocation3 + $0x8] sm:$0xff] %v2140
        %2149 = vst [vmem:[#allocation3 + $0x50] sm:$0xff] %v2141
        %2150 = vst [vmem:[#allocation3 + $0x98] sm:$0xff] %v2142
        %2151 = vst [vmem:[#allocation3 + $0xe0] sm:$0xff] %v2143
        %v2160 = vrot.slane %v1972, 5
        %v2161 = vrot.slane %v2160, 4
        %v2162 = vrot.slane %v1973, 5
        %v2163 = vsel %vm707, %v2161, %v2162
        %v2164 = vrot.slane %v1974, 5
        %v2165 = vrot.slane %v2164, 4
        %v2166 = vrot.slane %v1975, 5
        %v2167 = vsel %vm707, %v2165, %v2166
        %v2168 = vrot.slane %v1976, 5
        %v2169 = vrot.slane %v2168, 4
        %v2170 = vrot.slane %v1977, 5
        %v2171 = vsel %vm707, %v2169, %v2170
        %v2172 = vrot.slane %v1978, 5
        %v2173 = vrot.slane %v2172, 4
        %v2174 = vrot.slane %v1979, 5
        %v2175 = vsel %vm707, %v2173, %v2174
        %v2176 = vrot.slane %v1980, 5
        %v2177 = vrot.slane %v2176, 4
        %v2178 = vrot.slane %v1981, 5
        %v2179 = vsel %vm707, %v2177, %v2178
        %v2180 = vrot.slane %v1982, 5
        %v2181 = vrot.slane %v2180, 4
        %v2182 = vrot.slane %v1983, 5
        %v2183 = vsel %vm707, %v2181, %v2182
        %v2184 = vrot.slane %v1984, 5
        %v2185 = vrot.slane %v2184, 4
        %v2186 = vrot.slane %v1985, 5
        %v2187 = vsel %vm707, %v2185, %v2186
        %v2188 = vrot.slane %v1986, 5
        %v2189 = vrot.slane %v2188, 4
        %v2190 = vrot.slane %v1987, 5
        %v2191 = vsel %vm707, %v2189, %v2190
        %v2192 = vunpack.c.l.b16 %v2163
        %v2193 = vunpack.c.l.b16 %v2167
        %v2194 = vunpack.c.l.b16 %v2171
        %v2195 = vunpack.c.l.b16 %v2175
        %v2196 = vunpack.c.l.b16 %v2179
        %v2197 = vunpack.c.l.b16 %v2183
        %v2198 = vunpack.c.l.b16 %v2187
        %v2199 = vunpack.c.l.b16 %v2191
        %v2200 = vpack.c.b16 %v2193, %v2192
        %v2201 = vpack.c.b16 %v2195, %v2194
        %v2202 = vpack.c.b16 %v2197, %v2196
        %v2203 = vpack.c.b16 %v2199, %v2198
        %2208 = vst [vmem:[#allocation3 + $0x10] sm:$0xff] %v2200
        %2209 = vst [vmem:[#allocation3 + $0x58] sm:$0xff] %v2201
        %2210 = vst [vmem:[#allocation3 + $0xa0] sm:$0xff] %v2202
        %2211 = vst [vmem:[#allocation3 + $0xe8] sm:$0xff] %v2203
        %v2213 = vunpack.c.l.b16 %v1988
        %v2214 = vpack.c.b16 %v2002, %v2001
        %v2215 = vpack.c.b16 %v2004, %v2003
        %v2216 = vpack.c.b16 %v2006, %v2005
        %v2217 = vpack.c.b16 %v2213, %v2007
        %2222 = vst [vmem:[#allocation3 + $0x18] sm:$0xff] %v2214
        %2223 = vst [vmem:[#allocation3 + $0x60] sm:$0xff] %v2215
        %2224 = vst [vmem:[#allocation3 + $0xa8] sm:$0xff] %v2216
        %2225 = vst [vmem:[#allocation3 + $0xf0] sm:$0xff] %v2217
        %v2227 = vshrl.u32 %v1988, 16
        %v2229 = vrot.slane %v2227, 4
        %v2230 = vshll.u32 %v1988, 16
        %v2232 = vrot.slane %v2230, 5
        %v2233 = vor.u32 %v2229, %v2232
        %v2234 = vrot.slane %v2233, 4
        %v2236 = vshll.u32 %v1989, 16
        %v2238 = vrot.slane %v2236, 5
        %v2239 = vsel %vm564, %v2234, %v2238
        %v2240 = vunpack.c.l.b16 %v2239
        %v2241 = vpack.c.b16 %v2134, %v2133
        %v2242 = vpack.c.b16 %v2136, %v2135
        %v2243 = vpack.c.b16 %v2138, %v2137
        %v2244 = vpack.c.b16 %v2240, %v2139
        %2249 = vst [vmem:[#allocation3 + $0x20] sm:$0xff] %v2241
        %2250 = vst [vmem:[#allocation3 + $0x68] sm:$0xff] %v2242
        %2251 = vst [vmem:[#allocation3 + $0xb0] sm:$0xff] %v2243
        %2252 = vst [vmem:[#allocation3 + $0xf8] sm:$0xff] %v2244
        %v2254 = vrot.slane %v1988, 5
        %v2255 = vrot.slane %v2254, 4
        %v2256 = vrot.slane %v1989, 5
        %v2257 = vsel %vm707, %v2255, %v2256
        %v2258 = vunpack.c.l.b16 %v2257
        %v2259 = vpack.c.b16 %v2194, %v2193
        %v2260 = vpack.c.b16 %v2196, %v2195
        %v2261 = vpack.c.b16 %v2198, %v2197
        %v2262 = vpack.c.b16 %v2258, %v2199
        %2267 = vst [vmem:[#allocation3 + $0x28] sm:$0xff] %v2259
        %2268 = vst [vmem:[#allocation3 + $0x70] sm:$0xff] %v2260
        %2269 = vst [vmem:[#allocation3 + $0xb8] sm:$0xff] %v2261
        %2270 = vst [vmem:[#allocation3 + $0x100] sm:$0xff] %v2262
        %v2272 = vunpack.c.l.b16 %v1990
        %v2273 = vpack.c.b16 %v2272, %v2213
        %2275 = vst [vmem:[#allocation3 + $0x30] sm:$0xff] %v2009
        %2276 = vst [vmem:[#allocation3 + $0x78] sm:$0xff] %v2010
        %2277 = vst [vmem:[#allocation3 + $0xc0] sm:$0xff] %v2011
        %2278 = vst [vmem:[#allocation3 + $0x108] sm:$0xff] %v2273
        %v2280 = vshrl.u32 %v1990, 16
        %v2282 = vrot.slane %v2280, 4
        %v2283 = vshll.u32 %v1990, 16
        %v2285 = vrot.slane %v2283, 5
        %v2286 = vor.u32 %v2282, %v2285
        %v2287 = vrot.slane %v2286, 4
        %v2289 = vshll.u32 %v1991, 16
        %v2291 = vrot.slane %v2289, 5
        %v2292 = vsel %vm564, %v2287, %v2291
        %v2293 = vunpack.c.l.b16 %v2292
        %v2294 = vpack.c.b16 %v2293, %v2240
        %2296 = vst [vmem:[#allocation3 + $0x38] sm:$0xff] %v2141
        %2297 = vst [vmem:[#allocation3 + $0x80] sm:$0xff] %v2142
        %2298 = vst [vmem:[#allocation3 + $0xc8] sm:$0xff] %v2143
        %2299 = vst [vmem:[#allocation3 + $0x110] sm:$0xff] %v2294
        %v2301 = vrot.slane %v1990, 5
        %v2302 = vrot.slane %v2301, 4
        %v2303 = vrot.slane %v1991, 5
        %v2304 = vsel %vm707, %v2302, %v2303
        %v2305 = vunpack.c.l.b16 %v2304
        %v2306 = vpack.c.b16 %v2305, %v2258
        %2308 = vst [vmem:[#allocation3 + $0x40] sm:$0xff] %v2201
        %2309 = vst [vmem:[#allocation3 + $0x88] sm:$0xff] %v2202
        %2310 = vst [vmem:[#allocation3 + $0xd0] sm:$0xff] %v2203
        %2311 = vst [vmem:[#allocation3 + $0x118] sm:$0xff] %v2306
        %v2312 = vld [vmem:[#allocation3] sm:$0xff]
        %v2313 = vld [vmem:[#allocation3 + $0x8] sm:$0xff]
        %v2314 = vld [vmem:[#allocation3 + $0x10] sm:$0xff]
        %v2315 = vld [vmem:[#allocation3 + $0x18] sm:$0xff]
        %v2316 = vld [vmem:[#allocation3 + $0x20] sm:$0xff]
        %v2317 = vld [vmem:[#allocation3 + $0x28] sm:$0xff]
        %v2318 = vld [vmem:[#allocation3 + $0x30] sm:$0xff]
        %v2319 = vld [vmem:[#allocation3 + $0x38] sm:$0xff]
        %v2320 = vld [vmem:[#allocation3 + $0x40] sm:$0xff]
        %v2321 = vld [vmem:[#allocation3 + $0x48] sm:$0xff]
        %v2322 = vld [vmem:[#allocation3 + $0x50] sm:$0xff]
        %v2323 = vld [vmem:[#allocation3 + $0x58] sm:$0xff]
        %v2324 = vld [vmem:[#allocation3 + $0x60] sm:$0xff]
        %v2325 = vld [vmem:[#allocation3 + $0x68] sm:$0xff]
        %v2326 = vld [vmem:[#allocation3 + $0x70] sm:$0xff]
        %v2327 = vld [vmem:[#allocation3 + $0x78] sm:$0xff]
        %v2328 = vld [vmem:[#allocation3 + $0x80] sm:$0xff]
        %v2329 = vld [vmem:[#allocation3 + $0x88] sm:$0xff]
        %v2330 = vld [vmem:[#allocation3 + $0x90] sm:$0xff]
        %v2331 = vld [vmem:[#allocation3 + $0x98] sm:$0xff]
        %v2332 = vld [vmem:[#allocation3 + $0xa0] sm:$0xff]
        %v2333 = vld [vmem:[#allocation3 + $0xa8] sm:$0xff]
        %v2334 = vld [vmem:[#allocation3 + $0xb0] sm:$0xff]
        %v2335 = vld [vmem:[#allocation3 + $0xb8] sm:$0xff]
        %v2336 = vld [vmem:[#allocation3 + $0xc0] sm:$0xff]
        %v2337 = vld [vmem:[#allocation3 + $0xc8] sm:$0xff]
        %v2338 = vld [vmem:[#allocation3 + $0xd0] sm:$0xff]
        %v2339 = vld [vmem:[#allocation3 + $0xd8] sm:$0xff]
        %v2340 = vld [vmem:[#allocation3 + $0xe0] sm:$0xff]
        %v2341 = vld [vmem:[#allocation3 + $0xe8] sm:$0xff]
        %v2342 = vld [vmem:[#allocation3 + $0xf0] sm:$0xff]
        %v2343 = vld [vmem:[#allocation3 + $0xf8] sm:$0xff]
        %v2344 = vld [vmem:[#allocation3 + $0x100] sm:$0xff]
        %v2345 = vld [vmem:[#allocation3 + $0x108] sm:$0xff]
        %v2346 = vld [vmem:[#allocation3 + $0x110] sm:$0xff]
        %v2347 = vld [vmem:[#allocation3 + $0x118] sm:$0xff]
        %v2348 = vld [vmem:[#allocation9] sm:$0xf]
        %v2349 = vld [vmem:[#allocation9 + $0x4] sm:$0xf]
        %v2350 = vld [vmem:[#allocation9 + $0x8] sm:$0xf]
        %v2351 = vld [vmem:[#allocation9 + $0xc] sm:$0xf]
        %v2352 = vld [vmem:[#allocation9 + $0x10] sm:$0xf]
        %v2353 = vld [vmem:[#allocation9 + $0x14] sm:$0xf]
        %v2354 = vld [vmem:[#allocation9 + $0x18] sm:$0xf]
        %v2355 = vld [vmem:[#allocation9 + $0x1c] sm:$0xf]
        %v2356 = vld [vmem:[#allocation9 + $0x20] sm:$0xf]
        %v2357 = vld [vmem:[#allocation9 + $0x24] sm:$0xf]
        %v2358 = vld [vmem:[#allocation9 + $0x28] sm:$0xf]
        %v2359 = vld [vmem:[#allocation9 + $0x2c] sm:$0xf]
        %v2360 = vld [vmem:[#allocation9 + $0x30] sm:$0xf]
        %v2361 = vld [vmem:[#allocation9 + $0x34] sm:$0xf]
        %v2362 = vld [vmem:[#allocation9 + $0x38] sm:$0xf]
        %v2363 = vld [vmem:[#allocation9 + $0x3c] sm:$0xf]
        %v2364 = vld [vmem:[#allocation9 + $0x40] sm:$0xf]
        %v2365 = vld [vmem:[#allocation9 + $0x44] sm:$0xf]
        %v2366 = vld [vmem:[#allocation9 + $0x48] sm:$0xf]
        %v2367 = vld [vmem:[#allocation9 + $0x4c] sm:$0xf]
        %v2368 = vld [vmem:[#allocation9 + $0x50] sm:$0xf]
        %v2369 = vld [vmem:[#allocation9 + $0x54] sm:$0xf]
        %v2370 = vld [vmem:[#allocation9 + $0x58] sm:$0xf]
        %v2371 = vld [vmem:[#allocation9 + $0x5c] sm:$0xf]
        %v2372 = vld [vmem:[#allocation9 + $0x60] sm:$0xf]
        %v2373 = vld [vmem:[#allocation9 + $0x64] sm:$0xf]
        %v2374 = vld [vmem:[#allocation9 + $0x68] sm:$0xf]
        %v2375 = vld [vmem:[#allocation9 + $0x6c] sm:$0xf]
        %v2376 = vld [vmem:[#allocation9 + $0x70] sm:$0xf]
        %v2377 = vld [vmem:[#allocation9 + $0x74] sm:$0xf]
        %v2378 = vld [vmem:[#allocation9 + $0x78] sm:$0xf]
        %v2379 = vld [vmem:[#allocation9 + $0x7c] sm:$0xf]
        %v2380 = vld [vmem:[#allocation9 + $0x80] sm:$0xf]
        %v2381 = vld [vmem:[#allocation9 + $0x84] sm:$0xf]
        %v2382 = vld [vmem:[#allocation9 + $0x88] sm:$0xf]
        %v2383 = vld [vmem:[#allocation9 + $0x8c] sm:$0xf]
        %v2384 = vld [vmem:[#allocation9 + $0x90] sm:$0xf]
        %v2385 = vld [vmem:[#allocation9 + $0x94] sm:$0xf]
        %v2386 = vld [vmem:[#allocation9 + $0x98] sm:$0xf]
        %v2387 = vld [vmem:[#allocation9 + $0x9c] sm:$0xf]
        %v2388 = vld [vmem:[#allocation9 + $0xa0] sm:$0xf]
        %v2389 = vld [vmem:[#allocation9 + $0xa4] sm:$0xf]
        %v2390 = vld [vmem:[#allocation9 + $0xa8] sm:$0xf]
        %v2391 = vld [vmem:[#allocation9 + $0xac] sm:$0xf]
        %v2392 = vld [vmem:[#allocation9 + $0xb0] sm:$0xf]
        %v2393 = vld [vmem:[#allocation9 + $0xb4] sm:$0xf]
        %v2394 = vld [vmem:[#allocation9 + $0xb8] sm:$0xf]
        %v2395 = vld [vmem:[#allocation9 + $0xbc] sm:$0xf]
        %v2396 = vld [vmem:[#allocation9 + $0xc0] sm:$0xf]
        %v2397 = vld [vmem:[#allocation9 + $0xc4] sm:$0xf]
        %v2398 = vld [vmem:[#allocation9 + $0xc8] sm:$0xf]
        %v2399 = vld [vmem:[#allocation9 + $0xcc] sm:$0xf]
        %v2400 = vld [vmem:[#allocation9 + $0xd0] sm:$0xf]
        %v2401 = vld [vmem:[#allocation9 + $0xd4] sm:$0xf]
        %v2402 = vld [vmem:[#allocation9 + $0xd8] sm:$0xf]
        %v2403 = vld [vmem:[#allocation9 + $0xdc] sm:$0xf]
        %v2404 = vld [vmem:[#allocation9 + $0xe0] sm:$0xf]
        %v2405 = vld [vmem:[#allocation9 + $0xe4] sm:$0xf]
        %v2406 = vld [vmem:[#allocation9 + $0xe8] sm:$0xf]
        %v2407 = vld [vmem:[#allocation9 + $0xec] sm:$0xf]
        %v2408 = vld [vmem:[#allocation9 + $0xf0] sm:$0xf]
        %v2409 = vld [vmem:[#allocation9 + $0xf4] sm:$0xf]
        %v2410 = vld [vmem:[#allocation9 + $0xf8] sm:$0xf]
        %v2411 = vld [vmem:[#allocation9 + $0xfc] sm:$0xf]
        %v2412 = vld [vmem:[#allocation9 + $0x100] sm:$0xf]
        %v2413 = vld [vmem:[#allocation9 + $0x104] sm:$0xf]
        %v2414 = vld [vmem:[#allocation9 + $0x108] sm:$0xf]
        %v2415 = vld [vmem:[#allocation9 + $0x10c] sm:$0xf]
        %v2416 = vld [vmem:[#allocation9 + $0x110] sm:$0xf]
        %v2417 = vld [vmem:[#allocation9 + $0x114] sm:$0xf]
        %v2418 = vld [vmem:[#allocation9 + $0x118] sm:$0xf]
        %v2419 = vld [vmem:[#allocation9 + $0x11c] sm:$0xf]
        %v2420 = vld [vmem:[#allocation9 + $0x120] sm:$0xf]
        %v2421 = vld [vmem:[#allocation9 + $0x124] sm:$0xf]
        %v2422 = vld [vmem:[#allocation9 + $0x128] sm:$0xf]
        %v2423 = vld [vmem:[#allocation9 + $0x12c] sm:$0xf]
        %v2424 = vld [vmem:[#allocation9 + $0x130] sm:$0xf]
        %v2425 = vld [vmem:[#allocation9 + $0x134] sm:$0xf]
        %v2426 = vld [vmem:[#allocation9 + $0x138] sm:$0xf]
        %v2427 = vld [vmem:[#allocation9 + $0x13c] sm:$0xf]
        %v2428 = vld [vmem:[#allocation9 + $0x140] sm:$0xf]
        %v2429 = vld [vmem:[#allocation9 + $0x144] sm:$0xf]
        %v2430 = vld [vmem:[#allocation9 + $0x148] sm:$0xf]
        %v2431 = vld [vmem:[#allocation9 + $0x14c] sm:$0xf]
        %v2432 = vld [vmem:[#allocation9 + $0x150] sm:$0xf]
        %v2433 = vld [vmem:[#allocation9 + $0x154] sm:$0xf]
        %v2434 = vld [vmem:[#allocation9 + $0x158] sm:$0xf]
        %v2435 = vld [vmem:[#allocation9 + $0x15c] sm:$0xf]
        %v2436 = vld [vmem:[#allocation9 + $0x160] sm:$0xf]
        %v2437 = vld [vmem:[#allocation9 + $0x164] sm:$0xf]
        %v2438 = vld [vmem:[#allocation9 + $0x168] sm:$0xf]
        %v2439 = vld [vmem:[#allocation9 + $0x16c] sm:$0xf]
        %v2440 = vld [vmem:[#allocation9 + $0x170] sm:$0xf]
        %v2441 = vld [vmem:[#allocation9 + $0x174] sm:$0xf]
        %v2442 = vld [vmem:[#allocation9 + $0x178] sm:$0xf]
        %v2443 = vld [vmem:[#allocation9 + $0x17c] sm:$0xf]
        %v2444 = vld [vmem:[#allocation9 + $0x180] sm:$0xf]
        %v2445 = vld [vmem:[#allocation9 + $0x184] sm:$0xf]
        %v2446 = vld [vmem:[#allocation9 + $0x188] sm:$0xf]
        %v2447 = vld [vmem:[#allocation9 + $0x18c] sm:$0xf]
        %v2448 = vld [vmem:[#allocation9 + $0x190] sm:$0xf]
        %v2449 = vld [vmem:[#allocation9 + $0x194] sm:$0xf]
        %v2450 = vld [vmem:[#allocation9 + $0x198] sm:$0xf]
        %v2451 = vld [vmem:[#allocation9 + $0x19c] sm:$0xf]
        %v2452 = vld [vmem:[#allocation9 + $0x1a0] sm:$0xf]
        %v2453 = vld [vmem:[#allocation9 + $0x1a4] sm:$0xf]
        %v2454 = vld [vmem:[#allocation9 + $0x1a8] sm:$0xf]
        %v2455 = vld [vmem:[#allocation9 + $0x1ac] sm:$0xf]
        %v2456 = vld [vmem:[#allocation9 + $0x1b0] sm:$0xf]
        %v2457 = vld [vmem:[#allocation9 + $0x1b4] sm:$0xf]
        %v2458 = vld [vmem:[#allocation9 + $0x1b8] sm:$0xf]
        %v2459 = vld [vmem:[#allocation9 + $0x1bc] sm:$0xf]
        %v2460 = vld [vmem:[#allocation9 + $0x1c0] sm:$0xf]
        %v2461 = vld [vmem:[#allocation9 + $0x1c4] sm:$0xf]
        %v2462 = vld [vmem:[#allocation9 + $0x1c8] sm:$0xf]
        %v2463 = vld [vmem:[#allocation9 + $0x1cc] sm:$0xf]
        %v2464 = vld [vmem:[#allocation9 + $0x1d0] sm:$0xf]
        %v2465 = vld [vmem:[#allocation9 + $0x1d4] sm:$0xf]
        %v2466 = vld [vmem:[#allocation9 + $0x1d8] sm:$0xf]
        %v2467 = vld [vmem:[#allocation9 + $0x1dc] sm:$0xf]
        %v2468 = vld [vmem:[#allocation9 + $0x1e0] sm:$0xf]
        %v2469 = vld [vmem:[#allocation9 + $0x1e4] sm:$0xf]
        %v2470 = vld [vmem:[#allocation9 + $0x1e8] sm:$0xf]
        %v2471 = vld [vmem:[#allocation9 + $0x1ec] sm:$0xf]
        %v2472 = vld [vmem:[#allocation9 + $0x1f0] sm:$0xf]
        %v2473 = vld [vmem:[#allocation9 + $0x1f4] sm:$0xf]
        %v2474 = vld [vmem:[#allocation9 + $0x1f8] sm:$0xf]
        %v2475 = vld [vmem:[#allocation9 + $0x1fc] sm:$0xf]
        %v2476 = vld [vmem:[#allocation9 + $0x200] sm:$0xf]
        %v2477 = vld [vmem:[#allocation9 + $0x204] sm:$0xf]
        %v2478 = vld [vmem:[#allocation9 + $0x208] sm:$0xf]
        %v2479 = vld [vmem:[#allocation9 + $0x20c] sm:$0xf]
        %v2480 = vld [vmem:[#allocation9 + $0x210] sm:$0xf]
        %v2481 = vld [vmem:[#allocation9 + $0x214] sm:$0xf]
        %v2482 = vld [vmem:[#allocation9 + $0x218] sm:$0xf]
        %v2483 = vld [vmem:[#allocation9 + $0x21c] sm:$0xf]
        %v2484 = vld [vmem:[#allocation9 + $0x220] sm:$0xf]
        %v2485 = vld [vmem:[#allocation9 + $0x224] sm:$0xf]
        %v2486 = vld [vmem:[#allocation9 + $0x228] sm:$0xf]
        %v2487 = vld [vmem:[#allocation9 + $0x22c] sm:$0xf]
        %v2488 = vld [vmem:[#allocation9 + $0x230] sm:$0xf]
        %v2489 = vld [vmem:[#allocation9 + $0x234] sm:$0xf]
        %v2490 = vld [vmem:[#allocation9 + $0x238] sm:$0xf]
        %v2491 = vld [vmem:[#allocation9 + $0x23c] sm:$0xf]
        %v2492 = vld [vmem:[%s4] sm:$0x1]
        %v2494 = vlaneseq
        %v2495 = vshrl.u32 %v2494, 7
        %v2496 = vsub.s32 0, %v2495
        %v2497 = vrot.slane %v2492, %v2496
        %v2643 = vunpack.c.l.b16 %v2348
        %v2644 = vunpack.c.l.b16 %v2349
        %v2645 = vunpack.c.l.b16 %v2350
        %v2646 = vunpack.c.l.b16 %v2351
        %v2647 = vunpack.c.l.b16 %v2352
        %v2648 = vunpack.c.l.b16 %v2353
        %v2649 = vunpack.c.l.b16 %v2354
        %v2650 = vunpack.c.l.b16 %v2355
        %v2651 = vunpack.c.l.b16 %v2356
        %v2652 = vunpack.c.l.b16 %v2357
        %v2653 = vunpack.c.l.b16 %v2358
        %v2654 = vunpack.c.l.b16 %v2359
        %v2655 = vunpack.c.l.b16 %v2360
        %v2656 = vunpack.c.l.b16 %v2361
        %v2657 = vunpack.c.l.b16 %v2362
        %v2658 = vunpack.c.l.b16 %v2363
        %v2659 = vunpack.c.l.b16 %v2364
        %v2660 = vunpack.c.l.b16 %v2365
        %v2661 = vunpack.c.l.b16 %v2366
        %v2662 = vunpack.c.l.b16 %v2367
        %v2663 = vunpack.c.l.b16 %v2368
        %v2664 = vunpack.c.l.b16 %v2369
        %v2665 = vunpack.c.l.b16 %v2370
        %v2666 = vunpack.c.l.b16 %v2371
        %v2667 = vunpack.c.l.b16 %v2372
        %v2668 = vunpack.c.l.b16 %v2373
        %v2669 = vunpack.c.l.b16 %v2374
        %v2670 = vunpack.c.l.b16 %v2375
        %v2671 = vunpack.c.l.b16 %v2376
        %v2672 = vunpack.c.l.b16 %v2377
        %v2673 = vunpack.c.l.b16 %v2378
        %v2674 = vunpack.c.l.b16 %v2379
        %v2675 = vunpack.c.l.b16 %v2380
        %v2676 = vunpack.c.l.b16 %v2381
        %v2677 = vunpack.c.l.b16 %v2382
        %v2678 = vunpack.c.l.b16 %v2383
        %v2679 = vunpack.c.l.b16 %v2384
        %v2680 = vunpack.c.l.b16 %v2385
        %v2681 = vunpack.c.l.b16 %v2386
        %v2682 = vunpack.c.l.b16 %v2387
        %v2683 = vunpack.c.l.b16 %v2388
        %v2684 = vunpack.c.l.b16 %v2389
        %v2685 = vunpack.c.l.b16 %v2390
        %v2686 = vunpack.c.l.b16 %v2391
        %v2687 = vunpack.c.l.b16 %v2392
        %v2688 = vunpack.c.l.b16 %v2393
        %v2689 = vunpack.c.l.b16 %v2394
        %v2690 = vunpack.c.l.b16 %v2395
        %v2691 = vunpack.c.l.b16 %v2396
        %v2692 = vunpack.c.l.b16 %v2397
        %v2693 = vunpack.c.l.b16 %v2398
        %v2694 = vunpack.c.l.b16 %v2399
        %v2695 = vunpack.c.l.b16 %v2400
        %v2696 = vunpack.c.l.b16 %v2401
        %v2697 = vunpack.c.l.b16 %v2402
        %v2698 = vunpack.c.l.b16 %v2403
        %v2699 = vunpack.c.l.b16 %v2404
        %v2700 = vunpack.c.l.b16 %v2405
        %v2701 = vunpack.c.l.b16 %v2406
        %v2702 = vunpack.c.l.b16 %v2407
        %v2703 = vunpack.c.l.b16 %v2408
        %v2704 = vunpack.c.l.b16 %v2409
        %v2705 = vunpack.c.l.b16 %v2410
        %v2706 = vunpack.c.l.b16 %v2411
        %v2707 = vunpack.c.l.b16 %v2412
        %v2708 = vunpack.c.l.b16 %v2413
        %v2709 = vunpack.c.l.b16 %v2414
        %v2710 = vunpack.c.l.b16 %v2415
        %v2711 = vunpack.c.l.b16 %v2416
        %v2712 = vunpack.c.l.b16 %v2417
        %v2713 = vunpack.c.l.b16 %v2418
        %v2714 = vunpack.c.l.b16 %v2419
        %v2715 = vunpack.c.l.b16 %v2420
        %v2716 = vunpack.c.l.b16 %v2421
        %v2717 = vunpack.c.l.b16 %v2422
        %v2718 = vunpack.c.l.b16 %v2423
        %v2719 = vunpack.c.l.b16 %v2424
        %v2720 = vunpack.c.l.b16 %v2425
        %v2721 = vunpack.c.l.b16 %v2426
        %v2722 = vunpack.c.l.b16 %v2427
        %v2723 = vunpack.c.l.b16 %v2428
        %v2724 = vunpack.c.l.b16 %v2429
        %v2725 = vunpack.c.l.b16 %v2430
        %v2726 = vunpack.c.l.b16 %v2431
        %v2727 = vunpack.c.l.b16 %v2432
        %v2728 = vunpack.c.l.b16 %v2433
        %v2729 = vunpack.c.l.b16 %v2434
        %v2730 = vunpack.c.l.b16 %v2435
        %v2731 = vunpack.c.l.b16 %v2436
        %v2732 = vunpack.c.l.b16 %v2437
        %v2733 = vunpack.c.l.b16 %v2438
        %v2734 = vunpack.c.l.b16 %v2439
        %v2735 = vunpack.c.l.b16 %v2440
        %v2736 = vunpack.c.l.b16 %v2441
        %v2737 = vunpack.c.l.b16 %v2442
        %v2738 = vunpack.c.l.b16 %v2443
        %v2739 = vunpack.c.l.b16 %v2444
        %v2740 = vunpack.c.l.b16 %v2445
        %v2741 = vunpack.c.l.b16 %v2446
        %v2742 = vunpack.c.l.b16 %v2447
        %v2743 = vunpack.c.l.b16 %v2448
        %v2744 = vunpack.c.l.b16 %v2449
        %v2745 = vunpack.c.l.b16 %v2450
        %v2746 = vunpack.c.l.b16 %v2451
        %v2747 = vunpack.c.l.b16 %v2452
        %v2748 = vunpack.c.l.b16 %v2453
        %v2749 = vunpack.c.l.b16 %v2454
        %v2750 = vunpack.c.l.b16 %v2455
        %v2751 = vunpack.c.l.b16 %v2456
        %v2752 = vunpack.c.l.b16 %v2457
        %v2753 = vunpack.c.l.b16 %v2458
        %v2754 = vunpack.c.l.b16 %v2459
        %v2755 = vunpack.c.l.b16 %v2460
        %v2756 = vunpack.c.l.b16 %v2461
        %v2757 = vunpack.c.l.b16 %v2462
        %v2758 = vunpack.c.l.b16 %v2463
        %v2759 = vunpack.c.l.b16 %v2464
        %v2760 = vunpack.c.l.b16 %v2465
        %v2761 = vunpack.c.l.b16 %v2466
        %v2762 = vunpack.c.l.b16 %v2467
        %v2763 = vunpack.c.l.b16 %v2468
        %v2764 = vunpack.c.l.b16 %v2469
        %v2765 = vunpack.c.l.b16 %v2470
        %v2766 = vunpack.c.l.b16 %v2471
        %v2767 = vunpack.c.l.b16 %v2472
        %v2768 = vunpack.c.l.b16 %v2473
        %v2769 = vunpack.c.l.b16 %v2474
        %v2770 = vunpack.c.l.b16 %v2475
        %v2771 = vunpack.c.l.b16 %v2476
        %v2772 = vunpack.c.l.b16 %v2477
        %v2773 = vunpack.c.l.b16 %v2478
        %v2774 = vunpack.c.l.b16 %v2479
        %v2775 = vunpack.c.l.b16 %v2480
        %v2776 = vunpack.c.l.b16 %v2481
        %v2777 = vunpack.c.l.b16 %v2482
        %v2778 = vunpack.c.l.b16 %v2483
        %v2779 = vunpack.c.l.b16 %v2484
        %v2780 = vunpack.c.l.b16 %v2485
        %v2781 = vunpack.c.l.b16 %v2486
        %v2782 = vunpack.c.l.b16 %v2487
        %v2783 = vunpack.c.l.b16 %v2488
        %v2784 = vunpack.c.l.b16 %v2489
        %v2785 = vunpack.c.l.b16 %v2490
        %v2786 = vunpack.c.l.b16 %v2491
        %v2787 = vpack.c.b16 %v2644, %v2643
        %v2788 = vpack.c.b16 %v2646, %v2645
        %v2789 = vpack.c.b16 %v2648, %v2647
        %v2790 = vpack.c.b16 %v2650, %v2649
        %v2791 = vpack.c.b16 %v2652, %v2651
        %v2792 = vpack.c.b16 %v2654, %v2653
        %v2793 = vpack.c.b16 %v2656, %v2655
        %v2794 = vpack.c.b16 %v2658, %v2657
        %v2795 = vpack.c.b16 %v2660, %v2659
        %v2796 = vpack.c.b16 %v2662, %v2661
        %v2797 = vpack.c.b16 %v2664, %v2663
        %v2798 = vpack.c.b16 %v2666, %v2665
        %v2799 = vpack.c.b16 %v2668, %v2667
        %v2800 = vpack.c.b16 %v2670, %v2669
        %v2801 = vpack.c.b16 %v2672, %v2671
        %v2802 = vpack.c.b16 %v2674, %v2673
        %v2803 = vpack.c.b16 %v2676, %v2675
        %v2804 = vpack.c.b16 %v2678, %v2677
        %v2805 = vpack.c.b16 %v2680, %v2679
        %v2806 = vpack.c.b16 %v2682, %v2681
        %v2807 = vpack.c.b16 %v2684, %v2683
        %v2808 = vpack.c.b16 %v2686, %v2685
        %v2809 = vpack.c.b16 %v2688, %v2687
        %v2810 = vpack.c.b16 %v2690, %v2689
        %v2811 = vpack.c.b16 %v2692, %v2691
        %v2812 = vpack.c.b16 %v2694, %v2693
        %v2813 = vpack.c.b16 %v2696, %v2695
        %v2814 = vpack.c.b16 %v2698, %v2697
        %v2815 = vpack.c.b16 %v2700, %v2699
        %v2816 = vpack.c.b16 %v2702, %v2701
        %v2817 = vpack.c.b16 %v2704, %v2703
        %v2818 = vpack.c.b16 %v2706, %v2705
        %v2819 = vpack.c.b16 %v2708, %v2707
        %v2820 = vpack.c.b16 %v2710, %v2709
        %v2821 = vpack.c.b16 %v2712, %v2711
        %v2822 = vpack.c.b16 %v2714, %v2713
        %v2823 = vpack.c.b16 %v2716, %v2715
        %v2824 = vpack.c.b16 %v2718, %v2717
        %v2825 = vpack.c.b16 %v2720, %v2719
        %v2826 = vpack.c.b16 %v2722, %v2721
        %v2827 = vpack.c.b16 %v2724, %v2723
        %v2828 = vpack.c.b16 %v2726, %v2725
        %v2829 = vpack.c.b16 %v2728, %v2727
        %v2830 = vpack.c.b16 %v2730, %v2729
        %v2831 = vpack.c.b16 %v2732, %v2731
        %v2832 = vpack.c.b16 %v2734, %v2733
        %v2833 = vpack.c.b16 %v2736, %v2735
        %v2834 = vpack.c.b16 %v2738, %v2737
        %v2835 = vpack.c.b16 %v2740, %v2739
        %v2836 = vpack.c.b16 %v2742, %v2741
        %v2837 = vpack.c.b16 %v2744, %v2743
        %v2838 = vpack.c.b16 %v2746, %v2745
        %v2839 = vpack.c.b16 %v2748, %v2747
        %v2840 = vpack.c.b16 %v2750, %v2749
        %v2841 = vpack.c.b16 %v2752, %v2751
        %v2842 = vpack.c.b16 %v2754, %v2753
        %v2843 = vpack.c.b16 %v2756, %v2755
        %v2844 = vpack.c.b16 %v2758, %v2757
        %v2845 = vpack.c.b16 %v2760, %v2759
        %v2846 = vpack.c.b16 %v2762, %v2761
        %v2847 = vpack.c.b16 %v2764, %v2763
        %v2848 = vpack.c.b16 %v2766, %v2765
        %v2849 = vpack.c.b16 %v2768, %v2767
        %v2850 = vpack.c.b16 %v2770, %v2769
        %v2851 = vpack.c.b16 %v2772, %v2771
        %v2852 = vpack.c.b16 %v2774, %v2773
        %v2853 = vpack.c.b16 %v2776, %v2775
        %v2854 = vpack.c.b16 %v2778, %v2777
        %v2855 = vpack.c.b16 %v2780, %v2779
        %v2856 = vpack.c.b16 %v2782, %v2781
        %v2857 = vpack.c.b16 %v2784, %v2783
        %v2858 = vpack.c.b16 %v2786, %v2785
        %2931 = vmatprep.subr.bf16.mxu0 0
        %2932 = vmatpush1.bf16.msra.mxu0 %v2787
        %2933 = vmatprep.subr.bf16.mxu0 0
        %2934 = vmatpush1.bf16.msra.mxu0 %v2788
        %2935 = vmatprep.subr.bf16.mxu0 0
        %2936 = vmatpush1.bf16.msra.mxu0 %v2789
        %2937 = vmatprep.subr.bf16.mxu0 0
        %2938 = vmatpush1.bf16.msra.mxu0 %v2790
        %2939 = vmatprep.subr.bf16.mxu0 0
        %2940 = vmatpush1.bf16.msra.mxu0 %v2791
        %2941 = vmatprep.subr.bf16.mxu0 0
        %2942 = vmatpush1.bf16.msra.mxu0 %v2792
        %2943 = vmatprep.subr.bf16.mxu0 0
        %2944 = vmatpush1.bf16.msra.mxu0 %v2793
        %2945 = vmatprep.subr.bf16.mxu0 0
        %2946 = vmatpush1.bf16.msra.mxu0 %v2794
        %2947 = vmatprep.subr.bf16.mxu0 0
        %2948 = vmatpush1.bf16.msra.mxu0 %v2795
        %2949 = vmatprep.subr.bf16.mxu0 0
        %2950 = vmatpush1.bf16.msra.mxu0 %v2796
        %2951 = vmatprep.subr.bf16.mxu0 0
        %2952 = vmatpush1.bf16.msra.mxu0 %v2797
        %2953 = vmatprep.subr.bf16.mxu0 0
        %2954 = vmatpush1.bf16.msra.mxu0 %v2798
        %2955 = vmatprep.subr.bf16.mxu0 0
        %2956 = vmatpush1.bf16.msra.mxu0 %v2799
        %2957 = vmatprep.subr.bf16.mxu0 0
        %2958 = vmatpush1.bf16.msra.mxu0 %v2800
        %2959 = vmatprep.subr.bf16.mxu0 0
        %2960 = vmatpush1.bf16.msra.mxu0 %v2801
        %2961 = vmatprep.subr.bf16.mxu0 0
        %2962 = vmatpush1.bf16.msra.mxu0 %v2802
        %2963 = vmatprep.mubr.bf16.mxu0 %v2313
        %2964 = vmatmul.mubr.bf16.gmra.mrb[0].mxu0 %v2312
        %v2965 = vpop.f32.mrb[0].mxu0
        %v2966 = vadd.f32 %v2497, %v2965
        %v2967 = vpop.f32.mrb[0].mxu0
        %v2968 = vpop.f32.mrb[0].mxu0
        %v2969 = vadd.f32 %v2497, %v2968
        %v2970 = vpop.f32.mrb[0].mxu0
        %2971 = vmatprep.mubr.bf16.mxu0 %v2322
        %2972 = vmatmul.mubr.bf16.gmra.mrb[0].mxu0 %v2321
        %v2973 = vpop.f32.mrb[0].mxu0
        %v2974 = vadd.f32 %v2497, %v2973
        %v2975 = vpop.f32.mrb[0].mxu0
        %v2976 = vpop.f32.mrb[0].mxu0
        %v2977 = vadd.f32 %v2497, %v2976
        %v2978 = vpop.f32.mrb[0].mxu0
        %2979 = vmatprep.mubr.bf16.mxu0 %v2331
        %2980 = vmatmul.mubr.bf16.gmra.mrb[0].mxu0 %v2330
        %v2981 = vpop.f32.mrb[0].mxu0
        %v2982 = vadd.f32 %v2497, %v2981
        %v2983 = vpop.f32.mrb[0].mxu0
        %v2984 = vpop.f32.mrb[0].mxu0
        %v2985 = vadd.f32 %v2497, %v2984
        %v2986 = vpop.f32.mrb[0].mxu0
        %2987 = vmatprep.mubr.bf16.mxu0 %v2340
        %2988 = vmatmul.mubr.bf16.gmra.mrb[0].mxu0 %v2339
        %v2989 = vpop.f32.mrb[0].mxu0
        %v2990 = vadd.f32 %v2497, %v2989
        %v2991 = vpop.f32.mrb[0].mxu0
        %v2992 = vpop.f32.mrb[0].mxu0
        %v2993 = vadd.f32 %v2497, %v2992
        %v2994 = vpop.f32.mrb[0].mxu0
        %2995 = vdwg.mxu0
        %2996 = vmatprep.subr.bf16.mxu0 0
        %2997 = vmatpush1.bf16.msra.mxu0 %v2803
        %2998 = vmatprep.subr.bf16.mxu0 0
        %2999 = vmatpush1.bf16.msra.mxu0 %v2804
        %3000 = vmatprep.subr.bf16.mxu0 0
        %3001 = vmatpush1.bf16.msra.mxu0 %v2805
        %3002 = vmatprep.subr.bf16.mxu0 0
        %3003 = vmatpush1.bf16.msra.mxu0 %v2806
        %3004 = vmatprep.subr.bf16.mxu0 0
        %3005 = vmatpush1.bf16.msra.mxu0 %v2807
        %3006 = vmatprep.subr.bf16.mxu0 0
        %3007 = vmatpush1.bf16.msra.mxu0 %v2808
        %3008 = vmatprep.subr.bf16.mxu0 0
        %3009 = vmatpush1.bf16.msra.mxu0 %v2809
        %3010 = vmatprep.subr.bf16.mxu0 0
        %3011 = vmatpush1.bf16.msra.mxu0 %v2810
        %3012 = vmatprep.subr.bf16.mxu0 0
        %3013 = vmatpush1.bf16.msra.mxu0 %v2811
        %3014 = vmatprep.subr.bf16.mxu0 0
        %3015 = vmatpush1.bf16.msra.mxu0 %v2812
        %3016 = vmatprep.subr.bf16.mxu0 0
        %3017 = vmatpush1.bf16.msra.mxu0 %v2813
        %3018 = vmatprep.subr.bf16.mxu0 0
        %3019 = vmatpush1.bf16.msra.mxu0 %v2814
        %3020 = vmatprep.subr.bf16.mxu0 0
        %3021 = vmatpush1.bf16.msra.mxu0 %v2815
        %3022 = vmatprep.subr.bf16.mxu0 0
        %3023 = vmatpush1.bf16.msra.mxu0 %v2816
        %3024 = vmatprep.subr.bf16.mxu0 0
        %3025 = vmatpush1.bf16.msra.mxu0 %v2817
        %3026 = vmatprep.subr.bf16.mxu0 0
        %3027 = vmatpush1.bf16.msra.mxu0 %v2818
        %3028 = vmatprep.mubr.bf16.mxu0 %v2315
        %3029 = vmatmul.mubr.bf16.gmra.mrb[0].mxu0 %v2314
        %v3030 = vpop.f32.mrb[0].mxu0
        %v3031 = vadd.f32 %v2966, %v3030
        %v3032 = vpop.f32.mrb[0].mxu0
        %v3033 = vpop.f32.mrb[0].mxu0
        %v3034 = vadd.f32 %v2969, %v3033
        %v3035 = vpop.f32.mrb[0].mxu0
        %3036 = vmatprep.mubr.bf16.mxu0 %v2324
        %3037 = vmatmul.mubr.bf16.gmra.mrb[0].mxu0 %v2323
        %v3038 = vpop.f32.mrb[0].mxu0
        %v3039 = vadd.f32 %v2974, %v3038
        %v3040 = vpop.f32.mrb[0].mxu0
        %v3041 = vpop.f32.mrb[0].mxu0
        %v3042 = vadd.f32 %v2977, %v3041
        %v3043 = vpop.f32.mrb[0].mxu0
        %3044 = vmatprep.mubr.bf16.mxu0 %v2333
        %3045 = vmatmul.mubr.bf16.gmra.mrb[0].mxu0 %v2332
        %v3046 = vpop.f32.mrb[0].mxu0
        %v3047 = vadd.f32 %v2982, %v3046
        %v3048 = vpop.f32.mrb[0].mxu0
        %v3049 = vpop.f32.mrb[0].mxu0
        %v3050 = vadd.f32 %v2985, %v3049
        %v3051 = vpop.f32.mrb[0].mxu0
        %3052 = vmatprep.mubr.bf16.mxu0 %v2342
        %3053 = vmatmul.mubr.bf16.gmra.mrb[0].mxu0 %v2341
        %v3054 = vpop.f32.mrb[0].mxu0
        %v3055 = vadd.f32 %v2990, %v3054
        %v3056 = vpop.f32.mrb[0].mxu0
        %v3057 = vpop.f32.mrb[0].mxu0
        %v3058 = vadd.f32 %v2993, %v3057
        %v3059 = vpop.f32.mrb[0].mxu0
        %3060 = vdwg.mxu0
        %3061 = vmatprep.subr.bf16.mxu0 0
        %3062 = vmatpush1.bf16.msra.mxu0 %v2819
        %3063 = vmatprep.subr.bf16.mxu0 0
        %3064 = vmatpush1.bf16.msra.mxu0 %v2820
        %3065 = vmatprep.subr.bf16.mxu0 0
        %3066 = vmatpush1.bf16.msra.mxu0 %v2821
        %3067 = vmatprep.subr.bf16.mxu0 0
        %3068 = vmatpush1.bf16.msra.mxu0 %v2822
        %3069 = vmatprep.subr.bf16.mxu0 0
        %3070 = vmatpush1.bf16.msra.mxu0 %v2823
        %3071 = vmatprep.subr.bf16.mxu0 0
        %3072 = vmatpush1.bf16.msra.mxu0 %v2824
        %3073 = vmatprep.subr.bf16.mxu0 0
        %3074 = vmatpush1.bf16.msra.mxu0 %v2825
        %3075 = vmatprep.subr.bf16.mxu0 0
        %3076 = vmatpush1.bf16.msra.mxu0 %v2826
        %3077 = vmatprep.subr.bf16.mxu0 0
        %3078 = vmatpush1.bf16.msra.mxu0 %v2827
        %3079 = vmatprep.subr.bf16.mxu0 0
        %3080 = vmatpush1.bf16.msra.mxu0 %v2828
        %3081 = vmatprep.subr.bf16.mxu0 0
        %3082 = vmatpush1.bf16.msra.mxu0 %v2829
        %3083 = vmatprep.subr.bf16.mxu0 0
        %3084 = vmatpush1.bf16.msra.mxu0 %v2830
        %3085 = vmatprep.subr.bf16.mxu0 0
        %3086 = vmatpush1.bf16.msra.mxu0 %v2831
        %3087 = vmatprep.subr.bf16.mxu0 0
        %3088 = vmatpush1.bf16.msra.mxu0 %v2832
        %3089 = vmatprep.subr.bf16.mxu0 0
        %3090 = vmatpush1.bf16.msra.mxu0 %v2833
        %3091 = vmatprep.subr.bf16.mxu0 0
        %3092 = vmatpush1.bf16.msra.mxu0 %v2834
        %3093 = vmatprep.mubr.bf16.mxu0 %v2317
        %3094 = vmatmul.mubr.bf16.gmra.mrb[0].mxu0 %v2316
        %v3095 = vpop.f32.mrb[0].mxu0
        %v3096 = vadd.f32 %v3031, %v3095
        %v3097 = vpop.f32.mrb[0].mxu0
        %v3098 = vpop.f32.mrb[0].mxu0
        %v3099 = vadd.f32 %v3034, %v3098
        %v3100 = vpop.f32.mrb[0].mxu0
        %3101 = vmatprep.mubr.bf16.mxu0 %v2326
        %3102 = vmatmul.mubr.bf16.gmra.mrb[0].mxu0 %v2325
        %v3103 = vpop.f32.mrb[0].mxu0
        %v3104 = vadd.f32 %v3039, %v3103
        %v3105 = vpop.f32.mrb[0].mxu0
        %v3106 = vpop.f32.mrb[0].mxu0
        %v3107 = vadd.f32 %v3042, %v3106
        %v3108 = vpop.f32.mrb[0].mxu0
        %3109 = vmatprep.mubr.bf16.mxu0 %v2335
        %3110 = vmatmul.mubr.bf16.gmra.mrb[0].mxu0 %v2334
        %v3111 = vpop.f32.mrb[0].mxu0
        %v3112 = vadd.f32 %v3047, %v3111
        %v3113 = vpop.f32.mrb[0].mxu0
        %v3114 = vpop.f32.mrb[0].mxu0
        %v3115 = vadd.f32 %v3050, %v3114
        %v3116 = vpop.f32.mrb[0].mxu0
        %3117 = vmatprep.mubr.bf16.mxu0 %v2344
        %3118 = vmatmul.mubr.bf16.gmra.mrb[0].mxu0 %v2343
        %v3119 = vpop.f32.mrb[0].mxu0
        %v3120 = vadd.f32 %v3055, %v3119
        %v3121 = vpop.f32.mrb[0].mxu0
        %v3122 = vpop.f32.mrb[0].mxu0
        %v3123 = vadd.f32 %v3058, %v3122
        %v3124 = vpop.f32.mrb[0].mxu0
        %3125 = vdwg.mxu0
        %3126 = vmatprep.subr.bf16.mxu0 0
        %3127 = vmatpush1.bf16.msra.mxu0 %v2835
        %3128 = vmatprep.subr.bf16.mxu0 0
        %3129 = vmatpush1.bf16.msra.mxu0 %v2836
        %3130 = vmatprep.subr.bf16.mxu0 0
        %3131 = vmatpush1.bf16.msra.mxu0 %v2837
        %3132 = vmatprep.subr.bf16.mxu0 0
        %3133 = vmatpush1.bf16.msra.mxu0 %v2838
        %3134 = vmatprep.subr.bf16.mxu0 0
        %3135 = vmatpush1.bf16.msra.mxu0 %v2839
        %3136 = vmatprep.subr.bf16.mxu0 0
        %3137 = vmatpush1.bf16.msra.mxu0 %v2840
        %3138 = vmatprep.subr.bf16.mxu0 0
        %3139 = vmatpush1.bf16.msra.mxu0 %v2841
        %3140 = vmatprep.subr.bf16.mxu0 0
        %3141 = vmatpush1.bf16.msra.mxu0 %v2842
        %3142 = vmatprep.subr.bf16.mxu0 0
        %3143 = vmatpush1.bf16.msra.mxu0 %v2843
        %3144 = vmatprep.subr.bf16.mxu0 0
        %3145 = vmatpush1.bf16.msra.mxu0 %v2844
        %3146 = vmatprep.subr.bf16.mxu0 0
        %3147 = vmatpush1.bf16.msra.mxu0 %v2845
        %3148 = vmatprep.subr.bf16.mxu0 0
        %3149 = vmatpush1.bf16.msra.mxu0 %v2846
        %3150 = vmatprep.subr.bf16.mxu0 0
        %3151 = vmatpush1.bf16.msra.mxu0 %v2847
        %3152 = vmatprep.subr.bf16.mxu0 0
        %3153 = vmatpush1.bf16.msra.mxu0 %v2848
        %3154 = vmatprep.subr.bf16.mxu0 0
        %3155 = vmatpush1.bf16.msra.mxu0 %v2849
        %3156 = vmatprep.subr.bf16.mxu0 0
        %3157 = vmatpush1.bf16.msra.mxu0 %v2850
        %3158 = vmatprep.mubr.bf16.mxu0 %v2319
        %3159 = vmatmul.mubr.bf16.gmra.mrb[0].mxu0 %v2318
        %v3160 = vpop.f32.mrb[0].mxu0
        %v3161 = vadd.f32 %v3096, %v3160
        %v3162 = vpop.f32.mrb[0].mxu0
        %v3163 = vpop.f32.mrb[0].mxu0
        %v3164 = vadd.f32 %v3099, %v3163
        %v3165 = vpop.f32.mrb[0].mxu0
        %3166 = vmatprep.mubr.bf16.mxu0 %v2328
        %3167 = vmatmul.mubr.bf16.gmra.mrb[0].mxu0 %v2327
        %v3168 = vpop.f32.mrb[0].mxu0
        %v3169 = vadd.f32 %v3104, %v3168
        %v3170 = vpop.f32.mrb[0].mxu0
        %v3171 = vpop.f32.mrb[0].mxu0
        %v3172 = vadd.f32 %v3107, %v3171
        %v3173 = vpop.f32.mrb[0].mxu0
        %3174 = vmatprep.mubr.bf16.mxu0 %v2337
        %3175 = vmatmul.mubr.bf16.gmra.mrb[0].mxu0 %v2336
        %v3176 = vpop.f32.mrb[0].mxu0
        %v3177 = vadd.f32 %v3112, %v3176
        %v3178 = vpop.f32.mrb[0].mxu0
        %v3179 = vpop.f32.mrb[0].mxu0
        %v3180 = vadd.f32 %v3115, %v3179
        %v3181 = vpop.f32.mrb[0].mxu0
        %3182 = vmatprep.mubr.bf16.mxu0 %v2346
        %3183 = vmatmul.mubr.bf16.gmra.mrb[0].mxu0 %v2345
        %v3184 = vpop.f32.mrb[0].mxu0
        %v3185 = vadd.f32 %v3120, %v3184
        %v3186 = vpop.f32.mrb[0].mxu0
        %v3187 = vpop.f32.mrb[0].mxu0
        %v3188 = vadd.f32 %v3123, %v3187
        %v3189 = vpop.f32.mrb[0].mxu0
        %3190 = vdwg.mxu0
        %3191 = vmatprep.subr.bf16.mxu0 0
        %3192 = vmatpush1.bf16.msra.mxu0 %v2851
        %3193 = vmatprep.subr.bf16.mxu0 0
        %3194 = vmatpush1.bf16.msra.mxu0 %v2852
        %3195 = vmatprep.subr.bf16.mxu0 0
        %3196 = vmatpush1.bf16.msra.mxu0 %v2853
        %3197 = vmatprep.subr.bf16.mxu0 0
        %3198 = vmatpush1.bf16.msra.mxu0 %v2854
        %3199 = vmatprep.subr.bf16.mxu0 0
        %3200 = vmatpush1.bf16.msra.mxu0 %v2855
        %3201 = vmatprep.subr.bf16.mxu0 0
        %3202 = vmatpush1.bf16.msra.mxu0 %v2856
        %3203 = vmatprep.subr.bf16.mxu0 0
        %3204 = vmatpush1.bf16.msra.mxu0 %v2857
        %3205 = vmatprep.subr.bf16.mxu0 0
        %3206 = vmatpush1.bf16.msra.mxu0 %v2858
        %3207 = vmatprep.subr.bf16.mxu0 0
        %3208 = vmatpush1.bf16.msra.mxu0 0
        %3209 = vmatprep.subr.bf16.mxu0 0
        %3210 = vmatpush1.bf16.msra.mxu0 0
        %3211 = vmatprep.subr.bf16.mxu0 0
        %3212 = vmatpush1.bf16.msra.mxu0 0
        %3213 = vmatprep.subr.bf16.mxu0 0
        %3214 = vmatpush1.bf16.msra.mxu0 0
        %3215 = vmatprep.subr.bf16.mxu0 0
        %3216 = vmatpush1.bf16.msra.mxu0 0
        %3217 = vmatprep.subr.bf16.mxu0 0
        %3218 = vmatpush1.bf16.msra.mxu0 0
        %3219 = vmatprep.subr.bf16.mxu0 0
        %3220 = vmatpush1.bf16.msra.mxu0 0
        %3221 = vmatprep.subr.bf16.mxu0 0
        %3222 = vmatpush1.bf16.msra.mxu0 0
        %3223 = vmatprep.mubr.bf16.mxu0 0
        %3224 = vmatmul.mubr.bf16.gmra.mrb[0].mxu0 %v2320
        %v3225 = vpop.f32.mrb[0].mxu0
        %v3226 = vadd.f32 %v3161, %v3225
        %v3227 = vpop.f32.mrb[0].mxu0
        %v3228 = vpop.f32.mrb[0].mxu0
        %v3229 = vadd.f32 %v3164, %v3228
        %v3230 = vpop.f32.mrb[0].mxu0
        %3231 = vmatprep.mubr.bf16.mxu0 0
        %3232 = vmatmul.mubr.bf16.gmra.mrb[0].mxu0 %v2329
        %v3233 = vpop.f32.mrb[0].mxu0
        %v3234 = vadd.f32 %v3169, %v3233
        %v3235 = vpop.f32.mrb[0].mxu0
        %v3236 = vpop.f32.mrb[0].mxu0
        %v3237 = vadd.f32 %v3172, %v3236
        %v3238 = vpop.f32.mrb[0].mxu0
        %3239 = vmatprep.mubr.bf16.mxu0 0
        %3240 = vmatmul.mubr.bf16.gmra.mrb[0].mxu0 %v2338
        %v3241 = vpop.f32.mrb[0].mxu0
        %v3242 = vadd.f32 %v3177, %v3241
        %v3243 = vpop.f32.mrb[0].mxu0
        %v3244 = vpop.f32.mrb[0].mxu0
        %v3245 = vadd.f32 %v3180, %v3244
        %v3246 = vpop.f32.mrb[0].mxu0
        %3247 = vmatprep.mubr.bf16.mxu0 0
        %3248 = vmatmul.mubr.bf16.gmra.mrb[0].mxu0 %v2347
        %v3249 = vpop.f32.mrb[0].mxu0
        %v3250 = vadd.f32 %v3185, %v3249
        %v3251 = vpop.f32.mrb[0].mxu0
        %v3252 = vpop.f32.mrb[0].mxu0
        %v3253 = vadd.f32 %v3188, %v3252
        %v3254 = vpop.f32.mrb[0].mxu0
        %3255 = vdwg.mxu0
        %v3256 = vld [vmem:[%s237] sm:$0xff]
        %v3257 = vld [vmem:[%s237 + $0x8] sm:$0xff]
        %v3258 = vld [vmem:[%s237 + $0x10] sm:$0xff]
        %v3259 = vld [vmem:[%s237 + $0x18] sm:$0xff]
        %v3260 = vld [vmem:[%s237 + $0x20] sm:$0xff]
        %v3261 = vld [vmem:[%s237 + $0x28] sm:$0xff]
        %v3262 = vld [vmem:[%s237 + $0x30] sm:$0xff]
        %v3263 = vld [vmem:[%s237 + $0x38] sm:$0xff]
        %v3264 = vadd.f32 %v3226, %v3256
        %v3265 = vadd.f32 %v3229, %v3257
        %v3266 = vadd.f32 %v3234, %v3258
        %v3267 = vadd.f32 %v3237, %v3259
        %v3268 = vadd.f32 %v3242, %v3260
        %v3269 = vadd.f32 %v3245, %v3261
        %v3270 = vadd.f32 %v3250, %v3262
        %v3271 = vadd.f32 %v3253, %v3263
        %v3272 = vmax.f32 %v3264, 0.0
        %v3273 = vmax.f32 %v3265, 0.0
        %v3274 = vmax.f32 %v3266, 0.0
        %v3275 = vmax.f32 %v3267, 0.0
        %v3276 = vmax.f32 %v3268, 0.0
        %v3277 = vmax.f32 %v3269, 0.0
        %v3278 = vmax.f32 %v3270, 0.0
        %v3279 = vmax.f32 %v3271, 0.0
        %3280 = vst [vmem:[%s271] sm:$0xff] %v3272
        %3281 = vst [vmem:[%s271 + $0x8] sm:$0xff] %v3273
        %3282 = vst [vmem:[%s271 + $0x10] sm:$0xff] %v3274
        %3283 = vst [vmem:[%s271 + $0x18] sm:$0xff] %v3275
        %3284 = vst [vmem:[%s271 + $0x20] sm:$0xff] %v3276
        %3285 = vst [vmem:[%s271 + $0x28] sm:$0xff] %v3277
        %3286 = vst [vmem:[%s271 + $0x30] sm:$0xff] %v3278
        %3287 = vst [vmem:[%s271 + $0x38] sm:$0xff] %v3279
        %s3288 = sand.u32 %s141, 1
        %s3289 = scalar_lea.sflag [#allocation6], %s3288
        %s3290 = sand.u32 %s141, 1
        %s3291 = smul.addr %s3290, 64
        %s3292 = scalar_lea.vmem [#allocation10], %s3291
        // Predicated region
        $region53: #{tpu_custom_call.1} parent=39 // pred_check
          %p3293 = pneg %p151
        $region54: #{tpu_custom_call.1} parent=39 // pred_check_branch
          %3295 = sbr.rel (%p3293) target = $region56
        $region55: #{tpu_custom_call.1} parent=39 // pred_region
          %s3297 = ssub.s32 1024, 1024
          %3298 = vsyncadd %s3289, %s3297
          %s3299 = smul.addr %s23, 8
          %s3300 = smul.addr %s3299, 128
          %s3301 = scalar_lea.hbm %s5, %s3300
          %s3302 = sshll.u32 %s3292, 4
          %s3303 = int_to_ptr.vmem [resolvable:$true] %s3302
          %3308 = dma.vmem_to_hbm [thread:$0]  %s3303, 1024, %s3301, %s3289, 128, 128, 8
        $region56: #{tpu_custom_call.1} parent=39 // pred_fallthru
          _
      $region40: #{tpu_custom_call.1} parent=5 // pred_fallthru
        _
      %p3309 = scmp.le.s32.totalorder 2, %s18
      // Predicated region
      $region57: #{tpu_custom_call.1} parent=5 // pred_check
        %p3310 = pneg %p3309
      $region58: #{tpu_custom_call.1} parent=5 // pred_check_branch
        %3312 = sbr.rel (%p3310) target = $region60
      $region59: #{tpu_custom_call.1} parent=5 // pred_region
        %s3313 = ssub.s32 %s18, 2
        // Predicated region
        $region61: #{tpu_custom_call.1} parent=59 // pred_check
          %p3314 = pneg %p157
        $region62: #{tpu_custom_call.1} parent=59 // pred_check_branch
          %3316 = sbr.rel (%p3314) target = $region64
        $region63: #{tpu_custom_call.1} parent=59 // pred_region
          %s3317 = sand.u32 %s142, 1
          %s3318 = scalar_lea.sflag [#allocation6], %s3317
          %s3319 = sand.u32 %s142, 1
          %s3320 = smul.addr %s3319, 64
          %s3321 = scalar_lea.vmem [#allocation10], %s3320
          %3322 = dma.done %s3318, 1024
        $region64: #{tpu_custom_call.1} parent=59 // pred_fallthru
          _
      $region60: #{tpu_custom_call.1} parent=5 // pred_fallthru
        _
    $region6: #{tpu_custom_call.1} parent=1 // loop_footer
      %s22 = sadd.s32 1, %s18
    $region7: #{tpu_custom_call.1} parent=1 // loop_footer_branch
      %17 = sbr.rel target = $region3
    $region8: #{tpu_custom_call.1} parent=1 // loop_exit
      _
    %3323 = vsyncpa [#allocation5], 1
    %s3324 = scalar_lea.sflag [#allocation5], 1
    %3325 = vsyncpa %s3324, 1
    %3326 = vsyncpa [#allocation8], 1
    %3327 = vsyncpa [#allocation6], 1
    %s3328 = scalar_lea.sflag [#allocation6], 1
    %3329 = vsyncpa %s3328, 1

// kernel: tpu_custom_call.1
$region0: #{tpu_custom_call.1}
  #allocation0 [shape = 'u32[]', space=smem, size = 0x4, offset = 0x4, fixed_abs, tag = 'smem constant byte address 0x4 - core index']
  #allocation1 [shape = 'u32[144,128]{1,0:T(1,128)}', space=vmem, size = 0x12000, scoped, tag = 'internal scratch']
  #allocation2 [shape = 'bf16[1,10,10,128]{3,2,1,0:T(8,128)(2,1)}', space=vmem, size = 0xa000, scoped, tag = 'scratch operand']
  #allocation3 [shape = 'bf16[64,1152]{1,0:T(16,128)(2,1)}', space=vmem, size = 0x24000, scoped, tag = 'scratch operand']
  %s0 = inlined_call_operand.hbm [shape: f32[2,8,8,128], index: 0, kind: input, shape index: {}]
  %s1 = inlined_call_operand.hbm [shape: bf16[1152,128], index: 1, kind: input, shape index: {}]
  %s2 = inlined_call_operand.vmem [shape: f32[1,128], index: 2, kind: input, shape index: {}]
  %s3 = inlined_call_operand.hbm [shape: bf16[1152,128], index: 3, kind: input, shape index: {}]
  %s4 = inlined_call_operand.vmem [shape: f32[1,128], index: 4, kind: input, shape index: {}]
  %s5 = inlined_call_operand.hbm [shape: f32[2,8,8,128], index: 5, kind: output, shape index: {}]
  %s6 = sld [smem:[#allocation0]]
  $region65: #{tpu_custom_call.1} parent=0
    _
  %s8 = ssub.s32 1, %s6
  %s9 = scalar_select 0, %s8, %s6
  $region1: #{tpu_custom_call.1} parent=0
    #allocation4 [shape = 'u8[65536]{0}', space=vmem, size = 0x10000, scoped, tag = 'input window, operand 0']
    #allocation5 [shape = 's32[2]{0}', space=sflag, size = 0x8, scoped, tag = 'scoped memory for tpu_custom_call.1']
    #allocation6 [shape = 's32[2]{0}', space=sflag, size = 0x8, scoped, tag = 'scoped memory for tpu_custom_call.1']
    #allocation7 [shape = 'u8[294912]{0}', space=vmem, size = 0x48000, scoped, tag = 'input window, operand 1, single buffered']
    #allocation8 [shape = 's32[1]{0}', space=sflag, size = 0x4, scoped, tag = 'scoped memory for tpu_custom_call.1']
    #allocation9 [shape = 'u8[294912]{0}', space=vmem, size = 0x48000, scoped, tag = 'input window, operand 3, single buffered']
    #allocation10 [shape = 'u8[65536]{0}', space=vmem, size = 0x10000, scoped, tag = 'output window, operand 0']
    %10 = vsyncpa [#allocation5], 0
    %s11 = scalar_lea.sflag [#allocation5], 1
    %12 = vsyncpa %s11, 0
    %13 = vsyncpa [#allocation8], 0
    %14 = vsyncpa [#allocation6], 0
    %s15 = scalar_lea.sflag [#allocation6], 1
    %16 = vsyncpa %s15, 0
    loop: start=0, step=1, limit=4
    $region2: #{tpu_custom_call.1} parent=1 // loop_pre_header
      _
    $region3: #{tpu_custom_call.1} parent=1 // loop_header
      %s18 = sphi 0, %s22
      %p19 = scmp.ge.s32.totalorder %s18, 4
      %s28 = sphi 0, %s30
      %s31 = sphi 0, %s28
      %s32 = sphi 0, %s31
      %s48 = sphi 0, %s32
      %s52 = sphi 0, %s52
      %s54 = sphi 0, %s52
      %s55 = sphi 0, %s54
      %s69 = sphi 0, %s55
      %s73 = sphi 0, %s73
      %s75 = sphi 0, %s73
      %s76 = sphi 0, %s75
      %s90 = sphi 0, %s76
      %s94 = sphi 0, %s94
      %s96 = sphi 0, %s94
      %s97 = sphi 0, %s96
      %s111 = sphi 0, %s97
      %s115 = sphi 0, %s115
      %s117 = sphi 0, %s115
      %s118 = sphi 0, %s117
      %s132 = sphi 0, %s118
      %s138 = sphi 0, %s140
      %s141 = sphi 0, %s138
      %s142 = sphi 0, %s141
      %s158 = sphi 0, %s142
    $region4: #{tpu_custom_call.1} parent=1 // loop_header_branch
      %21 = sbr.rel (%p19) target = $region8
    $region5: #{tpu_custom_call.1} parent=1 // loop_body
      %s23 = ssub.s32 %s18, 1
      %s24 = ssub.s32 %s18, 2
      %s25 = sadd.s32 %s18, 1
      %s26 = ssub.s32 %s18, %s25
      %p27 = scmp.eq.s32.totalorder %s26, 0
      %s29 = sadd.s32 %s28, 1
      %s30 = scalar_select %p27, %s28, %s29
      %p33 = pneg %p27
      %p34 = scmp.eq.s32.totalorder %s18, 1
      %p35 = por %p33, %p34
      %p36 = scmp.ne.s32.totalorder %s28, %s31
      %p37 = scmp.eq.s32.totalorder %s18, 0
      %p38 = por %p36, %p37
      %p39 = scmp.ne.s32.totalorder %s28, %s31
      %p40 = scmp.eq.s32.totalorder %s23, 1
      %p41 = por %p39, %p40
      %p42 = scmp.ne.s32.totalorder %s31, %s32
      %p43 = scmp.eq.s32.totalorder %s23, 0
      %p44 = por %p42, %p43
      %p45 = scmp.ne.s32.totalorder %s31, %s32
      %p46 = scmp.eq.s32.totalorder %s24, 1
      %p47 = por %p45, %p46
      %p49 = scmp.ne.s32.totalorder %s32, %s48
      %p50 = scmp.eq.s32.totalorder %s24, 0
      %p51 = por %p49, %p50
      %s53 = sadd.s32 %s52, 1
      %p56 = scmp.eq.s32.totalorder %s18, 1
      %p57 = scmp.ne.s32.totalorder %s52, %s54
      %p58 = scmp.eq.s32.totalorder %s18, 0
      %p59 = por %p57, %p58
      %p60 = scmp.ne.s32.totalorder %s52, %s54
      %p61 = scmp.eq.s32.totalorder %s23, 1
      %p62 = por %p60, %p61
      %p63 = scmp.ne.s32.totalorder %s54, %s55
      %p64 = scmp.eq.s32.totalorder %s23, 0
      %p65 = por %p63, %p64
      %p66 = scmp.ne.s32.totalorder %s54, %s55
      %p67 = scmp.eq.s32.totalorder %s24, 1
      %p68 = por %p66, %p67
      %p70 = scmp.ne.s32.totalorder %s55, %s69
      %p71 = scmp.eq.s32.totalorder %s24, 0
      %p72 = por %p70, %p71
      %s74 = sadd.s32 %s73, 1
      %p77 = scmp.eq.s32.totalorder %s18, 1
      %p78 = scmp.ne.s32.totalorder %s73, %s75
      %p79 = scmp.eq.s32.totalorder %s18, 0
      %p80 = por %p78, %p79
      %p81 = scmp.ne.s32.totalorder %s73, %s75
      %p82 = scmp.eq.s32.totalorder %s23, 1
      %p83 = por %p81, %p82
      %p84 = scmp.ne.s32.totalorder %s75, %s76
      %p85 = scmp.eq.s32.totalorder %s23, 0
      %p86 = por %p84, %p85
      %p87 = scmp.ne.s32.totalorder %s75, %s76
      %p88 = scmp.eq.s32.totalorder %s24, 1
      %p89 = por %p87, %p88
      %p91 = scmp.ne.s32.totalorder %s76, %s90
      %p92 = scmp.eq.s32.totalorder %s24, 0
      %p93 = por %p91, %p92
      %s95 = sadd.s32 %s94, 1
      %p98 = scmp.eq.s32.totalorder %s18, 1
      %p99 = scmp.ne.s32.totalorder %s94, %s96
      %p100 = scmp.eq.s32.totalorder %s18, 0
      %p101 = por %p99, %p100
      %p102 = scmp.ne.s32.totalorder %s94, %s96
      %p103 = scmp.eq.s32.totalorder %s23, 1
      %p104 = por %p102, %p103
      %p105 = scmp.ne.s32.totalorder %s96, %s97
      %p106 = scmp.eq.s32.totalorder %s23, 0
      %p107 = por %p105, %p106
      %p108 = scmp.ne.s32.totalorder %s96, %s97
      %p109 = scmp.eq.s32.totalorder %s24, 1
      %p110 = por %p108, %p109
      %p112 = scmp.ne.s32.totalorder %s97, %s111
      %p113 = scmp.eq.s32.totalorder %s24, 0
      %p114 = por %p112, %p113
      %s116 = sadd.s32 %s115, 1
      %p119 = scmp.eq.s32.totalorder %s18, 1
      %p120 = scmp.ne.s32.totalorder %s115, %s117
      %p121 = scmp.eq.s32.totalorder %s18, 0
      %p122 = por %p120, %p121
      %p123 = scmp.ne.s32.totalorder %s115, %s117
      %p124 = scmp.eq.s32.totalorder %s23, 1
      %p125 = por %p123, %p124
      %p126 = scmp.ne.s32.totalorder %s117, %s118
      %p127 = scmp.eq.s32.totalorder %s23, 0
      %p128 = por %p126, %p127
      %p129 = scmp.ne.s32.totalorder %s117, %s118
      %p130 = scmp.eq.s32.totalorder %s24, 1
      %p131 = por %p129, %p130
      %p133 = scmp.ne.s32.totalorder %s118, %s132
      %p134 = scmp.eq.s32.totalorder %s24, 0
      %p135 = por %p133, %p134
      %s136 = ssub.s32 %s18, %s25
      %p137 = scmp.eq.s32.totalorder %s136, 0
      %s139 = sadd.s32 %s138, 1
      %s140 = scalar_select %p137, %s138, %s139
      %p143 = pneg %p137
      %p144 = scmp.eq.s32.totalorder %s18, 1
      %p145 = por %p143, %p144
      %p146 = scmp.ne.s32.totalorder %s138, %s141
      %p147 = scmp.eq.s32.totalorder %s18, 0
      %p148 = por %p146, %p147
      %p149 = scmp.ne.s32.totalorder %s138, %s141
      %p150 = scmp.eq.s32.totalorder %s23, 1
      %p151 = por %p149, %p150
      %p152 = scmp.ne.s32.totalorder %s141, %s142
      %p153 = scmp.eq.s32.totalorder %s23, 0
      %p154 = por %p152, %p153
      %p155 = scmp.ne.s32.totalorder %s141, %s142
      %p156 = scmp.eq.s32.totalorder %s24, 1
      %p157 = por %p155, %p156
      %p159 = scmp.ne.s32.totalorder %s142, %s158
      %p160 = scmp.eq.s32.totalorder %s24, 0
      %p161 = por %p159, %p160
      %p162 = scmp.le.s32.totalorder 1, %s18
      %p163 = scmp.lt.s32.totalorder %s18, 3
      %p164 = pnand %p162, %p163
      %p165 = pneg %p164
      // Predicated region
      $region9: #{tpu_custom_call.1} parent=5 // pred_check
        _
      $region10: #{tpu_custom_call.1} parent=5 // pred_check_branch
        %167 = sbr.rel (%p164) target = $region12
      $region11: #{tpu_custom_call.1} parent=5 // pred_region
        %s168 = ssub.s32 %s18, 1
        // Predicated region
        $region13: #{tpu_custom_call.1} parent=11 // pred_check
          %p169 = pneg %p65
        $region14: #{tpu_custom_call.1} parent=11 // pred_check_branch
          %171 = sbr.rel (%p169) target = $region16
        $region15: #{tpu_custom_call.1} parent=11 // pred_region
          %s173 = ssub.s32 9216, 9216
          %174 = vsyncadd [#allocation8], %s173
          %s175 = sshll.u32 [#allocation7], 4
          %s176 = int_to_ptr.vmem [resolvable:$true] %s175
          %181 = dma.hbm_to_vmem [thread:$0]  %s1, 9216, %s176, [#allocation8], 64, 64, 4
        $region16: #{tpu_custom_call.1} parent=11 // pred_fallthru
          _
        // Predicated region
        $region17: #{tpu_custom_call.1} parent=11 // pred_check
          %p182 = pneg %p86
        $region18: #{tpu_custom_call.1} parent=11 // pred_check_branch
          %184 = sbr.rel (%p182) target = $region20
        $region19: #{tpu_custom_call.1} parent=11 // pred_region
          _
        $region20: #{tpu_custom_call.1} parent=11 // pred_fallthru
          _
        // Predicated region
        $region21: #{tpu_custom_call.1} parent=11 // pred_check
          %p185 = pneg %p107
        $region22: #{tpu_custom_call.1} parent=11 // pred_check_branch
          %187 = sbr.rel (%p185) target = $region24
        $region23: #{tpu_custom_call.1} parent=11 // pred_region
          %s189 = ssub.s32 9216, 9216
          %190 = vsyncadd [#allocation8], %s189
          %s191 = sshll.u32 [#allocation9], 4
          %s192 = int_to_ptr.vmem [resolvable:$true] %s191
          %197 = dma.hbm_to_vmem [thread:$0]  %s3, 9216, %s192, [#allocation8], 64, 64, 4
        $region24: #{tpu_custom_call.1} parent=11 // pred_fallthru
          _
        // Predicated region
        $region25: #{tpu_custom_call.1} parent=11 // pred_check
          %p198 = pneg %p128
        $region26: #{tpu_custom_call.1} parent=11 // pred_check_branch
          %200 = sbr.rel (%p198) target = $region28
        $region27: #{tpu_custom_call.1} parent=11 // pred_region
          _
        $region28: #{tpu_custom_call.1} parent=11 // pred_fallthru
          _
      $region12: #{tpu_custom_call.1} parent=5 // pred_fallthru
        _
      %p201 = scmp.lt.s32.totalorder %s18, 2
      // Predicated region
      $region29: #{tpu_custom_call.1} parent=5 // pred_check
        %p202 = pneg %p201
      $region30: #{tpu_custom_call.1} parent=5 // pred_check_branch
        %204 = sbr.rel (%p202) target = $region32
      $region31: #{tpu_custom_call.1} parent=5 // pred_region
        // Predicated region
        $region33: #{tpu_custom_call.1} parent=31 // pred_check
          %p205 = pneg %p38
        $region34: #{tpu_custom_call.1} parent=31 // pred_check_branch
          %207 = sbr.rel (%p205) target = $region36
        $region35: #{tpu_custom_call.1} parent=31 // pred_region
          %s208 = sand.u32 %s28, 1
          %s209 = scalar_lea.sflag [#allocation5], %s208
          %s210 = sand.u32 %s28, 1
          %s211 = smul.addr %s210, 64
          %s212 = scalar_lea.vmem [#allocation4], %s211
          %s214 = ssub.s32 1024, 1024
          %215 = vsyncadd %s209, %s214
          %s216 = smul.addr %s18, 8
          %s217 = smul.addr %s216, 128
          %s218 = scalar_lea.hbm %s0, %s217
          %s219 = sshll.u32 %s212, 4
          %s220 = int_to_ptr.vmem [resolvable:$true] %s219
          %225 = dma.hbm_to_vmem [thread:$0]  %s218, 1024, %s220, %s209, 128, 128, 8
        $region36: #{tpu_custom_call.1} parent=31 // pred_fallthru
          _
      $region32: #{tpu_custom_call.1} parent=5 // pred_fallthru
        _
      %p226 = scmp.le.s32.totalorder 1, %s18
      %p227 = scmp.lt.s32.totalorder %s18, 3
      %p228 = pnand %p226, %p227
      %p229 = pneg %p228
      // Predicated region
      $region37: #{tpu_custom_call.1} parent=5 // pred_check
        _
      $region38: #{tpu_custom_call.1} parent=5 // pred_check_branch
        %231 = sbr.rel (%p228) target = $region40
      $region39: #{tpu_custom_call.1} parent=5 // pred_region
        %s232 = ssub.s32 %s18, 1
        %s233 = sand.u32 %s31, 1
        %s234 = scalar_lea.sflag [#allocation5], %s233
        %s235 = sand.u32 %s31, 1
        %s236 = smul.addr %s235, 64
        %s237 = scalar_lea.vmem [#allocation4], %s236
        // Predicated region
        $region41: #{tpu_custom_call.1} parent=39 // pred_check
          %p238 = pneg %p44
        $region42: #{tpu_custom_call.1} parent=39 // pred_check_branch
          %240 = sbr.rel (%p238) target = $region44
        $region43: #{tpu_custom_call.1} parent=39 // pred_region
          %241 = dma.done %s234, 1024
        $region44: #{tpu_custom_call.1} parent=39 // pred_fallthru
          _
        // Predicated region
        $region45: #{tpu_custom_call.1} parent=39 // pred_check
          %p242 = pneg %p65
        $region46: #{tpu_custom_call.1} parent=39 // pred_check_branch
          %244 = sbr.rel (%p242) target = $region48
        $region47: #{tpu_custom_call.1} parent=39 // pred_region
          %245 = dma.done [#allocation8], 9216
        $region48: #{tpu_custom_call.1} parent=39 // pred_fallthru
          _
        // Predicated region
        $region49: #{tpu_custom_call.1} parent=39 // pred_check
          %p246 = pneg %p107
        $region50: #{tpu_custom_call.1} parent=39 // pred_check_branch
          %248 = sbr.rel (%p246) target = $region52
        $region51: #{tpu_custom_call.1} parent=39 // pred_region
          %249 = dma.done [#allocation8], 9216
        $region52: #{tpu_custom_call.1} parent=39 // pred_fallthru
          _
        %s250 = sand.u32 %s31, 1
        %s251 = scalar_lea.sflag [#allocation5], %s250
        %s252 = sand.u32 %s31, 1
        %s253 = smul.addr %s252, 64
        %s254 = scalar_lea.vmem [#allocation4], %s253
        %p255 = pneg %p44
        %p256 = pneg %p41
        %p257 = pneg %p65
        %p258 = pneg %p62
        %p259 = pneg %p86
        %p260 = pneg %p83
        %p261 = pneg %p107
        %p262 = pneg %p104
        %p263 = pneg %p128
        %p264 = pneg %p125
        %p265 = pneg %p154
        %p266 = pneg %p151
        %s267 = sand.u32 %s141, 1
        %s268 = scalar_lea.sflag [#allocation6], %s267
        %s269 = sand.u32 %s141, 1
        %s270 = smul.addr %s269, 64
        %s271 = scalar_lea.vmem [#allocation10], %s270
        %273 = vst [vmem:[#allocation2] sm:$0xf] 0
        %274 = vst [vmem:[#allocation2 + $0x4] sm:$0x1] 0
        %s275 = scalar_lea.vmem [#allocation2], 72
        %276 = vst [vmem:[%s275] sm:$0xf] 0
        %277 = vst [vmem:[%s275 + $0x4] sm:$0x1] 0
        %vm278 = vcmask 1040384
        %vm279 = vsmask.f32 256
        %vm280 = vmand %vm278, %vm279
        %v281 = vld [vmem:[#allocation2] sm:$0x1]
        %v282 = vsel %vm280, 0, %v281
        %283 = vst [vmem:[#allocation2] sm:$0x1] %v282
        %v284 = vld [vmem:[#allocation2 + $0x8] sm:$0x1]
        %v285 = vsel %vm280, 0, %v284
        %286 = vst [vmem:[#allocation2 + $0x8] sm:$0x1] %v285
        %v287 = vld [vmem:[#allocation2 + $0x10] sm:$0x1]
        %v288 = vsel %vm280, 0, %v287
        %289 = vst [vmem:[#allocation2 + $0x10] sm:$0x1] %v288
        %v290 = vld [vmem:[#allocation2 + $0x18] sm:$0x1]
        %v291 = vsel %vm280, 0, %v290
        %292 = vst [vmem:[#allocation2 + $0x18] sm:$0x1] %v291
        %v293 = vld [vmem:[#allocation2 + $0x20] sm:$0x1]
        %v294 = vsel %vm280, 0, %v293
        %295 = vst [vmem:[#allocation2 + $0x20] sm:$0x1] %v294
        %v296 = vld [vmem:[#allocation2 + $0x28] sm:$0x1]
        %v297 = vsel %vm280, 0, %v296
        %298 = vst [vmem:[#allocation2 + $0x28] sm:$0x1] %v297
        %v299 = vld [vmem:[#allocation2 + $0x30] sm:$0x1]
        %v300 = vsel %vm280, 0, %v299
        %301 = vst [vmem:[#allocation2 + $0x30] sm:$0x1] %v300
        %v302 = vld [vmem:[#allocation2 + $0x38] sm:$0x1]
        %v303 = vsel %vm280, 0, %v302
        %304 = vst [vmem:[#allocation2 + $0x38] sm:$0x1] %v303
        %v305 = vld [vmem:[#allocation2 + $0x40] sm:$0x1]
        %v306 = vsel %vm280, 0, %v305
        %307 = vst [vmem:[#allocation2 + $0x40] sm:$0x1] %v306
        %v308 = vld [vmem:[#allocation2 + $0x48] sm:$0x1]
        %v309 = vsel %vm280, 0, %v308
        %310 = vst [vmem:[#allocation2 + $0x48] sm:$0x1] %v309
        %vm311 = vsmask.f32 7938
        %vm312 = vmand %vm278, %vm311
        %v313 = vld [vmem:[#allocation2 + $0x4] sm:$0x1]
        %v314 = vsel %vm312, 0, %v313
        %315 = vst [vmem:[#allocation2 + $0x4] sm:$0x1] %v314
        %v316 = vld [vmem:[#allocation2 + $0xc] sm:$0x1]
        %v317 = vsel %vm312, 0, %v316
        %318 = vst [vmem:[#allocation2 + $0xc] sm:$0x1] %v317
        %v319 = vld [vmem:[#allocation2 + $0x14] sm:$0x1]
        %v320 = vsel %vm312, 0, %v319
        %321 = vst [vmem:[#allocation2 + $0x14] sm:$0x1] %v320
        %v322 = vld [vmem:[#allocation2 + $0x1c] sm:$0x1]
        %v323 = vsel %vm312, 0, %v322
        %324 = vst [vmem:[#allocation2 + $0x1c] sm:$0x1] %v323
        %v325 = vld [vmem:[#allocation2 + $0x24] sm:$0x1]
        %v326 = vsel %vm312, 0, %v325
        %327 = vst [vmem:[#allocation2 + $0x24] sm:$0x1] %v326
        %v328 = vld [vmem:[#allocation2 + $0x2c] sm:$0x1]
        %v329 = vsel %vm312, 0, %v328
        %330 = vst [vmem:[#allocation2 + $0x2c] sm:$0x1] %v329
        %v331 = vld [vmem:[#allocation2 + $0x34] sm:$0x1]
        %v332 = vsel %vm312, 0, %v331
        %333 = vst [vmem:[#allocation2 + $0x34] sm:$0x1] %v332
        %v334 = vld [vmem:[#allocation2 + $0x3c] sm:$0x1]
        %v335 = vsel %vm312, 0, %v334
        %336 = vst [vmem:[#allocation2 + $0x3c] sm:$0x1] %v335
        %v337 = vld [vmem:[#allocation2 + $0x44] sm:$0x1]
        %v338 = vsel %vm312, 0, %v337
        %339 = vst [vmem:[#allocation2 + $0x44] sm:$0x1] %v338
        %v340 = vld [vmem:[#allocation2 + $0x4c] sm:$0x1]
        %v341 = vsel %vm312, 0, %v340
        %342 = vst [vmem:[#allocation2 + $0x4c] sm:$0x1] %v341
        %v343 = vld [vmem:[%s237] sm:$0xff]
        %v344 = vld [vmem:[%s237 + $0x8] sm:$0xff]
        %v345 = vld [vmem:[%s237 + $0x10] sm:$0xff]
        %v346 = vld [vmem:[%s237 + $0x18] sm:$0xff]
        %v347 = vld [vmem:[%s237 + $0x20] sm:$0xff]
        %v348 = vld [vmem:[%s237 + $0x28] sm:$0xff]
        %v349 = vld [vmem:[%s237 + $0x30] sm:$0xff]
        %v350 = vld [vmem:[%s237 + $0x38] sm:$0xff]
        %v351 = vpack.c.bf16 %v343, %v343
        %v352 = vpack.c.bf16 %v344, %v344
        %v353 = vpack.c.bf16 %v345, %v345
        %v354 = vpack.c.bf16 %v346, %v346
        %v355 = vpack.c.bf16 %v347, %v347
        %v356 = vpack.c.bf16 %v348, %v348
        %v357 = vpack.c.bf16 %v349, %v349
        %v358 = vpack.c.bf16 %v350, %v350
        %v367 = vunpack.c.l.b16 %v351
        %v368 = vunpack.c.l.b16 %v352
        %v369 = vunpack.c.l.b16 %v353
        %v370 = vunpack.c.l.b16 %v354
        %v371 = vunpack.c.l.b16 %v355
        %v372 = vunpack.c.l.b16 %v356
        %v373 = vunpack.c.l.b16 %v357
        %v374 = vunpack.c.l.b16 %v358
        %v375 = vpack.c.b16 %v367, %v367
        %v376 = vpack.c.b16 %v368, %v368
        %v377 = vpack.c.b16 %v369, %v369
        %v378 = vpack.c.b16 %v370, %v370
        %v379 = vpack.c.b16 %v371, %v371
        %v380 = vpack.c.b16 %v372, %v372
        %v381 = vpack.c.b16 %v373, %v373
        %v382 = vpack.c.b16 %v374, %v374
        %v384 = vshrl.u32 %v375, 16
        %v386 = vrot.slane %v384, 7
        %v387 = vshll.u32 %v375, 16
        %v389 = vor.u32 %v386, %v387
        %v390 = vrot.slane %v386, 4
        %v392 = vshrl.u32 %v376, 16
        %v394 = vrot.slane %v392, 7
        %v395 = vshll.u32 %v376, 16
        %v397 = vor.u32 %v394, %v395
        %v398 = vrot.slane %v394, 4
        %v400 = vshrl.u32 %v377, 16
        %v402 = vrot.slane %v400, 7
        %v403 = vshll.u32 %v377, 16
        %v405 = vor.u32 %v402, %v403
        %v406 = vrot.slane %v402, 4
        %v408 = vshrl.u32 %v378, 16
        %v410 = vrot.slane %v408, 7
        %v411 = vshll.u32 %v378, 16
        %v413 = vor.u32 %v410, %v411
        %v414 = vrot.slane %v410, 4
        %v416 = vshrl.u32 %v379, 16
        %v418 = vrot.slane %v416, 7
        %v419 = vshll.u32 %v379, 16
        %v421 = vor.u32 %v418, %v419
        %v422 = vrot.slane %v418, 4
        %v424 = vshrl.u32 %v380, 16
        %v426 = vrot.slane %v424, 7
        %v427 = vshll.u32 %v380, 16
        %v429 = vor.u32 %v426, %v427
        %v430 = vrot.slane %v426, 4
        %v432 = vshrl.u32 %v381, 16
        %v434 = vrot.slane %v432, 7
        %v435 = vshll.u32 %v381, 16
        %v437 = vor.u32 %v434, %v435
        %v438 = vrot.slane %v434, 4
        %v440 = vshrl.u32 %v382, 16
        %v442 = vrot.slane %v440, 7
        %v443 = vshll.u32 %v382, 16
        %v445 = vor.u32 %v442, %v443
        %v446 = vrot.slane %v442, 4
        %s463 = scalar_lea.vmem [#allocation2], 8
        %vm464 = vcmask 1043456
        %vm465 = vmand %vm464, %vm311
        %v466 = vld [vmem:[%s463] sm:$0xf]
        %v467 = vsel %vm465, %v389, %v466
        %468 = vst [vmem:[%s463] sm:$0xf] %v467
        %v469 = vld [vmem:[%s463 + $0x4] sm:$0x1]
        %v470 = vsel %vm280, %v390, %v469
        %471 = vst [vmem:[%s463 + $0x4] sm:$0x1] %v470
        %v472 = vld [vmem:[%s463 + $0x8] sm:$0xf]
        %v473 = vsel %vm465, %v397, %v472
        %474 = vst [vmem:[%s463 + $0x8] sm:$0xf] %v473
        %v475 = vld [vmem:[%s463 + $0xc] sm:$0x1]
        %v476 = vsel %vm280, %v398, %v475
        %477 = vst [vmem:[%s463 + $0xc] sm:$0x1] %v476
        %v478 = vld [vmem:[%s463 + $0x10] sm:$0xf]
        %v479 = vsel %vm465, %v405, %v478
        %480 = vst [vmem:[%s463 + $0x10] sm:$0xf] %v479
        %v481 = vld [vmem:[%s463 + $0x14] sm:$0x1]
        %v482 = vsel %vm280, %v406, %v481
        %483 = vst [vmem:[%s463 + $0x14] sm:$0x1] %v482
        %v484 = vld [vmem:[%s463 + $0x18] sm:$0xf]
        %v485 = vsel %vm465, %v413, %v484
        %486 = vst [vmem:[%s463 + $0x18] sm:$0xf] %v485
        %v487 = vld [vmem:[%s463 + $0x1c] sm:$0x1]
        %v488 = vsel %vm280, %v414, %v487
        %489 = vst [vmem:[%s463 + $0x1c] sm:$0x1] %v488
        %v490 = vld [vmem:[%s463 + $0x20] sm:$0xf]
        %v491 = vsel %vm465, %v421, %v490
        %492 = vst [vmem:[%s463 + $0x20] sm:$0xf] %v491
        %v493 = vld [vmem:[%s463 + $0x24] sm:$0x1]
        %v494 = vsel %vm280, %v422, %v493
        %495 = vst [vmem:[%s463 + $0x24] sm:$0x1] %v494
        %v496 = vld [vmem:[%s463 + $0x28] sm:$0xf]
        %v497 = vsel %vm465, %v429, %v496
        %498 = vst [vmem:[%s463 + $0x28] sm:$0xf] %v497
        %v499 = vld [vmem:[%s463 + $0x2c] sm:$0x1]
        %v500 = vsel %vm280, %v430, %v499
        %501 = vst [vmem:[%s463 + $0x2c] sm:$0x1] %v500
        %v502 = vld [vmem:[%s463 + $0x30] sm:$0xf]
        %v503 = vsel %vm465, %v437, %v502
        %504 = vst [vmem:[%s463 + $0x30] sm:$0xf] %v503
        %v505 = vld [vmem:[%s463 + $0x34] sm:$0x1]
        %v506 = vsel %vm280, %v438, %v505
        %507 = vst [vmem:[%s463 + $0x34] sm:$0x1] %v506
        %v508 = vld [vmem:[%s463 + $0x38] sm:$0xf]
        %v509 = vsel %vm465, %v445, %v508
        %510 = vst [vmem:[%s463 + $0x38] sm:$0xf] %v509
        %v511 = vld [vmem:[%s463 + $0x3c] sm:$0x1]
        %v512 = vsel %vm280, %v446, %v511
        %513 = vst [vmem:[%s463 + $0x3c] sm:$0x1] %v512
        %v514 = vld [vmem:[#allocation2] sm:$0xf]
        %v515 = vld [vmem:[#allocation2 + $0x4] sm:$0x1]
        %v516 = vld [vmem:[#allocation2 + $0x8] sm:$0xf]
        %v517 = vld [vmem:[#allocation2 + $0xc] sm:$0x1]
        %v518 = vld [vmem:[#allocation2 + $0x10] sm:$0xf]
        %v519 = vld [vmem:[#allocation2 + $0x14] sm:$0x1]
        %v520 = vld [vmem:[#allocation2 + $0x18] sm:$0xf]
        %v521 = vld [vmem:[#allocation2 + $0x1c] sm:$0x1]
        %v522 = vld [vmem:[#allocation2 + $0x20] sm:$0xf]
        %v523 = vld [vmem:[#allocation2 + $0x24] sm:$0x1]
        %v524 = vld [vmem:[#allocation2 + $0x28] sm:$0xf]
        %v525 = vld [vmem:[#allocation2 + $0x2c] sm:$0x1]
        %v526 = vld [vmem:[#allocation2 + $0x30] sm:$0xf]
        %v527 = vld [vmem:[#allocation2 + $0x34] sm:$0x1]
        %v528 = vld [vmem:[#allocation2 + $0x38] sm:$0xf]
        %v529 = vld [vmem:[#allocation2 + $0x3c] sm:$0x1]
        %v530 = vld [vmem:[#allocation2 + $0x40] sm:$0xf]
        %v531 = vld [vmem:[#allocation2 + $0x44] sm:$0x1]
        %v532 = vld [vmem:[#allocation2 + $0x48] sm:$0xf]
        %v533 = vld [vmem:[#allocation2 + $0x4c] sm:$0x1]
        %v542 = vunpack.c.l.b16 %v514
        %v543 = vunpack.c.l.b16 %v516
        %v544 = vunpack.c.l.b16 %v518
        %v545 = vunpack.c.l.b16 %v520
        %v546 = vunpack.c.l.b16 %v522
        %v547 = vunpack.c.l.b16 %v524
        %v548 = vunpack.c.l.b16 %v526
        %v549 = vunpack.c.l.b16 %v528
        %v550 = vpack.c.b16 %v543, %v542
        %v551 = vpack.c.b16 %v545, %v544
        %v552 = vpack.c.b16 %v547, %v546
        %v553 = vpack.c.b16 %v549, %v548
        %558 = vst [vmem:[#allocation3] sm:$0xff] %v550
        %559 = vst [vmem:[#allocation3 + $0x48] sm:$0xff] %v551
        %560 = vst [vmem:[#allocation3 + $0x90] sm:$0xff] %v552
        %561 = vst [vmem:[#allocation3 + $0xd8] sm:$0xff] %v553
        %vm562 = vsmask.f32 3328
        %vm563 = vsmask.f32 7440
        %vm564 = vmor %vm562, %vm563
        %v566 = vshrl.u32 %v514, 16
        %v568 = vrot.slane %v566, 4
        %v569 = vshll.u32 %v514, 16
        %v571 = vrot.slane %v569, 5
        %v572 = vor.u32 %v568, %v571
        %v573 = vrot.slane %v572, 4
        %v575 = vshll.u32 %v515, 16
        %v577 = vrot.slane %v575, 5
        %v578 = vsel %vm564, %v573, %v577
        %v580 = vshrl.u32 %v516, 16
        %v582 = vrot.slane %v580, 4
        %v583 = vshll.u32 %v516, 16
        %v585 = vrot.slane %v583, 5
        %v586 = vor.u32 %v582, %v585
        %v587 = vrot.slane %v586, 4
        %v589 = vshll.u32 %v517, 16
        %v591 = vrot.slane %v589, 5
        %v592 = vsel %vm564, %v587, %v591
        %v594 = vshrl.u32 %v518, 16
        %v596 = vrot.slane %v594, 4
        %v597 = vshll.u32 %v518, 16
        %v599 = vrot.slane %v597, 5
        %v600 = vor.u32 %v596, %v599
        %v601 = vrot.slane %v600, 4
        %v603 = vshll.u32 %v519, 16
        %v605 = vrot.slane %v603, 5
        %v606 = vsel %vm564, %v601, %v605
        %v608 = vshrl.u32 %v520, 16
        %v610 = vrot.slane %v608, 4
        %v611 = vshll.u32 %v520, 16
        %v613 = vrot.slane %v611, 5
        %v614 = vor.u32 %v610, %v613
        %v615 = vrot.slane %v614, 4
        %v617 = vshll.u32 %v521, 16
        %v619 = vrot.slane %v617, 5
        %v620 = vsel %vm564, %v615, %v619
        %v622 = vshrl.u32 %v522, 16
        %v624 = vrot.slane %v622, 4
        %v625 = vshll.u32 %v522, 16
        %v627 = vrot.slane %v625, 5
        %v628 = vor.u32 %v624, %v627
        %v629 = vrot.slane %v628, 4
        %v631 = vshll.u32 %v523, 16
        %v633 = vrot.slane %v631, 5
        %v634 = vsel %vm564, %v629, %v633
        %v636 = vshrl.u32 %v524, 16
        %v638 = vrot.slane %v636, 4
        %v639 = vshll.u32 %v524, 16
        %v641 = vrot.slane %v639, 5
        %v642 = vor.u32 %v638, %v641
        %v643 = vrot.slane %v642, 4
        %v645 = vshll.u32 %v525, 16
        %v647 = vrot.slane %v645, 5
        %v648 = vsel %vm564, %v643, %v647
        %v650 = vshrl.u32 %v526, 16
        %v652 = vrot.slane %v650, 4
        %v653 = vshll.u32 %v526, 16
        %v655 = vrot.slane %v653, 5
        %v656 = vor.u32 %v652, %v655
        %v657 = vrot.slane %v656, 4
        %v659 = vshll.u32 %v527, 16
        %v661 = vrot.slane %v659, 5
        %v662 = vsel %vm564, %v657, %v661
        %v664 = vshrl.u32 %v528, 16
        %v666 = vrot.slane %v664, 4
        %v667 = vshll.u32 %v528, 16
        %v669 = vrot.slane %v667, 5
        %v670 = vor.u32 %v666, %v669
        %v671 = vrot.slane %v670, 4
        %v673 = vshll.u32 %v529, 16
        %v675 = vrot.slane %v673, 5
        %v676 = vsel %vm564, %v671, %v675
        %v677 = vunpack.c.l.b16 %v578
        %v678 = vunpack.c.l.b16 %v592
        %v679 = vunpack.c.l.b16 %v606
        %v680 = vunpack.c.l.b16 %v620
        %v681 = vunpack.c.l.b16 %v634
        %v682 = vunpack.c.l.b16 %v648
        %v683 = vunpack.c.l.b16 %v662
        %v684 = vunpack.c.l.b16 %v676
        %v685 = vpack.c.b16 %v678, %v677
        %v686 = vpack.c.b16 %v680, %v679
        %v687 = vpack.c.b16 %v682, %v681
        %v688 = vpack.c.b16 %v684, %v683
        %693 = vst [vmem:[#allocation3 + $0x8] sm:$0xff] %v685
        %694 = vst [vmem:[#allocation3 + $0x50] sm:$0xff] %v686
        %695 = vst [vmem:[#allocation3 + $0x98] sm:$0xff] %v687
        %696 = vst [vmem:[#allocation3 + $0xe0] sm:$0xff] %v688
        %vm705 = vcmask 1042432
        %vm706 = vcmask 1046532
        %vm707 = vmor %vm705, %vm706
        %v708 = vrot.slane %v514, 5
        %v709 = vrot.slane %v708, 4
        %v710 = vrot.slane %v515, 5
        %v711 = vsel %vm707, %v709, %v710
        %v712 = vrot.slane %v516, 5
        %v713 = vrot.slane %v712, 4
        %v714 = vrot.slane %v517, 5
        %v715 = vsel %vm707, %v713, %v714
        %v716 = vrot.slane %v518, 5
        %v717 = vrot.slane %v716, 4
        %v718 = vrot.slane %v519, 5
        %v719 = vsel %vm707, %v717, %v718
        %v720 = vrot.slane %v520, 5
        %v721 = vrot.slane %v720, 4
        %v722 = vrot.slane %v521, 5
        %v723 = vsel %vm707, %v721, %v722
        %v724 = vrot.slane %v522, 5
        %v725 = vrot.slane %v724, 4
        %v726 = vrot.slane %v523, 5
        %v727 = vsel %vm707, %v725, %v726
        %v728 = vrot.slane %v524, 5
        %v729 = vrot.slane %v728, 4
        %v730 = vrot.slane %v525, 5
        %v731 = vsel %vm707, %v729, %v730
        %v732 = vrot.slane %v526, 5
        %v733 = vrot.slane %v732, 4
        %v734 = vrot.slane %v527, 5
        %v735 = vsel %vm707, %v733, %v734
        %v736 = vrot.slane %v528, 5
        %v737 = vrot.slane %v736, 4
        %v738 = vrot.slane %v529, 5
        %v739 = vsel %vm707, %v737, %v738
        %v740 = vunpack.c.l.b16 %v711
        %v741 = vunpack.c.l.b16 %v715
        %v742 = vunpack.c.l.b16 %v719
        %v743 = vunpack.c.l.b16 %v723
        %v744 = vunpack.c.l.b16 %v727
        %v745 = vunpack.c.l.b16 %v731
        %v746 = vunpack.c.l.b16 %v735
        %v747 = vunpack.c.l.b16 %v739
        %v748 = vpack.c.b16 %v741, %v740
        %v749 = vpack.c.b16 %v743, %v742
        %v750 = vpack.c.b16 %v745, %v744
        %v751 = vpack.c.b16 %v747, %v746
        %756 = vst [vmem:[#allocation3 + $0x10] sm:$0xff] %v748
        %757 = vst [vmem:[#allocation3 + $0x58] sm:$0xff] %v749
        %758 = vst [vmem:[#allocation3 + $0xa0] sm:$0xff] %v750
        %759 = vst [vmem:[#allocation3 + $0xe8] sm:$0xff] %v751
        %v761 = vunpack.c.l.b16 %v530
        %v762 = vpack.c.b16 %v544, %v543
        %v763 = vpack.c.b16 %v546, %v545
        %v764 = vpack.c.b16 %v548, %v547
        %v765 = vpack.c.b16 %v761, %v549
        %770 = vst [vmem:[#allocation3 + $0x18] sm:$0xff] %v762
        %771 = vst [vmem:[#allocation3 + $0x60] sm:$0xff] %v763
        %772 = vst [vmem:[#allocation3 + $0xa8] sm:$0xff] %v764
        %773 = vst [vmem:[#allocation3 + $0xf0] sm:$0xff] %v765
        %v775 = vshrl.u32 %v530, 16
        %v777 = vrot.slane %v775, 4
        %v778 = vshll.u32 %v530, 16
        %v780 = vrot.slane %v778, 5
        %v781 = vor.u32 %v777, %v780
        %v782 = vrot.slane %v781, 4
        %v784 = vshll.u32 %v531, 16
        %v786 = vrot.slane %v784, 5
        %v787 = vsel %vm564, %v782, %v786
        %v788 = vunpack.c.l.b16 %v787
        %v789 = vpack.c.b16 %v679, %v678
        %v790 = vpack.c.b16 %v681, %v680
        %v791 = vpack.c.b16 %v683, %v682
        %v792 = vpack.c.b16 %v788, %v684
        %797 = vst [vmem:[#allocation3 + $0x20] sm:$0xff] %v789
        %798 = vst [vmem:[#allocation3 + $0x68] sm:$0xff] %v790
        %799 = vst [vmem:[#allocation3 + $0xb0] sm:$0xff] %v791
        %800 = vst [vmem:[#allocation3 + $0xf8] sm:$0xff] %v792
        %v802 = vrot.slane %v530, 5
        %v803 = vrot.slane %v802, 4
        %v804 = vrot.slane %v531, 5
        %v805 = vsel %vm707, %v803, %v804
        %v806 = vunpack.c.l.b16 %v805
        %v807 = vpack.c.b16 %v742, %v741
        %v808 = vpack.c.b16 %v744, %v743
        %v809 = vpack.c.b16 %v746, %v745
        %v810 = vpack.c.b16 %v806, %v747
        %815 = vst [vmem:[#allocation3 + $0x28] sm:$0xff] %v807
        %816 = vst [vmem:[#allocation3 + $0x70] sm:$0xff] %v808
        %817 = vst [vmem:[#allocation3 + $0xb8] sm:$0xff] %v809
        %818 = vst [vmem:[#allocation3 + $0x100] sm:$0xff] %v810
        %v820 = vunpack.c.l.b16 %v532
        %v821 = vpack.c.b16 %v820, %v761
        %823 = vst [vmem:[#allocation3 + $0x30] sm:$0xff] %v551
        %824 = vst [vmem:[#allocation3 + $0x78] sm:$0xff] %v552
        %825 = vst [vmem:[#allocation3 + $0xc0] sm:$0xff] %v553
        %826 = vst [vmem:[#allocation3 + $0x108] sm:$0xff] %v821
        %v828 = vshrl.u32 %v532, 16
        %v830 = vrot.slane %v828, 4
        %v831 = vshll.u32 %v532, 16
        %v833 = vrot.slane %v831, 5
        %v834 = vor.u32 %v830, %v833
        %v835 = vrot.slane %v834, 4
        %v837 = vshll.u32 %v533, 16
        %v839 = vrot.slane %v837, 5
        %v840 = vsel %vm564, %v835, %v839
        %v841 = vunpack.c.l.b16 %v840
        %v842 = vpack.c.b16 %v841, %v788
        %844 = vst [vmem:[#allocation3 + $0x38] sm:$0xff] %v686
        %845 = vst [vmem:[#allocation3 + $0x80] sm:$0xff] %v687
        %846 = vst [vmem:[#allocation3 + $0xc8] sm:$0xff] %v688
        %847 = vst [vmem:[#allocation3 + $0x110] sm:$0xff] %v842
        %v849 = vrot.slane %v532, 5
        %v850 = vrot.slane %v849, 4
        %v851 = vrot.slane %v533, 5
        %v852 = vsel %vm707, %v850, %v851
        %v853 = vunpack.c.l.b16 %v852
        %v854 = vpack.c.b16 %v853, %v806
        %856 = vst [vmem:[#allocation3 + $0x40] sm:$0xff] %v749
        %857 = vst [vmem:[#allocation3 + $0x88] sm:$0xff] %v750
        %858 = vst [vmem:[#allocation3 + $0xd0] sm:$0xff] %v751
        %859 = vst [vmem:[#allocation3 + $0x118] sm:$0xff] %v854
        %v860 = vld [vmem:[#allocation3] sm:$0xff]
        %v861 = vld [vmem:[#allocation3 + $0x8] sm:$0xff]
        %v862 = vld [vmem:[#allocation3 + $0x10] sm:$0xff]
        %v863 = vld [vmem:[#allocation3 + $0x18] sm:$0xff]
        %v864 = vld [vmem:[#allocation3 + $0x20] sm:$0xff]
        %v865 = vld [vmem:[#allocation3 + $0x28] sm:$0xff]
        %v866 = vld [vmem:[#allocation3 + $0x30] sm:$0xff]
        %v867 = vld [vmem:[#allocation3 + $0x38] sm:$0xff]
        %v868 = vld [vmem:[#allocation3 + $0x40] sm:$0xff]
        %v869 = vld [vmem:[#allocation3 + $0x48] sm:$0xff]
        %v870 = vld [vmem:[#allocation3 + $0x50] sm:$0xff]
        %v871 = vld [vmem:[#allocation3 + $0x58] sm:$0xff]
        %v872 = vld [vmem:[#allocation3 + $0x60] sm:$0xff]
        %v873 = vld [vmem:[#allocation3 + $0x68] sm:$0xff]
        %v874 = vld [vmem:[#allocation3 + $0x70] sm:$0xff]
        %v875 = vld [vmem:[#allocation3 + $0x78] sm:$0xff]
        %v876 = vld [vmem:[#allocation3 + $0x80] sm:$0xff]
        %v877 = vld [vmem:[#allocation3 + $0x88] sm:$0xff]
        %v878 = vld [vmem:[#allocation3 + $0x90] sm:$0xff]
        %v879 = vld [vmem:[#allocation3 + $0x98] sm:$0xff]
        %v880 = vld [vmem:[#allocation3 + $0xa0] sm:$0xff]
        %v881 = vld [vmem:[#allocation3 + $0xa8] sm:$0xff]
        %v882 = vld [vmem:[#allocation3 + $0xb0] sm:$0xff]
        %v883 = vld [vmem:[#allocation3 + $0xb8] sm:$0xff]
        %v884 = vld [vmem:[#allocation3 + $0xc0] sm:$0xff]
        %v885 = vld [vmem:[#allocation3 + $0xc8] sm:$0xff]
        %v886 = vld [vmem:[#allocation3 + $0xd0] sm:$0xff]
        %v887 = vld [vmem:[#allocation3 + $0xd8] sm:$0xff]
        %v888 = vld [vmem:[#allocation3 + $0xe0] sm:$0xff]
        %v889 = vld [vmem:[#allocation3 + $0xe8] sm:$0xff]
        %v890 = vld [vmem:[#allocation3 + $0xf0] sm:$0xff]
        %v891 = vld [vmem:[#allocation3 + $0xf8] sm:$0xff]
        %v892 = vld [vmem:[#allocation3 + $0x100] sm:$0xff]
        %v893 = vld [vmem:[#allocation3 + $0x108] sm:$0xff]
        %v894 = vld [vmem:[#allocation3 + $0x110] sm:$0xff]
        %v895 = vld [vmem:[#allocation3 + $0x118] sm:$0xff]
        %v896 = vld [vmem:[#allocation7] sm:$0xf]
        %v897 = vld [vmem:[#allocation7 + $0x4] sm:$0xf]
        %v898 = vld [vmem:[#allocation7 + $0x8] sm:$0xf]
        %v899 = vld [vmem:[#allocation7 + $0xc] sm:$0xf]
        %v900 = vld [vmem:[#allocation7 + $0x10] sm:$0xf]
        %v901 = vld [vmem:[#allocation7 + $0x14] sm:$0xf]
        %v902 = vld [vmem:[#allocation7 + $0x18] sm:$0xf]
        %v903 = vld [vmem:[#allocation7 + $0x1c] sm:$0xf]
        %v904 = vld [vmem:[#allocation7 + $0x20] sm:$0xf]
        %v905 = vld [vmem:[#allocation7 + $0x24] sm:$0xf]
        %v906 = vld [vmem:[#allocation7 + $0x28] sm:$0xf]
        %v907 = vld [vmem:[#allocation7 + $0x2c] sm:$0xf]
        %v908 = vld [vmem:[#allocation7 + $0x30] sm:$0xf]
        %v909 = vld [vmem:[#allocation7 + $0x34] sm:$0xf]
        %v910 = vld [vmem:[#allocation7 + $0x38] sm:$0xf]
        %v911 = vld [vmem:[#allocation7 + $0x3c] sm:$0xf]
        %v912 = vld [vmem:[#allocation7 + $0x40] sm:$0xf]
        %v913 = vld [vmem:[#allocation7 + $0x44] sm:$0xf]
        %v914 = vld [vmem:[#allocation7 + $0x48] sm:$0xf]
        %v915 = vld [vmem:[#allocation7 + $0x4c] sm:$0xf]
        %v916 = vld [vmem:[#allocation7 + $0x50] sm:$0xf]
        %v917 = vld [vmem:[#allocation7 + $0x54] sm:$0xf]
        %v918 = vld [vmem:[#allocation7 + $0x58] sm:$0xf]
        %v919 = vld [vmem:[#allocation7 + $0x5c] sm:$0xf]
        %v920 = vld [vmem:[#allocation7 + $0x60] sm:$0xf]
        %v921 = vld [vmem:[#allocation7 + $0x64] sm:$0xf]
        %v922 = vld [vmem:[#allocation7 + $0x68] sm:$0xf]
        %v923 = vld [vmem:[#allocation7 + $0x6c] sm:$0xf]
        %v924 = vld [vmem:[#allocation7 + $0x70] sm:$0xf]
        %v925 = vld [vmem:[#allocation7 + $0x74] sm:$0xf]
        %v926 = vld [vmem:[#allocation7 + $0x78] sm:$0xf]
        %v927 = vld [vmem:[#allocation7 + $0x7c] sm:$0xf]
        %v928 = vld [vmem:[#allocation7 + $0x80] sm:$0xf]
        %v929 = vld [vmem:[#allocation7 + $0x84] sm:$0xf]
        %v930 = vld [vmem:[#allocation7 + $0x88] sm:$0xf]
        %v931 = vld [vmem:[#allocation7 + $0x8c] sm:$0xf]
        %v932 = vld [vmem:[#allocation7 + $0x90] sm:$0xf]
        %v933 = vld [vmem:[#allocation7 + $0x94] sm:$0xf]
        %v934 = vld [vmem:[#allocation7 + $0x98] sm:$0xf]
        %v935 = vld [vmem:[#allocation7 + $0x9c] sm:$0xf]
        %v936 = vld [vmem:[#allocation7 + $0xa0] sm:$0xf]
        %v937 = vld [vmem:[#allocation7 + $0xa4] sm:$0xf]
        %v938 = vld [vmem:[#allocation7 + $0xa8] sm:$0xf]
        %v939 = vld [vmem:[#allocation7 + $0xac] sm:$0xf]
        %v940 = vld [vmem:[#allocation7 + $0xb0] sm:$0xf]
        %v941 = vld [vmem:[#allocation7 + $0xb4] sm:$0xf]
        %v942 = vld [vmem:[#allocation7 + $0xb8] sm:$0xf]
        %v943 = vld [vmem:[#allocation7 + $0xbc] sm:$0xf]
        %v944 = vld [vmem:[#allocation7 + $0xc0] sm:$0xf]
        %v945 = vld [vmem:[#allocation7 + $0xc4] sm:$0xf]
        %v946 = vld [vmem:[#allocation7 + $0xc8] sm:$0xf]
        %v947 = vld [vmem:[#allocation7 + $0xcc] sm:$0xf]
        %v948 = vld [vmem:[#allocation7 + $0xd0] sm:$0xf]
        %v949 = vld [vmem:[#allocation7 + $0xd4] sm:$0xf]
        %v950 = vld [vmem:[#allocation7 + $0xd8] sm:$0xf]
        %v951 = vld [vmem:[#allocation7 + $0xdc] sm:$0xf]
        %v952 = vld [vmem:[#allocation7 + $0xe0] sm:$0xf]
        %v953 = vld [vmem:[#allocation7 + $0xe4] sm:$0xf]
        %v954 = vld [vmem:[#allocation7 + $0xe8] sm:$0xf]
        %v955 = vld [vmem:[#allocation7 + $0xec] sm:$0xf]
        %v956 = vld [vmem:[#allocation7 + $0xf0] sm:$0xf]
        %v957 = vld [vmem:[#allocation7 + $0xf4] sm:$0xf]
        %v958 = vld [vmem:[#allocation7 + $0xf8] sm:$0xf]
        %v959 = vld [vmem:[#allocation7 + $0xfc] sm:$0xf]
        %v960 = vld [vmem:[#allocation7 + $0x100] sm:$0xf]
        %v961 = vld [vmem:[#allocation7 + $0x104] sm:$0xf]
        %v962 = vld [vmem:[#allocation7 + $0x108] sm:$0xf]
        %v963 = vld [vmem:[#allocation7 + $0x10c] sm:$0xf]
        %v964 = vld [vmem:[#allocation7 + $0x110] sm:$0xf]
        %v965 = vld [vmem:[#allocation7 + $0x114] sm:$0xf]
        %v966 = vld [vmem:[#allocation7 + $0x118] sm:$0xf]
        %v967 = vld [vmem:[#allocation7 + $0x11c] sm:$0xf]
        %v968 = vld [vmem:[#allocation7 + $0x120] sm:$0xf]
        %v969 = vld [vmem:[#allocation7 + $0x124] sm:$0xf]
        %v970 = vld [vmem:[#allocation7 + $0x128] sm:$0xf]
        %v971 = vld [vmem:[#allocation7 + $0x12c] sm:$0xf]
        %v972 = vld [vmem:[#allocation7 + $0x130] sm:$0xf]
        %v973 = vld [vmem:[#allocation7 + $0x134] sm:$0xf]
        %v974 = vld [vmem:[#allocation7 + $0x138] sm:$0xf]
        %v975 = vld [vmem:[#allocation7 + $0x13c] sm:$0xf]
        %v976 = vld [vmem:[#allocation7 + $0x140] sm:$0xf]
        %v977 = vld [vmem:[#allocation7 + $0x144] sm:$0xf]
        %v978 = vld [vmem:[#allocation7 + $0x148] sm:$0xf]
        %v979 = vld [vmem:[#allocation7 + $0x14c] sm:$0xf]
        %v980 = vld [vmem:[#allocation7 + $0x150] sm:$0xf]
        %v981 = vld [vmem:[#allocation7 + $0x154] sm:$0xf]
        %v982 = vld [vmem:[#allocation7 + $0x158] sm:$0xf]
        %v983 = vld [vmem:[#allocation7 + $0x15c] sm:$0xf]
        %v984 = vld [vmem:[#allocation7 + $0x160] sm:$0xf]
        %v985 = vld [vmem:[#allocation7 + $0x164] sm:$0xf]
        %v986 = vld [vmem:[#allocation7 + $0x168] sm:$0xf]
        %v987 = vld [vmem:[#allocation7 + $0x16c] sm:$0xf]
        %v988 = vld [vmem:[#allocation7 + $0x170] sm:$0xf]
        %v989 = vld [vmem:[#allocation7 + $0x174] sm:$0xf]
        %v990 = vld [vmem:[#allocation7 + $0x178] sm:$0xf]
        %v991 = vld [vmem:[#allocation7 + $0x17c] sm:$0xf]
        %v992 = vld [vmem:[#allocation7 + $0x180] sm:$0xf]
        %v993 = vld [vmem:[#allocation7 + $0x184] sm:$0xf]
        %v994 = vld [vmem:[#allocation7 + $0x188] sm:$0xf]
        %v995 = vld [vmem:[#allocation7 + $0x18c] sm:$0xf]
        %v996 = vld [vmem:[#allocation7 + $0x190] sm:$0xf]
        %v997 = vld [vmem:[#allocation7 + $0x194] sm:$0xf]
        %v998 = vld [vmem:[#allocation7 + $0x198] sm:$0xf]
        %v999 = vld [vmem:[#allocation7 + $0x19c] sm:$0xf]
        %v1000 = vld [vmem:[#allocation7 + $0x1a0] sm:$0xf]
        %v1001 = vld [vmem:[#allocation7 + $0x1a4] sm:$0xf]
        %v1002 = vld [vmem:[#allocation7 + $0x1a8] sm:$0xf]
        %v1003 = vld [vmem:[#allocation7 + $0x1ac] sm:$0xf]
        %v1004 = vld [vmem:[#allocation7 + $0x1b0] sm:$0xf]
        %v1005 = vld [vmem:[#allocation7 + $0x1b4] sm:$0xf]
        %v1006 = vld [vmem:[#allocation7 + $0x1b8] sm:$0xf]
        %v1007 = vld [vmem:[#allocation7 + $0x1bc] sm:$0xf]
        %v1008 = vld [vmem:[#allocation7 + $0x1c0] sm:$0xf]
        %v1009 = vld [vmem:[#allocation7 + $0x1c4] sm:$0xf]
        %v1010 = vld [vmem:[#allocation7 + $0x1c8] sm:$0xf]
        %v1011 = vld [vmem:[#allocation7 + $0x1cc] sm:$0xf]
        %v1012 = vld [vmem:[#allocation7 + $0x1d0] sm:$0xf]
        %v1013 = vld [vmem:[#allocation7 + $0x1d4] sm:$0xf]
        %v1014 = vld [vmem:[#allocation7 + $0x1d8] sm:$0xf]
        %v1015 = vld [vmem:[#allocation7 + $0x1dc] sm:$0xf]
        %v1016 = vld [vmem:[#allocation7 + $0x1e0] sm:$0xf]
        %v1017 = vld [vmem:[#allocation7 + $0x1e4] sm:$0xf]
        %v1018 = vld [vmem:[#allocation7 + $0x1e8] sm:$0xf]
        %v1019 = vld [vmem:[#allocation7 + $0x1ec] sm:$0xf]
        %v1020 = vld [vmem:[#allocation7 + $0x1f0] sm:$0xf]
        %v1021 = vld [vmem:[#allocation7 + $0x1f4] sm:$0xf]
        %v1022 = vld [vmem:[#allocation7 + $0x1f8] sm:$0xf]
        %v1023 = vld [vmem:[#allocation7 + $0x1fc] sm:$0xf]
        %v1024 = vld [vmem:[#allocation7 + $0x200] sm:$0xf]
        %v1025 = vld [vmem:[#allocation7 + $0x204] sm:$0xf]
        %v1026 = vld [vmem:[#allocation7 + $0x208] sm:$0xf]
        %v1027 = vld [vmem:[#allocation7 + $0x20c] sm:$0xf]
        %v1028 = vld [vmem:[#allocation7 + $0x210] sm:$0xf]
        %v1029 = vld [vmem:[#allocation7 + $0x214] sm:$0xf]
        %v1030 = vld [vmem:[#allocation7 + $0x218] sm:$0xf]
        %v1031 = vld [vmem:[#allocation7 + $0x21c] sm:$0xf]
        %v1032 = vld [vmem:[#allocation7 + $0x220] sm:$0xf]
        %v1033 = vld [vmem:[#allocation7 + $0x224] sm:$0xf]
        %v1034 = vld [vmem:[#allocation7 + $0x228] sm:$0xf]
        %v1035 = vld [vmem:[#allocation7 + $0x22c] sm:$0xf]
        %v1036 = vld [vmem:[#allocation7 + $0x230] sm:$0xf]
        %v1037 = vld [vmem:[#allocation7 + $0x234] sm:$0xf]
        %v1038 = vld [vmem:[#allocation7 + $0x238] sm:$0xf]
        %v1039 = vld [vmem:[#allocation7 + $0x23c] sm:$0xf]
        %v1040 = vld [vmem:[%s2] sm:$0x1]
        %v1042 = vlaneseq
        %v1043 = vshrl.u32 %v1042, 7
        %v1044 = vsub.s32 0, %v1043
        %v1045 = vrot.slane %v1040, %v1044
        %v1191 = vunpack.c.l.b16 %v896
        %v1192 = vunpack.c.l.b16 %v897
        %v1193 = vunpack.c.l.b16 %v898
        %v1194 = vunpack.c.l.b16 %v899
        %v1195 = vunpack.c.l.b16 %v900
        %v1196 = vunpack.c.l.b16 %v901
        %v1197 = vunpack.c.l.b16 %v902
        %v1198 = vunpack.c.l.b16 %v903
        %v1199 = vunpack.c.l.b16 %v904
        %v1200 = vunpack.c.l.b16 %v905
        %v1201 = vunpack.c.l.b16 %v906
        %v1202 = vunpack.c.l.b16 %v907
        %v1203 = vunpack.c.l.b16 %v908
        %v1204 = vunpack.c.l.b16 %v909
        %v1205 = vunpack.c.l.b16 %v910
        %v1206 = vunpack.c.l.b16 %v911
        %v1207 = vunpack.c.l.b16 %v912
        %v1208 = vunpack.c.l.b16 %v913
        %v1209 = vunpack.c.l.b16 %v914
        %v1210 = vunpack.c.l.b16 %v915
        %v1211 = vunpack.c.l.b16 %v916
        %v1212 = vunpack.c.l.b16 %v917
        %v1213 = vunpack.c.l.b16 %v918
        %v1214 = vunpack.c.l.b16 %v919
        %v1215 = vunpack.c.l.b16 %v920
        %v1216 = vunpack.c.l.b16 %v921
        %v1217 = vunpack.c.l.b16 %v922
        %v1218 = vunpack.c.l.b16 %v923
        %v1219 = vunpack.c.l.b16 %v924
        %v1220 = vunpack.c.l.b16 %v925
        %v1221 = vunpack.c.l.b16 %v926
        %v1222 = vunpack.c.l.b16 %v927
        %v1223 = vunpack.c.l.b16 %v928
        %v1224 = vunpack.c.l.b16 %v929
        %v1225 = vunpack.c.l.b16 %v930
        %v1226 = vunpack.c.l.b16 %v931
        %v1227 = vunpack.c.l.b16 %v932
        %v1228 = vunpack.c.l.b16 %v933
        %v1229 = vunpack.c.l.b16 %v934
        %v1230 = vunpack.c.l.b16 %v935
        %v1231 = vunpack.c.l.b16 %v936
        %v1232 = vunpack.c.l.b16 %v937
        %v1233 = vunpack.c.l.b16 %v938
        %v1234 = vunpack.c.l.b16 %v939
        %v1235 = vunpack.c.l.b16 %v940
        %v1236 = vunpack.c.l.b16 %v941
        %v1237 = vunpack.c.l.b16 %v942
        %v1238 = vunpack.c.l.b16 %v943
        %v1239 = vunpack.c.l.b16 %v944
        %v1240 = vunpack.c.l.b16 %v945
        %v1241 = vunpack.c.l.b16 %v946
        %v1242 = vunpack.c.l.b16 %v947
        %v1243 = vunpack.c.l.b16 %v948
        %v1244 = vunpack.c.l.b16 %v949
        %v1245 = vunpack.c.l.b16 %v950
        %v1246 = vunpack.c.l.b16 %v951
        %v1247 = vunpack.c.l.b16 %v952
        %v1248 = vunpack.c.l.b16 %v953
        %v1249 = vunpack.c.l.b16 %v954
        %v1250 = vunpack.c.l.b16 %v955
        %v1251 = vunpack.c.l.b16 %v956
        %v1252 = vunpack.c.l.b16 %v957
        %v1253 = vunpack.c.l.b16 %v958
        %v1254 = vunpack.c.l.b16 %v959
        %v1255 = vunpack.c.l.b16 %v960
        %v1256 = vunpack.c.l.b16 %v961
        %v1257 = vunpack.c.l.b16 %v962
        %v1258 = vunpack.c.l.b16 %v963
        %v1259 = vunpack.c.l.b16 %v964
        %v1260 = vunpack.c.l.b16 %v965
        %v1261 = vunpack.c.l.b16 %v966
        %v1262 = vunpack.c.l.b16 %v967
        %v1263 = vunpack.c.l.b16 %v968
        %v1264 = vunpack.c.l.b16 %v969
        %v1265 = vunpack.c.l.b16 %v970
        %v1266 = vunpack.c.l.b16 %v971
        %v1267 = vunpack.c.l.b16 %v972
        %v1268 = vunpack.c.l.b16 %v973
        %v1269 = vunpack.c.l.b16 %v974
        %v1270 = vunpack.c.l.b16 %v975
        %v1271 = vunpack.c.l.b16 %v976
        %v1272 = vunpack.c.l.b16 %v977
        %v1273 = vunpack.c.l.b16 %v978
        %v1274 = vunpack.c.l.b16 %v979
        %v1275 = vunpack.c.l.b16 %v980
        %v1276 = vunpack.c.l.b16 %v981
        %v1277 = vunpack.c.l.b16 %v982
        %v1278 = vunpack.c.l.b16 %v983
        %v1279 = vunpack.c.l.b16 %v984
        %v1280 = vunpack.c.l.b16 %v985
        %v1281 = vunpack.c.l.b16 %v986
        %v1282 = vunpack.c.l.b16 %v987
        %v1283 = vunpack.c.l.b16 %v988
        %v1284 = vunpack.c.l.b16 %v989
        %v1285 = vunpack.c.l.b16 %v990
        %v1286 = vunpack.c.l.b16 %v991
        %v1287 = vunpack.c.l.b16 %v992
        %v1288 = vunpack.c.l.b16 %v993
        %v1289 = vunpack.c.l.b16 %v994
        %v1290 = vunpack.c.l.b16 %v995
        %v1291 = vunpack.c.l.b16 %v996
        %v1292 = vunpack.c.l.b16 %v997
        %v1293 = vunpack.c.l.b16 %v998
        %v1294 = vunpack.c.l.b16 %v999
        %v1295 = vunpack.c.l.b16 %v1000
        %v1296 = vunpack.c.l.b16 %v1001
        %v1297 = vunpack.c.l.b16 %v1002
        %v1298 = vunpack.c.l.b16 %v1003
        %v1299 = vunpack.c.l.b16 %v1004
        %v1300 = vunpack.c.l.b16 %v1005
        %v1301 = vunpack.c.l.b16 %v1006
        %v1302 = vunpack.c.l.b16 %v1007
        %v1303 = vunpack.c.l.b16 %v1008
        %v1304 = vunpack.c.l.b16 %v1009
        %v1305 = vunpack.c.l.b16 %v1010
        %v1306 = vunpack.c.l.b16 %v1011
        %v1307 = vunpack.c.l.b16 %v1012
        %v1308 = vunpack.c.l.b16 %v1013
        %v1309 = vunpack.c.l.b16 %v1014
        %v1310 = vunpack.c.l.b16 %v1015
        %v1311 = vunpack.c.l.b16 %v1016
        %v1312 = vunpack.c.l.b16 %v1017
        %v1313 = vunpack.c.l.b16 %v1018
        %v1314 = vunpack.c.l.b16 %v1019
        %v1315 = vunpack.c.l.b16 %v1020
        %v1316 = vunpack.c.l.b16 %v1021
        %v1317 = vunpack.c.l.b16 %v1022
        %v1318 = vunpack.c.l.b16 %v1023
        %v1319 = vunpack.c.l.b16 %v1024
        %v1320 = vunpack.c.l.b16 %v1025
        %v1321 = vunpack.c.l.b16 %v1026
        %v1322 = vunpack.c.l.b16 %v1027
        %v1323 = vunpack.c.l.b16 %v1028
        %v1324 = vunpack.c.l.b16 %v1029
        %v1325 = vunpack.c.l.b16 %v1030
        %v1326 = vunpack.c.l.b16 %v1031
        %v1327 = vunpack.c.l.b16 %v1032
        %v1328 = vunpack.c.l.b16 %v1033
        %v1329 = vunpack.c.l.b16 %v1034
        %v1330 = vunpack.c.l.b16 %v1035
        %v1331 = vunpack.c.l.b16 %v1036
        %v1332 = vunpack.c.l.b16 %v1037
        %v1333 = vunpack.c.l.b16 %v1038
        %v1334 = vunpack.c.l.b16 %v1039
        %v1335 = vpack.c.b16 %v1192, %v1191
        %v1336 = vpack.c.b16 %v1194, %v1193
        %v1337 = vpack.c.b16 %v1196, %v1195
        %v1338 = vpack.c.b16 %v1198, %v1197
        %v1339 = vpack.c.b16 %v1200, %v1199
        %v1340 = vpack.c.b16 %v1202, %v1201
        %v1341 = vpack.c.b16 %v1204, %v1203
        %v1342 = vpack.c.b16 %v1206, %v1205
        %v1343 = vpack.c.b16 %v1208, %v1207
        %v1344 = vpack.c.b16 %v1210, %v1209
        %v1345 = vpack.c.b16 %v1212, %v1211
        %v1346 = vpack.c.b16 %v1214, %v1213
        %v1347 = vpack.c.b16 %v1216, %v1215
        %v1348 = vpack.c.b16 %v1218, %v1217
        %v1349 = vpack.c.b16 %v1220, %v1219
        %v1350 = vpack.c.b16 %v1222, %v1221
        %v1351 = vpack.c.b16 %v1224, %v1223
        %v1352 = vpack.c.b16 %v1226, %v1225
        %v1353 = vpack.c.b16 %v1228, %v1227
        %v1354 = vpack.c.b16 %v1230, %v1229
        %v1355 = vpack.c.b16 %v1232, %v1231
        %v1356 = vpack.c.b16 %v1234, %v1233
        %v1357 = vpack.c.b16 %v1236, %v1235
        %v1358 = vpack.c.b16 %v1238, %v1237
        %v1359 = vpack.c.b16 %v1240, %v1239
        %v1360 = vpack.c.b16 %v1242, %v1241
        %v1361 = vpack.c.b16 %v1244, %v1243
        %v1362 = vpack.c.b16 %v1246, %v1245
        %v1363 = vpack.c.b16 %v1248, %v1247
        %v1364 = vpack.c.b16 %v1250, %v1249
        %v1365 = vpack.c.b16 %v1252, %v1251
        %v1366 = vpack.c.b16 %v1254, %v1253
        %v1367 = vpack.c.b16 %v1256, %v1255
        %v1368 = vpack.c.b16 %v1258, %v1257
        %v1369 = vpack.c.b16 %v1260, %v1259
        %v1370 = vpack.c.b16 %v1262, %v1261
        %v1371 = vpack.c.b16 %v1264, %v1263
        %v1372 = vpack.c.b16 %v1266, %v1265
        %v1373 = vpack.c.b16 %v1268, %v1267
        %v1374 = vpack.c.b16 %v1270, %v1269
        %v1375 = vpack.c.b16 %v1272, %v1271
        %v1376 = vpack.c.b16 %v1274, %v1273
        %v1377 = vpack.c.b16 %v1276, %v1275
        %v1378 = vpack.c.b16 %v1278, %v1277
        %v1379 = vpack.c.b16 %v1280, %v1279
        %v1380 = vpack.c.b16 %v1282, %v1281
        %v1381 = vpack.c.b16 %v1284, %v1283
        %v1382 = vpack.c.b16 %v1286, %v1285
        %v1383 = vpack.c.b16 %v1288, %v1287
        %v1384 = vpack.c.b16 %v1290, %v1289
        %v1385 = vpack.c.b16 %v1292, %v1291
        %v1386 = vpack.c.b16 %v1294, %v1293
        %v1387 = vpack.c.b16 %v1296, %v1295
        %v1388 = vpack.c.b16 %v1298, %v1297
        %v1389 = vpack.c.b16 %v1300, %v1299
        %v1390 = vpack.c.b16 %v1302, %v1301
        %v1391 = vpack.c.b16 %v1304, %v1303
        %v1392 = vpack.c.b16 %v1306, %v1305
        %v1393 = vpack.c.b16 %v1308, %v1307
        %v1394 = vpack.c.b16 %v1310, %v1309
        %v1395 = vpack.c.b16 %v1312, %v1311
        %v1396 = vpack.c.b16 %v1314, %v1313
        %v1397 = vpack.c.b16 %v1316, %v1315
        %v1398 = vpack.c.b16 %v1318, %v1317
        %v1399 = vpack.c.b16 %v1320, %v1319
        %v1400 = vpack.c.b16 %v1322, %v1321
        %v1401 = vpack.c.b16 %v1324, %v1323
        %v1402 = vpack.c.b16 %v1326, %v1325
        %v1403 = vpack.c.b16 %v1328, %v1327
        %v1404 = vpack.c.b16 %v1330, %v1329
        %v1405 = vpack.c.b16 %v1332, %v1331
        %v1406 = vpack.c.b16 %v1334, %v1333
        %1479 = vmatprep.subr.bf16.mxu0 0
        %1480 = vmatpush1.bf16.msra.mxu0 %v1335
        %1481 = vmatprep.subr.bf16.mxu0 0
        %1482 = vmatpush1.bf16.msra.mxu0 %v1336
        %1483 = vmatprep.subr.bf16.mxu0 0
        %1484 = vmatpush1.bf16.msra.mxu0 %v1337
        %1485 = vmatprep.subr.bf16.mxu0 0
        %1486 = vmatpush1.bf16.msra.mxu0 %v1338
        %1487 = vmatprep.subr.bf16.mxu0 0
        %1488 = vmatpush1.bf16.msra.mxu0 %v1339
        %1489 = vmatprep.subr.bf16.mxu0 0
        %1490 = vmatpush1.bf16.msra.mxu0 %v1340
        %1491 = vmatprep.subr.bf16.mxu0 0
        %1492 = vmatpush1.bf16.msra.mxu0 %v1341
        %1493 = vmatprep.subr.bf16.mxu0 0
        %1494 = vmatpush1.bf16.msra.mxu0 %v1342
        %1495 = vmatprep.subr.bf16.mxu0 0
        %1496 = vmatpush1.bf16.msra.mxu0 %v1343
        %1497 = vmatprep.subr.bf16.mxu0 0
        %1498 = vmatpush1.bf16.msra.mxu0 %v1344
        %1499 = vmatprep.subr.bf16.mxu0 0
        %1500 = vmatpush1.bf16.msra.mxu0 %v1345
        %1501 = vmatprep.subr.bf16.mxu0 0
        %1502 = vmatpush1.bf16.msra.mxu0 %v1346
        %1503 = vmatprep.subr.bf16.mxu0 0
        %1504 = vmatpush1.bf16.msra.mxu0 %v1347
        %1505 = vmatprep.subr.bf16.mxu0 0
        %1506 = vmatpush1.bf16.msra.mxu0 %v1348
        %1507 = vmatprep.subr.bf16.mxu0 0
        %1508 = vmatpush1.bf16.msra.mxu0 %v1349
        %1509 = vmatprep.subr.bf16.mxu0 0
        %1510 = vmatpush1.bf16.msra.mxu0 %v1350
        %1511 = vmatprep.mubr.bf16.mxu0 %v861
        %1512 = vmatmul.mubr.bf16.gmra.mrb[0].mxu0 %v860
        %v1513 = vpop.f32.mrb[0].mxu0
        %v1514 = vadd.f32 %v1045, %v1513
        %v1515 = vpop.f32.mrb[0].mxu0
        %v1516 = vpop.f32.mrb[0].mxu0
        %v1517 = vadd.f32 %v1045, %v1516
        %v1518 = vpop.f32.mrb[0].mxu0
        %1519 = vmatprep.mubr.bf16.mxu0 %v870
        %1520 = vmatmul.mubr.bf16.gmra.mrb[0].mxu0 %v869
        %v1521 = vpop.f32.mrb[0].mxu0
        %v1522 = vadd.f32 %v1045, %v1521
        %v1523 = vpop.f32.mrb[0].mxu0
        %v1524 = vpop.f32.mrb[0].mxu0
        %v1525 = vadd.f32 %v1045, %v1524
        %v1526 = vpop.f32.mrb[0].mxu0
        %1527 = vmatprep.mubr.bf16.mxu0 %v879
        %1528 = vmatmul.mubr.bf16.gmra.mrb[0].mxu0 %v878
        %v1529 = vpop.f32.mrb[0].mxu0
        %v1530 = vadd.f32 %v1045, %v1529
        %v1531 = vpop.f32.mrb[0].mxu0
        %v1532 = vpop.f32.mrb[0].mxu0
        %v1533 = vadd.f32 %v1045, %v1532
        %v1534 = vpop.f32.mrb[0].mxu0
        %1535 = vmatprep.mubr.bf16.mxu0 %v888
        %1536 = vmatmul.mubr.bf16.gmra.mrb[0].mxu0 %v887
        %v1537 = vpop.f32.mrb[0].mxu0
        %v1538 = vadd.f32 %v1045, %v1537
        %v1539 = vpop.f32.mrb[0].mxu0
        %v1540 = vpop.f32.mrb[0].mxu0
        %v1541 = vadd.f32 %v1045, %v1540
        %v1542 = vpop.f32.mrb[0].mxu0
        %1543 = vdwg.mxu0
        %1544 = vmatprep.subr.bf16.mxu0 0
        %1545 = vmatpush1.bf16.msra.mxu0 %v1351
        %1546 = vmatprep.subr.bf16.mxu0 0
        %1547 = vmatpush1.bf16.msra.mxu0 %v1352
        %1548 = vmatprep.subr.bf16.mxu0 0
        %1549 = vmatpush1.bf16.msra.mxu0 %v1353
        %1550 = vmatprep.subr.bf16.mxu0 0
        %1551 = vmatpush1.bf16.msra.mxu0 %v1354
        %1552 = vmatprep.subr.bf16.mxu0 0
        %1553 = vmatpush1.bf16.msra.mxu0 %v1355
        %1554 = vmatprep.subr.bf16.mxu0 0
        %1555 = vmatpush1.bf16.msra.mxu0 %v1356
        %1556 = vmatprep.subr.bf16.mxu0 0
        %1557 = vmatpush1.bf16.msra.mxu0 %v1357
        %1558 = vmatprep.subr.bf16.mxu0 0
        %1559 = vmatpush1.bf16.msra.mxu0 %v1358
        %1560 = vmatprep.subr.bf16.mxu0 0
        %1561 = vmatpush1.bf16.msra.mxu0 %v1359
        %1562 = vmatprep.subr.bf16.mxu0 0
        %1563 = vmatpush1.bf16.msra.mxu0 %v1360
        %1564 = vmatprep.subr.bf16.mxu0 0
        %1565 = vmatpush1.bf16.msra.mxu0 %v1361
        %1566 = vmatprep.subr.bf16.mxu0 0
        %1567 = vmatpush1.bf16.msra.mxu0 %v1362
        %1568 = vmatprep.subr.bf16.mxu0 0
        %1569 = vmatpush1.bf16.msra.mxu0 %v1363
        %1570 = vmatprep.subr.bf16.mxu0 0
        %1571 = vmatpush1.bf16.msra.mxu0 %v1364
        %1572 = vmatprep.subr.bf16.mxu0 0
        %1573 = vmatpush1.bf16.msra.mxu0 %v1365
        %1574 = vmatprep.subr.bf16.mxu0 0
        %1575 = vmatpush1.bf16.msra.mxu0 %v1366
        %1576 = vmatprep.mubr.bf16.mxu0 %v863
        %1577 = vmatmul.mubr.bf16.gmra.mrb[0].mxu0 %v862
        %v1578 = vpop.f32.mrb[0].mxu0
        %v1579 = vadd.f32 %v1514, %v1578
        %v1580 = vpop.f32.mrb[0].mxu0
        %v1581 = vpop.f32.mrb[0].mxu0
        %v1582 = vadd.f32 %v1517, %v1581
        %v1583 = vpop.f32.mrb[0].mxu0
        %1584 = vmatprep.mubr.bf16.mxu0 %v872
        %1585 = vmatmul.mubr.bf16.gmra.mrb[0].mxu0 %v871
        %v1586 = vpop.f32.mrb[0].mxu0
        %v1587 = vadd.f32 %v1522, %v1586
        %v1588 = vpop.f32.mrb[0].mxu0
        %v1589 = vpop.f32.mrb[0].mxu0
        %v1590 = vadd.f32 %v1525, %v1589
        %v1591 = vpop.f32.mrb[0].mxu0
        %1592 = vmatprep.mubr.bf16.mxu0 %v881
        %1593 = vmatmul.mubr.bf16.gmra.mrb[0].mxu0 %v880
        %v1594 = vpop.f32.mrb[0].mxu0
        %v1595 = vadd.f32 %v1530, %v1594
        %v1596 = vpop.f32.mrb[0].mxu0
        %v1597 = vpop.f32.mrb[0].mxu0
        %v1598 = vadd.f32 %v1533, %v1597
        %v1599 = vpop.f32.mrb[0].mxu0
        %1600 = vmatprep.mubr.bf16.mxu0 %v890
        %1601 = vmatmul.mubr.bf16.gmra.mrb[0].mxu0 %v889
        %v1602 = vpop.f32.mrb[0].mxu0
        %v1603 = vadd.f32 %v1538, %v1602
        %v1604 = vpop.f32.mrb[0].mxu0
        %v1605 = vpop.f32.mrb[0].mxu0
        %v1606 = vadd.f32 %v1541, %v1605
        %v1607 = vpop.f32.mrb[0].mxu0
        %1608 = vdwg.mxu0
        %1609 = vmatprep.subr.bf16.mxu0 0
        %1610 = vmatpush1.bf16.msra.mxu0 %v1367
        %1611 = vmatprep.subr.bf16.mxu0 0
        %1612 = vmatpush1.bf16.msra.mxu0 %v1368
        %1613 = vmatprep.subr.bf16.mxu0 0
        %1614 = vmatpush1.bf16.msra.mxu0 %v1369
        %1615 = vmatprep.subr.bf16.mxu0 0
        %1616 = vmatpush1.bf16.msra.mxu0 %v1370
        %1617 = vmatprep.subr.bf16.mxu0 0
        %1618 = vmatpush1.bf16.msra.mxu0 %v1371
        %1619 = vmatprep.subr.bf16.mxu0 0
        %1620 = vmatpush1.bf16.msra.mxu0 %v1372
        %1621 = vmatprep.subr.bf16.mxu0 0
        %1622 = vmatpush1.bf16.msra.mxu0 %v1373
        %1623 = vmatprep.subr.bf16.mxu0 0
        %1624 = vmatpush1.bf16.msra.mxu0 %v1374
        %1625 = vmatprep.subr.bf16.mxu0 0
        %1626 = vmatpush1.bf16.msra.mxu0 %v1375
        %1627 = vmatprep.subr.bf16.mxu0 0
        %1628 = vmatpush1.bf16.msra.mxu0 %v1376
        %1629 = vmatprep.subr.bf16.mxu0 0
        %1630 = vmatpush1.bf16.msra.mxu0 %v1377
        %1631 = vmatprep.subr.bf16.mxu0 0
        %1632 = vmatpush1.bf16.msra.mxu0 %v1378
        %1633 = vmatprep.subr.bf16.mxu0 0
        %1634 = vmatpush1.bf16.msra.mxu0 %v1379
        %1635 = vmatprep.subr.bf16.mxu0 0
        %1636 = vmatpush1.bf16.msra.mxu0 %v1380
        %1637 = vmatprep.subr.bf16.mxu0 0
        %1638 = vmatpush1.bf16.msra.mxu0 %v1381
        %1639 = vmatprep.subr.bf16.mxu0 0
        %1640 = vmatpush1.bf16.msra.mxu0 %v1382
        %1641 = vmatprep.mubr.bf16.mxu0 %v865
        %1642 = vmatmul.mubr.bf16.gmra.mrb[0].mxu0 %v864
        %v1643 = vpop.f32.mrb[0].mxu0
        %v1644 = vadd.f32 %v1579, %v1643
        %v1645 = vpop.f32.mrb[0].mxu0
        %v1646 = vpop.f32.mrb[0].mxu0
        %v1647 = vadd.f32 %v1582, %v1646
        %v1648 = vpop.f32.mrb[0].mxu0
        %1649 = vmatprep.mubr.bf16.mxu0 %v874
        %1650 = vmatmul.mubr.bf16.gmra.mrb[0].mxu0 %v873
        %v1651 = vpop.f32.mrb[0].mxu0
        %v1652 = vadd.f32 %v1587, %v1651
        %v1653 = vpop.f32.mrb[0].mxu0
        %v1654 = vpop.f32.mrb[0].mxu0
        %v1655 = vadd.f32 %v1590, %v1654
        %v1656 = vpop.f32.mrb[0].mxu0
        %1657 = vmatprep.mubr.bf16.mxu0 %v883
        %1658 = vmatmul.mubr.bf16.gmra.mrb[0].mxu0 %v882
        %v1659 = vpop.f32.mrb[0].mxu0
        %v1660 = vadd.f32 %v1595, %v1659
        %v1661 = vpop.f32.mrb[0].mxu0
        %v1662 = vpop.f32.mrb[0].mxu0
        %v1663 = vadd.f32 %v1598, %v1662
        %v1664 = vpop.f32.mrb[0].mxu0
        %1665 = vmatprep.mubr.bf16.mxu0 %v892
        %1666 = vmatmul.mubr.bf16.gmra.mrb[0].mxu0 %v891
        %v1667 = vpop.f32.mrb[0].mxu0
        %v1668 = vadd.f32 %v1603, %v1667
        %v1669 = vpop.f32.mrb[0].mxu0
        %v1670 = vpop.f32.mrb[0].mxu0
        %v1671 = vadd.f32 %v1606, %v1670
        %v1672 = vpop.f32.mrb[0].mxu0
        %1673 = vdwg.mxu0
        %1674 = vmatprep.subr.bf16.mxu0 0
        %1675 = vmatpush1.bf16.msra.mxu0 %v1383
        %1676 = vmatprep.subr.bf16.mxu0 0
        %1677 = vmatpush1.bf16.msra.mxu0 %v1384
        %1678 = vmatprep.subr.bf16.mxu0 0
        %1679 = vmatpush1.bf16.msra.mxu0 %v1385
        %1680 = vmatprep.subr.bf16.mxu0 0
        %1681 = vmatpush1.bf16.msra.mxu0 %v1386
        %1682 = vmatprep.subr.bf16.mxu0 0
        %1683 = vmatpush1.bf16.msra.mxu0 %v1387
        %1684 = vmatprep.subr.bf16.mxu0 0
        %1685 = vmatpush1.bf16.msra.mxu0 %v1388
        %1686 = vmatprep.subr.bf16.mxu0 0
        %1687 = vmatpush1.bf16.msra.mxu0 %v1389
        %1688 = vmatprep.subr.bf16.mxu0 0
        %1689 = vmatpush1.bf16.msra.mxu0 %v1390
        %1690 = vmatprep.subr.bf16.mxu0 0
        %1691 = vmatpush1.bf16.msra.mxu0 %v1391
        %1692 = vmatprep.subr.bf16.mxu0 0
        %1693 = vmatpush1.bf16.msra.mxu0 %v1392
        %1694 = vmatprep.subr.bf16.mxu0 0
        %1695 = vmatpush1.bf16.msra.mxu0 %v1393
        %1696 = vmatprep.subr.bf16.mxu0 0
        %1697 = vmatpush1.bf16.msra.mxu0 %v1394
        %1698 = vmatprep.subr.bf16.mxu0 0
        %1699 = vmatpush1.bf16.msra.mxu0 %v1395
        %1700 = vmatprep.subr.bf16.mxu0 0
        %1701 = vmatpush1.bf16.msra.mxu0 %v1396
        %1702 = vmatprep.subr.bf16.mxu0 0
        %1703 = vmatpush1.bf16.msra.mxu0 %v1397
        %1704 = vmatprep.subr.bf16.mxu0 0
        %1705 = vmatpush1.bf16.msra.mxu0 %v1398
        %1706 = vmatprep.mubr.bf16.mxu0 %v867
        %1707 = vmatmul.mubr.bf16.gmra.mrb[0].mxu0 %v866
        %v1708 = vpop.f32.mrb[0].mxu0
        %v1709 = vadd.f32 %v1644, %v1708
        %v1710 = vpop.f32.mrb[0].mxu0
        %v1711 = vpop.f32.mrb[0].mxu0
        %v1712 = vadd.f32 %v1647, %v1711
        %v1713 = vpop.f32.mrb[0].mxu0
        %1714 = vmatprep.mubr.bf16.mxu0 %v876
        %1715 = vmatmul.mubr.bf16.gmra.mrb[0].mxu0 %v875
        %v1716 = vpop.f32.mrb[0].mxu0
        %v1717 = vadd.f32 %v1652, %v1716
        %v1718 = vpop.f32.mrb[0].mxu0
        %v1719 = vpop.f32.mrb[0].mxu0
        %v1720 = vadd.f32 %v1655, %v1719
        %v1721 = vpop.f32.mrb[0].mxu0
        %1722 = vmatprep.mubr.bf16.mxu0 %v885
        %1723 = vmatmul.mubr.bf16.gmra.mrb[0].mxu0 %v884
        %v1724 = vpop.f32.mrb[0].mxu0
        %v1725 = vadd.f32 %v1660, %v1724
        %v1726 = vpop.f32.mrb[0].mxu0
        %v1727 = vpop.f32.mrb[0].mxu0
        %v1728 = vadd.f32 %v1663, %v1727
        %v1729 = vpop.f32.mrb[0].mxu0
        %1730 = vmatprep.mubr.bf16.mxu0 %v894
        %1731 = vmatmul.mubr.bf16.gmra.mrb[0].mxu0 %v893
        %v1732 = vpop.f32.mrb[0].mxu0
        %v1733 = vadd.f32 %v1668, %v1732
        %v1734 = vpop.f32.mrb[0].mxu0
        %v1735 = vpop.f32.mrb[0].mxu0
        %v1736 = vadd.f32 %v1671, %v1735
        %v1737 = vpop.f32.mrb[0].mxu0
        %1738 = vdwg.mxu0
        %1739 = vmatprep.subr.bf16.mxu0 0
        %1740 = vmatpush1.bf16.msra.mxu0 %v1399
        %1741 = vmatprep.subr.bf16.mxu0 0
        %1742 = vmatpush1.bf16.msra.mxu0 %v1400
        %1743 = vmatprep.subr.bf16.mxu0 0
        %1744 = vmatpush1.bf16.msra.mxu0 %v1401
        %1745 = vmatprep.subr.bf16.mxu0 0
        %1746 = vmatpush1.bf16.msra.mxu0 %v1402
        %1747 = vmatprep.subr.bf16.mxu0 0
        %1748 = vmatpush1.bf16.msra.mxu0 %v1403
        %1749 = vmatprep.subr.bf16.mxu0 0
        %1750 = vmatpush1.bf16.msra.mxu0 %v1404
        %1751 = vmatprep.subr.bf16.mxu0 0
        %1752 = vmatpush1.bf16.msra.mxu0 %v1405
        %1753 = vmatprep.subr.bf16.mxu0 0
        %1754 = vmatpush1.bf16.msra.mxu0 %v1406
        %1755 = vmatprep.subr.bf16.mxu0 0
        %1756 = vmatpush1.bf16.msra.mxu0 0
        %1757 = vmatprep.subr.bf16.mxu0 0
        %1758 = vmatpush1.bf16.msra.mxu0 0
        %1759 = vmatprep.subr.bf16.mxu0 0
        %1760 = vmatpush1.bf16.msra.mxu0 0
        %1761 = vmatprep.subr.bf16.mxu0 0
        %1762 = vmatpush1.bf16.msra.mxu0 0
        %1763 = vmatprep.subr.bf16.mxu0 0
        %1764 = vmatpush1.bf16.msra.mxu0 0
        %1765 = vmatprep.subr.bf16.mxu0 0
        %1766 = vmatpush1.bf16.msra.mxu0 0
        %1767 = vmatprep.subr.bf16.mxu0 0
        %1768 = vmatpush1.bf16.msra.mxu0 0
        %1769 = vmatprep.subr.bf16.mxu0 0
        %1770 = vmatpush1.bf16.msra.mxu0 0
        %1771 = vmatprep.mubr.bf16.mxu0 0
        %1772 = vmatmul.mubr.bf16.gmra.mrb[0].mxu0 %v868
        %v1773 = vpop.f32.mrb[0].mxu0
        %v1774 = vadd.f32 %v1709, %v1773
        %v1775 = vpop.f32.mrb[0].mxu0
        %v1776 = vpop.f32.mrb[0].mxu0
        %v1777 = vadd.f32 %v1712, %v1776
        %v1778 = vpop.f32.mrb[0].mxu0
        %1779 = vmatprep.mubr.bf16.mxu0 0
        %1780 = vmatmul.mubr.bf16.gmra.mrb[0].mxu0 %v877
        %v1781 = vpop.f32.mrb[0].mxu0
        %v1782 = vadd.f32 %v1717, %v1781
        %v1783 = vpop.f32.mrb[0].mxu0
        %v1784 = vpop.f32.mrb[0].mxu0
        %v1785 = vadd.f32 %v1720, %v1784
        %v1786 = vpop.f32.mrb[0].mxu0
        %1787 = vmatprep.mubr.bf16.mxu0 0
        %1788 = vmatmul.mubr.bf16.gmra.mrb[0].mxu0 %v886
        %v1789 = vpop.f32.mrb[0].mxu0
        %v1790 = vadd.f32 %v1725, %v1789
        %v1791 = vpop.f32.mrb[0].mxu0
        %v1792 = vpop.f32.mrb[0].mxu0
        %v1793 = vadd.f32 %v1728, %v1792
        %v1794 = vpop.f32.mrb[0].mxu0
        %1795 = vmatprep.mubr.bf16.mxu0 0
        %1796 = vmatmul.mubr.bf16.gmra.mrb[0].mxu0 %v895
        %v1797 = vpop.f32.mrb[0].mxu0
        %v1798 = vadd.f32 %v1733, %v1797
        %v1799 = vpop.f32.mrb[0].mxu0
        %v1800 = vpop.f32.mrb[0].mxu0
        %v1801 = vadd.f32 %v1736, %v1800
        %v1802 = vpop.f32.mrb[0].mxu0
        %1803 = vdwg.mxu0
        %v1804 = vmax.f32 %v1774, 0.0
        %v1805 = vmax.f32 %v1777, 0.0
        %v1806 = vmax.f32 %v1782, 0.0
        %v1807 = vmax.f32 %v1785, 0.0
        %v1808 = vmax.f32 %v1790, 0.0
        %v1809 = vmax.f32 %v1793, 0.0
        %v1810 = vmax.f32 %v1798, 0.0
        %v1811 = vmax.f32 %v1801, 0.0
        %v1812 = vpack.c.bf16 %v1804, %v1804
        %v1813 = vpack.c.bf16 %v1805, %v1805
        %v1814 = vpack.c.bf16 %v1806, %v1806
        %v1815 = vpack.c.bf16 %v1807, %v1807
        %v1816 = vpack.c.bf16 %v1808, %v1808
        %v1817 = vpack.c.bf16 %v1809, %v1809
        %v1818 = vpack.c.bf16 %v1810, %v1810
        %v1819 = vpack.c.bf16 %v1811, %v1811
        %v1828 = vunpack.c.l.b16 %v1812
        %v1829 = vunpack.c.l.b16 %v1813
        %v1830 = vunpack.c.l.b16 %v1814
        %v1831 = vunpack.c.l.b16 %v1815
        %v1832 = vunpack.c.l.b16 %v1816
        %v1833 = vunpack.c.l.b16 %v1817
        %v1834 = vunpack.c.l.b16 %v1818
        %v1835 = vunpack.c.l.b16 %v1819
        %v1836 = vpack.c.b16 %v1828, %v1828
        %v1837 = vpack.c.b16 %v1829, %v1829
        %v1838 = vpack.c.b16 %v1830, %v1830
        %v1839 = vpack.c.b16 %v1831, %v1831
        %v1840 = vpack.c.b16 %v1832, %v1832
        %v1841 = vpack.c.b16 %v1833, %v1833
        %v1842 = vpack.c.b16 %v1834, %v1834
        %v1843 = vpack.c.b16 %v1835, %v1835
        %v1845 = vshrl.u32 %v1836, 16
        %v1847 = vrot.slane %v1845, 7
        %v1848 = vshll.u32 %v1836, 16
        %v1850 = vor.u32 %v1847, %v1848
        %v1851 = vrot.slane %v1847, 4
        %v1853 = vshrl.u32 %v1837, 16
        %v1855 = vrot.slane %v1853, 7
        %v1856 = vshll.u32 %v1837, 16
        %v1858 = vor.u32 %v1855, %v1856
        %v1859 = vrot.slane %v1855, 4
        %v1861 = vshrl.u32 %v1838, 16
        %v1863 = vrot.slane %v1861, 7
        %v1864 = vshll.u32 %v1838, 16
        %v1866 = vor.u32 %v1863, %v1864
        %v1867 = vrot.slane %v1863, 4
        %v1869 = vshrl.u32 %v1839, 16
        %v1871 = vrot.slane %v1869, 7
        %v1872 = vshll.u32 %v1839, 16
        %v1874 = vor.u32 %v1871, %v1872
        %v1875 = vrot.slane %v1871, 4
        %v1877 = vshrl.u32 %v1840, 16
        %v1879 = vrot.slane %v1877, 7
        %v1880 = vshll.u32 %v1840, 16
        %v1882 = vor.u32 %v1879, %v1880
        %v1883 = vrot.slane %v1879, 4
        %v1885 = vshrl.u32 %v1841, 16
        %v1887 = vrot.slane %v1885, 7
        %v1888 = vshll.u32 %v1841, 16
        %v1890 = vor.u32 %v1887, %v1888
        %v1891 = vrot.slane %v1887, 4
        %v1893 = vshrl.u32 %v1842, 16
        %v1895 = vrot.slane %v1893, 7
        %v1896 = vshll.u32 %v1842, 16
        %v1898 = vor.u32 %v1895, %v1896
        %v1899 = vrot.slane %v1895, 4
        %v1901 = vshrl.u32 %v1843, 16
        %v1903 = vrot.slane %v1901, 7
        %v1904 = vshll.u32 %v1843, 16
        %v1906 = vor.u32 %v1903, %v1904
        %v1907 = vrot.slane %v1903, 4
        %v1924 = vld [vmem:[%s463] sm:$0xf]
        %v1925 = vsel %vm465, %v1850, %v1924
        %1926 = vst [vmem:[%s463] sm:$0xf] %v1925
        %v1927 = vld [vmem:[%s463 + $0x4] sm:$0x1]
        %v1928 = vsel %vm280, %v1851, %v1927
        %1929 = vst [vmem:[%s463 + $0x4] sm:$0x1] %v1928
        %v1930 = vld [vmem:[%s463 + $0x8] sm:$0xf]
        %v1931 = vsel %vm465, %v1858, %v1930
        %1932 = vst [vmem:[%s463 + $0x8] sm:$0xf] %v1931
        %v1933 = vld [vmem:[%s463 + $0xc] sm:$0x1]
        %v1934 = vsel %vm280, %v1859, %v1933
        %1935 = vst [vmem:[%s463 + $0xc] sm:$0x1] %v1934
        %v1936 = vld [vmem:[%s463 + $0x10] sm:$0xf]
        %v1937 = vsel %vm465, %v1866, %v1936
        %1938 = vst [vmem:[%s463 + $0x10] sm:$0xf] %v1937
        %v1939 = vld [vmem:[%s463 + $0x14] sm:$0x1]
        %v1940 = vsel %vm280, %v1867, %v1939
        %1941 = vst [vmem:[%s463 + $0x14] sm:$0x1] %v1940
        %v1942 = vld [vmem:[%s463 + $0x18] sm:$0xf]
        %v1943 = vsel %vm465, %v1874, %v1942
        %1944 = vst [vmem:[%s463 + $0x18] sm:$0xf] %v1943
        %v1945 = vld [vmem:[%s463 + $0x1c] sm:$0x1]
        %v1946 = vsel %vm280, %v1875, %v1945
        %1947 = vst [vmem:[%s463 + $0x1c] sm:$0x1] %v1946
        %v1948 = vld [vmem:[%s463 + $0x20] sm:$0xf]
        %v1949 = vsel %vm465, %v1882, %v1948
        %1950 = vst [vmem:[%s463 + $0x20] sm:$0xf] %v1949
        %v1951 = vld [vmem:[%s463 + $0x24] sm:$0x1]
        %v1952 = vsel %vm280, %v1883, %v1951
        %1953 = vst [vmem:[%s463 + $0x24] sm:$0x1] %v1952
        %v1954 = vld [vmem:[%s463 + $0x28] sm:$0xf]
        %v1955 = vsel %vm465, %v1890, %v1954
        %1956 = vst [vmem:[%s463 + $0x28] sm:$0xf] %v1955
        %v1957 = vld [vmem:[%s463 + $0x2c] sm:$0x1]
        %v1958 = vsel %vm280, %v1891, %v1957
        %1959 = vst [vmem:[%s463 + $0x2c] sm:$0x1] %v1958
        %v1960 = vld [vmem:[%s463 + $0x30] sm:$0xf]
        %v1961 = vsel %vm465, %v1898, %v1960
        %1962 = vst [vmem:[%s463 + $0x30] sm:$0xf] %v1961
        %v1963 = vld [vmem:[%s463 + $0x34] sm:$0x1]
        %v1964 = vsel %vm280, %v1899, %v1963
        %1965 = vst [vmem:[%s463 + $0x34] sm:$0x1] %v1964
        %v1966 = vld [vmem:[%s463 + $0x38] sm:$0xf]
        %v1967 = vsel %vm465, %v1906, %v1966
        %1968 = vst [vmem:[%s463 + $0x38] sm:$0xf] %v1967
        %v1969 = vld [vmem:[%s463 + $0x3c] sm:$0x1]
        %v1970 = vsel %vm280, %v1907, %v1969
        %1971 = vst [vmem:[%s463 + $0x3c] sm:$0x1] %v1970
        %v1972 = vld [vmem:[#allocation2] sm:$0xf]
        %v1973 = vld [vmem:[#allocation2 + $0x4] sm:$0x1]
        %v1974 = vld [vmem:[#allocation2 + $0x8] sm:$0xf]
        %v1975 = vld [vmem:[#allocation2 + $0xc] sm:$0x1]
        %v1976 = vld [vmem:[#allocation2 + $0x10] sm:$0xf]
        %v1977 = vld [vmem:[#allocation2 + $0x14] sm:$0x1]
        %v1978 = vld [vmem:[#allocation2 + $0x18] sm:$0xf]
        %v1979 = vld [vmem:[#allocation2 + $0x1c] sm:$0x1]
        %v1980 = vld [vmem:[#allocation2 + $0x20] sm:$0xf]
        %v1981 = vld [vmem:[#allocation2 + $0x24] sm:$0x1]
        %v1982 = vld [vmem:[#allocation2 + $0x28] sm:$0xf]
        %v1983 = vld [vmem:[#allocation2 + $0x2c] sm:$0x1]
        %v1984 = vld [vmem:[#allocation2 + $0x30] sm:$0xf]
        %v1985 = vld [vmem:[#allocation2 + $0x34] sm:$0x1]
        %v1986 = vld [vmem:[#allocation2 + $0x38] sm:$0xf]
        %v1987 = vld [vmem:[#allocation2 + $0x3c] sm:$0x1]
        %v1988 = vld [vmem:[#allocation2 + $0x40] sm:$0xf]
        %v1989 = vld [vmem:[#allocation2 + $0x44] sm:$0x1]
        %v1990 = vld [vmem:[#allocation2 + $0x48] sm:$0xf]
        %v1991 = vld [vmem:[#allocation2 + $0x4c] sm:$0x1]
        %v2000 = vunpack.c.l.b16 %v1972
        %v2001 = vunpack.c.l.b16 %v1974
        %v2002 = vunpack.c.l.b16 %v1976
        %v2003 = vunpack.c.l.b16 %v1978
        %v2004 = vunpack.c.l.b16 %v1980
        %v2005 = vunpack.c.l.b16 %v1982
        %v2006 = vunpack.c.l.b16 %v1984
        %v2007 = vunpack.c.l.b16 %v1986
        %v2008 = vpack.c.b16 %v2001, %v2000
        %v2009 = vpack.c.b16 %v2003, %v2002
        %v2010 = vpack.c.b16 %v2005, %v2004
        %v2011 = vpack.c.b16 %v2007, %v2006
        %2016 = vst [vmem:[#allocation3] sm:$0xff] %v2008
        %2017 = vst [vmem:[#allocation3 + $0x48] sm:$0xff] %v2009
        %2018 = vst [vmem:[#allocation3 + $0x90] sm:$0xff] %v2010
        %2019 = vst [vmem:[#allocation3 + $0xd8] sm:$0xff] %v2011
        %v2021 = vshrl.u32 %v1972, 16
        %v2023 = vrot.slane %v2021, 4
        %v2024 = vshll.u32 %v1972, 16
        %v2026 = vrot.slane %v2024, 5
        %v2027 = vor.u32 %v2023, %v2026
        %v2028 = vrot.slane %v2027, 4
        %v2030 = vshll.u32 %v1973, 16
        %v2032 = vrot.slane %v2030, 5
        %v2033 = vsel %vm564, %v2028, %v2032
        %v2035 = vshrl.u32 %v1974, 16
        %v2037 = vrot.slane %v2035, 4
        %v2038 = vshll.u32 %v1974, 16
        %v2040 = vrot.slane %v2038, 5
        %v2041 = vor.u32 %v2037, %v2040
        %v2042 = vrot.slane %v2041, 4
        %v2044 = vshll.u32 %v1975, 16
        %v2046 = vrot.slane %v2044, 5
        %v2047 = vsel %vm564, %v2042, %v2046
        %v2049 = vshrl.u32 %v1976, 16
        %v2051 = vrot.slane %v2049, 4
        %v2052 = vshll.u32 %v1976, 16
        %v2054 = vrot.slane %v2052, 5
        %v2055 = vor.u32 %v2051, %v2054
        %v2056 = vrot.slane %v2055, 4
        %v2058 = vshll.u32 %v1977, 16
        %v2060 = vrot.slane %v2058, 5
        %v2061 = vsel %vm564, %v2056, %v2060
        %v2063 = vshrl.u32 %v1978, 16
        %v2065 = vrot.slane %v2063, 4
        %v2066 = vshll.u32 %v1978, 16
        %v2068 = vrot.slane %v2066, 5
        %v2069 = vor.u32 %v2065, %v2068
        %v2070 = vrot.slane %v2069, 4
        %v2072 = vshll.u32 %v1979, 16
        %v2074 = vrot.slane %v2072, 5
        %v2075 = vsel %vm564, %v2070, %v2074
        %v2077 = vshrl.u32 %v1980, 16
        %v2079 = vrot.slane %v2077, 4
        %v2080 = vshll.u32 %v1980, 16
        %v2082 = vrot.slane %v2080, 5
        %v2083 = vor.u32 %v2079, %v2082
        %v2084 = vrot.slane %v2083, 4
        %v2086 = vshll.u32 %v1981, 16
        %v2088 = vrot.slane %v2086, 5
        %v2089 = vsel %vm564, %v2084, %v2088
        %v2091 = vshrl.u32 %v1982, 16
        %v2093 = vrot.slane %v2091, 4
        %v2094 = vshll.u32 %v1982, 16
        %v2096 = vrot.slane %v2094, 5
        %v2097 = vor.u32 %v2093, %v2096
        %v2098 = vrot.slane %v2097, 4
        %v2100 = vshll.u32 %v1983, 16
        %v2102 = vrot.slane %v2100, 5
        %v2103 = vsel %vm564, %v2098, %v2102
        %v2105 = vshrl.u32 %v1984, 16
        %v2107 = vrot.slane %v2105, 4
        %v2108 = vshll.u32 %v1984, 16
        %v2110 = vrot.slane %v2108, 5
        %v2111 = vor.u32 %v2107, %v2110
        %v2112 = vrot.slane %v2111, 4
        %v2114 = vshll.u32 %v1985, 16
        %v2116 = vrot.slane %v2114, 5
        %v2117 = vsel %vm564, %v2112, %v2116
        %v2119 = vshrl.u32 %v1986, 16
        %v2121 = vrot.slane %v2119, 4
        %v2122 = vshll.u32 %v1986, 16
        %v2124 = vrot.slane %v2122, 5
        %v2125 = vor.u32 %v2121, %v2124
        %v2126 = vrot.slane %v2125, 4
        %v2128 = vshll.u32 %v1987, 16
        %v2130 = vrot.slane %v2128, 5
        %v2131 = vsel %vm564, %v2126, %v2130
        %v2132 = vunpack.c.l.b16 %v2033
        %v2133 = vunpack.c.l.b16 %v2047
        %v2134 = vunpack.c.l.b16 %v2061
        %v2135 = vunpack.c.l.b16 %v2075
        %v2136 = vunpack.c.l.b16 %v2089
        %v2137 = vunpack.c.l.b16 %v2103
        %v2138 = vunpack.c.l.b16 %v2117
        %v2139 = vunpack.c.l.b16 %v2131
        %v2140 = vpack.c.b16 %v2133, %v2132
        %v2141 = vpack.c.b16 %v2135, %v2134
        %v2142 = vpack.c.b16 %v2137, %v2136
        %v2143 = vpack.c.b16 %v2139, %v2138
        %2148 = vst [vmem:[#allocation3 + $0x8] sm:$0xff] %v2140
        %2149 = vst [vmem:[#allocation3 + $0x50] sm:$0xff] %v2141
        %2150 = vst [vmem:[#allocation3 + $0x98] sm:$0xff] %v2142
        %2151 = vst [vmem:[#allocation3 + $0xe0] sm:$0xff] %v2143
        %v2160 = vrot.slane %v1972, 5
        %v2161 = vrot.slane %v2160, 4
        %v2162 = vrot.slane %v1973, 5
        %v2163 = vsel %vm707, %v2161, %v2162
        %v2164 = vrot.slane %v1974, 5
        %v2165 = vrot.slane %v2164, 4
        %v2166 = vrot.slane %v1975, 5
        %v2167 = vsel %vm707, %v2165, %v2166
        %v2168 = vrot.slane %v1976, 5
        %v2169 = vrot.slane %v2168, 4
        %v2170 = vrot.slane %v1977, 5
        %v2171 = vsel %vm707, %v2169, %v2170
        %v2172 = vrot.slane %v1978, 5
        %v2173 = vrot.slane %v2172, 4
        %v2174 = vrot.slane %v1979, 5
        %v2175 = vsel %vm707, %v2173, %v2174
        %v2176 = vrot.slane %v1980, 5
        %v2177 = vrot.slane %v2176, 4
        %v2178 = vrot.slane %v1981, 5
        %v2179 = vsel %vm707, %v2177, %v2178
        %v2180 = vrot.slane %v1982, 5
        %v2181 = vrot.slane %v2180, 4
        %v2182 = vrot.slane %v1983, 5
        %v2183 = vsel %vm707, %v2181, %v2182
        %v2184 = vrot.slane %v1984, 5
        %v2185 = vrot.slane %v2184, 4
        %v2186 = vrot.slane %v1985, 5
        %v2187 = vsel %vm707, %v2185, %v2186
        %v2188 = vrot.slane %v1986, 5
        %v2189 = vrot.slane %v2188, 4
        %v2190 = vrot.slane %v1987, 5
        %v2191 = vsel %vm707, %v2189, %v2190
        %v2192 = vunpack.c.l.b16 %v2163
        %v2193 = vunpack.c.l.b16 %v2167
        %v2194 = vunpack.c.l.b16 %v2171
        %v2195 = vunpack.c.l.b16 %v2175
        %v2196 = vunpack.c.l.b16 %v2179
        %v2197 = vunpack.c.l.b16 %v2183
        %v2198 = vunpack.c.l.b16 %v2187
        %v2199 = vunpack.c.l.b16 %v2191
        %v2200 = vpack.c.b16 %v2193, %v2192
        %v2201 = vpack.c.b16 %v2195, %v2194
        %v2202 = vpack.c.b16 %v2197, %v2196
        %v2203 = vpack.c.b16 %v2199, %v2198
        %2208 = vst [vmem:[#allocation3 + $0x10] sm:$0xff] %v2200
        %2209 = vst [vmem:[#allocation3 + $0x58] sm:$0xff] %v2201
        %2210 = vst [vmem:[#allocation3 + $0xa0] sm:$0xff] %v2202
        %2211 = vst [vmem:[#allocation3 + $0xe8] sm:$0xff] %v2203
        %v2213 = vunpack.c.l.b16 %v1988
        %v2214 = vpack.c.b16 %v2002, %v2001
        %v2215 = vpack.c.b16 %v2004, %v2003
        %v2216 = vpack.c.b16 %v2006, %v2005
        %v2217 = vpack.c.b16 %v2213, %v2007
        %2222 = vst [vmem:[#allocation3 + $0x18] sm:$0xff] %v2214
        %2223 = vst [vmem:[#allocation3 + $0x60] sm:$0xff] %v2215
        %2224 = vst [vmem:[#allocation3 + $0xa8] sm:$0xff] %v2216
        %2225 = vst [vmem:[#allocation3 + $0xf0] sm:$0xff] %v2217
        %v2227 = vshrl.u32 %v1988, 16
        %v2229 = vrot.slane %v2227, 4
        %v2230 = vshll.u32 %v1988, 16
        %v2232 = vrot.slane %v2230, 5
        %v2233 = vor.u32 %v2229, %v2232
        %v2234 = vrot.slane %v2233, 4
        %v2236 = vshll.u32 %v1989, 16
        %v2238 = vrot.slane %v2236, 5
        %v2239 = vsel %vm564, %v2234, %v2238
        %v2240 = vunpack.c.l.b16 %v2239
        %v2241 = vpack.c.b16 %v2134, %v2133
        %v2242 = vpack.c.b16 %v2136, %v2135
        %v2243 = vpack.c.b16 %v2138, %v2137
        %v2244 = vpack.c.b16 %v2240, %v2139
        %2249 = vst [vmem:[#allocation3 + $0x20] sm:$0xff] %v2241
        %2250 = vst [vmem:[#allocation3 + $0x68] sm:$0xff] %v2242
        %2251 = vst [vmem:[#allocation3 + $0xb0] sm:$0xff] %v2243
        %2252 = vst [vmem:[#allocation3 + $0xf8] sm:$0xff] %v2244
        %v2254 = vrot.slane %v1988, 5
        %v2255 = vrot.slane %v2254, 4
        %v2256 = vrot.slane %v1989, 5
        %v2257 = vsel %vm707, %v2255, %v2256
        %v2258 = vunpack.c.l.b16 %v2257
        %v2259 = vpack.c.b16 %v2194, %v2193
        %v2260 = vpack.c.b16 %v2196, %v2195
        %v2261 = vpack.c.b16 %v2198, %v2197
        %v2262 = vpack.c.b16 %v2258, %v2199
        %2267 = vst [vmem:[#allocation3 + $0x28] sm:$0xff] %v2259
        %2268 = vst [vmem:[#allocation3 + $0x70] sm:$0xff] %v2260
        %2269 = vst [vmem:[#allocation3 + $0xb8] sm:$0xff] %v2261
        %2270 = vst [vmem:[#allocation3 + $0x100] sm:$0xff] %v2262
        %v2272 = vunpack.c.l.b16 %v1990
        %v2273 = vpack.c.b16 %v2272, %v2213
        %2275 = vst [vmem:[#allocation3 + $0x30] sm:$0xff] %v2009
        %2276 = vst [vmem:[#allocation3 + $0x78] sm:$0xff] %v2010
        %2277 = vst [vmem:[#allocation3 + $0xc0] sm:$0xff] %v2011
        %2278 = vst [vmem:[#allocation3 + $0x108] sm:$0xff] %v2273
        %v2280 = vshrl.u32 %v1990, 16
        %v2282 = vrot.slane %v2280, 4
        %v2283 = vshll.u32 %v1990, 16
        %v2285 = vrot.slane %v2283, 5
        %v2286 = vor.u32 %v2282, %v2285
        %v2287 = vrot.slane %v2286, 4
        %v2289 = vshll.u32 %v1991, 16
        %v2291 = vrot.slane %v2289, 5
        %v2292 = vsel %vm564, %v2287, %v2291
        %v2293 = vunpack.c.l.b16 %v2292
        %v2294 = vpack.c.b16 %v2293, %v2240
        %2296 = vst [vmem:[#allocation3 + $0x38] sm:$0xff] %v2141
        %2297 = vst [vmem:[#allocation3 + $0x80] sm:$0xff] %v2142
        %2298 = vst [vmem:[#allocation3 + $0xc8] sm:$0xff] %v2143
        %2299 = vst [vmem:[#allocation3 + $0x110] sm:$0xff] %v2294
        %v2301 = vrot.slane %v1990, 5
        %v2302 = vrot.slane %v2301, 4
        %v2303 = vrot.slane %v1991, 5
        %v2304 = vsel %vm707, %v2302, %v2303
        %v2305 = vunpack.c.l.b16 %v2304
        %v2306 = vpack.c.b16 %v2305, %v2258
        %2308 = vst [vmem:[#allocation3 + $0x40] sm:$0xff] %v2201
        %2309 = vst [vmem:[#allocation3 + $0x88] sm:$0xff] %v2202
        %2310 = vst [vmem:[#allocation3 + $0xd0] sm:$0xff] %v2203
        %2311 = vst [vmem:[#allocation3 + $0x118] sm:$0xff] %v2306
        %v2312 = vld [vmem:[#allocation3] sm:$0xff]
        %v2313 = vld [vmem:[#allocation3 + $0x8] sm:$0xff]
        %v2314 = vld [vmem:[#allocation3 + $0x10] sm:$0xff]
        %v2315 = vld [vmem:[#allocation3 + $0x18] sm:$0xff]
        %v2316 = vld [vmem:[#allocation3 + $0x20] sm:$0xff]
        %v2317 = vld [vmem:[#allocation3 + $0x28] sm:$0xff]
        %v2318 = vld [vmem:[#allocation3 + $0x30] sm:$0xff]
        %v2319 = vld [vmem:[#allocation3 + $0x38] sm:$0xff]
        %v2320 = vld [vmem:[#allocation3 + $0x40] sm:$0xff]
        %v2321 = vld [vmem:[#allocation3 + $0x48] sm:$0xff]
        %v2322 = vld [vmem:[#allocation3 + $0x50] sm:$0xff]
        %v2323 = vld [vmem:[#allocation3 + $0x58] sm:$0xff]
        %v2324 = vld [vmem:[#allocation3 + $0x60] sm:$0xff]
        %v2325 = vld [vmem:[#allocation3 + $0x68] sm:$0xff]
        %v2326 = vld [vmem:[#allocation3 + $0x70] sm:$0xff]
        %v2327 = vld [vmem:[#allocation3 + $0x78] sm:$0xff]
        %v2328 = vld [vmem:[#allocation3 + $0x80] sm:$0xff]
        %v2329 = vld [vmem:[#allocation3 + $0x88] sm:$0xff]
        %v2330 = vld [vmem:[#allocation3 + $0x90] sm:$0xff]
        %v2331 = vld [vmem:[#allocation3 + $0x98] sm:$0xff]
        %v2332 = vld [vmem:[#allocation3 + $0xa0] sm:$0xff]
        %v2333 = vld [vmem:[#allocation3 + $0xa8] sm:$0xff]
        %v2334 = vld [vmem:[#allocation3 + $0xb0] sm:$0xff]
        %v2335 = vld [vmem:[#allocation3 + $0xb8] sm:$0xff]
        %v2336 = vld [vmem:[#allocation3 + $0xc0] sm:$0xff]
        %v2337 = vld [vmem:[#allocation3 + $0xc8] sm:$0xff]
        %v2338 = vld [vmem:[#allocation3 + $0xd0] sm:$0xff]
        %v2339 = vld [vmem:[#allocation3 + $0xd8] sm:$0xff]
        %v2340 = vld [vmem:[#allocation3 + $0xe0] sm:$0xff]
        %v2341 = vld [vmem:[#allocation3 + $0xe8] sm:$0xff]
        %v2342 = vld [vmem:[#allocation3 + $0xf0] sm:$0xff]
        %v2343 = vld [vmem:[#allocation3 + $0xf8] sm:$0xff]
        %v2344 = vld [vmem:[#allocation3 + $0x100] sm:$0xff]
        %v2345 = vld [vmem:[#allocation3 + $0x108] sm:$0xff]
        %v2346 = vld [vmem:[#allocation3 + $0x110] sm:$0xff]
        %v2347 = vld [vmem:[#allocation3 + $0x118] sm:$0xff]
        %v2348 = vld [vmem:[#allocation9] sm:$0xf]
        %v2349 = vld [vmem:[#allocation9 + $0x4] sm:$0xf]
        %v2350 = vld [vmem:[#allocation9 + $0x8] sm:$0xf]
        %v2351 = vld [vmem:[#allocation9 + $0xc] sm:$0xf]
        %v2352 = vld [vmem:[#allocation9 + $0x10] sm:$0xf]
        %v2353 = vld [vmem:[#allocation9 + $0x14] sm:$0xf]
        %v2354 = vld [vmem:[#allocation9 + $0x18] sm:$0xf]
        %v2355 = vld [vmem:[#allocation9 + $0x1c] sm:$0xf]
        %v2356 = vld [vmem:[#allocation9 + $0x20] sm:$0xf]
        %v2357 = vld [vmem:[#allocation9 + $0x24] sm:$0xf]
        %v2358 = vld [vmem:[#allocation9 + $0x28] sm:$0xf]
        %v2359 = vld [vmem:[#allocation9 + $0x2c] sm:$0xf]
        %v2360 = vld [vmem:[#allocation9 + $0x30] sm:$0xf]
        %v2361 = vld [vmem:[#allocation9 + $0x34] sm:$0xf]
        %v2362 = vld [vmem:[#allocation9 + $0x38] sm:$0xf]
        %v2363 = vld [vmem:[#allocation9 + $0x3c] sm:$0xf]
        %v2364 = vld [vmem:[#allocation9 + $0x40] sm:$0xf]
        %v2365 = vld [vmem:[#allocation9 + $0x44] sm:$0xf]
        %v2366 = vld [vmem:[#allocation9 + $0x48] sm:$0xf]
        %v2367 = vld [vmem:[#allocation9 + $0x4c] sm:$0xf]
        %v2368 = vld [vmem:[#allocation9 + $0x50] sm:$0xf]
        %v2369 = vld [vmem:[#allocation9 + $0x54] sm:$0xf]
        %v2370 = vld [vmem:[#allocation9 + $0x58] sm:$0xf]
        %v2371 = vld [vmem:[#allocation9 + $0x5c] sm:$0xf]
        %v2372 = vld [vmem:[#allocation9 + $0x60] sm:$0xf]
        %v2373 = vld [vmem:[#allocation9 + $0x64] sm:$0xf]
        %v2374 = vld [vmem:[#allocation9 + $0x68] sm:$0xf]
        %v2375 = vld [vmem:[#allocation9 + $0x6c] sm:$0xf]
        %v2376 = vld [vmem:[#allocation9 + $0x70] sm:$0xf]
        %v2377 = vld [vmem:[#allocation9 + $0x74] sm:$0xf]
        %v2378 = vld [vmem:[#allocation9 + $0x78] sm:$0xf]
        %v2379 = vld [vmem:[#allocation9 + $0x7c] sm:$0xf]
        %v2380 = vld [vmem:[#allocation9 + $0x80] sm:$0xf]
        %v2381 = vld [vmem:[#allocation9 + $0x84] sm:$0xf]
        %v2382 = vld [vmem:[#allocation9 + $0x88] sm:$0xf]
        %v2383 = vld [vmem:[#allocation9 + $0x8c] sm:$0xf]
        %v2384 = vld [vmem:[#allocation9 + $0x90] sm:$0xf]
        %v2385 = vld [vmem:[#allocation9 + $0x94] sm:$0xf]
        %v2386 = vld [vmem:[#allocation9 + $0x98] sm:$0xf]
        %v2387 = vld [vmem:[#allocation9 + $0x9c] sm:$0xf]
        %v2388 = vld [vmem:[#allocation9 + $0xa0] sm:$0xf]
        %v2389 = vld [vmem:[#allocation9 + $0xa4] sm:$0xf]
        %v2390 = vld [vmem:[#allocation9 + $0xa8] sm:$0xf]
        %v2391 = vld [vmem:[#allocation9 + $0xac] sm:$0xf]
        %v2392 = vld [vmem:[#allocation9 + $0xb0] sm:$0xf]
        %v2393 = vld [vmem:[#allocation9 + $0xb4] sm:$0xf]
        %v2394 = vld [vmem:[#allocation9 + $0xb8] sm:$0xf]
        %v2395 = vld [vmem:[#allocation9 + $0xbc] sm:$0xf]
        %v2396 = vld [vmem:[#allocation9 + $0xc0] sm:$0xf]
        %v2397 = vld [vmem:[#allocation9 + $0xc4] sm:$0xf]
        %v2398 = vld [vmem:[#allocation9 + $0xc8] sm:$0xf]
        %v2399 = vld [vmem:[#allocation9 + $0xcc] sm:$0xf]
        %v2400 = vld [vmem:[#allocation9 + $0xd0] sm:$0xf]
        %v2401 = vld [vmem:[#allocation9 + $0xd4] sm:$0xf]
        %v2402 = vld [vmem:[#allocation9 + $0xd8] sm:$0xf]
        %v2403 = vld [vmem:[#allocation9 + $0xdc] sm:$0xf]
        %v2404 = vld [vmem:[#allocation9 + $0xe0] sm:$0xf]
        %v2405 = vld [vmem:[#allocation9 + $0xe4] sm:$0xf]
        %v2406 = vld [vmem:[#allocation9 + $0xe8] sm:$0xf]
        %v2407 = vld [vmem:[#allocation9 + $0xec] sm:$0xf]
        %v2408 = vld [vmem:[#allocation9 + $0xf0] sm:$0xf]
        %v2409 = vld [vmem:[#allocation9 + $0xf4] sm:$0xf]
        %v2410 = vld [vmem:[#allocation9 + $0xf8] sm:$0xf]
        %v2411 = vld [vmem:[#allocation9 + $0xfc] sm:$0xf]
        %v2412 = vld [vmem:[#allocation9 + $0x100] sm:$0xf]
        %v2413 = vld [vmem:[#allocation9 + $0x104] sm:$0xf]
        %v2414 = vld [vmem:[#allocation9 + $0x108] sm:$0xf]
        %v2415 = vld [vmem:[#allocation9 + $0x10c] sm:$0xf]
        %v2416 = vld [vmem:[#allocation9 + $0x110] sm:$0xf]
        %v2417 = vld [vmem:[#allocation9 + $0x114] sm:$0xf]
        %v2418 = vld [vmem:[#allocation9 + $0x118] sm:$0xf]
        %v2419 = vld [vmem:[#allocation9 + $0x11c] sm:$0xf]
        %v2420 = vld [vmem:[#allocation9 + $0x120] sm:$0xf]
        %v2421 = vld [vmem:[#allocation9 + $0x124] sm:$0xf]
        %v2422 = vld [vmem:[#allocation9 + $0x128] sm:$0xf]
        %v2423 = vld [vmem:[#allocation9 + $0x12c] sm:$0xf]
        %v2424 = vld [vmem:[#allocation9 + $0x130] sm:$0xf]
        %v2425 = vld [vmem:[#allocation9 + $0x134] sm:$0xf]
        %v2426 = vld [vmem:[#allocation9 + $0x138] sm:$0xf]
        %v2427 = vld [vmem:[#allocation9 + $0x13c] sm:$0xf]
        %v2428 = vld [vmem:[#allocation9 + $0x140] sm:$0xf]
        %v2429 = vld [vmem:[#allocation9 + $0x144] sm:$0xf]
        %v2430 = vld [vmem:[#allocation9 + $0x148] sm:$0xf]
        %v2431 = vld [vmem:[#allocation9 + $0x14c] sm:$0xf]
        %v2432 = vld [vmem:[#allocation9 + $0x150] sm:$0xf]
        %v2433 = vld [vmem:[#allocation9 + $0x154] sm:$0xf]
        %v2434 = vld [vmem:[#allocation9 + $0x158] sm:$0xf]
        %v2435 = vld [vmem:[#allocation9 + $0x15c] sm:$0xf]
        %v2436 = vld [vmem:[#allocation9 + $0x160] sm:$0xf]
        %v2437 = vld [vmem:[#allocation9 + $0x164] sm:$0xf]
        %v2438 = vld [vmem:[#allocation9 + $0x168] sm:$0xf]
        %v2439 = vld [vmem:[#allocation9 + $0x16c] sm:$0xf]
        %v2440 = vld [vmem:[#allocation9 + $0x170] sm:$0xf]
        %v2441 = vld [vmem:[#allocation9 + $0x174] sm:$0xf]
        %v2442 = vld [vmem:[#allocation9 + $0x178] sm:$0xf]
        %v2443 = vld [vmem:[#allocation9 + $0x17c] sm:$0xf]
        %v2444 = vld [vmem:[#allocation9 + $0x180] sm:$0xf]
        %v2445 = vld [vmem:[#allocation9 + $0x184] sm:$0xf]
        %v2446 = vld [vmem:[#allocation9 + $0x188] sm:$0xf]
        %v2447 = vld [vmem:[#allocation9 + $0x18c] sm:$0xf]
        %v2448 = vld [vmem:[#allocation9 + $0x190] sm:$0xf]
        %v2449 = vld [vmem:[#allocation9 + $0x194] sm:$0xf]
        %v2450 = vld [vmem:[#allocation9 + $0x198] sm:$0xf]
        %v2451 = vld [vmem:[#allocation9 + $0x19c] sm:$0xf]
        %v2452 = vld [vmem:[#allocation9 + $0x1a0] sm:$0xf]
        %v2453 = vld [vmem:[#allocation9 + $0x1a4] sm:$0xf]
        %v2454 = vld [vmem:[#allocation9 + $0x1a8] sm:$0xf]
        %v2455 = vld [vmem:[#allocation9 + $0x1ac] sm:$0xf]
        %v2456 = vld [vmem:[#allocation9 + $0x1b0] sm:$0xf]
        %v2457 = vld [vmem:[#allocation9 + $0x1b4] sm:$0xf]
        %v2458 = vld [vmem:[#allocation9 + $0x1b8] sm:$0xf]
        %v2459 = vld [vmem:[#allocation9 + $0x1bc] sm:$0xf]
        %v2460 = vld [vmem:[#allocation9 + $0x1c0] sm:$0xf]
        %v2461 = vld [vmem:[#allocation9 + $0x1c4] sm:$0xf]
        %v2462 = vld [vmem:[#allocation9 + $0x1c8] sm:$0xf]
        %v2463 = vld [vmem:[#allocation9 + $0x1cc] sm:$0xf]
        %v2464 = vld [vmem:[#allocation9 + $0x1d0] sm:$0xf]
        %v2465 = vld [vmem:[#allocation9 + $0x1d4] sm:$0xf]
        %v2466 = vld [vmem:[#allocation9 + $0x1d8] sm:$0xf]
        %v2467 = vld [vmem:[#allocation9 + $0x1dc] sm:$0xf]
        %v2468 = vld [vmem:[#allocation9 + $0x1e0] sm:$0xf]
        %v2469 = vld [vmem:[#allocation9 + $0x1e4] sm:$0xf]
        %v2470 = vld [vmem:[#allocation9 + $0x1e8] sm:$0xf]
        %v2471 = vld [vmem:[#allocation9 + $0x1ec] sm:$0xf]
        %v2472 = vld [vmem:[#allocation9 + $0x1f0] sm:$0xf]
        %v2473 = vld [vmem:[#allocation9 + $0x1f4] sm:$0xf]
        %v2474 = vld [vmem:[#allocation9 + $0x1f8] sm:$0xf]
        %v2475 = vld [vmem:[#allocation9 + $0x1fc] sm:$0xf]
        %v2476 = vld [vmem:[#allocation9 + $0x200] sm:$0xf]
        %v2477 = vld [vmem:[#allocation9 + $0x204] sm:$0xf]
        %v2478 = vld [vmem:[#allocation9 + $0x208] sm:$0xf]
        %v2479 = vld [vmem:[#allocation9 + $0x20c] sm:$0xf]
        %v2480 = vld [vmem:[#allocation9 + $0x210] sm:$0xf]
        %v2481 = vld [vmem:[#allocation9 + $0x214] sm:$0xf]
        %v2482 = vld [vmem:[#allocation9 + $0x218] sm:$0xf]
        %v2483 = vld [vmem:[#allocation9 + $0x21c] sm:$0xf]
        %v2484 = vld [vmem:[#allocation9 + $0x220] sm:$0xf]
        %v2485 = vld [vmem:[#allocation9 + $0x224] sm:$0xf]
        %v2486 = vld [vmem:[#allocation9 + $0x228] sm:$0xf]
        %v2487 = vld [vmem:[#allocation9 + $0x22c] sm:$0xf]
        %v2488 = vld [vmem:[#allocation9 + $0x230] sm:$0xf]
        %v2489 = vld [vmem:[#allocation9 + $0x234] sm:$0xf]
        %v2490 = vld [vmem:[#allocation9 + $0x238] sm:$0xf]
        %v2491 = vld [vmem:[#allocation9 + $0x23c] sm:$0xf]
        %v2492 = vld [vmem:[%s4] sm:$0x1]
        %v2494 = vlaneseq
        %v2495 = vshrl.u32 %v2494, 7
        %v2496 = vsub.s32 0, %v2495
        %v2497 = vrot.slane %v2492, %v2496
        %v2643 = vunpack.c.l.b16 %v2348
        %v2644 = vunpack.c.l.b16 %v2349
        %v2645 = vunpack.c.l.b16 %v2350
        %v2646 = vunpack.c.l.b16 %v2351
        %v2647 = vunpack.c.l.b16 %v2352
        %v2648 = vunpack.c.l.b16 %v2353
        %v2649 = vunpack.c.l.b16 %v2354
        %v2650 = vunpack.c.l.b16 %v2355
        %v2651 = vunpack.c.l.b16 %v2356
        %v2652 = vunpack.c.l.b16 %v2357
        %v2653 = vunpack.c.l.b16 %v2358
        %v2654 = vunpack.c.l.b16 %v2359
        %v2655 = vunpack.c.l.b16 %v2360
        %v2656 = vunpack.c.l.b16 %v2361
        %v2657 = vunpack.c.l.b16 %v2362
        %v2658 = vunpack.c.l.b16 %v2363
        %v2659 = vunpack.c.l.b16 %v2364
        %v2660 = vunpack.c.l.b16 %v2365
        %v2661 = vunpack.c.l.b16 %v2366
        %v2662 = vunpack.c.l.b16 %v2367
        %v2663 = vunpack.c.l.b16 %v2368
        %v2664 = vunpack.c.l.b16 %v2369
        %v2665 = vunpack.c.l.b16 %v2370
        %v2666 = vunpack.c.l.b16 %v2371
        %v2667 = vunpack.c.l.b16 %v2372
        %v2668 = vunpack.c.l.b16 %v2373
        %v2669 = vunpack.c.l.b16 %v2374
        %v2670 = vunpack.c.l.b16 %v2375
        %v2671 = vunpack.c.l.b16 %v2376
        %v2672 = vunpack.c.l.b16 %v2377
        %v2673 = vunpack.c.l.b16 %v2378
        %v2674 = vunpack.c.l.b16 %v2379
        %v2675 = vunpack.c.l.b16 %v2380
        %v2676 = vunpack.c.l.b16 %v2381
        %v2677 = vunpack.c.l.b16 %v2382
        %v2678 = vunpack.c.l.b16 %v2383
        %v2679 = vunpack.c.l.b16 %v2384
        %v2680 = vunpack.c.l.b16 %v2385
        %v2681 = vunpack.c.l.b16 %v2386
        %v2682 = vunpack.c.l.b16 %v2387
        %v2683 = vunpack.c.l.b16 %v2388
        %v2684 = vunpack.c.l.b16 %v2389
        %v2685 = vunpack.c.l.b16 %v2390
        %v2686 = vunpack.c.l.b16 %v2391
        %v2687 = vunpack.c.l.b16 %v2392
        %v2688 = vunpack.c.l.b16 %v2393
        %v2689 = vunpack.c.l.b16 %v2394
        %v2690 = vunpack.c.l.b16 %v2395
        %v2691 = vunpack.c.l.b16 %v2396
        %v2692 = vunpack.c.l.b16 %v2397
        %v2693 = vunpack.c.l.b16 %v2398
        %v2694 = vunpack.c.l.b16 %v2399
        %v2695 = vunpack.c.l.b16 %v2400
        %v2696 = vunpack.c.l.b16 %v2401
        %v2697 = vunpack.c.l.b16 %v2402
        %v2698 = vunpack.c.l.b16 %v2403
        %v2699 = vunpack.c.l.b16 %v2404
        %v2700 = vunpack.c.l.b16 %v2405
        %v2701 = vunpack.c.l.b16 %v2406
        %v2702 = vunpack.c.l.b16 %v2407
        %v2703 = vunpack.c.l.b16 %v2408
        %v2704 = vunpack.c.l.b16 %v2409
        %v2705 = vunpack.c.l.b16 %v2410
        %v2706 = vunpack.c.l.b16 %v2411
        %v2707 = vunpack.c.l.b16 %v2412
        %v2708 = vunpack.c.l.b16 %v2413
        %v2709 = vunpack.c.l.b16 %v2414
        %v2710 = vunpack.c.l.b16 %v2415
        %v2711 = vunpack.c.l.b16 %v2416
        %v2712 = vunpack.c.l.b16 %v2417
        %v2713 = vunpack.c.l.b16 %v2418
        %v2714 = vunpack.c.l.b16 %v2419
        %v2715 = vunpack.c.l.b16 %v2420
        %v2716 = vunpack.c.l.b16 %v2421
        %v2717 = vunpack.c.l.b16 %v2422
        %v2718 = vunpack.c.l.b16 %v2423
        %v2719 = vunpack.c.l.b16 %v2424
        %v2720 = vunpack.c.l.b16 %v2425
        %v2721 = vunpack.c.l.b16 %v2426
        %v2722 = vunpack.c.l.b16 %v2427
        %v2723 = vunpack.c.l.b16 %v2428
        %v2724 = vunpack.c.l.b16 %v2429
        %v2725 = vunpack.c.l.b16 %v2430
        %v2726 = vunpack.c.l.b16 %v2431
        %v2727 = vunpack.c.l.b16 %v2432
        %v2728 = vunpack.c.l.b16 %v2433
        %v2729 = vunpack.c.l.b16 %v2434
        %v2730 = vunpack.c.l.b16 %v2435
        %v2731 = vunpack.c.l.b16 %v2436
        %v2732 = vunpack.c.l.b16 %v2437
        %v2733 = vunpack.c.l.b16 %v2438
        %v2734 = vunpack.c.l.b16 %v2439
        %v2735 = vunpack.c.l.b16 %v2440
        %v2736 = vunpack.c.l.b16 %v2441
        %v2737 = vunpack.c.l.b16 %v2442
        %v2738 = vunpack.c.l.b16 %v2443
        %v2739 = vunpack.c.l.b16 %v2444
        %v2740 = vunpack.c.l.b16 %v2445
        %v2741 = vunpack.c.l.b16 %v2446
        %v2742 = vunpack.c.l.b16 %v2447
        %v2743 = vunpack.c.l.b16 %v2448
        %v2744 = vunpack.c.l.b16 %v2449
        %v2745 = vunpack.c.l.b16 %v2450
        %v2746 = vunpack.c.l.b16 %v2451
        %v2747 = vunpack.c.l.b16 %v2452
        %v2748 = vunpack.c.l.b16 %v2453
        %v2749 = vunpack.c.l.b16 %v2454
        %v2750 = vunpack.c.l.b16 %v2455
        %v2751 = vunpack.c.l.b16 %v2456
        %v2752 = vunpack.c.l.b16 %v2457
        %v2753 = vunpack.c.l.b16 %v2458
        %v2754 = vunpack.c.l.b16 %v2459
        %v2755 = vunpack.c.l.b16 %v2460
        %v2756 = vunpack.c.l.b16 %v2461
        %v2757 = vunpack.c.l.b16 %v2462
        %v2758 = vunpack.c.l.b16 %v2463
        %v2759 = vunpack.c.l.b16 %v2464
        %v2760 = vunpack.c.l.b16 %v2465
        %v2761 = vunpack.c.l.b16 %v2466
        %v2762 = vunpack.c.l.b16 %v2467
        %v2763 = vunpack.c.l.b16 %v2468
        %v2764 = vunpack.c.l.b16 %v2469
        %v2765 = vunpack.c.l.b16 %v2470
        %v2766 = vunpack.c.l.b16 %v2471
        %v2767 = vunpack.c.l.b16 %v2472
        %v2768 = vunpack.c.l.b16 %v2473
        %v2769 = vunpack.c.l.b16 %v2474
        %v2770 = vunpack.c.l.b16 %v2475
        %v2771 = vunpack.c.l.b16 %v2476
        %v2772 = vunpack.c.l.b16 %v2477
        %v2773 = vunpack.c.l.b16 %v2478
        %v2774 = vunpack.c.l.b16 %v2479
        %v2775 = vunpack.c.l.b16 %v2480
        %v2776 = vunpack.c.l.b16 %v2481
        %v2777 = vunpack.c.l.b16 %v2482
        %v2778 = vunpack.c.l.b16 %v2483
        %v2779 = vunpack.c.l.b16 %v2484
        %v2780 = vunpack.c.l.b16 %v2485
        %v2781 = vunpack.c.l.b16 %v2486
        %v2782 = vunpack.c.l.b16 %v2487
        %v2783 = vunpack.c.l.b16 %v2488
        %v2784 = vunpack.c.l.b16 %v2489
        %v2785 = vunpack.c.l.b16 %v2490
        %v2786 = vunpack.c.l.b16 %v2491
        %v2787 = vpack.c.b16 %v2644, %v2643
        %v2788 = vpack.c.b16 %v2646, %v2645
        %v2789 = vpack.c.b16 %v2648, %v2647
        %v2790 = vpack.c.b16 %v2650, %v2649
        %v2791 = vpack.c.b16 %v2652, %v2651
        %v2792 = vpack.c.b16 %v2654, %v2653
        %v2793 = vpack.c.b16 %v2656, %v2655
        %v2794 = vpack.c.b16 %v2658, %v2657
        %v2795 = vpack.c.b16 %v2660, %v2659
        %v2796 = vpack.c.b16 %v2662, %v2661
        %v2797 = vpack.c.b16 %v2664, %v2663
        %v2798 = vpack.c.b16 %v2666, %v2665
        %v2799 = vpack.c.b16 %v2668, %v2667
        %v2800 = vpack.c.b16 %v2670, %v2669
        %v2801 = vpack.c.b16 %v2672, %v2671
        %v2802 = vpack.c.b16 %v2674, %v2673
        %v2803 = vpack.c.b16 %v2676, %v2675
        %v2804 = vpack.c.b16 %v2678, %v2677
        %v2805 = vpack.c.b16 %v2680, %v2679
        %v2806 = vpack.c.b16 %v2682, %v2681
        %v2807 = vpack.c.b16 %v2684, %v2683
        %v2808 = vpack.c.b16 %v2686, %v2685
        %v2809 = vpack.c.b16 %v2688, %v2687
        %v2810 = vpack.c.b16 %v2690, %v2689
        %v2811 = vpack.c.b16 %v2692, %v2691
        %v2812 = vpack.c.b16 %v2694, %v2693
        %v2813 = vpack.c.b16 %v2696, %v2695
        %v2814 = vpack.c.b16 %v2698, %v2697
        %v2815 = vpack.c.b16 %v2700, %v2699
        %v2816 = vpack.c.b16 %v2702, %v2701
        %v2817 = vpack.c.b16 %v2704, %v2703
        %v2818 = vpack.c.b16 %v2706, %v2705
        %v2819 = vpack.c.b16 %v2708, %v2707
        %v2820 = vpack.c.b16 %v2710, %v2709
        %v2821 = vpack.c.b16 %v2712, %v2711
        %v2822 = vpack.c.b16 %v2714, %v2713
        %v2823 = vpack.c.b16 %v2716, %v2715
        %v2824 = vpack.c.b16 %v2718, %v2717
        %v2825 = vpack.c.b16 %v2720, %v2719
        %v2826 = vpack.c.b16 %v2722, %v2721
        %v2827 = vpack.c.b16 %v2724, %v2723
        %v2828 = vpack.c.b16 %v2726, %v2725
        %v2829 = vpack.c.b16 %v2728, %v2727
        %v2830 = vpack.c.b16 %v2730, %v2729
        %v2831 = vpack.c.b16 %v2732, %v2731
        %v2832 = vpack.c.b16 %v2734, %v2733
        %v2833 = vpack.c.b16 %v2736, %v2735
        %v2834 = vpack.c.b16 %v2738, %v2737
        %v2835 = vpack.c.b16 %v2740, %v2739
        %v2836 = vpack.c.b16 %v2742, %v2741
        %v2837 = vpack.c.b16 %v2744, %v2743
        %v2838 = vpack.c.b16 %v2746, %v2745
        %v2839 = vpack.c.b16 %v2748, %v2747
        %v2840 = vpack.c.b16 %v2750, %v2749
        %v2841 = vpack.c.b16 %v2752, %v2751
        %v2842 = vpack.c.b16 %v2754, %v2753
        %v2843 = vpack.c.b16 %v2756, %v2755
        %v2844 = vpack.c.b16 %v2758, %v2757
        %v2845 = vpack.c.b16 %v2760, %v2759
        %v2846 = vpack.c.b16 %v2762, %v2761
        %v2847 = vpack.c.b16 %v2764, %v2763
        %v2848 = vpack.c.b16 %v2766, %v2765
        %v2849 = vpack.c.b16 %v2768, %v2767
        %v2850 = vpack.c.b16 %v2770, %v2769
        %v2851 = vpack.c.b16 %v2772, %v2771
        %v2852 = vpack.c.b16 %v2774, %v2773
        %v2853 = vpack.c.b16 %v2776, %v2775
        %v2854 = vpack.c.b16 %v2778, %v2777
        %v2855 = vpack.c.b16 %v2780, %v2779
        %v2856 = vpack.c.b16 %v2782, %v2781
        %v2857 = vpack.c.b16 %v2784, %v2783
        %v2858 = vpack.c.b16 %v2786, %v2785
        %2931 = vmatprep.subr.bf16.mxu0 0
        %2932 = vmatpush1.bf16.msra.mxu0 %v2787
        %2933 = vmatprep.subr.bf16.mxu0 0
        %2934 = vmatpush1.bf16.msra.mxu0 %v2788
        %2935 = vmatprep.subr.bf16.mxu0 0
        %2936 = vmatpush1.bf16.msra.mxu0 %v2789
        %2937 = vmatprep.subr.bf16.mxu0 0
        %2938 = vmatpush1.bf16.msra.mxu0 %v2790
        %2939 = vmatprep.subr.bf16.mxu0 0
        %2940 = vmatpush1.bf16.msra.mxu0 %v2791
        %2941 = vmatprep.subr.bf16.mxu0 0
        %2942 = vmatpush1.bf16.msra.mxu0 %v2792
        %2943 = vmatprep.subr.bf16.mxu0 0
        %2944 = vmatpush1.bf16.msra.mxu0 %v2793
        %2945 = vmatprep.subr.bf16.mxu0 0
        %2946 = vmatpush1.bf16.msra.mxu0 %v2794
        %2947 = vmatprep.subr.bf16.mxu0 0
        %2948 = vmatpush1.bf16.msra.mxu0 %v2795
        %2949 = vmatprep.subr.bf16.mxu0 0
        %2950 = vmatpush1.bf16.msra.mxu0 %v2796
        %2951 = vmatprep.subr.bf16.mxu0 0
        %2952 = vmatpush1.bf16.msra.mxu0 %v2797
        %2953 = vmatprep.subr.bf16.mxu0 0
        %2954 = vmatpush1.bf16.msra.mxu0 %v2798
        %2955 = vmatprep.subr.bf16.mxu0 0
        %2956 = vmatpush1.bf16.msra.mxu0 %v2799
        %2957 = vmatprep.subr.bf16.mxu0 0
        %2958 = vmatpush1.bf16.msra.mxu0 %v2800
        %2959 = vmatprep.subr.bf16.mxu0 0
        %2960 = vmatpush1.bf16.msra.mxu0 %v2801
        %2961 = vmatprep.subr.bf16.mxu0 0
        %2962 = vmatpush1.bf16.msra.mxu0 %v2802
        %2963 = vmatprep.mubr.bf16.mxu0 %v2313
        %2964 = vmatmul.mubr.bf16.gmra.mrb[0].mxu0 %v2312
        %v2965 = vpop.f32.mrb[0].mxu0
        %v2966 = vadd.f32 %v2497, %v2965
        %v2967 = vpop.f32.mrb[0].mxu0
        %v2968 = vpop.f32.mrb[0].mxu0
        %v2969 = vadd.f32 %v2497, %v2968
        %v2970 = vpop.f32.mrb[0].mxu0
        %2971 = vmatprep.mubr.bf16.mxu0 %v2322
        %2972 = vmatmul.mubr.bf16.gmra.mrb[0].mxu0 %v2321
        %v2973 = vpop.f32.mrb[0].mxu0
        %v2974 = vadd.f32 %v2497, %v2973
        %v2975 = vpop.f32.mrb[0].mxu0
        %v2976 = vpop.f32.mrb[0].mxu0
        %v2977 = vadd.f32 %v2497, %v2976
        %v2978 = vpop.f32.mrb[0].mxu0
        %2979 = vmatprep.mubr.bf16.mxu0 %v2331
        %2980 = vmatmul.mubr.bf16.gmra.mrb[0].mxu0 %v2330
        %v2981 = vpop.f32.mrb[0].mxu0
        %v2982 = vadd.f32 %v2497, %v2981
        %v2983 = vpop.f32.mrb[0].mxu0
        %v2984 = vpop.f32.mrb[0].mxu0
        %v2985 = vadd.f32 %v2497, %v2984
        %v2986 = vpop.f32.mrb[0].mxu0
        %2987 = vmatprep.mubr.bf16.mxu0 %v2340
        %2988 = vmatmul.mubr.bf16.gmra.mrb[0].mxu0 %v2339
        %v2989 = vpop.f32.mrb[0].mxu0
        %v2990 = vadd.f32 %v2497, %v2989
        %v2991 = vpop.f32.mrb[0].mxu0
        %v2992 = vpop.f32.mrb[0].mxu0
        %v2993 = vadd.f32 %v2497, %v2992
        %v2994 = vpop.f32.mrb[0].mxu0
        %2995 = vdwg.mxu0
        %2996 = vmatprep.subr.bf16.mxu0 0
        %2997 = vmatpush1.bf16.msra.mxu0 %v2803
        %2998 = vmatprep.subr.bf16.mxu0 0
        %2999 = vmatpush1.bf16.msra.mxu0 %v2804
        %3000 = vmatprep.subr.bf16.mxu0 0
        %3001 = vmatpush1.bf16.msra.mxu0 %v2805
        %3002 = vmatprep.subr.bf16.mxu0 0
        %3003 = vmatpush1.bf16.msra.mxu0 %v2806
        %3004 = vmatprep.subr.bf16.mxu0 0
        %3005 = vmatpush1.bf16.msra.mxu0 %v2807
        %3006 = vmatprep.subr.bf16.mxu0 0
        %3007 = vmatpush1.bf16.msra.mxu0 %v2808
        %3008 = vmatprep.subr.bf16.mxu0 0
        %3009 = vmatpush1.bf16.msra.mxu0 %v2809
        %3010 = vmatprep.subr.bf16.mxu0 0
        %3011 = vmatpush1.bf16.msra.mxu0 %v2810
        %3012 = vmatprep.subr.bf16.mxu0 0
        %3013 = vmatpush1.bf16.msra.mxu0 %v2811
        %3014 = vmatprep.subr.bf16.mxu0 0
        %3015 = vmatpush1.bf16.msra.mxu0 %v2812
        %3016 = vmatprep.subr.bf16.mxu0 0
        %3017 = vmatpush1.bf16.msra.mxu0 %v2813
        %3018 = vmatprep.subr.bf16.mxu0 0
        %3019 = vmatpush1.bf16.msra.mxu0 %v2814
        %3020 = vmatprep.subr.bf16.mxu0 0
        %3021 = vmatpush1.bf16.msra.mxu0 %v2815
        %3022 = vmatprep.subr.bf16.mxu0 0
        %3023 = vmatpush1.bf16.msra.mxu0 %v2816
        %3024 = vmatprep.subr.bf16.mxu0 0
        %3025 = vmatpush1.bf16.msra.mxu0 %v2817
        %3026 = vmatprep.subr.bf16.mxu0 0
        %3027 = vmatpush1.bf16.msra.mxu0 %v2818
        %3028 = vmatprep.mubr.bf16.mxu0 %v2315
        %3029 = vmatmul.mubr.bf16.gmra.mrb[0].mxu0 %v2314
        %v3030 = vpop.f32.mrb[0].mxu0
        %v3031 = vadd.f32 %v2966, %v3030
        %v3032 = vpop.f32.mrb[0].mxu0
        %v3033 = vpop.f32.mrb[0].mxu0
        %v3034 = vadd.f32 %v2969, %v3033
        %v3035 = vpop.f32.mrb[0].mxu0
        %3036 = vmatprep.mubr.bf16.mxu0 %v2324
        %3037 = vmatmul.mubr.bf16.gmra.mrb[0].mxu0 %v2323
        %v3038 = vpop.f32.mrb[0].mxu0
        %v3039 = vadd.f32 %v2974, %v3038
        %v3040 = vpop.f32.mrb[0].mxu0
        %v3041 = vpop.f32.mrb[0].mxu0
        %v3042 = vadd.f32 %v2977, %v3041
        %v3043 = vpop.f32.mrb[0].mxu0
        %3044 = vmatprep.mubr.bf16.mxu0 %v2333
        %3045 = vmatmul.mubr.bf16.gmra.mrb[0].mxu0 %v2332
        %v3046 = vpop.f32.mrb[0].mxu0
        %v3047 = vadd.f32 %v2982, %v3046
        %v3048 = vpop.f32.mrb[0].mxu0
        %v3049 = vpop.f32.mrb[0].mxu0
        %v3050 = vadd.f32 %v2985, %v3049
        %v3051 = vpop.f32.mrb[0].mxu0
        %3052 = vmatprep.mubr.bf16.mxu0 %v2342
        %3053 = vmatmul.mubr.bf16.gmra.mrb[0].mxu0 %v2341
        %v3054 = vpop.f32.mrb[0].mxu0
        %v3055 = vadd.f32 %v2990, %v3054
        %v3056 = vpop.f32.mrb[0].mxu0
        %v3057 = vpop.f32.mrb[0].mxu0
        %v3058 = vadd.f32 %v2993, %v3057
        %v3059 = vpop.f32.mrb[0].mxu0
        %3060 = vdwg.mxu0
        %3061 = vmatprep.subr.bf16.mxu0 0
        %3062 = vmatpush1.bf16.msra.mxu0 %v2819
        %3063 = vmatprep.subr.bf16.mxu0 0
        %3064 = vmatpush1.bf16.msra.mxu0 %v2820
        %3065 = vmatprep.subr.bf16.mxu0 0
        %3066 = vmatpush1.bf16.msra.mxu0 %v2821
        %3067 = vmatprep.subr.bf16.mxu0 0
        %3068 = vmatpush1.bf16.msra.mxu0 %v2822
        %3069 = vmatprep.subr.bf16.mxu0 0
        %3070 = vmatpush1.bf16.msra.mxu0 %v2823
        %3071 = vmatprep.subr.bf16.mxu0 0
        %3072 = vmatpush1.bf16.msra.mxu0 %v2824
        %3073 = vmatprep.subr.bf16.mxu0 0
        %3074 = vmatpush1.bf16.msra.mxu0 %v2825
        %3075 = vmatprep.subr.bf16.mxu0 0
        %3076 = vmatpush1.bf16.msra.mxu0 %v2826
        %3077 = vmatprep.subr.bf16.mxu0 0
        %3078 = vmatpush1.bf16.msra.mxu0 %v2827
        %3079 = vmatprep.subr.bf16.mxu0 0
        %3080 = vmatpush1.bf16.msra.mxu0 %v2828
        %3081 = vmatprep.subr.bf16.mxu0 0
        %3082 = vmatpush1.bf16.msra.mxu0 %v2829
        %3083 = vmatprep.subr.bf16.mxu0 0
        %3084 = vmatpush1.bf16.msra.mxu0 %v2830
        %3085 = vmatprep.subr.bf16.mxu0 0
        %3086 = vmatpush1.bf16.msra.mxu0 %v2831
        %3087 = vmatprep.subr.bf16.mxu0 0
        %3088 = vmatpush1.bf16.msra.mxu0 %v2832
        %3089 = vmatprep.subr.bf16.mxu0 0
        %3090 = vmatpush1.bf16.msra.mxu0 %v2833
        %3091 = vmatprep.subr.bf16.mxu0 0
        %3092 = vmatpush1.bf16.msra.mxu0 %v2834
        %3093 = vmatprep.mubr.bf16.mxu0 %v2317
        %3094 = vmatmul.mubr.bf16.gmra.mrb[0].mxu0 %v2316
        %v3095 = vpop.f32.mrb[0].mxu0
        %v3096 = vadd.f32 %v3031, %v3095
        %v3097 = vpop.f32.mrb[0].mxu0
        %v3098 = vpop.f32.mrb[0].mxu0
        %v3099 = vadd.f32 %v3034, %v3098
        %v3100 = vpop.f32.mrb[0].mxu0
        %3101 = vmatprep.mubr.bf16.mxu0 %v2326
        %3102 = vmatmul.mubr.bf16.gmra.mrb[0].mxu0 %v2325
        %v3103 = vpop.f32.mrb[0].mxu0
        %v3104 = vadd.f32 %v3039, %v3103
        %v3105 = vpop.f32.mrb[0].mxu0
        %v3106 = vpop.f32.mrb[0].mxu0
        %v3107 = vadd.f32 %v3042, %v3106
        %v3108 = vpop.f32.mrb[0].mxu0
        %3109 = vmatprep.mubr.bf16.mxu0 %v2335
        %3110 = vmatmul.mubr.bf16.gmra.mrb[0].mxu0 %v2334
        %v3111 = vpop.f32.mrb[0].mxu0
        %v3112 = vadd.f32 %v3047, %v3111
        %v3113 = vpop.f32.mrb[0].mxu0
        %v3114 = vpop.f32.mrb[0].mxu0
        %v3115 = vadd.f32 %v3050, %v3114
        %v3116 = vpop.f32.mrb[0].mxu0
        %3117 = vmatprep.mubr.bf16.mxu0 %v2344
        %3118 = vmatmul.mubr.bf16.gmra.mrb[0].mxu0 %v2343
        %v3119 = vpop.f32.mrb[0].mxu0
        %v3120 = vadd.f32 %v3055, %v3119
        %v3121 = vpop.f32.mrb[0].mxu0
        %v3122 = vpop.f32.mrb[0].mxu0
        %v3123 = vadd.f32 %v3058, %v3122
        %v3124 = vpop.f32.mrb[0].mxu0
        %3125 = vdwg.mxu0
        %3126 = vmatprep.subr.bf16.mxu0 0
        %3127 = vmatpush1.bf16.msra.mxu0 %v2835
        %3128 = vmatprep.subr.bf16.mxu0 0
        %3129 = vmatpush1.bf16.msra.mxu0 %v2836
        %3130 = vmatprep.subr.bf16.mxu0 0
        %3131 = vmatpush1.bf16.msra.mxu0 %v2837
        %3132 = vmatprep.subr.bf16.mxu0 0
        %3133 = vmatpush1.bf16.msra.mxu0 %v2838
        %3134 = vmatprep.subr.bf16.mxu0 0
        %3135 = vmatpush1.bf16.msra.mxu0 %v2839
        %3136 = vmatprep.subr.bf16.mxu0 0
        %3137 = vmatpush1.bf16.msra.mxu0 %v2840
        %3138 = vmatprep.subr.bf16.mxu0 0
        %3139 = vmatpush1.bf16.msra.mxu0 %v2841
        %3140 = vmatprep.subr.bf16.mxu0 0
        %3141 = vmatpush1.bf16.msra.mxu0 %v2842
        %3142 = vmatprep.subr.bf16.mxu0 0
        %3143 = vmatpush1.bf16.msra.mxu0 %v2843
        %3144 = vmatprep.subr.bf16.mxu0 0
        %3145 = vmatpush1.bf16.msra.mxu0 %v2844
        %3146 = vmatprep.subr.bf16.mxu0 0
        %3147 = vmatpush1.bf16.msra.mxu0 %v2845
        %3148 = vmatprep.subr.bf16.mxu0 0
        %3149 = vmatpush1.bf16.msra.mxu0 %v2846
        %3150 = vmatprep.subr.bf16.mxu0 0
        %3151 = vmatpush1.bf16.msra.mxu0 %v2847
        %3152 = vmatprep.subr.bf16.mxu0 0
        %3153 = vmatpush1.bf16.msra.mxu0 %v2848
        %3154 = vmatprep.subr.bf16.mxu0 0
        %3155 = vmatpush1.bf16.msra.mxu0 %v2849
        %3156 = vmatprep.subr.bf16.mxu0 0
        %3157 = vmatpush1.bf16.msra.mxu0 %v2850
        %3158 = vmatprep.mubr.bf16.mxu0 %v2319
        %3159 = vmatmul.mubr.bf16.gmra.mrb[0].mxu0 %v2318
        %v3160 = vpop.f32.mrb[0].mxu0
        %v3161 = vadd.f32 %v3096, %v3160
        %v3162 = vpop.f32.mrb[0].mxu0
        %v3163 = vpop.f32.mrb[0].mxu0
        %v3164 = vadd.f32 %v3099, %v3163
        %v3165 = vpop.f32.mrb[0].mxu0
        %3166 = vmatprep.mubr.bf16.mxu0 %v2328
        %3167 = vmatmul.mubr.bf16.gmra.mrb[0].mxu0 %v2327
        %v3168 = vpop.f32.mrb[0].mxu0
        %v3169 = vadd.f32 %v3104, %v3168
        %v3170 = vpop.f32.mrb[0].mxu0
        %v3171 = vpop.f32.mrb[0].mxu0
        %v3172 = vadd.f32 %v3107, %v3171
        %v3173 = vpop.f32.mrb[0].mxu0
        %3174 = vmatprep.mubr.bf16.mxu0 %v2337
        %3175 = vmatmul.mubr.bf16.gmra.mrb[0].mxu0 %v2336
        %v3176 = vpop.f32.mrb[0].mxu0
        %v3177 = vadd.f32 %v3112, %v3176
        %v3178 = vpop.f32.mrb[0].mxu0
        %v3179 = vpop.f32.mrb[0].mxu0
        %v3180 = vadd.f32 %v3115, %v3179
        %v3181 = vpop.f32.mrb[0].mxu0
        %3182 = vmatprep.mubr.bf16.mxu0 %v2346
        %3183 = vmatmul.mubr.bf16.gmra.mrb[0].mxu0 %v2345
        %v3184 = vpop.f32.mrb[0].mxu0
        %v3185 = vadd.f32 %v3120, %v3184
        %v3186 = vpop.f32.mrb[0].mxu0
        %v3187 = vpop.f32.mrb[0].mxu0
        %v3188 = vadd.f32 %v3123, %v3187
        %v3189 = vpop.f32.mrb[0].mxu0
        %3190 = vdwg.mxu0
        %3191 = vmatprep.subr.bf16.mxu0 0
        %3192 = vmatpush1.bf16.msra.mxu0 %v2851
        %3193 = vmatprep.subr.bf16.mxu0 0
        %3194 = vmatpush1.bf16.msra.mxu0 %v2852
        %3195 = vmatprep.subr.bf16.mxu0 0
        %3196 = vmatpush1.bf16.msra.mxu0 %v2853
        %3197 = vmatprep.subr.bf16.mxu0 0
        %3198 = vmatpush1.bf16.msra.mxu0 %v2854
        %3199 = vmatprep.subr.bf16.mxu0 0
        %3200 = vmatpush1.bf16.msra.mxu0 %v2855
        %3201 = vmatprep.subr.bf16.mxu0 0
        %3202 = vmatpush1.bf16.msra.mxu0 %v2856
        %3203 = vmatprep.subr.bf16.mxu0 0
        %3204 = vmatpush1.bf16.msra.mxu0 %v2857
        %3205 = vmatprep.subr.bf16.mxu0 0
        %3206 = vmatpush1.bf16.msra.mxu0 %v2858
        %3207 = vmatprep.subr.bf16.mxu0 0
        %3208 = vmatpush1.bf16.msra.mxu0 0
        %3209 = vmatprep.subr.bf16.mxu0 0
        %3210 = vmatpush1.bf16.msra.mxu0 0
        %3211 = vmatprep.subr.bf16.mxu0 0
        %3212 = vmatpush1.bf16.msra.mxu0 0
        %3213 = vmatprep.subr.bf16.mxu0 0
        %3214 = vmatpush1.bf16.msra.mxu0 0
        %3215 = vmatprep.subr.bf16.mxu0 0
        %3216 = vmatpush1.bf16.msra.mxu0 0
        %3217 = vmatprep.subr.bf16.mxu0 0
        %3218 = vmatpush1.bf16.msra.mxu0 0
        %3219 = vmatprep.subr.bf16.mxu0 0
        %3220 = vmatpush1.bf16.msra.mxu0 0
        %3221 = vmatprep.subr.bf16.mxu0 0
        %3222 = vmatpush1.bf16.msra.mxu0 0
        %3223 = vmatprep.mubr.bf16.mxu0 0
        %3224 = vmatmul.mubr.bf16.gmra.mrb[0].mxu0 %v2320
        %v3225 = vpop.f32.mrb[0].mxu0
        %v3226 = vadd.f32 %v3161, %v3225
        %v3227 = vpop.f32.mrb[0].mxu0
        %v3228 = vpop.f32.mrb[0].mxu0
        %v3229 = vadd.f32 %v3164, %v3228
        %v3230 = vpop.f32.mrb[0].mxu0
        %3231 = vmatprep.mubr.bf16.mxu0 0
        %3232 = vmatmul.mubr.bf16.gmra.mrb[0].mxu0 %v2329
        %v3233 = vpop.f32.mrb[0].mxu0
        %v3234 = vadd.f32 %v3169, %v3233
        %v3235 = vpop.f32.mrb[0].mxu0
        %v3236 = vpop.f32.mrb[0].mxu0
        %v3237 = vadd.f32 %v3172, %v3236
        %v3238 = vpop.f32.mrb[0].mxu0
        %3239 = vmatprep.mubr.bf16.mxu0 0
        %3240 = vmatmul.mubr.bf16.gmra.mrb[0].mxu0 %v2338
        %v3241 = vpop.f32.mrb[0].mxu0
        %v3242 = vadd.f32 %v3177, %v3241
        %v3243 = vpop.f32.mrb[0].mxu0
        %v3244 = vpop.f32.mrb[0].mxu0
        %v3245 = vadd.f32 %v3180, %v3244
        %v3246 = vpop.f32.mrb[0].mxu0
        %3247 = vmatprep.mubr.bf16.mxu0 0
        %3248 = vmatmul.mubr.bf16.gmra.mrb[0].mxu0 %v2347
        %v3249 = vpop.f32.mrb[0].mxu0
        %v3250 = vadd.f32 %v3185, %v3249
        %v3251 = vpop.f32.mrb[0].mxu0
        %v3252 = vpop.f32.mrb[0].mxu0
        %v3253 = vadd.f32 %v3188, %v3252
        %v3254 = vpop.f32.mrb[0].mxu0
        %3255 = vdwg.mxu0
        %v3256 = vld [vmem:[%s237] sm:$0xff]
        %v3257 = vld [vmem:[%s237 + $0x8] sm:$0xff]
        %v3258 = vld [vmem:[%s237 + $0x10] sm:$0xff]
        %v3259 = vld [vmem:[%s237 + $0x18] sm:$0xff]
        %v3260 = vld [vmem:[%s237 + $0x20] sm:$0xff]
        %v3261 = vld [vmem:[%s237 + $0x28] sm:$0xff]
        %v3262 = vld [vmem:[%s237 + $0x30] sm:$0xff]
        %v3263 = vld [vmem:[%s237 + $0x38] sm:$0xff]
        %v3264 = vadd.f32 %v3226, %v3256
        %v3265 = vadd.f32 %v3229, %v3257
        %v3266 = vadd.f32 %v3234, %v3258
        %v3267 = vadd.f32 %v3237, %v3259
        %v3268 = vadd.f32 %v3242, %v3260
        %v3269 = vadd.f32 %v3245, %v3261
        %v3270 = vadd.f32 %v3250, %v3262
        %v3271 = vadd.f32 %v3253, %v3263
        %v3272 = vmax.f32 %v3264, 0.0
        %v3273 = vmax.f32 %v3265, 0.0
        %v3274 = vmax.f32 %v3266, 0.0
        %v3275 = vmax.f32 %v3267, 0.0
        %v3276 = vmax.f32 %v3268, 0.0
        %v3277 = vmax.f32 %v3269, 0.0
        %v3278 = vmax.f32 %v3270, 0.0
        %v3279 = vmax.f32 %v3271, 0.0
        %3280 = vst [vmem:[%s271] sm:$0xff] %v3272
        %3281 = vst [vmem:[%s271 + $0x8] sm:$0xff] %v3273
        %3282 = vst [vmem:[%s271 + $0x10] sm:$0xff] %v3274
        %3283 = vst [vmem:[%s271 + $0x18] sm:$0xff] %v3275
        %3284 = vst [vmem:[%s271 + $0x20] sm:$0xff] %v3276
        %3285 = vst [vmem:[%s271 + $0x28] sm:$0xff] %v3277
        %3286 = vst [vmem:[%s271 + $0x30] sm:$0xff] %v3278
        %3287 = vst [vmem:[%s271 + $0x38] sm:$0xff] %v3279
        %s3288 = sand.u32 %s141, 1
        %s3289 = scalar_lea.sflag [#allocation6], %s3288
        %s3290 = sand.u32 %s141, 1
        %s3291 = smul.addr %s3290, 64
        %s3292 = scalar_lea.vmem [#allocation10], %s3291
        // Predicated region
        $region53: #{tpu_custom_call.1} parent=39 // pred_check
          %p3293 = pneg %p151
        $region54: #{tpu_custom_call.1} parent=39 // pred_check_branch
          %3295 = sbr.rel (%p3293) target = $region56
        $region55: #{tpu_custom_call.1} parent=39 // pred_region
          %s3297 = ssub.s32 1024, 1024
          %3298 = vsyncadd %s3289, %s3297
          %s3299 = smul.addr %s23, 8
          %s3300 = smul.addr %s3299, 128
          %s3301 = scalar_lea.hbm %s5, %s3300
          %s3302 = sshll.u32 %s3292, 4
          %s3303 = int_to_ptr.vmem [resolvable:$true] %s3302
          %3308 = dma.vmem_to_hbm [thread:$0]  %s3303, 1024, %s3301, %s3289, 128, 128, 8
        $region56: #{tpu_custom_call.1} parent=39 // pred_fallthru
          _
      $region40: #{tpu_custom_call.1} parent=5 // pred_fallthru
        _
      %p3309 = scmp.le.s32.totalorder 2, %s18
      // Predicated region
      $region57: #{tpu_custom_call.1} parent=5 // pred_check
        %p3310 = pneg %p3309
      $region58: #{tpu_custom_call.1} parent=5 // pred_check_branch
        %3312 = sbr.rel (%p3310) target = $region60
      $region59: #{tpu_custom_call.1} parent=5 // pred_region
        %s3313 = ssub.s32 %s18, 2
        // Predicated region
        $region61: #{tpu_custom_call.1} parent=59 // pred_check
          %p3314 = pneg %p157
        $region62: #{tpu_custom_call.1} parent=59 // pred_check_branch
          %3316 = sbr.rel (%p3314) target = $region64
        $region63: #{tpu_custom_call.1} parent=59 // pred_region
          %s3317 = sand.u32 %s142, 1
          %s3318 = scalar_lea.sflag [#allocation6], %s3317
          %s3319 = sand.u32 %s142, 1
          %s3320 = smul.addr %s3319, 64
          %s3321 = scalar_lea.vmem [#allocation10], %s3320
          %3322 = dma.done %s3318, 1024
        $region64: #{tpu_custom_call.1} parent=59 // pred_fallthru
          _
      $region60: #{tpu_custom_call.1} parent=5 // pred_fallthru
        _
    $region6: #{tpu_custom_call.1} parent=1 // loop_footer
      %s22 = sadd.s32 1, %s18
    $region7: #{tpu_custom_call.1} parent=1 // loop_footer_branch
      %17 = sbr.rel target = $region3
    $region8: #{tpu_custom_call.1} parent=1 // loop_exit
      _
    %3323 = vsyncpa [#allocation5], 1
    %s3324 = scalar_lea.sflag [#allocation5], 1
    %3325 = vsyncpa %s3324, 1
    %3326 = vsyncpa [#allocation8], 1
    %3327 = vsyncpa [#allocation6], 1
    %s3328 = scalar_lea.sflag [#allocation6], 1
    %3329 = vsyncpa %s3328, 1

</llo_original>
